<compile_context>
chip_gen: v7x
topology: tpu7x:2x2x1
jax: 0.10.0
libtpu: 0.0.40
codegen_flags: <defaults>
</compile_context>

<pallas_src>
import functools

import jax
import jax.numpy as jnp
from jax import lax
from jax.experimental import pallas as pl
from jax.experimental.pallas import tpu as pltpu

EPS = 1e-5


# ---------------------------------------------------------------------------
# In-kernel helpers
# ---------------------------------------------------------------------------
def _mm(a, w):
    # MXU matmul, f32 accumulation, DEFAULT precision (bf16 operand rounding).
    # K <= 24 here, so the drift stays well inside the check tolerance.
    return jnp.dot(a, w, preferred_element_type=jnp.float32)


def _bn(y, gamma, beta, m):
    # One-pass training-mode BatchNorm1d over the m = N*L rows of y: (m, C).
    # Biased variance via E[x^2] - E[x]^2; gamma*rsqrt folded into one scale,
    # the final expression is FMA-shaped.  rsqrt runs on the EUP (free slot).
    inv_m = 1.0 / float(m)
    s1 = jnp.sum(y, axis=0, keepdims=True)
    s2 = jnp.sum(y * y, axis=0, keepdims=True)
    mean = s1 * inv_m
    var = s2 * inv_m - mean * mean
    scale = gamma * lax.rsqrt(var + EPS)
    shift = beta - mean * scale
    return y * scale + shift


def _conv3_taps(a, pad_ref, w_ref, n, l, c_in):
    """k=3 / stride=1 / padding=1 conv along L of `a` (n, l, c_in).

    `pad_ref` is an (n, l+2, c_in) VMEM scratch.  Only the two boundary rows
    are zeroed (no full-buffer zero fill); the centre tap reuses `a` directly.
    Returns the un-biased conv output, shape (n*l, c_out), f32.
    """
    m = n * l
    pad_ref[:, 0:1, :] = jnp.zeros((n, 1, c_in), jnp.float32)
    pad_ref[:, l + 1:l + 2, :] = jnp.zeros((n, 1, c_in), jnp.float32)
    pad_ref[:, 1:l + 1, :] = a
    t0 = pad_ref[:, 0:l, :].reshape(m, c_in)
    t2 = pad_ref[:, 2:l + 2, :].reshape(m, c_in)
    # Three tap matmuls.  (A lane-axis im2col concat would merge them into one
    # MXU push, but with c_in <= 8 that relayout costs more than it saves.)
    return _mm(t0, w_ref[0]) + _mm(a.reshape(m, c_in), w_ref[1]) + _mm(t2, w_ref[2])


def _downsample(x3, n, l_in, l_out, stride):
    """Gather rows 0, stride, 2*stride, ... along L: (n, l_in, c) -> (n, l_out, c).

    Implemented as an exact 0/1 selection matmul on the (otherwise idle) MXU;
    HIGHEST precision keeps it a bit-exact gather and avoids relying on
    sublane-strided loads.
    """
    jj = lax.broadcasted_iota(jnp.int32, (l_out, l_in), 0)
    ll = lax.broadcasted_iota(jnp.int32, (l_out, l_in), 1)
    sel2 = jnp.where(ll == stride * jj, 1.0, 0.0).astype(jnp.float32)
    sel = jnp.broadcast_to(sel2[None, :, :], (n, l_out, l_in))
    return lax.dot_general(
        sel, x3, (((2,), (1,)), ((0,), (0,))),
        preferred_element_type=jnp.float32,
        precision=lax.Precision.HIGHEST)                    # (n, l_out, c)


def _residual_block(a, cfg, w1_ref, w2_ref, vec_ref, wp_ref, pad1_ref, pad2_ref):
    """One ResidualBlock applied to the in-VMEM activation `a` (n, l_in, c_in)."""
    l_in, l_out, c_in, c_out, stride, use_proj = cfg
    n = a.shape[0]
    m_out = n * l_out

    # conv1 (k=3, pad=1): evaluate at stride 1 over the full length, then (for
    # downsampling blocks) gather the strided rows *before* BN.
    y = _conv3_taps(a, pad1_ref, w1_ref, n, l_in, c_in)          # (n*l_in, c_out)
    if stride == 1:
        xr = a.reshape(m_out, c_in)
    else:
        y = _downsample(y.reshape(n, l_in, c_out), n, l_in, l_out, stride)
        y = y.reshape(m_out, c_out)
        xr = _downsample(a, n, l_in, l_out, stride).reshape(m_out, c_in)
    y = y + vec_ref[0:1, :]                                      # conv1 bias
    h = jnp.maximum(_bn(y, vec_ref[1:2, :], vec_ref[2:3, :], m_out), 0.0)

    # conv2 (k=3, stride=1, pad=1) on the post-ReLU activations.
    z = _conv3_taps(h.reshape(n, l_out, c_out), pad2_ref, w2_ref, n, l_out, c_out)
    z = z + vec_ref[3:4, :]                                      # conv2 bias
    o = _bn(z, vec_ref[4:5, :], vec_ref[5:6, :], m_out)

    # residual path: 1x1 strided projection when channels change / downsampling,
    # otherwise the (already correctly strided) input itself.
    if use_proj:
        res = _mm(xr, wp_ref[...]) + vec_ref[6:7, :]
    else:
        res = xr
    return jnp.maximum(o + res, 0.0).reshape(n, l_out, c_out)


# ---------------------------------------------------------------------------
# Fused whole-network kernel (single pallas_call, grid-free)
# ---------------------------------------------------------------------------
def _make_fused_kernel(cfgs):
    nb = len(cfgs)

    def kernel(*refs):
        it = iter(refs)
        x_ref = next(it)
        per_block = []
        for cfg in cfgs:
            w1, w2, vec = next(it), next(it), next(it)
            wp = next(it) if cfg[5] else None
            per_block.append((w1, w2, vec, wp))
        out_refs = [next(it) for _ in range(nb)]
        scratch = [next(it) for _ in range(2 * nb)]

        a = x_ref[...]                    # (N, L0, C0); stays in VMEM throughout
        for i, cfg in enumerate(cfgs):
            w1, w2, vec, wp = per_block[i]
            a = _residual_block(a, cfg, w1, w2, vec, wp,
                                scratch[2 * i], scratch[2 * i + 1])
            out_refs[i][...] = a          # every block output is a kernel output

    return kernel


@functools.partial(jax.jit, static_argnames=("cfgs",))
def _forward(x_ncl, weights, cfgs):
    n = x_ncl.shape[0]
    x_nlc = jnp.transpose(x_ncl, (0, 2, 1))            # NCL -> NLC once
    inputs = (x_nlc,) + tuple(weights)

    out_shape = tuple(jax.ShapeDtypeStruct((n, c[1], c[3]), jnp.float32)
                      for c in cfgs)
    scratch_shapes = []
    for c in cfgs:
        scratch_shapes.append(pltpu.VMEM((n, c[0] + 2, c[2]), jnp.float32))  # conv1 pad
        scratch_shapes.append(pltpu.VMEM((n, c[1] + 2, c[3]), jnp.float32))  # conv2 pad

    outs_nlc = pl.pallas_call(
        _make_fused_kernel(cfgs),
        out_shape=out_shape,
        in_specs=[pl.BlockSpec(memory_space=pltpu.MemorySpace.VMEM)] * len(inputs),
        out_specs=tuple(pl.BlockSpec(memory_space=pltpu.MemorySpace.VMEM)
                        for _ in cfgs),
        scratch_shapes=scratch_shapes,
    )(*inputs)
    outs_ncl = tuple(jnp.transpose(o, (0, 2, 1)) for o in outs_nlc)   # back to NCL
    return outs_ncl[-1], outs_ncl


def residual_network(x_ncl, params):
    """Forward of ResidualNetwork.  x is (N, C, L); returns (final, [block outputs])."""
    _, c0, l0 = x_ncl.shape
    cfgs, weights = [], []
    l_in, c_in = int(l0), int(c0)
    for p in params:
        c_out = int(p['w1'].shape[2])
        stride = int(p['stride'])
        use_proj = bool(p['use_proj'])
        l_out = (l_in - 1) // stride + 1
        cfgs.append((l_in, l_out, c_in, c_out, stride, use_proj))
        weights += [p['w1'], p['w2'], p['vec']]
        if use_proj:
            weights.append(p['wp'])
        l_in, c_in = l_out, c_out
    final, outs = _forward(x_ncl, tuple(weights), cfgs=tuple(cfgs))
    return final, list(outs)


# ---------------------------------------------------------------------------
# Deterministic parameter construction (synthetic, no checkpoint load)
# ---------------------------------------------------------------------------
def init_params(key, residual_blocks):
    params = []
    for i, out_dim in enumerate(residual_blocks):
        in_dim = residual_blocks[i - 1] if i > 0 else residual_blocks[0]
        downsample = i in (0, 2)
        need_proj = (in_dim != out_dim) or downsample
        key, *ks = jax.random.split(key, 11)
        p = {
            'stride': 2 if downsample else 1,
            'use_proj': need_proj,
            # PyTorch-layout tensors (used by the pure-JAX reference)
            'w1_oik': 0.1 * jax.random.normal(ks[0], (out_dim, in_dim, 3), jnp.float32),
            'b1_vec': 0.1 * jax.random.normal(ks[1], (out_dim,), jnp.float32),
            'g1_vec': 1.0 + 0.1 * jax.random.normal(ks[2], (out_dim,), jnp.float32),
            'be1_vec': 0.1 * jax.random.normal(ks[3], (out_dim,), jnp.float32),
            'w2_oik': 0.1 * jax.random.normal(ks[4], (out_dim, out_dim, 3), jnp.float32),
            'b2_vec': 0.1 * jax.random.normal(ks[5], (out_dim,), jnp.float32),
            'g2_vec': 1.0 + 0.1 * jax.random.normal(ks[6], (out_dim,), jnp.float32),
            'be2_vec': 0.1 * jax.random.normal(ks[7], (out_dim,), jnp.float32),
        }
        if need_proj:
            p['wp_oik'] = 0.1 * jax.random.normal(ks[8], (out_dim, in_dim, 1), jnp.float32)
            p['bp_vec'] = 0.1 * jax.random.normal(ks[9], (out_dim,), jnp.float32)
            p['wp'] = jnp.transpose(p['wp_oik'][:, :, 0], (1, 0))   # (Cin, Cout)
            bp = p['bp_vec']
        else:
            bp = jnp.zeros((out_dim,), jnp.float32)
        # kernel-layout views
        p['w1'] = jnp.transpose(p['w1_oik'], (2, 1, 0))   # (3, Cin, Cout)
        p['w2'] = jnp.transpose(p['w2_oik'], (2, 1, 0))   # (3, Cout, Cout)
        # packed per-channel vectors: [b1, g1, be1, b2, g2, be2, bp, 0]
        p['vec'] = jnp.stack([p['b1_vec'], p['g1_vec'], p['be1_vec'],
                              p['b2_vec'], p['g2_vec'], p['be2_vec'],
                              bp, jnp.zeros((out_dim,), jnp.float32)], axis=0)
        params.append(p)
    return params


# ---------------------------------------------------------------------------
# Pure-JAX reference (NCL, lax.conv, HIGHEST precision) for correctness check
# ---------------------------------------------------------------------------
def _conv1d_ref(x_ncl, w_oik, b, stride, pad):
    y = lax.conv_general_dilated(x_ncl, w_oik, (stride,), [(pad, pad)],
                                 dimension_numbers=('NCH', 'OIH', 'NCH'),
                                 precision=lax.Precision.HIGHEST)
    return y + b[None, :, None]


def _bn_ref(y, g, be):
    mean = jnp.mean(y, axis=(0, 2), keepdims=True)
    var = jnp.mean((y - mean) ** 2, axis=(0, 2), keepdims=True)
    return (y - mean) / jnp.sqrt(var + EPS) * g[None, :, None] + be[None, :, None]


def residual_block_ref(x_ncl, p):
    out = _conv1d_ref(x_ncl, p['w1_oik'], p['b1_vec'], p['stride'], 1)
    out = jnp.maximum(_bn_ref(out, p['g1_vec'], p['be1_vec']), 0.0)
    out = _conv1d_ref(out, p['w2_oik'], p['b2_vec'], 1, 1)
    out = _bn_ref(out, p['g2_vec'], p['be2_vec'])
    if p['use_proj']:
        res = _conv1d_ref(x_ncl, p['wp_oik'], p['bp_vec'], p['stride'], 0)
    else:
        res = x_ncl
    return jnp.maximum(out + res, 0.0)


if __name__ == "__main__":
    residual_blocks = [4, 8, 8, 8]            # ResidualNetwork([4, 8, 8, 8])
    key = jax.random.PRNGKey(0)
    kx, kp = jax.random.split(key)
    params = init_params(kp, residual_blocks)

    # PyTorch-convention input: (N, C, L)
    x = jax.random.normal(kx, (2, residual_blocks[0], 16), jnp.float32)

    final, outs = residual_network(x, params)
    final = jax.block_until_ready(final)

    # Verify against the pure-JAX reference block by block.  The kernel runs
    # its conv matmuls at DEFAULT MXU precision (bf16 operand rounding, per the
    # perf guidance) while the reference uses HIGHEST f32, so allow a small
    # amount of drift accumulated over the 8 conv+BN stages.
    xr = x
    for p, o in zip(params, outs):
        xr = residual_block_ref(xr, p)
        assert xr.shape == o.shape, (xr.shape, o.shape)
        assert bool(jnp.allclose(xr, o, atol=2e-2, rtol=2e-2)), "mismatch vs reference"
    assert bool(jnp.allclose(xr, final, atol=2e-2, rtol=2e-2))

    print("KERNEL_OK")
</pallas_src>

<mosaic_0001>
module attributes {stable_mosaic.version = 11 : i64} {
  func.func @kernel(%arg0: memref<2x16x4xf32, #tpu.memory_space<vmem>>, %arg1: memref<3x4x4xf32, #tpu.memory_space<vmem>>, %arg2: memref<3x4x4xf32, #tpu.memory_space<vmem>>, %arg3: memref<8x4xf32, #tpu.memory_space<vmem>>, %arg4: memref<4x4xf32, #tpu.memory_space<vmem>>, %arg5: memref<3x4x8xf32, #tpu.memory_space<vmem>>, %arg6: memref<3x8x8xf32, #tpu.memory_space<vmem>>, %arg7: memref<8x8xf32, #tpu.memory_space<vmem>>, %arg8: memref<4x8xf32, #tpu.memory_space<vmem>>, %arg9: memref<3x8x8xf32, #tpu.memory_space<vmem>>, %arg10: memref<3x8x8xf32, #tpu.memory_space<vmem>>, %arg11: memref<8x8xf32, #tpu.memory_space<vmem>>, %arg12: memref<8x8xf32, #tpu.memory_space<vmem>>, %arg13: memref<3x8x8xf32, #tpu.memory_space<vmem>>, %arg14: memref<3x8x8xf32, #tpu.memory_space<vmem>>, %arg15: memref<8x8xf32, #tpu.memory_space<vmem>>, %arg16: memref<2x8x4xf32, #tpu.memory_space<vmem>>, %arg17: memref<2x8x8xf32, #tpu.memory_space<vmem>>, %arg18: memref<2x4x8xf32, #tpu.memory_space<vmem>>, %arg19: memref<2x4x8xf32, #tpu.memory_space<vmem>>, %arg20: memref<2x18x4xf32, #tpu.memory_space<vmem>>, %arg21: memref<2x10x4xf32, #tpu.memory_space<vmem>>, %arg22: memref<2x10x4xf32, #tpu.memory_space<vmem>>, %arg23: memref<2x10x8xf32, #tpu.memory_space<vmem>>, %arg24: memref<2x10x8xf32, #tpu.memory_space<vmem>>, %arg25: memref<2x6x8xf32, #tpu.memory_space<vmem>>, %arg26: memref<2x6x8xf32, #tpu.memory_space<vmem>>, %arg27: memref<2x6x8xf32, #tpu.memory_space<vmem>>) attributes {dimension_semantics = [], scalar_prefetch = 0 : i64, scratch_operands = 8 : i64, tpu.core_type = #tpu.core_type<tc>} {
    %c0 = arith.constant 0 : index
    %c0_0 = arith.constant 0 : index
    %c0_1 = arith.constant 0 : index
    %0 = vector.load %arg0[%c0, %c0_0, %c0_1] : memref<2x16x4xf32, #tpu.memory_space<vmem>>, vector<2x16x4xf32>
    %cst = arith.constant 0.000000e+00 : f32
    %1 = vector.broadcast %cst : f32 to vector<2x1x4xf32>
    %c0_2 = arith.constant 0 : index
    %c0_3 = arith.constant 0 : index
    %c0_4 = arith.constant 0 : index
    %2 = vector.load %arg20[%c0_2, %c0_3, %c0_4] : memref<2x18x4xf32, #tpu.memory_space<vmem>>, vector<2x1x4xf32>
    tpu.vector_store %arg20[%c0_2, %c0_3, %c0_4], %1 {strides = array<i32>} : memref<2x18x4xf32, #tpu.memory_space<vmem>>, vector<2x1x4xf32>,
    %cst_5 = arith.constant 0.000000e+00 : f32
    %3 = vector.broadcast %cst_5 : f32 to vector<2x1x4xf32>
    %c0_6 = arith.constant 0 : index
    %c17 = arith.constant 17 : index
    %c0_7 = arith.constant 0 : index
    %4 = vector.load %arg20[%c0_6, %c17, %c0_7] : memref<2x18x4xf32, #tpu.memory_space<vmem>>, vector<2x1x4xf32>
    tpu.vector_store %arg20[%c0_6, %c17, %c0_7], %3 {strides = array<i32>} : memref<2x18x4xf32, #tpu.memory_space<vmem>>, vector<2x1x4xf32>,
    %c0_8 = arith.constant 0 : index
    %c1 = arith.constant 1 : index
    %c0_9 = arith.constant 0 : index
    %5 = vector.load %arg20[%c0_8, %c1, %c0_9] : memref<2x18x4xf32, #tpu.memory_space<vmem>>, vector<2x16x4xf32>
    tpu.vector_store %arg20[%c0_8, %c1, %c0_9], %0 {strides = array<i32>} : memref<2x18x4xf32, #tpu.memory_space<vmem>>, vector<2x16x4xf32>,
    %c0_10 = arith.constant 0 : index
    %c0_11 = arith.constant 0 : index
    %c0_12 = arith.constant 0 : index
    %6 = vector.load %arg20[%c0_10, %c0_11, %c0_12] : memref<2x18x4xf32, #tpu.memory_space<vmem>>, vector<2x16x4xf32>
    %7 = vector.shape_cast %6 : vector<2x16x4xf32> to vector<32x4xf32>
    %c0_13 = arith.constant 0 : index
    %c2 = arith.constant 2 : index
    %c0_14 = arith.constant 0 : index
    %8 = vector.load %arg20[%c0_13, %c2, %c0_14] : memref<2x18x4xf32, #tpu.memory_space<vmem>>, vector<2x16x4xf32>
    %9 = vector.shape_cast %8 : vector<2x16x4xf32> to vector<32x4xf32>
    %c0_15 = arith.constant 0 : index
    %c0_16 = arith.constant 0 : index
    %c0_17 = arith.constant 0 : index
    %10 = vector.load %arg1[%c0_15, %c0_16, %c0_17] : memref<3x4x4xf32, #tpu.memory_space<vmem>>, vector<1x4x4xf32>
    %11 = vector.shape_cast %10 : vector<1x4x4xf32> to vector<4x4xf32>
    %cst_18 = arith.constant dense<0.000000e+00> : vector<32x4xf32>
    %12 = tpu.matmul %7, %11, %cst_18 {dimension_numbers = #tpu.dot_dimension_numbers<[1], [0], [0], [1], [0, 0, 1, 1], [], []>} : vector<32x4xf32>, vector<4x4xf32>, vector<32x4xf32> -> vector<32x4xf32>
    %13 = vector.shape_cast %0 : vector<2x16x4xf32> to vector<32x4xf32>
    %c1_19 = arith.constant 1 : index
    %c0_20 = arith.constant 0 : index
    %c0_21 = arith.constant 0 : index
    %14 = vector.load %arg1[%c1_19, %c0_20, %c0_21] : memref<3x4x4xf32, #tpu.memory_space<vmem>>, vector<1x4x4xf32>
    %15 = vector.shape_cast %14 : vector<1x4x4xf32> to vector<4x4xf32>
    %cst_22 = arith.constant dense<0.000000e+00> : vector<32x4xf32>
    %16 = tpu.matmul %13, %15, %cst_22 {dimension_numbers = #tpu.dot_dimension_numbers<[1], [0], [0], [1], [0, 0, 1, 1], [], []>} : vector<32x4xf32>, vector<4x4xf32>, vector<32x4xf32> -> vector<32x4xf32>
    %17 = arith.addf %12, %16 : vector<32x4xf32>
    %c2_23 = arith.constant 2 : index
    %c0_24 = arith.constant 0 : index
    %c0_25 = arith.constant 0 : index
    %18 = vector.load %arg1[%c2_23, %c0_24, %c0_25] : memref<3x4x4xf32, #tpu.memory_space<vmem>>, vector<1x4x4xf32>
    %19 = vector.shape_cast %18 : vector<1x4x4xf32> to vector<4x4xf32>
    %cst_26 = arith.constant dense<0.000000e+00> : vector<32x4xf32>
    %20 = tpu.matmul %9, %19, %cst_26 {dimension_numbers = #tpu.dot_dimension_numbers<[1], [0], [0], [1], [0, 0, 1, 1], [], []>} : vector<32x4xf32>, vector<4x4xf32>, vector<32x4xf32> -> vector<32x4xf32>
    %21 = arith.addf %17, %20 : vector<32x4xf32>
    %22 = vector.shape_cast %21 : vector<32x4xf32> to vector<2x16x4xf32>
    %23 = tpu.iota {dimensions = array<i32: 0>} : vector<8x16xi32>
    %24 = tpu.iota {dimensions = array<i32: 1>} : vector<8x16xi32>
    %c2_i32 = arith.constant 2 : i32
    %25 = vector.broadcast %c2_i32 : i32 to vector<8x16xi32>
    %26 = arith.muli %25, %23 : vector<8x16xi32>
    %27 = arith.cmpi eq, %24, %26 : vector<8x16xi32>
    %cst_27 = arith.constant 1.000000e+00 : f32
    %cst_28 = arith.constant 0.000000e+00 : f32
    %28 = vector.broadcast %cst_27 : f32 to vector<8x16xf32>
    %29 = vector.broadcast %cst_28 : f32 to vector<8x16xf32>
    %30 = arith.select %27, %28, %29 : vector<8x16xi1>, vector<8x16xf32>
    %31 = vector.shape_cast %30 : vector<8x16xf32> to vector<1x8x16xf32>
    %32 = vector.shape_cast %31 : vector<1x8x16xf32> to vector<1x8x16xf32>
    %33 = vector.broadcast %32 : vector<1x8x16xf32> to vector<2x8x16xf32>
    %cst_29 = arith.constant dense<0.000000e+00> : vector<2x8x4xf32>
    %34 = tpu.matmul %33, %22, %cst_29 {dimension_numbers = #tpu.dot_dimension_numbers<[2], [1], [1], [2], [0, 0, 0, 1, 1, 2], [0], [0]>, precision = #tpu.contract_precision<fp32>} : vector<2x8x16xf32>, vector<2x16x4xf32>, vector<2x8x4xf32> -> vector<2x8x4xf32>
    %35 = vector.shape_cast %34 : vector<2x8x4xf32> to vector<16x4xf32>
    %36 = tpu.iota {dimensions = array<i32: 0>} : vector<8x16xi32>
    %37 = tpu.iota {dimensions = array<i32: 1>} : vector<8x16xi32>
    %c2_i32_30 = arith.constant 2 : i32
    %38 = vector.broadcast %c2_i32_30 : i32 to vector<8x16xi32>
    %39 = arith.muli %38, %36 : vector<8x16xi32>
    %40 = arith.cmpi eq, %37, %39 : vector<8x16xi32>
    %cst_31 = arith.constant 1.000000e+00 : f32
    %cst_32 = arith.constant 0.000000e+00 : f32
    %41 = vector.broadcast %cst_31 : f32 to vector<8x16xf32>
    %42 = vector.broadcast %cst_32 : f32 to vector<8x16xf32>
    %43 = arith.select %40, %41, %42 : vector<8x16xi1>, vector<8x16xf32>
    %44 = vector.shape_cast %43 : vector<8x16xf32> to vector<1x8x16xf32>
    %45 = vector.shape_cast %44 : vector<1x8x16xf32> to vector<1x8x16xf32>
    %46 = vector.broadcast %45 : vector<1x8x16xf32> to vector<2x8x16xf32>
    %cst_33 = arith.constant dense<0.000000e+00> : vector<2x8x4xf32>
    %47 = tpu.matmul %46, %0, %cst_33 {dimension_numbers = #tpu.dot_dimension_numbers<[2], [1], [1], [2], [0, 0, 0, 1, 1, 2], [0], [0]>, precision = #tpu.contract_precision<fp32>} : vector<2x8x16xf32>, vector<2x16x4xf32>, vector<2x8x4xf32> -> vector<2x8x4xf32>
    %48 = vector.shape_cast %47 : vector<2x8x4xf32> to vector<16x4xf32>
    %c0_34 = arith.constant 0 : index
    %c0_35 = arith.constant 0 : index
    %49 = vector.load %arg3[%c0_34, %c0_35] : memref<8x4xf32, #tpu.memory_space<vmem>>, vector<1x4xf32>
    %50 = vector.broadcast %49 : vector<1x4xf32> to vector<16x4xf32>
    %51 = arith.addf %35, %50 : vector<16x4xf32>
    %c1_36 = arith.constant 1 : index
    %c0_37 = arith.constant 0 : index
    %52 = vector.load %arg3[%c1_36, %c0_37] : memref<8x4xf32, #tpu.memory_space<vmem>>, vector<1x4xf32>
    %c2_38 = arith.constant 2 : index
    %c0_39 = arith.constant 0 : index
    %53 = vector.load %arg3[%c2_38, %c0_39] : memref<8x4xf32, #tpu.memory_space<vmem>>, vector<1x4xf32>
    %cst_40 = arith.constant dense<0.000000e+00> : vector<4xf32>
    %54 = vector.multi_reduction <add>, %51, %cst_40 [0] : vector<16x4xf32> to vector<4xf32>
    %55 = vector.shape_cast %54 : vector<4xf32> to vector<1x4xf32>
    %56 = arith.mulf %51, %51 : vector<16x4xf32>
    %cst_41 = arith.constant dense<0.000000e+00> : vector<4xf32>
    %57 = vector.multi_reduction <add>, %56, %cst_41 [0] : vector<16x4xf32> to vector<4xf32>
    %58 = vector.shape_cast %57 : vector<4xf32> to vector<1x4xf32>
    %cst_42 = arith.constant 6.250000e-02 : f32
    %59 = vector.broadcast %cst_42 : f32 to vector<1x4xf32>
    %60 = arith.mulf %55, %59 : vector<1x4xf32>
    %cst_43 = arith.constant 6.250000e-02 : f32
    %61 = vector.broadcast %cst_43 : f32 to vector<1x4xf32>
    %62 = arith.mulf %58, %61 : vector<1x4xf32>
    %63 = arith.mulf %60, %60 : vector<1x4xf32>
    %64 = arith.subf %62, %63 : vector<1x4xf32>
    %cst_44 = arith.constant 9.99999974E-6 : f32
    %65 = vector.broadcast %cst_44 : f32 to vector<1x4xf32>
    %66 = arith.addf %64, %65 : vector<1x4xf32>
    %67 = math.rsqrt %66 : vector<1x4xf32>
    %68 = arith.mulf %52, %67 : vector<1x4xf32>
    %69 = arith.mulf %60, %68 : vector<1x4xf32>
    %70 = arith.subf %53, %69 : vector<1x4xf32>
    %71 = vector.broadcast %68 : vector<1x4xf32> to vector<16x4xf32>
    %72 = arith.mulf %51, %71 : vector<16x4xf32>
    %73 = vector.broadcast %70 : vector<1x4xf32> to vector<16x4xf32>
    %74 = arith.addf %72, %73 : vector<16x4xf32>
    %cst_45 = arith.constant 0.000000e+00 : f32
    %75 = vector.broadcast %cst_45 : f32 to vector<16x4xf32>
    %76 = arith.maximumf %74, %75 : vector<16x4xf32>
    %77 = vector.shape_cast %76 : vector<16x4xf32> to vector<2x8x4xf32>
    %cst_46 = arith.constant 0.000000e+00 : f32
    %78 = vector.broadcast %cst_46 : f32 to vector<2x1x4xf32>
    %c0_47 = arith.constant 0 : index
    %c0_48 = arith.constant 0 : index
    %c0_49 = arith.constant 0 : index
    %79 = vector.load %arg21[%c0_47, %c0_48, %c0_49] : memref<2x10x4xf32, #tpu.memory_space<vmem>>, vector<2x1x4xf32>
    tpu.vector_store %arg21[%c0_47, %c0_48, %c0_49], %78 {strides = array<i32>} : memref<2x10x4xf32, #tpu.memory_space<vmem>>, vector<2x1x4xf32>,
    %cst_50 = arith.constant 0.000000e+00 : f32
    %80 = vector.broadcast %cst_50 : f32 to vector<2x1x4xf32>
    %c0_51 = arith.constant 0 : index
    %c9 = arith.constant 9 : index
    %c0_52 = arith.constant 0 : index
    %81 = vector.load %arg21[%c0_51, %c9, %c0_52] : memref<2x10x4xf32, #tpu.memory_space<vmem>>, vector<2x1x4xf32>
    tpu.vector_store %arg21[%c0_51, %c9, %c0_52], %80 {strides = array<i32>} : memref<2x10x4xf32, #tpu.memory_space<vmem>>, vector<2x1x4xf32>,
    %c0_53 = arith.constant 0 : index
    %c1_54 = arith.constant 1 : index
    %c0_55 = arith.constant 0 : index
    %82 = vector.load %arg21[%c0_53, %c1_54, %c0_55] : memref<2x10x4xf32, #tpu.memory_space<vmem>>, vector<2x8x4xf32>
    tpu.vector_store %arg21[%c0_53, %c1_54, %c0_55], %77 {strides = array<i32>} : memref<2x10x4xf32, #tpu.memory_space<vmem>>, vector<2x8x4xf32>,
    %c0_56 = arith.constant 0 : index
    %c0_57 = arith.constant 0 : index
    %c0_58 = arith.constant 0 : index
    %83 = vector.load %arg21[%c0_56, %c0_57, %c0_58] : memref<2x10x4xf32, #tpu.memory_space<vmem>>, vector<2x8x4xf32>
    %84 = vector.shape_cast %83 : vector<2x8x4xf32> to vector<16x4xf32>
    %c0_59 = arith.constant 0 : index
    %c2_60 = arith.constant 2 : index
    %c0_61 = arith.constant 0 : index
    %85 = vector.load %arg21[%c0_59, %c2_60, %c0_61] : memref<2x10x4xf32, #tpu.memory_space<vmem>>, vector<2x8x4xf32>
    %86 = vector.shape_cast %85 : vector<2x8x4xf32> to vector<16x4xf32>
    %c0_62 = arith.constant 0 : index
    %c0_63 = arith.constant 0 : index
    %c0_64 = arith.constant 0 : index
    %87 = vector.load %arg2[%c0_62, %c0_63, %c0_64] : memref<3x4x4xf32, #tpu.memory_space<vmem>>, vector<1x4x4xf32>
    %88 = vector.shape_cast %87 : vector<1x4x4xf32> to vector<4x4xf32>
    %cst_65 = arith.constant dense<0.000000e+00> : vector<16x4xf32>
    %89 = tpu.matmul %84, %88, %cst_65 {dimension_numbers = #tpu.dot_dimension_numbers<[1], [0], [0], [1], [0, 0, 1, 1], [], []>} : vector<16x4xf32>, vector<4x4xf32>, vector<16x4xf32> -> vector<16x4xf32>
    %90 = vector.shape_cast %77 : vector<2x8x4xf32> to vector<16x4xf32>
    %c1_66 = arith.constant 1 : index
    %c0_67 = arith.constant 0 : index
    %c0_68 = arith.constant 0 : index
    %91 = vector.load %arg2[%c1_66, %c0_67, %c0_68] : memref<3x4x4xf32, #tpu.memory_space<vmem>>, vector<1x4x4xf32>
    %92 = vector.shape_cast %91 : vector<1x4x4xf32> to vector<4x4xf32>
    %cst_69 = arith.constant dense<0.000000e+00> : vector<16x4xf32>
    %93 = tpu.matmul %90, %92, %cst_69 {dimension_numbers = #tpu.dot_dimension_numbers<[1], [0], [0], [1], [0, 0, 1, 1], [], []>} : vector<16x4xf32>, vector<4x4xf32>, vector<16x4xf32> -> vector<16x4xf32>
    %94 = arith.addf %89, %93 : vector<16x4xf32>
    %c2_70 = arith.constant 2 : index
    %c0_71 = arith.constant 0 : index
    %c0_72 = arith.constant 0 : index
    %95 = vector.load %arg2[%c2_70, %c0_71, %c0_72] : memref<3x4x4xf32, #tpu.memory_space<vmem>>, vector<1x4x4xf32>
    %96 = vector.shape_cast %95 : vector<1x4x4xf32> to vector<4x4xf32>
    %cst_73 = arith.constant dense<0.000000e+00> : vector<16x4xf32>
    %97 = tpu.matmul %86, %96, %cst_73 {dimension_numbers = #tpu.dot_dimension_numbers<[1], [0], [0], [1], [0, 0, 1, 1], [], []>} : vector<16x4xf32>, vector<4x4xf32>, vector<16x4xf32> -> vector<16x4xf32>
    %98 = arith.addf %94, %97 : vector<16x4xf32>
    %c3 = arith.constant 3 : index
    %c0_74 = arith.constant 0 : index
    %99 = vector.load %arg3[%c3, %c0_74] : memref<8x4xf32, #tpu.memory_space<vmem>>, vector<1x4xf32>
    %100 = vector.broadcast %99 : vector<1x4xf32> to vector<16x4xf32>
    %101 = arith.addf %98, %100 : vector<16x4xf32>
    %c4 = arith.constant 4 : index
    %c0_75 = arith.constant 0 : index
    %102 = vector.load %arg3[%c4, %c0_75] : memref<8x4xf32, #tpu.memory_space<vmem>>, vector<1x4xf32>
    %c5 = arith.constant 5 : index
    %c0_76 = arith.constant 0 : index
    %103 = vector.load %arg3[%c5, %c0_76] : memref<8x4xf32, #tpu.memory_space<vmem>>, vector<1x4xf32>
    %cst_77 = arith.constant dense<0.000000e+00> : vector<4xf32>
    %104 = vector.multi_reduction <add>, %101, %cst_77 [0] : vector<16x4xf32> to vector<4xf32>
    %105 = vector.shape_cast %104 : vector<4xf32> to vector<1x4xf32>
    %106 = arith.mulf %101, %101 : vector<16x4xf32>
    %cst_78 = arith.constant dense<0.000000e+00> : vector<4xf32>
    %107 = vector.multi_reduction <add>, %106, %cst_78 [0] : vector<16x4xf32> to vector<4xf32>
    %108 = vector.shape_cast %107 : vector<4xf32> to vector<1x4xf32>
    %cst_79 = arith.constant 6.250000e-02 : f32
    %109 = vector.broadcast %cst_79 : f32 to vector<1x4xf32>
    %110 = arith.mulf %105, %109 : vector<1x4xf32>
    %cst_80 = arith.constant 6.250000e-02 : f32
    %111 = vector.broadcast %cst_80 : f32 to vector<1x4xf32>
    %112 = arith.mulf %108, %111 : vector<1x4xf32>
    %113 = arith.mulf %110, %110 : vector<1x4xf32>
    %114 = arith.subf %112, %113 : vector<1x4xf32>
    %cst_81 = arith.constant 9.99999974E-6 : f32
    %115 = vector.broadcast %cst_81 : f32 to vector<1x4xf32>
    %116 = arith.addf %114, %115 : vector<1x4xf32>
    %117 = math.rsqrt %116 : vector<1x4xf32>
    %118 = arith.mulf %102, %117 : vector<1x4xf32>
    %119 = arith.mulf %110, %118 : vector<1x4xf32>
    %120 = arith.subf %103, %119 : vector<1x4xf32>
    %121 = vector.broadcast %118 : vector<1x4xf32> to vector<16x4xf32>
    %122 = arith.mulf %101, %121 : vector<16x4xf32>
    %123 = vector.broadcast %120 : vector<1x4xf32> to vector<16x4xf32>
    %124 = arith.addf %122, %123 : vector<16x4xf32>
    %c0_82 = arith.constant 0 : index
    %c0_83 = arith.constant 0 : index
    %125 = vector.load %arg4[%c0_82, %c0_83] : memref<4x4xf32, #tpu.memory_space<vmem>>, vector<4x4xf32>
    %cst_84 = arith.constant dense<0.000000e+00> : vector<16x4xf32>
    %126 = tpu.matmul %48, %125, %cst_84 {dimension_numbers = #tpu.dot_dimension_numbers<[1], [0], [0], [1], [0, 0, 1, 1], [], []>} : vector<16x4xf32>, vector<4x4xf32>, vector<16x4xf32> -> vector<16x4xf32>
    %c6 = arith.constant 6 : index
    %c0_85 = arith.constant 0 : index
    %127 = vector.load %arg3[%c6, %c0_85] : memref<8x4xf32, #tpu.memory_space<vmem>>, vector<1x4xf32>
    %128 = vector.broadcast %127 : vector<1x4xf32> to vector<16x4xf32>
    %129 = arith.addf %126, %128 : vector<16x4xf32>
    %130 = arith.addf %124, %129 : vector<16x4xf32>
    %cst_86 = arith.constant 0.000000e+00 : f32
    %131 = vector.broadcast %cst_86 : f32 to vector<16x4xf32>
    %132 = arith.maximumf %130, %131 : vector<16x4xf32>
    %133 = vector.shape_cast %132 : vector<16x4xf32> to vector<2x8x4xf32>
    %c0_87 = arith.constant 0 : index
    %c0_88 = arith.constant 0 : index
    %c0_89 = arith.constant 0 : index
    %134 = vector.load %arg16[%c0_87, %c0_88, %c0_89] : memref<2x8x4xf32, #tpu.memory_space<vmem>>, vector<2x8x4xf32>
    tpu.vector_store %arg16[%c0_87, %c0_88, %c0_89], %133 {strides = array<i32>} : memref<2x8x4xf32, #tpu.memory_space<vmem>>, vector<2x8x4xf32>,
    %cst_90 = arith.constant 0.000000e+00 : f32
    %135 = vector.broadcast %cst_90 : f32 to vector<2x1x4xf32>
    %c0_91 = arith.constant 0 : index
    %c0_92 = arith.constant 0 : index
    %c0_93 = arith.constant 0 : index
    %136 = vector.load %arg22[%c0_91, %c0_92, %c0_93] : memref<2x10x4xf32, #tpu.memory_space<vmem>>, vector<2x1x4xf32>
    tpu.vector_store %arg22[%c0_91, %c0_92, %c0_93], %135 {strides = array<i32>} : memref<2x10x4xf32, #tpu.memory_space<vmem>>, vector<2x1x4xf32>,
    %cst_94 = arith.constant 0.000000e+00 : f32
    %137 = vector.broadcast %cst_94 : f32 to vector<2x1x4xf32>
    %c0_95 = arith.constant 0 : index
    %c9_96 = arith.constant 9 : index
    %c0_97 = arith.constant 0 : index
    %138 = vector.load %arg22[%c0_95, %c9_96, %c0_97] : memref<2x10x4xf32, #tpu.memory_space<vmem>>, vector<2x1x4xf32>
    tpu.vector_store %arg22[%c0_95, %c9_96, %c0_97], %137 {strides = array<i32>} : memref<2x10x4xf32, #tpu.memory_space<vmem>>, vector<2x1x4xf32>,
    %c0_98 = arith.constant 0 : index
    %c1_99 = arith.constant 1 : index
    %c0_100 = arith.constant 0 : index
    %139 = vector.load %arg22[%c0_98, %c1_99, %c0_100] : memref<2x10x4xf32, #tpu.memory_space<vmem>>, vector<2x8x4xf32>
    tpu.vector_store %arg22[%c0_98, %c1_99, %c0_100], %133 {strides = array<i32>} : memref<2x10x4xf32, #tpu.memory_space<vmem>>, vector<2x8x4xf32>,
    %c0_101 = arith.constant 0 : index
    %c0_102 = arith.constant 0 : index
    %c0_103 = arith.constant 0 : index
    %140 = vector.load %arg22[%c0_101, %c0_102, %c0_103] : memref<2x10x4xf32, #tpu.memory_space<vmem>>, vector<2x8x4xf32>
    %141 = vector.shape_cast %140 : vector<2x8x4xf32> to vector<16x4xf32>
    %c0_104 = arith.constant 0 : index
    %c2_105 = arith.constant 2 : index
    %c0_106 = arith.constant 0 : index
    %142 = vector.load %arg22[%c0_104, %c2_105, %c0_106] : memref<2x10x4xf32, #tpu.memory_space<vmem>>, vector<2x8x4xf32>
    %143 = vector.shape_cast %142 : vector<2x8x4xf32> to vector<16x4xf32>
    %c0_107 = arith.constant 0 : index
    %c0_108 = arith.constant 0 : index
    %c0_109 = arith.constant 0 : index
    %144 = vector.load %arg5[%c0_107, %c0_108, %c0_109] : memref<3x4x8xf32, #tpu.memory_space<vmem>>, vector<1x4x8xf32>
    %145 = vector.shape_cast %144 : vector<1x4x8xf32> to vector<4x8xf32>
    %cst_110 = arith.constant dense<0.000000e+00> : vector<16x8xf32>
    %146 = tpu.matmul %141, %145, %cst_110 {dimension_numbers = #tpu.dot_dimension_numbers<[1], [0], [0], [1], [0, 0, 1, 1], [], []>} : vector<16x4xf32>, vector<4x8xf32>, vector<16x8xf32> -> vector<16x8xf32>
    %147 = vector.shape_cast %133 : vector<2x8x4xf32> to vector<16x4xf32>
    %c1_111 = arith.constant 1 : index
    %c0_112 = arith.constant 0 : index
    %c0_113 = arith.constant 0 : index
    %148 = vector.load %arg5[%c1_111, %c0_112, %c0_113] : memref<3x4x8xf32, #tpu.memory_space<vmem>>, vector<1x4x8xf32>
    %149 = vector.shape_cast %148 : vector<1x4x8xf32> to vector<4x8xf32>
    %cst_114 = arith.constant dense<0.000000e+00> : vector<16x8xf32>
    %150 = tpu.matmul %147, %149, %cst_114 {dimension_numbers = #tpu.dot_dimension_numbers<[1], [0], [0], [1], [0, 0, 1, 1], [], []>} : vector<16x4xf32>, vector<4x8xf32>, vector<16x8xf32> -> vector<16x8xf32>
    %151 = arith.addf %146, %150 : vector<16x8xf32>
    %c2_115 = arith.constant 2 : index
    %c0_116 = arith.constant 0 : index
    %c0_117 = arith.constant 0 : index
    %152 = vector.load %arg5[%c2_115, %c0_116, %c0_117] : memref<3x4x8xf32, #tpu.memory_space<vmem>>, vector<1x4x8xf32>
    %153 = vector.shape_cast %152 : vector<1x4x8xf32> to vector<4x8xf32>
    %cst_118 = arith.constant dense<0.000000e+00> : vector<16x8xf32>
    %154 = tpu.matmul %143, %153, %cst_118 {dimension_numbers = #tpu.dot_dimension_numbers<[1], [0], [0], [1], [0, 0, 1, 1], [], []>} : vector<16x4xf32>, vector<4x8xf32>, vector<16x8xf32> -> vector<16x8xf32>
    %155 = arith.addf %151, %154 : vector<16x8xf32>
    %156 = vector.shape_cast %133 : vector<2x8x4xf32> to vector<16x4xf32>
    %c0_119 = arith.constant 0 : index
    %c0_120 = arith.constant 0 : index
    %157 = vector.load %arg7[%c0_119, %c0_120] : memref<8x8xf32, #tpu.memory_space<vmem>>, vector<1x8xf32>
    %158 = vector.broadcast %157 : vector<1x8xf32> to vector<16x8xf32>
    %159 = arith.addf %155, %158 : vector<16x8xf32>
    %c1_121 = arith.constant 1 : index
    %c0_122 = arith.constant 0 : index
    %160 = vector.load %arg7[%c1_121, %c0_122] : memref<8x8xf32, #tpu.memory_space<vmem>>, vector<1x8xf32>
    %c2_123 = arith.constant 2 : index
    %c0_124 = arith.constant 0 : index
    %161 = vector.load %arg7[%c2_123, %c0_124] : memref<8x8xf32, #tpu.memory_space<vmem>>, vector<1x8xf32>
    %cst_125 = arith.constant dense<0.000000e+00> : vector<8xf32>
    %162 = vector.multi_reduction <add>, %159, %cst_125 [0] : vector<16x8xf32> to vector<8xf32>
    %163 = vector.shape_cast %162 : vector<8xf32> to vector<1x8xf32>
    %164 = arith.mulf %159, %159 : vector<16x8xf32>
    %cst_126 = arith.constant dense<0.000000e+00> : vector<8xf32>
    %165 = vector.multi_reduction <add>, %164, %cst_126 [0] : vector<16x8xf32> to vector<8xf32>
    %166 = vector.shape_cast %165 : vector<8xf32> to vector<1x8xf32>
    %cst_127 = arith.constant 6.250000e-02 : f32
    %167 = vector.broadcast %cst_127 : f32 to vector<1x8xf32>
    %168 = arith.mulf %163, %167 : vector<1x8xf32>
    %cst_128 = arith.constant 6.250000e-02 : f32
    %169 = vector.broadcast %cst_128 : f32 to vector<1x8xf32>
    %170 = arith.mulf %166, %169 : vector<1x8xf32>
    %171 = arith.mulf %168, %168 : vector<1x8xf32>
    %172 = arith.subf %170, %171 : vector<1x8xf32>
    %cst_129 = arith.constant 9.99999974E-6 : f32
    %173 = vector.broadcast %cst_129 : f32 to vector<1x8xf32>
    %174 = arith.addf %172, %173 : vector<1x8xf32>
    %175 = math.rsqrt %174 : vector<1x8xf32>
    %176 = arith.mulf %160, %175 : vector<1x8xf32>
    %177 = arith.mulf %168, %176 : vector<1x8xf32>
    %178 = arith.subf %161, %177 : vector<1x8xf32>
    %179 = vector.broadcast %176 : vector<1x8xf32> to vector<16x8xf32>
    %180 = arith.mulf %159, %179 : vector<16x8xf32>
    %181 = vector.broadcast %178 : vector<1x8xf32> to vector<16x8xf32>
    %182 = arith.addf %180, %181 : vector<16x8xf32>
    %cst_130 = arith.constant 0.000000e+00 : f32
    %183 = vector.broadcast %cst_130 : f32 to vector<16x8xf32>
    %184 = arith.maximumf %182, %183 : vector<16x8xf32>
    %185 = vector.shape_cast %184 : vector<16x8xf32> to vector<2x8x8xf32>
    %cst_131 = arith.constant 0.000000e+00 : f32
    %186 = vector.broadcast %cst_131 : f32 to vector<2x1x8xf32>
    %c0_132 = arith.constant 0 : index
    %c0_133 = arith.constant 0 : index
    %c0_134 = arith.constant 0 : index
    %187 = vector.load %arg23[%c0_132, %c0_133, %c0_134] : memref<2x10x8xf32, #tpu.memory_space<vmem>>, vector<2x1x8xf32>
    tpu.vector_store %arg23[%c0_132, %c0_133, %c0_134], %186 {strides = array<i32>} : memref<2x10x8xf32, #tpu.memory_space<vmem>>, vector<2x1x8xf32>,
    %cst_135 = arith.constant 0.000000e+00 : f32
    %188 = vector.broadcast %cst_135 : f32 to vector<2x1x8xf32>
    %c0_136 = arith.constant 0 : index
    %c9_137 = arith.constant 9 : index
    %c0_138 = arith.constant 0 : index
    %189 = vector.load %arg23[%c0_136, %c9_137, %c0_138] : memref<2x10x8xf32, #tpu.memory_space<vmem>>, vector<2x1x8xf32>
    tpu.vector_store %arg23[%c0_136, %c9_137, %c0_138], %188 {strides = array<i32>} : memref<2x10x8xf32, #tpu.memory_space<vmem>>, vector<2x1x8xf32>,
    %c0_139 = arith.constant 0 : index
    %c1_140 = arith.constant 1 : index
    %c0_141 = arith.constant 0 : index
    %190 = vector.load %arg23[%c0_139, %c1_140, %c0_141] : memref<2x10x8xf32, #tpu.memory_space<vmem>>, vector<2x8x8xf32>
    tpu.vector_store %arg23[%c0_139, %c1_140, %c0_141], %185 {strides = array<i32>} : memref<2x10x8xf32, #tpu.memory_space<vmem>>, vector<2x8x8xf32>,
    %c0_142 = arith.constant 0 : index
    %c0_143 = arith.constant 0 : index
    %c0_144 = arith.constant 0 : index
    %191 = vector.load %arg23[%c0_142, %c0_143, %c0_144] : memref<2x10x8xf32, #tpu.memory_space<vmem>>, vector<2x8x8xf32>
    %192 = vector.shape_cast %191 : vector<2x8x8xf32> to vector<16x8xf32>
    %c0_145 = arith.constant 0 : index
    %c2_146 = arith.constant 2 : index
    %c0_147 = arith.constant 0 : index
    %193 = vector.load %arg23[%c0_145, %c2_146, %c0_147] : memref<2x10x8xf32, #tpu.memory_space<vmem>>, vector<2x8x8xf32>
    %194 = vector.shape_cast %193 : vector<2x8x8xf32> to vector<16x8xf32>
    %c0_148 = arith.constant 0 : index
    %c0_149 = arith.constant 0 : index
    %c0_150 = arith.constant 0 : index
    %195 = vector.load %arg6[%c0_148, %c0_149, %c0_150] : memref<3x8x8xf32, #tpu.memory_space<vmem>>, vector<1x8x8xf32>
    %196 = vector.shape_cast %195 : vector<1x8x8xf32> to vector<8x8xf32>
    %cst_151 = arith.constant dense<0.000000e+00> : vector<16x8xf32>
    %197 = tpu.matmul %192, %196, %cst_151 {dimension_numbers = #tpu.dot_dimension_numbers<[1], [0], [0], [1], [0, 0, 1, 1], [], []>} : vector<16x8xf32>, vector<8x8xf32>, vector<16x8xf32> -> vector<16x8xf32>
    %198 = vector.shape_cast %185 : vector<2x8x8xf32> to vector<16x8xf32>
    %c1_152 = arith.constant 1 : index
    %c0_153 = arith.constant 0 : index
    %c0_154 = arith.constant 0 : index
    %199 = vector.load %arg6[%c1_152, %c0_153, %c0_154] : memref<3x8x8xf32, #tpu.memory_space<vmem>>, vector<1x8x8xf32>
    %200 = vector.shape_cast %199 : vector<1x8x8xf32> to vector<8x8xf32>
    %cst_155 = arith.constant dense<0.000000e+00> : vector<16x8xf32>
    %201 = tpu.matmul %198, %200, %cst_155 {dimension_numbers = #tpu.dot_dimension_numbers<[1], [0], [0], [1], [0, 0, 1, 1], [], []>} : vector<16x8xf32>, vector<8x8xf32>, vector<16x8xf32> -> vector<16x8xf32>
    %202 = arith.addf %197, %201 : vector<16x8xf32>
    %c2_156 = arith.constant 2 : index
    %c0_157 = arith.constant 0 : index
    %c0_158 = arith.constant 0 : index
    %203 = vector.load %arg6[%c2_156, %c0_157, %c0_158] : memref<3x8x8xf32, #tpu.memory_space<vmem>>, vector<1x8x8xf32>
    %204 = vector.shape_cast %203 : vector<1x8x8xf32> to vector<8x8xf32>
    %cst_159 = arith.constant dense<0.000000e+00> : vector<16x8xf32>
    %205 = tpu.matmul %194, %204, %cst_159 {dimension_numbers = #tpu.dot_dimension_numbers<[1], [0], [0], [1], [0, 0, 1, 1], [], []>} : vector<16x8xf32>, vector<8x8xf32>, vector<16x8xf32> -> vector<16x8xf32>
    %206 = arith.addf %202, %205 : vector<16x8xf32>
    %c3_160 = arith.constant 3 : index
    %c0_161 = arith.constant 0 : index
    %207 = vector.load %arg7[%c3_160, %c0_161] : memref<8x8xf32, #tpu.memory_space<vmem>>, vector<1x8xf32>
    %208 = vector.broadcast %207 : vector<1x8xf32> to vector<16x8xf32>
    %209 = arith.addf %206, %208 : vector<16x8xf32>
    %c4_162 = arith.constant 4 : index
    %c0_163 = arith.constant 0 : index
    %210 = vector.load %arg7[%c4_162, %c0_163] : memref<8x8xf32, #tpu.memory_space<vmem>>, vector<1x8xf32>
    %c5_164 = arith.constant 5 : index
    %c0_165 = arith.constant 0 : index
    %211 = vector.load %arg7[%c5_164, %c0_165] : memref<8x8xf32, #tpu.memory_space<vmem>>, vector<1x8xf32>
    %cst_166 = arith.constant dense<0.000000e+00> : vector<8xf32>
    %212 = vector.multi_reduction <add>, %209, %cst_166 [0] : vector<16x8xf32> to vector<8xf32>
    %213 = vector.shape_cast %212 : vector<8xf32> to vector<1x8xf32>
    %214 = arith.mulf %209, %209 : vector<16x8xf32>
    %cst_167 = arith.constant dense<0.000000e+00> : vector<8xf32>
    %215 = vector.multi_reduction <add>, %214, %cst_167 [0] : vector<16x8xf32> to vector<8xf32>
    %216 = vector.shape_cast %215 : vector<8xf32> to vector<1x8xf32>
    %cst_168 = arith.constant 6.250000e-02 : f32
    %217 = vector.broadcast %cst_168 : f32 to vector<1x8xf32>
    %218 = arith.mulf %213, %217 : vector<1x8xf32>
    %cst_169 = arith.constant 6.250000e-02 : f32
    %219 = vector.broadcast %cst_169 : f32 to vector<1x8xf32>
    %220 = arith.mulf %216, %219 : vector<1x8xf32>
    %221 = arith.mulf %218, %218 : vector<1x8xf32>
    %222 = arith.subf %220, %221 : vector<1x8xf32>
    %cst_170 = arith.constant 9.99999974E-6 : f32
    %223 = vector.broadcast %cst_170 : f32 to vector<1x8xf32>
    %224 = arith.addf %222, %223 : vector<1x8xf32>
    %225 = math.rsqrt %224 : vector<1x8xf32>
    %226 = arith.mulf %210, %225 : vector<1x8xf32>
    %227 = arith.mulf %218, %226 : vector<1x8xf32>
    %228 = arith.subf %211, %227 : vector<1x8xf32>
    %229 = vector.broadcast %226 : vector<1x8xf32> to vector<16x8xf32>
    %230 = arith.mulf %209, %229 : vector<16x8xf32>
    %231 = vector.broadcast %228 : vector<1x8xf32> to vector<16x8xf32>
    %232 = arith.addf %230, %231 : vector<16x8xf32>
    %c0_171 = arith.constant 0 : index
    %c0_172 = arith.constant 0 : index
    %233 = vector.load %arg8[%c0_171, %c0_172] : memref<4x8xf32, #tpu.memory_space<vmem>>, vector<4x8xf32>
    %cst_173 = arith.constant dense<0.000000e+00> : vector<16x8xf32>
    %234 = tpu.matmul %156, %233, %cst_173 {dimension_numbers = #tpu.dot_dimension_numbers<[1], [0], [0], [1], [0, 0, 1, 1], [], []>} : vector<16x4xf32>, vector<4x8xf32>, vector<16x8xf32> -> vector<16x8xf32>
    %c6_174 = arith.constant 6 : index
    %c0_175 = arith.constant 0 : index
    %235 = vector.load %arg7[%c6_174, %c0_175] : memref<8x8xf32, #tpu.memory_space<vmem>>, vector<1x8xf32>
    %236 = vector.broadcast %235 : vector<1x8xf32> to vector<16x8xf32>
    %237 = arith.addf %234, %236 : vector<16x8xf32>
    %238 = arith.addf %232, %237 : vector<16x8xf32>
    %cst_176 = arith.constant 0.000000e+00 : f32
    %239 = vector.broadcast %cst_176 : f32 to vector<16x8xf32>
    %240 = arith.maximumf %238, %239 : vector<16x8xf32>
    %241 = vector.shape_cast %240 : vector<16x8xf32> to vector<2x8x8xf32>
    %c0_177 = arith.constant 0 : index
    %c0_178 = arith.constant 0 : index
    %c0_179 = arith.constant 0 : index
    %242 = vector.load %arg17[%c0_177, %c0_178, %c0_179] : memref<2x8x8xf32, #tpu.memory_space<vmem>>, vector<2x8x8xf32>
    tpu.vector_store %arg17[%c0_177, %c0_178, %c0_179], %241 {strides = array<i32>} : memref<2x8x8xf32, #tpu.memory_space<vmem>>, vector<2x8x8xf32>,
    %cst_180 = arith.constant 0.000000e+00 : f32
    %243 = vector.broadcast %cst_180 : f32 to vector<2x1x8xf32>
    %c0_181 = arith.constant 0 : index
    %c0_182 = arith.constant 0 : index
    %c0_183 = arith.constant 0 : index
    %244 = vector.load %arg24[%c0_181, %c0_182, %c0_183] : memref<2x10x8xf32, #tpu.memory_space<vmem>>, vector<2x1x8xf32>
    tpu.vector_store %arg24[%c0_181, %c0_182, %c0_183], %243 {strides = array<i32>} : memref<2x10x8xf32, #tpu.memory_space<vmem>>, vector<2x1x8xf32>,
    %cst_184 = arith.constant 0.000000e+00 : f32
    %245 = vector.broadcast %cst_184 : f32 to vector<2x1x8xf32>
    %c0_185 = arith.constant 0 : index
    %c9_186 = arith.constant 9 : index
    %c0_187 = arith.constant 0 : index
    %246 = vector.load %arg24[%c0_185, %c9_186, %c0_187] : memref<2x10x8xf32, #tpu.memory_space<vmem>>, vector<2x1x8xf32>
    tpu.vector_store %arg24[%c0_185, %c9_186, %c0_187], %245 {strides = array<i32>} : memref<2x10x8xf32, #tpu.memory_space<vmem>>, vector<2x1x8xf32>,
    %c0_188 = arith.constant 0 : index
    %c1_189 = arith.constant 1 : index
    %c0_190 = arith.constant 0 : index
    %247 = vector.load %arg24[%c0_188, %c1_189, %c0_190] : memref<2x10x8xf32, #tpu.memory_space<vmem>>, vector<2x8x8xf32>
    tpu.vector_store %arg24[%c0_188, %c1_189, %c0_190], %241 {strides = array<i32>} : memref<2x10x8xf32, #tpu.memory_space<vmem>>, vector<2x8x8xf32>,
    %c0_191 = arith.constant 0 : index
    %c0_192 = arith.constant 0 : index
    %c0_193 = arith.constant 0 : index
    %248 = vector.load %arg24[%c0_191, %c0_192, %c0_193] : memref<2x10x8xf32, #tpu.memory_space<vmem>>, vector<2x8x8xf32>
    %249 = vector.shape_cast %248 : vector<2x8x8xf32> to vector<16x8xf32>
    %c0_194 = arith.constant 0 : index
    %c2_195 = arith.constant 2 : index
    %c0_196 = arith.constant 0 : index
    %250 = vector.load %arg24[%c0_194, %c2_195, %c0_196] : memref<2x10x8xf32, #tpu.memory_space<vmem>>, vector<2x8x8xf32>
    %251 = vector.shape_cast %250 : vector<2x8x8xf32> to vector<16x8xf32>
    %c0_197 = arith.constant 0 : index
    %c0_198 = arith.constant 0 : index
    %c0_199 = arith.constant 0 : index
    %252 = vector.load %arg9[%c0_197, %c0_198, %c0_199] : memref<3x8x8xf32, #tpu.memory_space<vmem>>, vector<1x8x8xf32>
    %253 = vector.shape_cast %252 : vector<1x8x8xf32> to vector<8x8xf32>
    %cst_200 = arith.constant dense<0.000000e+00> : vector<16x8xf32>
    %254 = tpu.matmul %249, %253, %cst_200 {dimension_numbers = #tpu.dot_dimension_numbers<[1], [0], [0], [1], [0, 0, 1, 1], [], []>} : vector<16x8xf32>, vector<8x8xf32>, vector<16x8xf32> -> vector<16x8xf32>
    %255 = vector.shape_cast %241 : vector<2x8x8xf32> to vector<16x8xf32>
    %c1_201 = arith.constant 1 : index
    %c0_202 = arith.constant 0 : index
    %c0_203 = arith.constant 0 : index
    %256 = vector.load %arg9[%c1_201, %c0_202, %c0_203] : memref<3x8x8xf32, #tpu.memory_space<vmem>>, vector<1x8x8xf32>
    %257 = vector.shape_cast %256 : vector<1x8x8xf32> to vector<8x8xf32>
    %cst_204 = arith.constant dense<0.000000e+00> : vector<16x8xf32>
    %258 = tpu.matmul %255, %257, %cst_204 {dimension_numbers = #tpu.dot_dimension_numbers<[1], [0], [0], [1], [0, 0, 1, 1], [], []>} : vector<16x8xf32>, vector<8x8xf32>, vector<16x8xf32> -> vector<16x8xf32>
    %259 = arith.addf %254, %258 : vector<16x8xf32>
    %c2_205 = arith.constant 2 : index
    %c0_206 = arith.constant 0 : index
    %c0_207 = arith.constant 0 : index
    %260 = vector.load %arg9[%c2_205, %c0_206, %c0_207] : memref<3x8x8xf32, #tpu.memory_space<vmem>>, vector<1x8x8xf32>
    %261 = vector.shape_cast %260 : vector<1x8x8xf32> to vector<8x8xf32>
    %cst_208 = arith.constant dense<0.000000e+00> : vector<16x8xf32>
    %262 = tpu.matmul %251, %261, %cst_208 {dimension_numbers = #tpu.dot_dimension_numbers<[1], [0], [0], [1], [0, 0, 1, 1], [], []>} : vector<16x8xf32>, vector<8x8xf32>, vector<16x8xf32> -> vector<16x8xf32>
    %263 = arith.addf %259, %262 : vector<16x8xf32>
    %264 = vector.shape_cast %263 : vector<16x8xf32> to vector<2x8x8xf32>
    %265 = tpu.iota {dimensions = array<i32: 0>} : vector<4x8xi32>
    %266 = tpu.iota {dimensions = array<i32: 1>} : vector<4x8xi32>
    %c2_i32_209 = arith.constant 2 : i32
    %267 = vector.broadcast %c2_i32_209 : i32 to vector<4x8xi32>
    %268 = arith.muli %267, %265 : vector<4x8xi32>
    %269 = arith.cmpi eq, %266, %268 : vector<4x8xi32>
    %cst_210 = arith.constant 1.000000e+00 : f32
    %cst_211 = arith.constant 0.000000e+00 : f32
    %270 = vector.broadcast %cst_210 : f32 to vector<4x8xf32>
    %271 = vector.broadcast %cst_211 : f32 to vector<4x8xf32>
    %272 = arith.select %269, %270, %271 : vector<4x8xi1>, vector<4x8xf32>
    %273 = vector.shape_cast %272 : vector<4x8xf32> to vector<1x4x8xf32>
    %274 = vector.shape_cast %273 : vector<1x4x8xf32> to vector<1x4x8xf32>
    %275 = vector.broadcast %274 : vector<1x4x8xf32> to vector<2x4x8xf32>
    %cst_212 = arith.constant dense<0.000000e+00> : vector<2x4x8xf32>
    %276 = tpu.matmul %275, %264, %cst_212 {dimension_numbers = #tpu.dot_dimension_numbers<[2], [1], [1], [2], [0, 0, 0, 1, 1, 2], [0], [0]>, precision = #tpu.contract_precision<fp32>} : vector<2x4x8xf32>, vector<2x8x8xf32>, vector<2x4x8xf32> -> vector<2x4x8xf32>
    %277 = vector.shape_cast %276 : vector<2x4x8xf32> to vector<8x8xf32>
    %278 = tpu.iota {dimensions = array<i32: 0>} : vector<4x8xi32>
    %279 = tpu.iota {dimensions = array<i32: 1>} : vector<4x8xi32>
    %c2_i32_213 = arith.constant 2 : i32
    %280 = vector.broadcast %c2_i32_213 : i32 to vector<4x8xi32>
    %281 = arith.muli %280, %278 : vector<4x8xi32>
    %282 = arith.cmpi eq, %279, %281 : vector<4x8xi32>
    %cst_214 = arith.constant 1.000000e+00 : f32
    %cst_215 = arith.constant 0.000000e+00 : f32
    %283 = vector.broadcast %cst_214 : f32 to vector<4x8xf32>
    %284 = vector.broadcast %cst_215 : f32 to vector<4x8xf32>
    %285 = arith.select %282, %283, %284 : vector<4x8xi1>, vector<4x8xf32>
    %286 = vector.shape_cast %285 : vector<4x8xf32> to vector<1x4x8xf32>
    %287 = vector.shape_cast %286 : vector<1x4x8xf32> to vector<1x4x8xf32>
    %288 = vector.broadcast %287 : vector<1x4x8xf32> to vector<2x4x8xf32>
    %cst_216 = arith.constant dense<0.000000e+00> : vector<2x4x8xf32>
    %289 = tpu.matmul %288, %241, %cst_216 {dimension_numbers = #tpu.dot_dimension_numbers<[2], [1], [1], [2], [0, 0, 0, 1, 1, 2], [0], [0]>, precision = #tpu.contract_precision<fp32>} : vector<2x4x8xf32>, vector<2x8x8xf32>, vector<2x4x8xf32> -> vector<2x4x8xf32>
    %290 = vector.shape_cast %289 : vector<2x4x8xf32> to vector<8x8xf32>
    %c0_217 = arith.constant 0 : index
    %c0_218 = arith.constant 0 : index
    %291 = vector.load %arg11[%c0_217, %c0_218] : memref<8x8xf32, #tpu.memory_space<vmem>>, vector<1x8xf32>
    %292 = vector.broadcast %291 : vector<1x8xf32> to vector<8x8xf32>
    %293 = arith.addf %277, %292 : vector<8x8xf32>
    %c1_219 = arith.constant 1 : index
    %c0_220 = arith.constant 0 : index
    %294 = vector.load %arg11[%c1_219, %c0_220] : memref<8x8xf32, #tpu.memory_space<vmem>>, vector<1x8xf32>
    %c2_221 = arith.constant 2 : index
    %c0_222 = arith.constant 0 : index
    %295 = vector.load %arg11[%c2_221, %c0_222] : memref<8x8xf32, #tpu.memory_space<vmem>>, vector<1x8xf32>
    %cst_223 = arith.constant dense<0.000000e+00> : vector<8xf32>
    %296 = vector.multi_reduction <add>, %293, %cst_223 [0] : vector<8x8xf32> to vector<8xf32>
    %297 = vector.shape_cast %296 : vector<8xf32> to vector<1x8xf32>
    %298 = arith.mulf %293, %293 : vector<8x8xf32>
    %cst_224 = arith.constant dense<0.000000e+00> : vector<8xf32>
    %299 = vector.multi_reduction <add>, %298, %cst_224 [0] : vector<8x8xf32> to vector<8xf32>
    %300 = vector.shape_cast %299 : vector<8xf32> to vector<1x8xf32>
    %cst_225 = arith.constant 1.250000e-01 : f32
    %301 = vector.broadcast %cst_225 : f32 to vector<1x8xf32>
    %302 = arith.mulf %297, %301 : vector<1x8xf32>
    %cst_226 = arith.constant 1.250000e-01 : f32
    %303 = vector.broadcast %cst_226 : f32 to vector<1x8xf32>
    %304 = arith.mulf %300, %303 : vector<1x8xf32>
    %305 = arith.mulf %302, %302 : vector<1x8xf32>
    %306 = arith.subf %304, %305 : vector<1x8xf32>
    %cst_227 = arith.constant 9.99999974E-6 : f32
    %307 = vector.broadcast %cst_227 : f32 to vector<1x8xf32>
    %308 = arith.addf %306, %307 : vector<1x8xf32>
    %309 = math.rsqrt %308 : vector<1x8xf32>
    %310 = arith.mulf %294, %309 : vector<1x8xf32>
    %311 = arith.mulf %302, %310 : vector<1x8xf32>
    %312 = arith.subf %295, %311 : vector<1x8xf32>
    %313 = vector.broadcast %310 : vector<1x8xf32> to vector<8x8xf32>
    %314 = arith.mulf %293, %313 : vector<8x8xf32>
    %315 = vector.broadcast %312 : vector<1x8xf32> to vector<8x8xf32>
    %316 = arith.addf %314, %315 : vector<8x8xf32>
    %cst_228 = arith.constant 0.000000e+00 : f32
    %317 = vector.broadcast %cst_228 : f32 to vector<8x8xf32>
    %318 = arith.maximumf %316, %317 : vector<8x8xf32>
    %319 = vector.shape_cast %318 : vector<8x8xf32> to vector<2x4x8xf32>
    %cst_229 = arith.constant 0.000000e+00 : f32
    %320 = vector.broadcast %cst_229 : f32 to vector<2x1x8xf32>
    %c0_230 = arith.constant 0 : index
    %c0_231 = arith.constant 0 : index
    %c0_232 = arith.constant 0 : index
    %321 = vector.load %arg25[%c0_230, %c0_231, %c0_232] : memref<2x6x8xf32, #tpu.memory_space<vmem>>, vector<2x1x8xf32>
    tpu.vector_store %arg25[%c0_230, %c0_231, %c0_232], %320 {strides = array<i32>} : memref<2x6x8xf32, #tpu.memory_space<vmem>>, vector<2x1x8xf32>,
    %cst_233 = arith.constant 0.000000e+00 : f32
    %322 = vector.broadcast %cst_233 : f32 to vector<2x1x8xf32>
    %c0_234 = arith.constant 0 : index
    %c5_235 = arith.constant 5 : index
    %c0_236 = arith.constant 0 : index
    %323 = vector.load %arg25[%c0_234, %c5_235, %c0_236] : memref<2x6x8xf32, #tpu.memory_space<vmem>>, vector<2x1x8xf32>
    tpu.vector_store %arg25[%c0_234, %c5_235, %c0_236], %322 {strides = array<i32>} : memref<2x6x8xf32, #tpu.memory_space<vmem>>, vector<2x1x8xf32>,
    %c0_237 = arith.constant 0 : index
    %c1_238 = arith.constant 1 : index
    %c0_239 = arith.constant 0 : index
    %324 = vector.load %arg25[%c0_237, %c1_238, %c0_239] : memref<2x6x8xf32, #tpu.memory_space<vmem>>, vector<2x4x8xf32>
    tpu.vector_store %arg25[%c0_237, %c1_238, %c0_239], %319 {strides = array<i32>} : memref<2x6x8xf32, #tpu.memory_space<vmem>>, vector<2x4x8xf32>,
    %c0_240 = arith.constant 0 : index
    %c0_241 = arith.constant 0 : index
    %c0_242 = arith.constant 0 : index
    %325 = vector.load %arg25[%c0_240, %c0_241, %c0_242] : memref<2x6x8xf32, #tpu.memory_space<vmem>>, vector<2x4x8xf32>
    %326 = vector.shape_cast %325 : vector<2x4x8xf32> to vector<8x8xf32>
    %c0_243 = arith.constant 0 : index
    %c2_244 = arith.constant 2 : index
    %c0_245 = arith.constant 0 : index
    %327 = vector.load %arg25[%c0_243, %c2_244, %c0_245] : memref<2x6x8xf32, #tpu.memory_space<vmem>>, vector<2x4x8xf32>
    %328 = vector.shape_cast %327 : vector<2x4x8xf32> to vector<8x8xf32>
    %c0_246 = arith.constant 0 : index
    %c0_247 = arith.constant 0 : index
    %c0_248 = arith.constant 0 : index
    %329 = vector.load %arg10[%c0_246, %c0_247, %c0_248] : memref<3x8x8xf32, #tpu.memory_space<vmem>>, vector<1x8x8xf32>
    %330 = vector.shape_cast %329 : vector<1x8x8xf32> to vector<8x8xf32>
    %cst_249 = arith.constant dense<0.000000e+00> : vector<8x8xf32>
    %331 = tpu.matmul %326, %330, %cst_249 {dimension_numbers = #tpu.dot_dimension_numbers<[1], [0], [0], [1], [0, 0, 1, 1], [], []>} : vector<8x8xf32>, vector<8x8xf32>, vector<8x8xf32> -> vector<8x8xf32>
    %332 = vector.shape_cast %319 : vector<2x4x8xf32> to vector<8x8xf32>
    %c1_250 = arith.constant 1 : index
    %c0_251 = arith.constant 0 : index
    %c0_252 = arith.constant 0 : index
    %333 = vector.load %arg10[%c1_250, %c0_251, %c0_252] : memref<3x8x8xf32, #tpu.memory_space<vmem>>, vector<1x8x8xf32>
    %334 = vector.shape_cast %333 : vector<1x8x8xf32> to vector<8x8xf32>
    %cst_253 = arith.constant dense<0.000000e+00> : vector<8x8xf32>
    %335 = tpu.matmul %332, %334, %cst_253 {dimension_numbers = #tpu.dot_dimension_numbers<[1], [0], [0], [1], [0, 0, 1, 1], [], []>} : vector<8x8xf32>, vector<8x8xf32>, vector<8x8xf32> -> vector<8x8xf32>
    %336 = arith.addf %331, %335 : vector<8x8xf32>
    %c2_254 = arith.constant 2 : index
    %c0_255 = arith.constant 0 : index
    %c0_256 = arith.constant 0 : index
    %337 = vector.load %arg10[%c2_254, %c0_255, %c0_256] : memref<3x8x8xf32, #tpu.memory_space<vmem>>, vector<1x8x8xf32>
    %338 = vector.shape_cast %337 : vector<1x8x8xf32> to vector<8x8xf32>
    %cst_257 = arith.constant dense<0.000000e+00> : vector<8x8xf32>
    %339 = tpu.matmul %328, %338, %cst_257 {dimension_numbers = #tpu.dot_dimension_numbers<[1], [0], [0], [1], [0, 0, 1, 1], [], []>} : vector<8x8xf32>, vector<8x8xf32>, vector<8x8xf32> -> vector<8x8xf32>
    %340 = arith.addf %336, %339 : vector<8x8xf32>
    %c3_258 = arith.constant 3 : index
    %c0_259 = arith.constant 0 : index
    %341 = vector.load %arg11[%c3_258, %c0_259] : memref<8x8xf32, #tpu.memory_space<vmem>>, vector<1x8xf32>
    %342 = vector.broadcast %341 : vector<1x8xf32> to vector<8x8xf32>
    %343 = arith.addf %340, %342 : vector<8x8xf32>
    %c4_260 = arith.constant 4 : index
    %c0_261 = arith.constant 0 : index
    %344 = vector.load %arg11[%c4_260, %c0_261] : memref<8x8xf32, #tpu.memory_space<vmem>>, vector<1x8xf32>
    %c5_262 = arith.constant 5 : index
    %c0_263 = arith.constant 0 : index
    %345 = vector.load %arg11[%c5_262, %c0_263] : memref<8x8xf32, #tpu.memory_space<vmem>>, vector<1x8xf32>
    %cst_264 = arith.constant dense<0.000000e+00> : vector<8xf32>
    %346 = vector.multi_reduction <add>, %343, %cst_264 [0] : vector<8x8xf32> to vector<8xf32>
    %347 = vector.shape_cast %346 : vector<8xf32> to vector<1x8xf32>
    %348 = arith.mulf %343, %343 : vector<8x8xf32>
    %cst_265 = arith.constant dense<0.000000e+00> : vector<8xf32>
    %349 = vector.multi_reduction <add>, %348, %cst_265 [0] : vector<8x8xf32> to vector<8xf32>
    %350 = vector.shape_cast %349 : vector<8xf32> to vector<1x8xf32>
    %cst_266 = arith.constant 1.250000e-01 : f32
    %351 = vector.broadcast %cst_266 : f32 to vector<1x8xf32>
    %352 = arith.mulf %347, %351 : vector<1x8xf32>
    %cst_267 = arith.constant 1.250000e-01 : f32
    %353 = vector.broadcast %cst_267 : f32 to vector<1x8xf32>
    %354 = arith.mulf %350, %353 : vector<1x8xf32>
    %355 = arith.mulf %352, %352 : vector<1x8xf32>
    %356 = arith.subf %354, %355 : vector<1x8xf32>
    %cst_268 = arith.constant 9.99999974E-6 : f32
    %357 = vector.broadcast %cst_268 : f32 to vector<1x8xf32>
    %358 = arith.addf %356, %357 : vector<1x8xf32>
    %359 = math.rsqrt %358 : vector<1x8xf32>
    %360 = arith.mulf %344, %359 : vector<1x8xf32>
    %361 = arith.mulf %352, %360 : vector<1x8xf32>
    %362 = arith.subf %345, %361 : vector<1x8xf32>
    %363 = vector.broadcast %360 : vector<1x8xf32> to vector<8x8xf32>
    %364 = arith.mulf %343, %363 : vector<8x8xf32>
    %365 = vector.broadcast %362 : vector<1x8xf32> to vector<8x8xf32>
    %366 = arith.addf %364, %365 : vector<8x8xf32>
    %c0_269 = arith.constant 0 : index
    %c0_270 = arith.constant 0 : index
    %367 = vector.load %arg12[%c0_269, %c0_270] : memref<8x8xf32, #tpu.memory_space<vmem>>, vector<8x8xf32>
    %cst_271 = arith.constant dense<0.000000e+00> : vector<8x8xf32>
    %368 = tpu.matmul %290, %367, %cst_271 {dimension_numbers = #tpu.dot_dimension_numbers<[1], [0], [0], [1], [0, 0, 1, 1], [], []>} : vector<8x8xf32>, vector<8x8xf32>, vector<8x8xf32> -> vector<8x8xf32>
    %c6_272 = arith.constant 6 : index
    %c0_273 = arith.constant 0 : index
    %369 = vector.load %arg11[%c6_272, %c0_273] : memref<8x8xf32, #tpu.memory_space<vmem>>, vector<1x8xf32>
    %370 = vector.broadcast %369 : vector<1x8xf32> to vector<8x8xf32>
    %371 = arith.addf %368, %370 : vector<8x8xf32>
    %372 = arith.addf %366, %371 : vector<8x8xf32>
    %cst_274 = arith.constant 0.000000e+00 : f32
    %373 = vector.broadcast %cst_274 : f32 to vector<8x8xf32>
    %374 = arith.maximumf %372, %373 : vector<8x8xf32>
    %375 = vector.shape_cast %374 : vector<8x8xf32> to vector<2x4x8xf32>
    %c0_275 = arith.constant 0 : index
    %c0_276 = arith.constant 0 : index
    %c0_277 = arith.constant 0 : index
    %376 = vector.load %arg18[%c0_275, %c0_276, %c0_277] : memref<2x4x8xf32, #tpu.memory_space<vmem>>, vector<2x4x8xf32>
    tpu.vector_store %arg18[%c0_275, %c0_276, %c0_277], %375 {strides = array<i32>} : memref<2x4x8xf32, #tpu.memory_space<vmem>>, vector<2x4x8xf32>,
    %cst_278 = arith.constant 0.000000e+00 : f32
    %377 = vector.broadcast %cst_278 : f32 to vector<2x1x8xf32>
    %c0_279 = arith.constant 0 : index
    %c0_280 = arith.constant 0 : index
    %c0_281 = arith.constant 0 : index
    %378 = vector.load %arg26[%c0_279, %c0_280, %c0_281] : memref<2x6x8xf32, #tpu.memory_space<vmem>>, vector<2x1x8xf32>
    tpu.vector_store %arg26[%c0_279, %c0_280, %c0_281], %377 {strides = array<i32>} : memref<2x6x8xf32, #tpu.memory_space<vmem>>, vector<2x1x8xf32>,
    %cst_282 = arith.constant 0.000000e+00 : f32
    %379 = vector.broadcast %cst_282 : f32 to vector<2x1x8xf32>
    %c0_283 = arith.constant 0 : index
    %c5_284 = arith.constant 5 : index
    %c0_285 = arith.constant 0 : index
    %380 = vector.load %arg26[%c0_283, %c5_284, %c0_285] : memref<2x6x8xf32, #tpu.memory_space<vmem>>, vector<2x1x8xf32>
    tpu.vector_store %arg26[%c0_283, %c5_284, %c0_285], %379 {strides = array<i32>} : memref<2x6x8xf32, #tpu.memory_space<vmem>>, vector<2x1x8xf32>,
    %c0_286 = arith.constant 0 : index
    %c1_287 = arith.constant 1 : index
    %c0_288 = arith.constant 0 : index
    %381 = vector.load %arg26[%c0_286, %c1_287, %c0_288] : memref<2x6x8xf32, #tpu.memory_space<vmem>>, vector<2x4x8xf32>
    tpu.vector_store %arg26[%c0_286, %c1_287, %c0_288], %375 {strides = array<i32>} : memref<2x6x8xf32, #tpu.memory_space<vmem>>, vector<2x4x8xf32>,
    %c0_289 = arith.constant 0 : index
    %c0_290 = arith.constant 0 : index
    %c0_291 = arith.constant 0 : index
    %382 = vector.load %arg26[%c0_289, %c0_290, %c0_291] : memref<2x6x8xf32, #tpu.memory_space<vmem>>, vector<2x4x8xf32>
    %383 = vector.shape_cast %382 : vector<2x4x8xf32> to vector<8x8xf32>
    %c0_292 = arith.constant 0 : index
    %c2_293 = arith.constant 2 : index
    %c0_294 = arith.constant 0 : index
    %384 = vector.load %arg26[%c0_292, %c2_293, %c0_294] : memref<2x6x8xf32, #tpu.memory_space<vmem>>, vector<2x4x8xf32>
    %385 = vector.shape_cast %384 : vector<2x4x8xf32> to vector<8x8xf32>
    %c0_295 = arith.constant 0 : index
    %c0_296 = arith.constant 0 : index
    %c0_297 = arith.constant 0 : index
    %386 = vector.load %arg13[%c0_295, %c0_296, %c0_297] : memref<3x8x8xf32, #tpu.memory_space<vmem>>, vector<1x8x8xf32>
    %387 = vector.shape_cast %386 : vector<1x8x8xf32> to vector<8x8xf32>
    %cst_298 = arith.constant dense<0.000000e+00> : vector<8x8xf32>
    %388 = tpu.matmul %383, %387, %cst_298 {dimension_numbers = #tpu.dot_dimension_numbers<[1], [0], [0], [1], [0, 0, 1, 1], [], []>} : vector<8x8xf32>, vector<8x8xf32>, vector<8x8xf32> -> vector<8x8xf32>
    %389 = vector.shape_cast %375 : vector<2x4x8xf32> to vector<8x8xf32>
    %c1_299 = arith.constant 1 : index
    %c0_300 = arith.constant 0 : index
    %c0_301 = arith.constant 0 : index
    %390 = vector.load %arg13[%c1_299, %c0_300, %c0_301] : memref<3x8x8xf32, #tpu.memory_space<vmem>>, vector<1x8x8xf32>
    %391 = vector.shape_cast %390 : vector<1x8x8xf32> to vector<8x8xf32>
    %cst_302 = arith.constant dense<0.000000e+00> : vector<8x8xf32>
    %392 = tpu.matmul %389, %391, %cst_302 {dimension_numbers = #tpu.dot_dimension_numbers<[1], [0], [0], [1], [0, 0, 1, 1], [], []>} : vector<8x8xf32>, vector<8x8xf32>, vector<8x8xf32> -> vector<8x8xf32>
    %393 = arith.addf %388, %392 : vector<8x8xf32>
    %c2_303 = arith.constant 2 : index
    %c0_304 = arith.constant 0 : index
    %c0_305 = arith.constant 0 : index
    %394 = vector.load %arg13[%c2_303, %c0_304, %c0_305] : memref<3x8x8xf32, #tpu.memory_space<vmem>>, vector<1x8x8xf32>
    %395 = vector.shape_cast %394 : vector<1x8x8xf32> to vector<8x8xf32>
    %cst_306 = arith.constant dense<0.000000e+00> : vector<8x8xf32>
    %396 = tpu.matmul %385, %395, %cst_306 {dimension_numbers = #tpu.dot_dimension_numbers<[1], [0], [0], [1], [0, 0, 1, 1], [], []>} : vector<8x8xf32>, vector<8x8xf32>, vector<8x8xf32> -> vector<8x8xf32>
    %397 = arith.addf %393, %396 : vector<8x8xf32>
    %398 = vector.shape_cast %375 : vector<2x4x8xf32> to vector<8x8xf32>
    %c0_307 = arith.constant 0 : index
    %c0_308 = arith.constant 0 : index
    %399 = vector.load %arg15[%c0_307, %c0_308] : memref<8x8xf32, #tpu.memory_space<vmem>>, vector<1x8xf32>
    %400 = vector.broadcast %399 : vector<1x8xf32> to vector<8x8xf32>
    %401 = arith.addf %397, %400 : vector<8x8xf32>
    %c1_309 = arith.constant 1 : index
    %c0_310 = arith.constant 0 : index
    %402 = vector.load %arg15[%c1_309, %c0_310] : memref<8x8xf32, #tpu.memory_space<vmem>>, vector<1x8xf32>
    %c2_311 = arith.constant 2 : index
    %c0_312 = arith.constant 0 : index
    %403 = vector.load %arg15[%c2_311, %c0_312] : memref<8x8xf32, #tpu.memory_space<vmem>>, vector<1x8xf32>
    %cst_313 = arith.constant dense<0.000000e+00> : vector<8xf32>
    %404 = vector.multi_reduction <add>, %401, %cst_313 [0] : vector<8x8xf32> to vector<8xf32>
    %405 = vector.shape_cast %404 : vector<8xf32> to vector<1x8xf32>
    %406 = arith.mulf %401, %401 : vector<8x8xf32>
    %cst_314 = arith.constant dense<0.000000e+00> : vector<8xf32>
    %407 = vector.multi_reduction <add>, %406, %cst_314 [0] : vector<8x8xf32> to vector<8xf32>
    %408 = vector.shape_cast %407 : vector<8xf32> to vector<1x8xf32>
    %cst_315 = arith.constant 1.250000e-01 : f32
    %409 = vector.broadcast %cst_315 : f32 to vector<1x8xf32>
    %410 = arith.mulf %405, %409 : vector<1x8xf32>
    %cst_316 = arith.constant 1.250000e-01 : f32
    %411 = vector.broadcast %cst_316 : f32 to vector<1x8xf32>
    %412 = arith.mulf %408, %411 : vector<1x8xf32>
    %413 = arith.mulf %410, %410 : vector<1x8xf32>
    %414 = arith.subf %412, %413 : vector<1x8xf32>
    %cst_317 = arith.constant 9.99999974E-6 : f32
    %415 = vector.broadcast %cst_317 : f32 to vector<1x8xf32>
    %416 = arith.addf %414, %415 : vector<1x8xf32>
    %417 = math.rsqrt %416 : vector<1x8xf32>
    %418 = arith.mulf %402, %417 : vector<1x8xf32>
    %419 = arith.mulf %410, %418 : vector<1x8xf32>
    %420 = arith.subf %403, %419 : vector<1x8xf32>
    %421 = vector.broadcast %418 : vector<1x8xf32> to vector<8x8xf32>
    %422 = arith.mulf %401, %421 : vector<8x8xf32>
    %423 = vector.broadcast %420 : vector<1x8xf32> to vector<8x8xf32>
    %424 = arith.addf %422, %423 : vector<8x8xf32>
    %cst_318 = arith.constant 0.000000e+00 : f32
    %425 = vector.broadcast %cst_318 : f32 to vector<8x8xf32>
    %426 = arith.maximumf %424, %425 : vector<8x8xf32>
    %427 = vector.shape_cast %426 : vector<8x8xf32> to vector<2x4x8xf32>
    %cst_319 = arith.constant 0.000000e+00 : f32
    %428 = vector.broadcast %cst_319 : f32 to vector<2x1x8xf32>
    %c0_320 = arith.constant 0 : index
    %c0_321 = arith.constant 0 : index
    %c0_322 = arith.constant 0 : index
    %429 = vector.load %arg27[%c0_320, %c0_321, %c0_322] : memref<2x6x8xf32, #tpu.memory_space<vmem>>, vector<2x1x8xf32>
    tpu.vector_store %arg27[%c0_320, %c0_321, %c0_322], %428 {strides = array<i32>} : memref<2x6x8xf32, #tpu.memory_space<vmem>>, vector<2x1x8xf32>,
    %cst_323 = arith.constant 0.000000e+00 : f32
    %430 = vector.broadcast %cst_323 : f32 to vector<2x1x8xf32>
    %c0_324 = arith.constant 0 : index
    %c5_325 = arith.constant 5 : index
    %c0_326 = arith.constant 0 : index
    %431 = vector.load %arg27[%c0_324, %c5_325, %c0_326] : memref<2x6x8xf32, #tpu.memory_space<vmem>>, vector<2x1x8xf32>
    tpu.vector_store %arg27[%c0_324, %c5_325, %c0_326], %430 {strides = array<i32>} : memref<2x6x8xf32, #tpu.memory_space<vmem>>, vector<2x1x8xf32>,
    %c0_327 = arith.constant 0 : index
    %c1_328 = arith.constant 1 : index
    %c0_329 = arith.constant 0 : index
    %432 = vector.load %arg27[%c0_327, %c1_328, %c0_329] : memref<2x6x8xf32, #tpu.memory_space<vmem>>, vector<2x4x8xf32>
    tpu.vector_store %arg27[%c0_327, %c1_328, %c0_329], %427 {strides = array<i32>} : memref<2x6x8xf32, #tpu.memory_space<vmem>>, vector<2x4x8xf32>,
    %c0_330 = arith.constant 0 : index
    %c0_331 = arith.constant 0 : index
    %c0_332 = arith.constant 0 : index
    %433 = vector.load %arg27[%c0_330, %c0_331, %c0_332] : memref<2x6x8xf32, #tpu.memory_space<vmem>>, vector<2x4x8xf32>
    %434 = vector.shape_cast %433 : vector<2x4x8xf32> to vector<8x8xf32>
    %c0_333 = arith.constant 0 : index
    %c2_334 = arith.constant 2 : index
    %c0_335 = arith.constant 0 : index
    %435 = vector.load %arg27[%c0_333, %c2_334, %c0_335] : memref<2x6x8xf32, #tpu.memory_space<vmem>>, vector<2x4x8xf32>
    %436 = vector.shape_cast %435 : vector<2x4x8xf32> to vector<8x8xf32>
    %c0_336 = arith.constant 0 : index
    %c0_337 = arith.constant 0 : index
    %c0_338 = arith.constant 0 : index
    %437 = vector.load %arg14[%c0_336, %c0_337, %c0_338] : memref<3x8x8xf32, #tpu.memory_space<vmem>>, vector<1x8x8xf32>
    %438 = vector.shape_cast %437 : vector<1x8x8xf32> to vector<8x8xf32>
    %cst_339 = arith.constant dense<0.000000e+00> : vector<8x8xf32>
    %439 = tpu.matmul %434, %438, %cst_339 {dimension_numbers = #tpu.dot_dimension_numbers<[1], [0], [0], [1], [0, 0, 1, 1], [], []>} : vector<8x8xf32>, vector<8x8xf32>, vector<8x8xf32> -> vector<8x8xf32>
    %440 = vector.shape_cast %427 : vector<2x4x8xf32> to vector<8x8xf32>
    %c1_340 = arith.constant 1 : index
    %c0_341 = arith.constant 0 : index
    %c0_342 = arith.constant 0 : index
    %441 = vector.load %arg14[%c1_340, %c0_341, %c0_342] : memref<3x8x8xf32, #tpu.memory_space<vmem>>, vector<1x8x8xf32>
    %442 = vector.shape_cast %441 : vector<1x8x8xf32> to vector<8x8xf32>
    %cst_343 = arith.constant dense<0.000000e+00> : vector<8x8xf32>
    %443 = tpu.matmul %440, %442, %cst_343 {dimension_numbers = #tpu.dot_dimension_numbers<[1], [0], [0], [1], [0, 0, 1, 1], [], []>} : vector<8x8xf32>, vector<8x8xf32>, vector<8x8xf32> -> vector<8x8xf32>
    %444 = arith.addf %439, %443 : vector<8x8xf32>
    %c2_344 = arith.constant 2 : index
    %c0_345 = arith.constant 0 : index
    %c0_346 = arith.constant 0 : index
    %445 = vector.load %arg14[%c2_344, %c0_345, %c0_346] : memref<3x8x8xf32, #tpu.memory_space<vmem>>, vector<1x8x8xf32>
    %446 = vector.shape_cast %445 : vector<1x8x8xf32> to vector<8x8xf32>
    %cst_347 = arith.constant dense<0.000000e+00> : vector<8x8xf32>
    %447 = tpu.matmul %436, %446, %cst_347 {dimension_numbers = #tpu.dot_dimension_numbers<[1], [0], [0], [1], [0, 0, 1, 1], [], []>} : vector<8x8xf32>, vector<8x8xf32>, vector<8x8xf32> -> vector<8x8xf32>
    %448 = arith.addf %444, %447 : vector<8x8xf32>
    %c3_348 = arith.constant 3 : index
    %c0_349 = arith.constant 0 : index
    %449 = vector.load %arg15[%c3_348, %c0_349] : memref<8x8xf32, #tpu.memory_space<vmem>>, vector<1x8xf32>
    %450 = vector.broadcast %449 : vector<1x8xf32> to vector<8x8xf32>
    %451 = arith.addf %448, %450 : vector<8x8xf32>
    %c4_350 = arith.constant 4 : index
    %c0_351 = arith.constant 0 : index
    %452 = vector.load %arg15[%c4_350, %c0_351] : memref<8x8xf32, #tpu.memory_space<vmem>>, vector<1x8xf32>
    %c5_352 = arith.constant 5 : index
    %c0_353 = arith.constant 0 : index
    %453 = vector.load %arg15[%c5_352, %c0_353] : memref<8x8xf32, #tpu.memory_space<vmem>>, vector<1x8xf32>
    %cst_354 = arith.constant dense<0.000000e+00> : vector<8xf32>
    %454 = vector.multi_reduction <add>, %451, %cst_354 [0] : vector<8x8xf32> to vector<8xf32>
    %455 = vector.shape_cast %454 : vector<8xf32> to vector<1x8xf32>
    %456 = arith.mulf %451, %451 : vector<8x8xf32>
    %cst_355 = arith.constant dense<0.000000e+00> : vector<8xf32>
    %457 = vector.multi_reduction <add>, %456, %cst_355 [0] : vector<8x8xf32> to vector<8xf32>
    %458 = vector.shape_cast %457 : vector<8xf32> to vector<1x8xf32>
    %cst_356 = arith.constant 1.250000e-01 : f32
    %459 = vector.broadcast %cst_356 : f32 to vector<1x8xf32>
    %460 = arith.mulf %455, %459 : vector<1x8xf32>
    %cst_357 = arith.constant 1.250000e-01 : f32
    %461 = vector.broadcast %cst_357 : f32 to vector<1x8xf32>
    %462 = arith.mulf %458, %461 : vector<1x8xf32>
    %463 = arith.mulf %460, %460 : vector<1x8xf32>
    %464 = arith.subf %462, %463 : vector<1x8xf32>
    %cst_358 = arith.constant 9.99999974E-6 : f32
    %465 = vector.broadcast %cst_358 : f32 to vector<1x8xf32>
    %466 = arith.addf %464, %465 : vector<1x8xf32>
    %467 = math.rsqrt %466 : vector<1x8xf32>
    %468 = arith.mulf %452, %467 : vector<1x8xf32>
    %469 = arith.mulf %460, %468 : vector<1x8xf32>
    %470 = arith.subf %453, %469 : vector<1x8xf32>
    %471 = vector.broadcast %468 : vector<1x8xf32> to vector<8x8xf32>
    %472 = arith.mulf %451, %471 : vector<8x8xf32>
    %473 = vector.broadcast %470 : vector<1x8xf32> to vector<8x8xf32>
    %474 = arith.addf %472, %473 : vector<8x8xf32>
    %475 = arith.addf %474, %398 : vector<8x8xf32>
    %cst_359 = arith.constant 0.000000e+00 : f32
    %476 = vector.broadcast %cst_359 : f32 to vector<8x8xf32>
    %477 = arith.maximumf %475, %476 : vector<8x8xf32>
    %478 = vector.shape_cast %477 : vector<8x8xf32> to vector<2x4x8xf32>
    %c0_360 = arith.constant 0 : index
    %c0_361 = arith.constant 0 : index
    %c0_362 = arith.constant 0 : index
    %479 = vector.load %arg19[%c0_360, %c0_361, %c0_362] : memref<2x4x8xf32, #tpu.memory_space<vmem>>, vector<2x4x8xf32>
    tpu.vector_store %arg19[%c0_360, %c0_361, %c0_362], %478 {strides = array<i32>} : memref<2x4x8xf32, #tpu.memory_space<vmem>>, vector<2x4x8xf32>,
    return
  }
}

</mosaic_0001>

<llo_original>
// kernel: _forward.1
$region0: #{_forward.1}
  #allocation0 [shape = 'u32[]', space=smem, size = 0x4, offset = 0x4, fixed_abs, tag = 'smem constant byte address 0x4 - core index']
  #allocation1 [shape = 'u32[144,128]{1,0:T(1,128)}', space=vmem, size = 0x12000, scoped, tag = 'internal scratch']
  #allocation2 [shape = 'f32[2,18,4]{2,1,0:T(8,128)}', space=vmem, size = 0x6000, scoped, tag = 'scratch operand']
  #allocation3 [shape = 'f32[2,10,4]{2,1,0:T(8,128)}', space=vmem, size = 0x4000, scoped, tag = 'scratch operand']
  #allocation4 [shape = 'f32[2,10,4]{2,1,0:T(8,128)}', space=vmem, size = 0x4000, scoped, tag = 'scratch operand']
  #allocation5 [shape = 'f32[2,10,8]{2,1,0:T(8,128)}', space=vmem, size = 0x4000, scoped, tag = 'scratch operand']
  #allocation6 [shape = 'f32[2,10,8]{2,1,0:T(8,128)}', space=vmem, size = 0x4000, scoped, tag = 'scratch operand']
  #allocation7 [shape = 'f32[2,6,8]{2,1,0:T(8,128)}', space=vmem, size = 0x2000, scoped, tag = 'scratch operand']
  #allocation8 [shape = 'f32[2,6,8]{2,1,0:T(8,128)}', space=vmem, size = 0x2000, scoped, tag = 'scratch operand']
  #allocation9 [shape = 'f32[2,6,8]{2,1,0:T(8,128)}', space=vmem, size = 0x2000, scoped, tag = 'scratch operand']
  %s0 = inlined_call_operand.vmem [shape: f32[2,16,4], index: 0, kind: input, shape index: {}]
  %s1 = inlined_call_operand.hbm [shape: f32[3,4,4], index: 1, kind: input, shape index: {}]
  %s2 = inlined_call_operand.hbm [shape: f32[3,4,4], index: 2, kind: input, shape index: {}]
  %s3 = inlined_call_operand.vmem [shape: f32[8,4], index: 3, kind: input, shape index: {}]
  %s4 = inlined_call_operand.hbm [shape: f32[4,4], index: 4, kind: input, shape index: {}]
  %s5 = inlined_call_operand.hbm [shape: f32[3,4,8], index: 5, kind: input, shape index: {}]
  %s6 = inlined_call_operand.vmem [shape: f32[3,8,8], index: 6, kind: input, shape index: {}]
  %s7 = inlined_call_operand.hbm [shape: f32[8,8], index: 7, kind: input, shape index: {}]
  %s8 = inlined_call_operand.hbm [shape: f32[4,8], index: 8, kind: input, shape index: {}]
  %s9 = inlined_call_operand.vmem [shape: f32[3,8,8], index: 9, kind: input, shape index: {}]
  %s10 = inlined_call_operand.vmem [shape: f32[3,8,8], index: 10, kind: input, shape index: {}]
  %s11 = inlined_call_operand.hbm [shape: f32[8,8], index: 11, kind: input, shape index: {}]
  %s12 = inlined_call_operand.hbm [shape: f32[8,8], index: 12, kind: input, shape index: {}]
  %s13 = inlined_call_operand.vmem [shape: f32[3,8,8], index: 13, kind: input, shape index: {}]
  %s14 = inlined_call_operand.hbm [shape: f32[3,8,8], index: 14, kind: input, shape index: {}]
  %s15 = inlined_call_operand.vmem [shape: f32[8,8], index: 15, kind: input, shape index: {}]
  %s16 = inlined_call_operand.vmem [shape: f32[2,8,4], index: 16, kind: output, shape index: {0}]
  %s17 = inlined_call_operand.vmem [shape: f32[2,8,8], index: 17, kind: output, shape index: {1}]
  %s18 = inlined_call_operand.hbm [shape: f32[2,4,8], index: 18, kind: output, shape index: {2}]
  %s19 = inlined_call_operand.vmem [shape: f32[2,4,8], index: 19, kind: output, shape index: {3}]
  %20 = xla_tuple %s16, %s17, %s18, %s19
  %s21 = sld [smem:[#allocation0]]
  $region134: #{_forward.1} parent=0
    _
  %s23 = ssub.s32 1, %s21
  %s24 = scalar_select 0, %s23, %s21
  $region1: #{_forward.1} parent=0
    #allocation10 [shape = 'u8[6144]{0}', space=vmem, size = 0x1800, scoped, tag = 'input window, operand 1, single buffered']
    #allocation11 [shape = 's32[1]{0}', space=sflag, size = 0x4, scoped, tag = 'scoped memory for _forward.1']
    #allocation12 [shape = 's32[1]{0}', space=sflag, size = 0x4, scoped, tag = 'scoped memory for _forward.1']
    #allocation13 [shape = 'u8[6144]{0}', space=vmem, size = 0x1800, scoped, tag = 'input window, operand 2, single buffered']
    #allocation14 [shape = 's32[1]{0}', space=sflag, size = 0x4, scoped, tag = 'scoped memory for _forward.1']
    #allocation15 [shape = 'u8[2048]{0}', space=vmem, size = 0x800, scoped, tag = 'input window, operand 4, single buffered']
    #allocation16 [shape = 'u8[6144]{0}', space=vmem, size = 0x1800, scoped, tag = 'input window, operand 5, single buffered']
    #allocation17 [shape = 's32[1]{0}', space=sflag, size = 0x4, scoped, tag = 'scoped memory for _forward.1']
    #allocation18 [shape = 'u8[4096]{0}', space=vmem, size = 0x1000, scoped, tag = 'input window, operand 7, single buffered']
    #allocation19 [shape = 'u8[2048]{0}', space=vmem, size = 0x800, scoped, tag = 'input window, operand 8, single buffered']
    #allocation20 [shape = 's32[1]{0}', space=sflag, size = 0x4, scoped, tag = 'scoped memory for _forward.1']
    #allocation21 [shape = 'u8[4096]{0}', space=vmem, size = 0x1000, scoped, tag = 'input window, operand 11, single buffered']
    #allocation22 [shape = 'u8[4096]{0}', space=vmem, size = 0x1000, scoped, tag = 'input window, operand 12, single buffered']
    #allocation23 [shape = 's32[1]{0}', space=sflag, size = 0x4, scoped, tag = 'scoped memory for _forward.1']
    #allocation24 [shape = 'u8[12288]{0}', space=vmem, size = 0x3000, scoped, tag = 'input window, operand 14, single buffered']
    #allocation25 [shape = 'u8[4096]{0}', space=vmem, size = 0x1000, scoped, tag = 'output window, operand 2, single buffered']
    %25 = vsyncpa [#allocation11], 0
    %26 = vsyncpa [#allocation14], 0
    %27 = vsyncpa [#allocation17], 0
    %28 = vsyncpa [#allocation20], 0
    %29 = vsyncpa [#allocation23], 0
    %30 = vsyncpa [#allocation12], 0
    // Predicated region
    $region2: #{_forward.1} parent=1 // pred_check
      _
    $region3: #{_forward.1} parent=1 // pred_check_branch
      %32 = sbr.rel (0) target = $region5
    $region4: #{_forward.1} parent=1 // pred_region
      _
    $region5: #{_forward.1} parent=1 // pred_fallthru
      _
    // Predicated region
    $region6: #{_forward.1} parent=1 // pred_check
      _
    $region7: #{_forward.1} parent=1 // pred_check_branch
      %34 = sbr.rel (0) target = $region9
    $region8: #{_forward.1} parent=1 // pred_region
      %s36 = ssub.s32 192, 192
      %37 = vsyncadd [#allocation11], %s36
      %s38 = sshll.u32 [#allocation10], 4
      %s39 = int_to_ptr.vmem [resolvable:$true] %s38
      %44 = dma.hbm_to_vmem [thread:$0]  %s1, 192, %s39, [#allocation11], 64, 64, 4
    $region9: #{_forward.1} parent=1 // pred_fallthru
      _
    // Predicated region
    $region10: #{_forward.1} parent=1 // pred_check
      _
    $region11: #{_forward.1} parent=1 // pred_check_branch
      %46 = sbr.rel (0) target = $region13
    $region12: #{_forward.1} parent=1 // pred_region
      %s48 = ssub.s32 192, 192
      %49 = vsyncadd [#allocation14], %s48
      %s50 = sshll.u32 [#allocation13], 4
      %s51 = int_to_ptr.vmem [resolvable:$true] %s50
      %56 = dma.hbm_to_vmem [thread:$0]  %s2, 192, %s51, [#allocation14], 64, 64, 4
    $region13: #{_forward.1} parent=1 // pred_fallthru
      _
    // Predicated region
    $region14: #{_forward.1} parent=1 // pred_check
      _
    $region15: #{_forward.1} parent=1 // pred_check_branch
      %58 = sbr.rel (0) target = $region17
    $region16: #{_forward.1} parent=1 // pred_region
      _
    $region17: #{_forward.1} parent=1 // pred_fallthru
      _
    // Predicated region
    $region18: #{_forward.1} parent=1 // pred_check
      _
    $region19: #{_forward.1} parent=1 // pred_check_branch
      %60 = sbr.rel (0) target = $region21
    $region20: #{_forward.1} parent=1 // pred_region
      %s62 = ssub.s32 64, 64
      %63 = vsyncadd [#allocation14], %s62
      %s65 = sshll.u32 [#allocation15], 4
      %s66 = int_to_ptr.vmem [resolvable:$true] %s65
      %68 = dma.hbm_to_vmem [thread:$0]  %s4, 64, %s66, [#allocation14]
    $region21: #{_forward.1} parent=1 // pred_fallthru
      _
    // Predicated region
    $region22: #{_forward.1} parent=1 // pred_check
      _
    $region23: #{_forward.1} parent=1 // pred_check_branch
      %70 = sbr.rel (0) target = $region25
    $region24: #{_forward.1} parent=1 // pred_region
      %s72 = ssub.s32 192, 192
      %73 = vsyncadd [#allocation17], %s72
      %s74 = sshll.u32 [#allocation16], 4
      %s75 = int_to_ptr.vmem [resolvable:$true] %s74
      %80 = dma.hbm_to_vmem [thread:$0]  %s5, 192, %s75, [#allocation17], 64, 64, 4
    $region25: #{_forward.1} parent=1 // pred_fallthru
      _
    // Predicated region
    $region26: #{_forward.1} parent=1 // pred_check
      _
    $region27: #{_forward.1} parent=1 // pred_check_branch
      %82 = sbr.rel (0) target = $region29
    $region28: #{_forward.1} parent=1 // pred_region
      _
    $region29: #{_forward.1} parent=1 // pred_fallthru
      _
    // Predicated region
    $region30: #{_forward.1} parent=1 // pred_check
      _
    $region31: #{_forward.1} parent=1 // pred_check_branch
      %84 = sbr.rel (0) target = $region33
    $region32: #{_forward.1} parent=1 // pred_region
      %s86 = ssub.s32 128, 128
      %87 = vsyncadd [#allocation17], %s86
      %s89 = sshll.u32 [#allocation18], 4
      %s90 = int_to_ptr.vmem [resolvable:$true] %s89
      %92 = dma.hbm_to_vmem [thread:$0]  %s7, 128, %s90, [#allocation17]
    $region33: #{_forward.1} parent=1 // pred_fallthru
      _
    // Predicated region
    $region34: #{_forward.1} parent=1 // pred_check
      _
    $region35: #{_forward.1} parent=1 // pred_check_branch
      %94 = sbr.rel (0) target = $region37
    $region36: #{_forward.1} parent=1 // pred_region
      %s96 = ssub.s32 64, 64
      %97 = vsyncadd [#allocation20], %s96
      %s99 = sshll.u32 [#allocation19], 4
      %s100 = int_to_ptr.vmem [resolvable:$true] %s99
      %102 = dma.hbm_to_vmem [thread:$0]  %s8, 64, %s100, [#allocation20]
    $region37: #{_forward.1} parent=1 // pred_fallthru
      _
    // Predicated region
    $region38: #{_forward.1} parent=1 // pred_check
      _
    $region39: #{_forward.1} parent=1 // pred_check_branch
      %104 = sbr.rel (0) target = $region41
    $region40: #{_forward.1} parent=1 // pred_region
      _
    $region41: #{_forward.1} parent=1 // pred_fallthru
      _
    // Predicated region
    $region42: #{_forward.1} parent=1 // pred_check
      _
    $region43: #{_forward.1} parent=1 // pred_check_branch
      %106 = sbr.rel (0) target = $region45
    $region44: #{_forward.1} parent=1 // pred_region
      _
    $region45: #{_forward.1} parent=1 // pred_fallthru
      _
    // Predicated region
    $region46: #{_forward.1} parent=1 // pred_check
      _
    $region47: #{_forward.1} parent=1 // pred_check_branch
      %108 = sbr.rel (0) target = $region49
    $region48: #{_forward.1} parent=1 // pred_region
      %s110 = ssub.s32 128, 128
      %111 = vsyncadd [#allocation20], %s110
      %s113 = sshll.u32 [#allocation21], 4
      %s114 = int_to_ptr.vmem [resolvable:$true] %s113
      %116 = dma.hbm_to_vmem [thread:$0]  %s11, 128, %s114, [#allocation20]
    $region49: #{_forward.1} parent=1 // pred_fallthru
      _
    // Predicated region
    $region50: #{_forward.1} parent=1 // pred_check
      _
    $region51: #{_forward.1} parent=1 // pred_check_branch
      %118 = sbr.rel (0) target = $region53
    $region52: #{_forward.1} parent=1 // pred_region
      %s120 = ssub.s32 128, 128
      %121 = vsyncadd [#allocation23], %s120
      %s123 = sshll.u32 [#allocation22], 4
      %s124 = int_to_ptr.vmem [resolvable:$true] %s123
      %126 = dma.hbm_to_vmem [thread:$0]  %s12, 128, %s124, [#allocation23]
    $region53: #{_forward.1} parent=1 // pred_fallthru
      _
    // Predicated region
    $region54: #{_forward.1} parent=1 // pred_check
      _
    $region55: #{_forward.1} parent=1 // pred_check_branch
      %128 = sbr.rel (0) target = $region57
    $region56: #{_forward.1} parent=1 // pred_region
      _
    $region57: #{_forward.1} parent=1 // pred_fallthru
      _
    // Predicated region
    $region58: #{_forward.1} parent=1 // pred_check
      _
    $region59: #{_forward.1} parent=1 // pred_check_branch
      %130 = sbr.rel (0) target = $region61
    $region60: #{_forward.1} parent=1 // pred_region
      %s132 = ssub.s32 384, 384
      %133 = vsyncadd [#allocation23], %s132
      %s134 = sshll.u32 [#allocation24], 4
      %s135 = int_to_ptr.vmem [resolvable:$true] %s134
      %140 = dma.hbm_to_vmem [thread:$0]  %s14, 384, %s135, [#allocation23], 128, 128, 8
    $region61: #{_forward.1} parent=1 // pred_fallthru
      _
    // Predicated region
    $region62: #{_forward.1} parent=1 // pred_check
      _
    $region63: #{_forward.1} parent=1 // pred_check_branch
      %142 = sbr.rel (0) target = $region65
    $region64: #{_forward.1} parent=1 // pred_region
      _
    $region65: #{_forward.1} parent=1 // pred_fallthru
      _
    // Predicated region
    $region66: #{_forward.1} parent=1 // pred_check
      _
    $region67: #{_forward.1} parent=1 // pred_check_branch
      %144 = sbr.rel (0) target = $region69
    $region68: #{_forward.1} parent=1 // pred_region
      %145 = dma.done [#allocation11], 192
    $region69: #{_forward.1} parent=1 // pred_fallthru
      _
    // Predicated region
    $region70: #{_forward.1} parent=1 // pred_check
      _
    $region71: #{_forward.1} parent=1 // pred_check_branch
      %147 = sbr.rel (0) target = $region73
    $region72: #{_forward.1} parent=1 // pred_region
      %148 = dma.done [#allocation14], 192
    $region73: #{_forward.1} parent=1 // pred_fallthru
      _
    // Predicated region
    $region74: #{_forward.1} parent=1 // pred_check
      _
    $region75: #{_forward.1} parent=1 // pred_check_branch
      %150 = sbr.rel (0) target = $region77
    $region76: #{_forward.1} parent=1 // pred_region
      %151 = dma.done [#allocation14], 64
    $region77: #{_forward.1} parent=1 // pred_fallthru
      _
    // Predicated region
    $region78: #{_forward.1} parent=1 // pred_check
      _
    $region79: #{_forward.1} parent=1 // pred_check_branch
      %153 = sbr.rel (0) target = $region81
    $region80: #{_forward.1} parent=1 // pred_region
      %154 = dma.done [#allocation17], 192
    $region81: #{_forward.1} parent=1 // pred_fallthru
      _
    // Predicated region
    $region82: #{_forward.1} parent=1 // pred_check
      _
    $region83: #{_forward.1} parent=1 // pred_check_branch
      %156 = sbr.rel (0) target = $region85
    $region84: #{_forward.1} parent=1 // pred_region
      %157 = dma.done [#allocation17], 128
    $region85: #{_forward.1} parent=1 // pred_fallthru
      _
    // Predicated region
    $region86: #{_forward.1} parent=1 // pred_check
      _
    $region87: #{_forward.1} parent=1 // pred_check_branch
      %159 = sbr.rel (0) target = $region89
    $region88: #{_forward.1} parent=1 // pred_region
      %160 = dma.done [#allocation20], 64
    $region89: #{_forward.1} parent=1 // pred_fallthru
      _
    // Predicated region
    $region90: #{_forward.1} parent=1 // pred_check
      _
    $region91: #{_forward.1} parent=1 // pred_check_branch
      %162 = sbr.rel (0) target = $region93
    $region92: #{_forward.1} parent=1 // pred_region
      %163 = dma.done [#allocation20], 128
    $region93: #{_forward.1} parent=1 // pred_fallthru
      _
    // Predicated region
    $region94: #{_forward.1} parent=1 // pred_check
      _
    $region95: #{_forward.1} parent=1 // pred_check_branch
      %165 = sbr.rel (0) target = $region97
    $region96: #{_forward.1} parent=1 // pred_region
      %166 = dma.done [#allocation23], 128
    $region97: #{_forward.1} parent=1 // pred_fallthru
      _
    // Predicated region
    $region98: #{_forward.1} parent=1 // pred_check
      _
    $region99: #{_forward.1} parent=1 // pred_check_branch
      %168 = sbr.rel (0) target = $region101
    $region100: #{_forward.1} parent=1 // pred_region
      %169 = dma.done [#allocation23], 384
    $region101: #{_forward.1} parent=1 // pred_fallthru
      _
    %v170 = vld [vmem:[%s0] sm:$0xff]
    %v171 = vld [vmem:[%s0 + $0x8] sm:$0xff]
    %v172 = vld [vmem:[%s0 + $0x10] sm:$0xff]
    %v173 = vld [vmem:[%s0 + $0x18] sm:$0xff]
    %vm174 = vcmask 24576
    %175 = vst.msk [vmem:[#allocation2] sm:$0x1] %vm174, 0.0
    %176 = vst.msk [vmem:[#allocation2 + $0x18] sm:$0x1] %vm174, 0.0
    %177 = vst.msk [vmem:[#allocation2 + $0x11] sm:$0x1] %vm174, 0.0
    %178 = vst.msk [vmem:[#allocation2 + $0x29] sm:$0x1] %vm174, 0.0
    %vm179 = vcmask 31744
    %180 = vst.msk [vmem:[#allocation2 + $0x1] sm:$0xff] %vm179, %v170
    %181 = vst.msk [vmem:[#allocation2 + $0x9] sm:$0xff] %vm179, %v171
    %182 = vst.msk [vmem:[#allocation2 + $0x19] sm:$0xff] %vm179, %v172
    %183 = vst.msk [vmem:[#allocation2 + $0x21] sm:$0xff] %vm179, %v173
    %v184 = vld [vmem:[#allocation2] sm:$0xff]
    %v185 = vld [vmem:[#allocation2 + $0x8] sm:$0xff]
    %v186 = vld [vmem:[#allocation2 + $0x18] sm:$0xff]
    %v187 = vld [vmem:[#allocation2 + $0x20] sm:$0xff]
    %v188 = vld [vmem:[#allocation2 + $0x2] sm:$0xff]
    %v189 = vld [vmem:[#allocation2 + $0xa] sm:$0xff]
    %v190 = vld [vmem:[#allocation2 + $0x1a] sm:$0xff]
    %v191 = vld [vmem:[#allocation2 + $0x22] sm:$0xff]
    %v192 = vld [vmem:[#allocation10] sm:$0xf]
    %s193 = scalar_lea.vmem [#allocation10], 4
    %v194 = vld [vmem:[%s193] sm:$0xf]
    %v196 = vsel %vm179, %v170, 0
    %v199 = vsel %vm179, %v171, 0
    %v202 = vsel %vm179, %v172, 0
    %v205 = vsel %vm179, %v173, 0
    %vm207 = vcmask 1043456
    %v209 = vsel %vm207, %v194, 0
    %211 = vmatprep.subr.mxu0 0.0
    %212 = vmatpush1.msra.mxu0 %v209
    %213 = vmatprep.subr.mxu0 0.0
    %214 = vmatpush1.msra.mxu0 0.0
    %215 = vmatprep.subr.mxu0 0.0
    %216 = vmatpush1.msra.mxu0 0.0
    %217 = vmatprep.subr.mxu0 0.0
    %218 = vmatpush1.msra.mxu0 0.0
    %219 = vmatprep.subr.mxu0 0.0
    %220 = vmatpush1.msra.mxu0 0.0
    %221 = vmatprep.subr.mxu0 0.0
    %222 = vmatpush1.msra.mxu0 0.0
    %223 = vmatprep.subr.mxu0 0.0
    %224 = vmatpush1.msra.mxu0 0.0
    %225 = vmatprep.subr.mxu0 0.0
    %226 = vmatpush1.msra.mxu0 0.0
    %227 = vmatprep.subr.mxu0 0.0
    %228 = vmatpush1.msra.mxu0 0.0
    %229 = vmatprep.subr.mxu0 0.0
    %230 = vmatpush1.msra.mxu0 0.0
    %231 = vmatprep.subr.mxu0 0.0
    %232 = vmatpush1.msra.mxu0 0.0
    %233 = vmatprep.subr.mxu0 0.0
    %234 = vmatpush1.msra.mxu0 0.0
    %235 = vmatprep.subr.mxu0 0.0
    %236 = vmatpush1.msra.mxu0 0.0
    %237 = vmatprep.subr.mxu0 0.0
    %238 = vmatpush1.msra.mxu0 0.0
    %239 = vmatprep.subr.mxu0 0.0
    %240 = vmatpush1.msra.mxu0 0.0
    %241 = vmatprep.subr.mxu0 0.0
    %242 = vmatpush1.msra.mxu0 0.0
    %243 = vmatprep.subr.mxu0 0.0
    %244 = vmatpush1.msra.mxu0 0.0
    %245 = vmatprep.subr.mxu0 0.0
    %246 = vmatpush1.msra.mxu0 0.0
    %247 = vmatprep.subr.mxu0 0.0
    %248 = vmatpush1.msra.mxu0 0.0
    %249 = vmatprep.subr.mxu0 0.0
    %250 = vmatpush1.msra.mxu0 0.0
    %251 = vmatprep.subr.mxu0 0.0
    %252 = vmatpush1.msra.mxu0 0.0
    %253 = vmatprep.subr.mxu0 0.0
    %254 = vmatpush1.msra.mxu0 0.0
    %255 = vmatprep.subr.mxu0 0.0
    %256 = vmatpush1.msra.mxu0 0.0
    %257 = vmatprep.subr.mxu0 0.0
    %258 = vmatpush1.msra.mxu0 0.0
    %259 = vmatprep.subr.mxu0 0.0
    %260 = vmatpush1.msra.mxu0 0.0
    %261 = vmatprep.subr.mxu0 0.0
    %262 = vmatpush1.msra.mxu0 0.0
    %263 = vmatprep.subr.mxu0 0.0
    %264 = vmatpush1.msra.mxu0 0.0
    %265 = vmatprep.subr.mxu0 0.0
    %266 = vmatpush1.msra.mxu0 0.0
    %267 = vmatprep.subr.mxu0 0.0
    %268 = vmatpush1.msra.mxu0 0.0
    %269 = vmatprep.subr.mxu0 0.0
    %270 = vmatpush1.msra.mxu0 0.0
    %271 = vmatprep.subr.mxu0 0.0
    %272 = vmatpush1.msra.mxu0 0.0
    %273 = vmatprep.subr.mxu0 0.0
    %274 = vmatpush1.msra.mxu0 0.0
    %275 = vmatprep.mubr.f32.mxu0 0.0
    %276 = vmatmul.mubr.f32.gmra.mrb[0].mxu0 %v196
    %v277 = vpop.f32.mrb[0].mxu0
    %v278 = vadd.f32 0.0, %v277
    %v279 = vpop.f32.mrb[0].mxu0
    %280 = vmatprep.mubr.f32.mxu0 0.0
    %281 = vmatmul.mubr.f32.gmra.mrb[0].mxu0 %v199
    %v282 = vpop.f32.mrb[0].mxu0
    %v283 = vadd.f32 0.0, %v282
    %v284 = vpop.f32.mrb[0].mxu0
    %285 = vmatprep.mubr.f32.mxu0 0.0
    %286 = vmatmul.mubr.f32.gmra.mrb[0].mxu0 %v202
    %v287 = vpop.f32.mrb[0].mxu0
    %v288 = vadd.f32 0.0, %v287
    %v289 = vpop.f32.mrb[0].mxu0
    %290 = vmatprep.mubr.f32.mxu0 0.0
    %291 = vmatmul.mubr.f32.gmra.mrb[0].mxu0 %v205
    %v292 = vpop.f32.mrb[0].mxu0
    %v293 = vadd.f32 0.0, %v292
    %v294 = vpop.f32.mrb[0].mxu0
    %295 = vdwg.mxu0
    %v297 = vsel %vm179, %v184, 0
    %v300 = vsel %vm179, %v185, 0
    %v303 = vsel %vm179, %v186, 0
    %v306 = vsel %vm179, %v187, 0
    %v309 = vsel %vm207, %v192, 0
    %311 = vmatprep.subr.mxu0 0.0
    %312 = vmatpush1.msra.mxu0 %v309
    %313 = vmatprep.subr.mxu0 0.0
    %314 = vmatpush1.msra.mxu0 0.0
    %315 = vmatprep.subr.mxu0 0.0
    %316 = vmatpush1.msra.mxu0 0.0
    %317 = vmatprep.subr.mxu0 0.0
    %318 = vmatpush1.msra.mxu0 0.0
    %319 = vmatprep.subr.mxu0 0.0
    %320 = vmatpush1.msra.mxu0 0.0
    %321 = vmatprep.subr.mxu0 0.0
    %322 = vmatpush1.msra.mxu0 0.0
    %323 = vmatprep.subr.mxu0 0.0
    %324 = vmatpush1.msra.mxu0 0.0
    %325 = vmatprep.subr.mxu0 0.0
    %326 = vmatpush1.msra.mxu0 0.0
    %327 = vmatprep.subr.mxu0 0.0
    %328 = vmatpush1.msra.mxu0 0.0
    %329 = vmatprep.subr.mxu0 0.0
    %330 = vmatpush1.msra.mxu0 0.0
    %331 = vmatprep.subr.mxu0 0.0
    %332 = vmatpush1.msra.mxu0 0.0
    %333 = vmatprep.subr.mxu0 0.0
    %334 = vmatpush1.msra.mxu0 0.0
    %335 = vmatprep.subr.mxu0 0.0
    %336 = vmatpush1.msra.mxu0 0.0
    %337 = vmatprep.subr.mxu0 0.0
    %338 = vmatpush1.msra.mxu0 0.0
    %339 = vmatprep.subr.mxu0 0.0
    %340 = vmatpush1.msra.mxu0 0.0
    %341 = vmatprep.subr.mxu0 0.0
    %342 = vmatpush1.msra.mxu0 0.0
    %343 = vmatprep.subr.mxu0 0.0
    %344 = vmatpush1.msra.mxu0 0.0
    %345 = vmatprep.subr.mxu0 0.0
    %346 = vmatpush1.msra.mxu0 0.0
    %347 = vmatprep.subr.mxu0 0.0
    %348 = vmatpush1.msra.mxu0 0.0
    %349 = vmatprep.subr.mxu0 0.0
    %350 = vmatpush1.msra.mxu0 0.0
    %351 = vmatprep.subr.mxu0 0.0
    %352 = vmatpush1.msra.mxu0 0.0
    %353 = vmatprep.subr.mxu0 0.0
    %354 = vmatpush1.msra.mxu0 0.0
    %355 = vmatprep.subr.mxu0 0.0
    %356 = vmatpush1.msra.mxu0 0.0
    %357 = vmatprep.subr.mxu0 0.0
    %358 = vmatpush1.msra.mxu0 0.0
    %359 = vmatprep.subr.mxu0 0.0
    %360 = vmatpush1.msra.mxu0 0.0
    %361 = vmatprep.subr.mxu0 0.0
    %362 = vmatpush1.msra.mxu0 0.0
    %363 = vmatprep.subr.mxu0 0.0
    %364 = vmatpush1.msra.mxu0 0.0
    %365 = vmatprep.subr.mxu0 0.0
    %366 = vmatpush1.msra.mxu0 0.0
    %367 = vmatprep.subr.mxu0 0.0
    %368 = vmatpush1.msra.mxu0 0.0
    %369 = vmatprep.subr.mxu0 0.0
    %370 = vmatpush1.msra.mxu0 0.0
    %371 = vmatprep.subr.mxu0 0.0
    %372 = vmatpush1.msra.mxu0 0.0
    %373 = vmatprep.subr.mxu0 0.0
    %374 = vmatpush1.msra.mxu0 0.0
    %375 = vmatprep.mubr.f32.mxu0 0.0
    %376 = vmatmul.mubr.f32.gmra.mrb[0].mxu0 %v297
    %v377 = vpop.f32.mrb[0].mxu0
    %v378 = vadd.f32 %v278, %v377
    %v379 = vpop.f32.mrb[0].mxu0
    %380 = vmatprep.mubr.f32.mxu0 0.0
    %381 = vmatmul.mubr.f32.gmra.mrb[0].mxu0 %v300
    %v382 = vpop.f32.mrb[0].mxu0
    %v383 = vadd.f32 %v283, %v382
    %v384 = vpop.f32.mrb[0].mxu0
    %385 = vmatprep.mubr.f32.mxu0 0.0
    %386 = vmatmul.mubr.f32.gmra.mrb[0].mxu0 %v303
    %v387 = vpop.f32.mrb[0].mxu0
    %v388 = vadd.f32 %v288, %v387
    %v389 = vpop.f32.mrb[0].mxu0
    %390 = vmatprep.mubr.f32.mxu0 0.0
    %391 = vmatmul.mubr.f32.gmra.mrb[0].mxu0 %v306
    %v392 = vpop.f32.mrb[0].mxu0
    %v393 = vadd.f32 %v293, %v392
    %v394 = vpop.f32.mrb[0].mxu0
    %395 = vdwg.mxu0
    %s396 = scalar_lea.vmem [#allocation10], 8
    %v397 = vld [vmem:[%s396] sm:$0xf]
    %v399 = vsel %vm179, %v188, 0
    %v402 = vsel %vm179, %v189, 0
    %v405 = vsel %vm179, %v190, 0
    %v408 = vsel %vm179, %v191, 0
    %v411 = vsel %vm207, %v397, 0
    %413 = vmatprep.subr.mxu0 0.0
    %414 = vmatpush1.msra.mxu0 %v411
    %415 = vmatprep.subr.mxu0 0.0
    %416 = vmatpush1.msra.mxu0 0.0
    %417 = vmatprep.subr.mxu0 0.0
    %418 = vmatpush1.msra.mxu0 0.0
    %419 = vmatprep.subr.mxu0 0.0
    %420 = vmatpush1.msra.mxu0 0.0
    %421 = vmatprep.subr.mxu0 0.0
    %422 = vmatpush1.msra.mxu0 0.0
    %423 = vmatprep.subr.mxu0 0.0
    %424 = vmatpush1.msra.mxu0 0.0
    %425 = vmatprep.subr.mxu0 0.0
    %426 = vmatpush1.msra.mxu0 0.0
    %427 = vmatprep.subr.mxu0 0.0
    %428 = vmatpush1.msra.mxu0 0.0
    %429 = vmatprep.subr.mxu0 0.0
    %430 = vmatpush1.msra.mxu0 0.0
    %431 = vmatprep.subr.mxu0 0.0
    %432 = vmatpush1.msra.mxu0 0.0
    %433 = vmatprep.subr.mxu0 0.0
    %434 = vmatpush1.msra.mxu0 0.0
    %435 = vmatprep.subr.mxu0 0.0
    %436 = vmatpush1.msra.mxu0 0.0
    %437 = vmatprep.subr.mxu0 0.0
    %438 = vmatpush1.msra.mxu0 0.0
    %439 = vmatprep.subr.mxu0 0.0
    %440 = vmatpush1.msra.mxu0 0.0
    %441 = vmatprep.subr.mxu0 0.0
    %442 = vmatpush1.msra.mxu0 0.0
    %443 = vmatprep.subr.mxu0 0.0
    %444 = vmatpush1.msra.mxu0 0.0
    %445 = vmatprep.subr.mxu0 0.0
    %446 = vmatpush1.msra.mxu0 0.0
    %447 = vmatprep.subr.mxu0 0.0
    %448 = vmatpush1.msra.mxu0 0.0
    %449 = vmatprep.subr.mxu0 0.0
    %450 = vmatpush1.msra.mxu0 0.0
    %451 = vmatprep.subr.mxu0 0.0
    %452 = vmatpush1.msra.mxu0 0.0
    %453 = vmatprep.subr.mxu0 0.0
    %454 = vmatpush1.msra.mxu0 0.0
    %455 = vmatprep.subr.mxu0 0.0
    %456 = vmatpush1.msra.mxu0 0.0
    %457 = vmatprep.subr.mxu0 0.0
    %458 = vmatpush1.msra.mxu0 0.0
    %459 = vmatprep.subr.mxu0 0.0
    %460 = vmatpush1.msra.mxu0 0.0
    %461 = vmatprep.subr.mxu0 0.0
    %462 = vmatpush1.msra.mxu0 0.0
    %463 = vmatprep.subr.mxu0 0.0
    %464 = vmatpush1.msra.mxu0 0.0
    %465 = vmatprep.subr.mxu0 0.0
    %466 = vmatpush1.msra.mxu0 0.0
    %467 = vmatprep.subr.mxu0 0.0
    %468 = vmatpush1.msra.mxu0 0.0
    %469 = vmatprep.subr.mxu0 0.0
    %470 = vmatpush1.msra.mxu0 0.0
    %471 = vmatprep.subr.mxu0 0.0
    %472 = vmatpush1.msra.mxu0 0.0
    %473 = vmatprep.subr.mxu0 0.0
    %474 = vmatpush1.msra.mxu0 0.0
    %475 = vmatprep.subr.mxu0 0.0
    %476 = vmatpush1.msra.mxu0 0.0
    %477 = vmatprep.mubr.f32.mxu0 0.0
    %478 = vmatmul.mubr.f32.gmra.mrb[0].mxu0 %v399
    %v479 = vpop.f32.mrb[0].mxu0
    %v480 = vadd.f32 0.0, %v479
    %v481 = vpop.f32.mrb[0].mxu0
    %482 = vmatprep.mubr.f32.mxu0 0.0
    %483 = vmatmul.mubr.f32.gmra.mrb[0].mxu0 %v402
    %v484 = vpop.f32.mrb[0].mxu0
    %v485 = vadd.f32 0.0, %v484
    %v486 = vpop.f32.mrb[0].mxu0
    %487 = vmatprep.mubr.f32.mxu0 0.0
    %488 = vmatmul.mubr.f32.gmra.mrb[0].mxu0 %v405
    %v489 = vpop.f32.mrb[0].mxu0
    %v490 = vadd.f32 0.0, %v489
    %v491 = vpop.f32.mrb[0].mxu0
    %492 = vmatprep.mubr.f32.mxu0 0.0
    %493 = vmatmul.mubr.f32.gmra.mrb[0].mxu0 %v408
    %v494 = vpop.f32.mrb[0].mxu0
    %v495 = vadd.f32 0.0, %v494
    %v496 = vpop.f32.mrb[0].mxu0
    %497 = vdwg.mxu0
    %v498 = vadd.f32 %v378, %v480
    %v499 = vadd.f32 %v383, %v485
    %v500 = vadd.f32 %v388, %v490
    %v501 = vadd.f32 %v393, %v495
    %v502 = vlaneseq
    %v503 = vshrl.u32 %v502, 7
    %v504 = vlaneseq
    %v505 = vand.u32 %v504, 127
    %v506 = vmul.u32 %v503, 2
    %vm507 = vcmp.eq.s32.totalorder %v505, %v506
    %v508 = vsel %vm507, 1.0, 0.0
    %vm509 = vcmask 130048
    %v511 = vsel %vm509, %v508, 0
    %513 = vmatprep.subr.mxu0 0.0
    %v514 = vand.u32 %v498, 4294901760
    %515 = vmatpush1.msra.mxu0 %v514
    %516 = vmatprep.subr.mxu0 0.0
    %v517 = vand.u32 %v499, 4294901760
    %518 = vmatpush1.msra.mxu0 %v517
    %519 = vmatprep.subr.mxu0 0.0
    %520 = vmatpush1.msra.mxu0 0.0
    %521 = vmatprep.subr.mxu0 0.0
    %522 = vmatpush1.msra.mxu0 0.0
    %523 = vmatprep.subr.mxu0 0.0
    %524 = vmatpush1.msra.mxu0 0.0
    %525 = vmatprep.subr.mxu0 0.0
    %526 = vmatpush1.msra.mxu0 0.0
    %527 = vmatprep.subr.mxu0 0.0
    %528 = vmatpush1.msra.mxu0 0.0
    %529 = vmatprep.subr.mxu0 0.0
    %530 = vmatpush1.msra.mxu0 0.0
    %531 = vmatprep.subr.mxu0 0.0
    %532 = vmatpush1.msra.mxu0 0.0
    %533 = vmatprep.subr.mxu0 0.0
    %534 = vmatpush1.msra.mxu0 0.0
    %535 = vmatprep.subr.mxu0 0.0
    %536 = vmatpush1.msra.mxu0 0.0
    %537 = vmatprep.subr.mxu0 0.0
    %538 = vmatpush1.msra.mxu0 0.0
    %539 = vmatprep.subr.mxu0 0.0
    %540 = vmatpush1.msra.mxu0 0.0
    %541 = vmatprep.subr.mxu0 0.0
    %542 = vmatpush1.msra.mxu0 0.0
    %543 = vmatprep.subr.mxu0 0.0
    %544 = vmatpush1.msra.mxu0 0.0
    %545 = vmatprep.subr.mxu0 0.0
    %546 = vmatpush1.msra.mxu0 0.0
    %547 = vmatprep.subr.mxu0 0.0
    %548 = vmatpush1.msra.mxu0 0.0
    %549 = vmatprep.subr.mxu0 0.0
    %550 = vmatpush1.msra.mxu0 0.0
    %551 = vmatprep.subr.mxu0 0.0
    %552 = vmatpush1.msra.mxu0 0.0
    %553 = vmatprep.subr.mxu0 0.0
    %554 = vmatpush1.msra.mxu0 0.0
    %555 = vmatprep.subr.mxu0 0.0
    %556 = vmatpush1.msra.mxu0 0.0
    %557 = vmatprep.subr.mxu0 0.0
    %558 = vmatpush1.msra.mxu0 0.0
    %559 = vmatprep.subr.mxu0 0.0
    %560 = vmatpush1.msra.mxu0 0.0
    %561 = vmatprep.subr.mxu0 0.0
    %562 = vmatpush1.msra.mxu0 0.0
    %563 = vmatprep.subr.mxu0 0.0
    %564 = vmatpush1.msra.mxu0 0.0
    %565 = vmatprep.subr.mxu0 0.0
    %566 = vmatpush1.msra.mxu0 0.0
    %567 = vmatprep.subr.mxu0 0.0
    %568 = vmatpush1.msra.mxu0 0.0
    %569 = vmatprep.subr.mxu0 0.0
    %570 = vmatpush1.msra.mxu0 0.0
    %571 = vmatprep.subr.mxu0 0.0
    %572 = vmatpush1.msra.mxu0 0.0
    %573 = vmatprep.subr.mxu0 0.0
    %574 = vmatpush1.msra.mxu0 0.0
    %575 = vmatprep.subr.mxu0 0.0
    %576 = vmatpush1.msra.mxu0 0.0
    %577 = vmatprep.subr.mxu0 0.0
    %578 = vmatpush1.msra.mxu0 0.0
    %579 = vmatprep.mubr.f32.mxu0 0.0
    %v580 = vand.u32 %v511, 4294901760
    %v581 = vsub.f32 %v511, %v580
    %v582 = vand.u32 %v581, 4294901760
    %v583 = vsub.f32 %v581, %v582
    %v584 = vand.u32 %v583, 4294901760
    %585 = vmatmul.mubr.f32.gmra.mrb[0].mxu0 %v584
    %v586 = vpop.f32.mrb[0].mxu0
    %v587 = vadd.f32 0.0, %v586
    %v588 = vpop.f32.mrb[0].mxu0
    %589 = vdwg.mxu0
    %590 = vmatprep.subr.mxu0 0.0
    %v591 = vand.u32 %v498, 4294901760
    %v592 = vsub.f32 %v498, %v591
    %v593 = vand.u32 %v592, 4294901760
    %v594 = vsub.f32 %v592, %v593
    %v595 = vand.u32 %v594, 4294901760
    %596 = vmatpush1.msra.mxu0 %v595
    %597 = vmatprep.subr.mxu0 0.0
    %v598 = vand.u32 %v499, 4294901760
    %v599 = vsub.f32 %v499, %v598
    %v600 = vand.u32 %v599, 4294901760
    %v601 = vsub.f32 %v599, %v600
    %v602 = vand.u32 %v601, 4294901760
    %603 = vmatpush1.msra.mxu0 %v602
    %604 = vmatprep.subr.mxu0 0.0
    %605 = vmatpush1.msra.mxu0 0.0
    %606 = vmatprep.subr.mxu0 0.0
    %607 = vmatpush1.msra.mxu0 0.0
    %608 = vmatprep.subr.mxu0 0.0
    %609 = vmatpush1.msra.mxu0 0.0
    %610 = vmatprep.subr.mxu0 0.0
    %611 = vmatpush1.msra.mxu0 0.0
    %612 = vmatprep.subr.mxu0 0.0
    %613 = vmatpush1.msra.mxu0 0.0
    %614 = vmatprep.subr.mxu0 0.0
    %615 = vmatpush1.msra.mxu0 0.0
    %616 = vmatprep.subr.mxu0 0.0
    %617 = vmatpush1.msra.mxu0 0.0
    %618 = vmatprep.subr.mxu0 0.0
    %619 = vmatpush1.msra.mxu0 0.0
    %620 = vmatprep.subr.mxu0 0.0
    %621 = vmatpush1.msra.mxu0 0.0
    %622 = vmatprep.subr.mxu0 0.0
    %623 = vmatpush1.msra.mxu0 0.0
    %624 = vmatprep.subr.mxu0 0.0
    %625 = vmatpush1.msra.mxu0 0.0
    %626 = vmatprep.subr.mxu0 0.0
    %627 = vmatpush1.msra.mxu0 0.0
    %628 = vmatprep.subr.mxu0 0.0
    %629 = vmatpush1.msra.mxu0 0.0
    %630 = vmatprep.subr.mxu0 0.0
    %631 = vmatpush1.msra.mxu0 0.0
    %632 = vmatprep.subr.mxu0 0.0
    %633 = vmatpush1.msra.mxu0 0.0
    %634 = vmatprep.subr.mxu0 0.0
    %635 = vmatpush1.msra.mxu0 0.0
    %636 = vmatprep.subr.mxu0 0.0
    %637 = vmatpush1.msra.mxu0 0.0
    %638 = vmatprep.subr.mxu0 0.0
    %639 = vmatpush1.msra.mxu0 0.0
    %640 = vmatprep.subr.mxu0 0.0
    %641 = vmatpush1.msra.mxu0 0.0
    %642 = vmatprep.subr.mxu0 0.0
    %643 = vmatpush1.msra.mxu0 0.0
    %644 = vmatprep.subr.mxu0 0.0
    %645 = vmatpush1.msra.mxu0 0.0
    %646 = vmatprep.subr.mxu0 0.0
    %647 = vmatpush1.msra.mxu0 0.0
    %648 = vmatprep.subr.mxu0 0.0
    %649 = vmatpush1.msra.mxu0 0.0
    %650 = vmatprep.subr.mxu0 0.0
    %651 = vmatpush1.msra.mxu0 0.0
    %652 = vmatprep.subr.mxu0 0.0
    %653 = vmatpush1.msra.mxu0 0.0
    %654 = vmatprep.subr.mxu0 0.0
    %655 = vmatpush1.msra.mxu0 0.0
    %656 = vmatprep.subr.mxu0 0.0
    %657 = vmatpush1.msra.mxu0 0.0
    %658 = vmatprep.subr.mxu0 0.0
    %659 = vmatpush1.msra.mxu0 0.0
    %660 = vmatprep.subr.mxu0 0.0
    %661 = vmatpush1.msra.mxu0 0.0
    %662 = vmatprep.subr.mxu0 0.0
    %663 = vmatpush1.msra.mxu0 0.0
    %664 = vmatprep.mubr.f32.mxu0 0.0
    %v665 = vand.u32 %v511, 4294901760
    %666 = vmatmul.mubr.f32.gmra.mrb[0].mxu0 %v665
    %v667 = vpop.f32.mrb[0].mxu0
    %v668 = vadd.f32 %v587, %v667
    %v669 = vpop.f32.mrb[0].mxu0
    %670 = vdwg.mxu0
    %671 = vmatprep.subr.mxu0 0.0
    %v672 = vand.u32 %v498, 4294901760
    %v673 = vsub.f32 %v498, %v672
    %674 = vmatpush1.msra.mxu0 %v673
    %675 = vmatprep.subr.mxu0 0.0
    %v676 = vand.u32 %v499, 4294901760
    %v677 = vsub.f32 %v499, %v676
    %678 = vmatpush1.msra.mxu0 %v677
    %679 = vmatprep.subr.mxu0 0.0
    %680 = vmatpush1.msra.mxu0 0.0
    %681 = vmatprep.subr.mxu0 0.0
    %682 = vmatpush1.msra.mxu0 0.0
    %683 = vmatprep.subr.mxu0 0.0
    %684 = vmatpush1.msra.mxu0 0.0
    %685 = vmatprep.subr.mxu0 0.0
    %686 = vmatpush1.msra.mxu0 0.0
    %687 = vmatprep.subr.mxu0 0.0
    %688 = vmatpush1.msra.mxu0 0.0
    %689 = vmatprep.subr.mxu0 0.0
    %690 = vmatpush1.msra.mxu0 0.0
    %691 = vmatprep.subr.mxu0 0.0
    %692 = vmatpush1.msra.mxu0 0.0
    %693 = vmatprep.subr.mxu0 0.0
    %694 = vmatpush1.msra.mxu0 0.0
    %695 = vmatprep.subr.mxu0 0.0
    %696 = vmatpush1.msra.mxu0 0.0
    %697 = vmatprep.subr.mxu0 0.0
    %698 = vmatpush1.msra.mxu0 0.0
    %699 = vmatprep.subr.mxu0 0.0
    %700 = vmatpush1.msra.mxu0 0.0
    %701 = vmatprep.subr.mxu0 0.0
    %702 = vmatpush1.msra.mxu0 0.0
    %703 = vmatprep.subr.mxu0 0.0
    %704 = vmatpush1.msra.mxu0 0.0
    %705 = vmatprep.subr.mxu0 0.0
    %706 = vmatpush1.msra.mxu0 0.0
    %707 = vmatprep.subr.mxu0 0.0
    %708 = vmatpush1.msra.mxu0 0.0
    %709 = vmatprep.subr.mxu0 0.0
    %710 = vmatpush1.msra.mxu0 0.0
    %711 = vmatprep.subr.mxu0 0.0
    %712 = vmatpush1.msra.mxu0 0.0
    %713 = vmatprep.subr.mxu0 0.0
    %714 = vmatpush1.msra.mxu0 0.0
    %715 = vmatprep.subr.mxu0 0.0
    %716 = vmatpush1.msra.mxu0 0.0
    %717 = vmatprep.subr.mxu0 0.0
    %718 = vmatpush1.msra.mxu0 0.0
    %719 = vmatprep.subr.mxu0 0.0
    %720 = vmatpush1.msra.mxu0 0.0
    %721 = vmatprep.subr.mxu0 0.0
    %722 = vmatpush1.msra.mxu0 0.0
    %723 = vmatprep.subr.mxu0 0.0
    %724 = vmatpush1.msra.mxu0 0.0
    %725 = vmatprep.subr.mxu0 0.0
    %726 = vmatpush1.msra.mxu0 0.0
    %727 = vmatprep.subr.mxu0 0.0
    %728 = vmatpush1.msra.mxu0 0.0
    %729 = vmatprep.subr.mxu0 0.0
    %730 = vmatpush1.msra.mxu0 0.0
    %731 = vmatprep.subr.mxu0 0.0
    %732 = vmatpush1.msra.mxu0 0.0
    %733 = vmatprep.subr.mxu0 0.0
    %734 = vmatpush1.msra.mxu0 0.0
    %735 = vmatprep.subr.mxu0 0.0
    %736 = vmatpush1.msra.mxu0 0.0
    %737 = vmatprep.subr.mxu0 0.0
    %738 = vmatpush1.msra.mxu0 0.0
    %739 = vmatprep.mubr.f32.mxu0 0.0
    %v740 = vand.u32 %v511, 4294901760
    %v741 = vsub.f32 %v511, %v740
    %742 = vmatmul.mubr.f32.gmra.mrb[0].mxu0 %v741
    %v743 = vpop.f32.mrb[0].mxu0
    %v744 = vadd.f32 %v668, %v743
    %v745 = vpop.f32.mrb[0].mxu0
    %746 = vdwg.mxu0
    %747 = vmatprep.subr.mxu0 0.0
    %v748 = vand.u32 %v498, 4294901760
    %749 = vmatpush1.msra.mxu0 %v748
    %750 = vmatprep.subr.mxu0 0.0
    %v751 = vand.u32 %v499, 4294901760
    %752 = vmatpush1.msra.mxu0 %v751
    %753 = vmatprep.subr.mxu0 0.0
    %754 = vmatpush1.msra.mxu0 0.0
    %755 = vmatprep.subr.mxu0 0.0
    %756 = vmatpush1.msra.mxu0 0.0
    %757 = vmatprep.subr.mxu0 0.0
    %758 = vmatpush1.msra.mxu0 0.0
    %759 = vmatprep.subr.mxu0 0.0
    %760 = vmatpush1.msra.mxu0 0.0
    %761 = vmatprep.subr.mxu0 0.0
    %762 = vmatpush1.msra.mxu0 0.0
    %763 = vmatprep.subr.mxu0 0.0
    %764 = vmatpush1.msra.mxu0 0.0
    %765 = vmatprep.subr.mxu0 0.0
    %766 = vmatpush1.msra.mxu0 0.0
    %767 = vmatprep.subr.mxu0 0.0
    %768 = vmatpush1.msra.mxu0 0.0
    %769 = vmatprep.subr.mxu0 0.0
    %770 = vmatpush1.msra.mxu0 0.0
    %771 = vmatprep.subr.mxu0 0.0
    %772 = vmatpush1.msra.mxu0 0.0
    %773 = vmatprep.subr.mxu0 0.0
    %774 = vmatpush1.msra.mxu0 0.0
    %775 = vmatprep.subr.mxu0 0.0
    %776 = vmatpush1.msra.mxu0 0.0
    %777 = vmatprep.subr.mxu0 0.0
    %778 = vmatpush1.msra.mxu0 0.0
    %779 = vmatprep.subr.mxu0 0.0
    %780 = vmatpush1.msra.mxu0 0.0
    %781 = vmatprep.subr.mxu0 0.0
    %782 = vmatpush1.msra.mxu0 0.0
    %783 = vmatprep.subr.mxu0 0.0
    %784 = vmatpush1.msra.mxu0 0.0
    %785 = vmatprep.subr.mxu0 0.0
    %786 = vmatpush1.msra.mxu0 0.0
    %787 = vmatprep.subr.mxu0 0.0
    %788 = vmatpush1.msra.mxu0 0.0
    %789 = vmatprep.subr.mxu0 0.0
    %790 = vmatpush1.msra.mxu0 0.0
    %791 = vmatprep.subr.mxu0 0.0
    %792 = vmatpush1.msra.mxu0 0.0
    %793 = vmatprep.subr.mxu0 0.0
    %794 = vmatpush1.msra.mxu0 0.0
    %795 = vmatprep.subr.mxu0 0.0
    %796 = vmatpush1.msra.mxu0 0.0
    %797 = vmatprep.subr.mxu0 0.0
    %798 = vmatpush1.msra.mxu0 0.0
    %799 = vmatprep.subr.mxu0 0.0
    %800 = vmatpush1.msra.mxu0 0.0
    %801 = vmatprep.subr.mxu0 0.0
    %802 = vmatpush1.msra.mxu0 0.0
    %803 = vmatprep.subr.mxu0 0.0
    %804 = vmatpush1.msra.mxu0 0.0
    %805 = vmatprep.subr.mxu0 0.0
    %806 = vmatpush1.msra.mxu0 0.0
    %807 = vmatprep.subr.mxu0 0.0
    %808 = vmatpush1.msra.mxu0 0.0
    %809 = vmatprep.subr.mxu0 0.0
    %810 = vmatpush1.msra.mxu0 0.0
    %811 = vmatprep.subr.mxu0 0.0
    %812 = vmatpush1.msra.mxu0 0.0
    %813 = vmatprep.mubr.f32.mxu0 0.0
    %v814 = vand.u32 %v511, 4294901760
    %v815 = vsub.f32 %v511, %v814
    %v816 = vand.u32 %v815, 4294901760
    %817 = vmatmul.mubr.f32.gmra.mrb[0].mxu0 %v816
    %v818 = vpop.f32.mrb[0].mxu0
    %v819 = vadd.f32 %v744, %v818
    %v820 = vpop.f32.mrb[0].mxu0
    %821 = vdwg.mxu0
    %822 = vmatprep.subr.mxu0 0.0
    %v823 = vand.u32 %v498, 4294901760
    %v824 = vsub.f32 %v498, %v823
    %v825 = vand.u32 %v824, 4294901760
    %826 = vmatpush1.msra.mxu0 %v825
    %827 = vmatprep.subr.mxu0 0.0
    %v828 = vand.u32 %v499, 4294901760
    %v829 = vsub.f32 %v499, %v828
    %v830 = vand.u32 %v829, 4294901760
    %831 = vmatpush1.msra.mxu0 %v830
    %832 = vmatprep.subr.mxu0 0.0
    %833 = vmatpush1.msra.mxu0 0.0
    %834 = vmatprep.subr.mxu0 0.0
    %835 = vmatpush1.msra.mxu0 0.0
    %836 = vmatprep.subr.mxu0 0.0
    %837 = vmatpush1.msra.mxu0 0.0
    %838 = vmatprep.subr.mxu0 0.0
    %839 = vmatpush1.msra.mxu0 0.0
    %840 = vmatprep.subr.mxu0 0.0
    %841 = vmatpush1.msra.mxu0 0.0
    %842 = vmatprep.subr.mxu0 0.0
    %843 = vmatpush1.msra.mxu0 0.0
    %844 = vmatprep.subr.mxu0 0.0
    %845 = vmatpush1.msra.mxu0 0.0
    %846 = vmatprep.subr.mxu0 0.0
    %847 = vmatpush1.msra.mxu0 0.0
    %848 = vmatprep.subr.mxu0 0.0
    %849 = vmatpush1.msra.mxu0 0.0
    %850 = vmatprep.subr.mxu0 0.0
    %851 = vmatpush1.msra.mxu0 0.0
    %852 = vmatprep.subr.mxu0 0.0
    %853 = vmatpush1.msra.mxu0 0.0
    %854 = vmatprep.subr.mxu0 0.0
    %855 = vmatpush1.msra.mxu0 0.0
    %856 = vmatprep.subr.mxu0 0.0
    %857 = vmatpush1.msra.mxu0 0.0
    %858 = vmatprep.subr.mxu0 0.0
    %859 = vmatpush1.msra.mxu0 0.0
    %860 = vmatprep.subr.mxu0 0.0
    %861 = vmatpush1.msra.mxu0 0.0
    %862 = vmatprep.subr.mxu0 0.0
    %863 = vmatpush1.msra.mxu0 0.0
    %864 = vmatprep.subr.mxu0 0.0
    %865 = vmatpush1.msra.mxu0 0.0
    %866 = vmatprep.subr.mxu0 0.0
    %867 = vmatpush1.msra.mxu0 0.0
    %868 = vmatprep.subr.mxu0 0.0
    %869 = vmatpush1.msra.mxu0 0.0
    %870 = vmatprep.subr.mxu0 0.0
    %871 = vmatpush1.msra.mxu0 0.0
    %872 = vmatprep.subr.mxu0 0.0
    %873 = vmatpush1.msra.mxu0 0.0
    %874 = vmatprep.subr.mxu0 0.0
    %875 = vmatpush1.msra.mxu0 0.0
    %876 = vmatprep.subr.mxu0 0.0
    %877 = vmatpush1.msra.mxu0 0.0
    %878 = vmatprep.subr.mxu0 0.0
    %879 = vmatpush1.msra.mxu0 0.0
    %880 = vmatprep.subr.mxu0 0.0
    %881 = vmatpush1.msra.mxu0 0.0
    %882 = vmatprep.subr.mxu0 0.0
    %883 = vmatpush1.msra.mxu0 0.0
    %884 = vmatprep.subr.mxu0 0.0
    %885 = vmatpush1.msra.mxu0 0.0
    %886 = vmatprep.subr.mxu0 0.0
    %887 = vmatpush1.msra.mxu0 0.0
    %888 = vmatprep.subr.mxu0 0.0
    %889 = vmatpush1.msra.mxu0 0.0
    %890 = vmatprep.subr.mxu0 0.0
    %891 = vmatpush1.msra.mxu0 0.0
    %892 = vmatprep.mubr.f32.mxu0 0.0
    %v893 = vand.u32 %v511, 4294901760
    %894 = vmatmul.mubr.f32.gmra.mrb[0].mxu0 %v893
    %v895 = vpop.f32.mrb[0].mxu0
    %v896 = vadd.f32 %v819, %v895
    %v897 = vpop.f32.mrb[0].mxu0
    %898 = vdwg.mxu0
    %899 = vmatprep.subr.mxu0 0.0
    %v900 = vand.u32 %v498, 4294901760
    %901 = vmatpush1.msra.mxu0 %v900
    %902 = vmatprep.subr.mxu0 0.0
    %v903 = vand.u32 %v499, 4294901760
    %904 = vmatpush1.msra.mxu0 %v903
    %905 = vmatprep.subr.mxu0 0.0
    %906 = vmatpush1.msra.mxu0 0.0
    %907 = vmatprep.subr.mxu0 0.0
    %908 = vmatpush1.msra.mxu0 0.0
    %909 = vmatprep.subr.mxu0 0.0
    %910 = vmatpush1.msra.mxu0 0.0
    %911 = vmatprep.subr.mxu0 0.0
    %912 = vmatpush1.msra.mxu0 0.0
    %913 = vmatprep.subr.mxu0 0.0
    %914 = vmatpush1.msra.mxu0 0.0
    %915 = vmatprep.subr.mxu0 0.0
    %916 = vmatpush1.msra.mxu0 0.0
    %917 = vmatprep.subr.mxu0 0.0
    %918 = vmatpush1.msra.mxu0 0.0
    %919 = vmatprep.subr.mxu0 0.0
    %920 = vmatpush1.msra.mxu0 0.0
    %921 = vmatprep.subr.mxu0 0.0
    %922 = vmatpush1.msra.mxu0 0.0
    %923 = vmatprep.subr.mxu0 0.0
    %924 = vmatpush1.msra.mxu0 0.0
    %925 = vmatprep.subr.mxu0 0.0
    %926 = vmatpush1.msra.mxu0 0.0
    %927 = vmatprep.subr.mxu0 0.0
    %928 = vmatpush1.msra.mxu0 0.0
    %929 = vmatprep.subr.mxu0 0.0
    %930 = vmatpush1.msra.mxu0 0.0
    %931 = vmatprep.subr.mxu0 0.0
    %932 = vmatpush1.msra.mxu0 0.0
    %933 = vmatprep.subr.mxu0 0.0
    %934 = vmatpush1.msra.mxu0 0.0
    %935 = vmatprep.subr.mxu0 0.0
    %936 = vmatpush1.msra.mxu0 0.0
    %937 = vmatprep.subr.mxu0 0.0
    %938 = vmatpush1.msra.mxu0 0.0
    %939 = vmatprep.subr.mxu0 0.0
    %940 = vmatpush1.msra.mxu0 0.0
    %941 = vmatprep.subr.mxu0 0.0
    %942 = vmatpush1.msra.mxu0 0.0
    %943 = vmatprep.subr.mxu0 0.0
    %944 = vmatpush1.msra.mxu0 0.0
    %945 = vmatprep.subr.mxu0 0.0
    %946 = vmatpush1.msra.mxu0 0.0
    %947 = vmatprep.subr.mxu0 0.0
    %948 = vmatpush1.msra.mxu0 0.0
    %949 = vmatprep.subr.mxu0 0.0
    %950 = vmatpush1.msra.mxu0 0.0
    %951 = vmatprep.subr.mxu0 0.0
    %952 = vmatpush1.msra.mxu0 0.0
    %953 = vmatprep.subr.mxu0 0.0
    %954 = vmatpush1.msra.mxu0 0.0
    %955 = vmatprep.subr.mxu0 0.0
    %956 = vmatpush1.msra.mxu0 0.0
    %957 = vmatprep.subr.mxu0 0.0
    %958 = vmatpush1.msra.mxu0 0.0
    %959 = vmatprep.subr.mxu0 0.0
    %960 = vmatpush1.msra.mxu0 0.0
    %961 = vmatprep.subr.mxu0 0.0
    %962 = vmatpush1.msra.mxu0 0.0
    %963 = vmatprep.subr.mxu0 0.0
    %964 = vmatpush1.msra.mxu0 0.0
    %965 = vmatprep.mubr.f32.mxu0 0.0
    %v966 = vand.u32 %v511, 4294901760
    %967 = vmatmul.mubr.f32.gmra.mrb[0].mxu0 %v966
    %v968 = vpop.f32.mrb[0].mxu0
    %v969 = vadd.f32 %v896, %v968
    %v970 = vpop.f32.mrb[0].mxu0
    %971 = vdwg.mxu0
    %972 = vmatprep.subr.mxu0 0.0
    %v973 = vand.u32 %v500, 4294901760
    %974 = vmatpush1.msra.mxu0 %v973
    %975 = vmatprep.subr.mxu0 0.0
    %v976 = vand.u32 %v501, 4294901760
    %977 = vmatpush1.msra.mxu0 %v976
    %978 = vmatprep.subr.mxu0 0.0
    %979 = vmatpush1.msra.mxu0 0.0
    %980 = vmatprep.subr.mxu0 0.0
    %981 = vmatpush1.msra.mxu0 0.0
    %982 = vmatprep.subr.mxu0 0.0
    %983 = vmatpush1.msra.mxu0 0.0
    %984 = vmatprep.subr.mxu0 0.0
    %985 = vmatpush1.msra.mxu0 0.0
    %986 = vmatprep.subr.mxu0 0.0
    %987 = vmatpush1.msra.mxu0 0.0
    %988 = vmatprep.subr.mxu0 0.0
    %989 = vmatpush1.msra.mxu0 0.0
    %990 = vmatprep.subr.mxu0 0.0
    %991 = vmatpush1.msra.mxu0 0.0
    %992 = vmatprep.subr.mxu0 0.0
    %993 = vmatpush1.msra.mxu0 0.0
    %994 = vmatprep.subr.mxu0 0.0
    %995 = vmatpush1.msra.mxu0 0.0
    %996 = vmatprep.subr.mxu0 0.0
    %997 = vmatpush1.msra.mxu0 0.0
    %998 = vmatprep.subr.mxu0 0.0
    %999 = vmatpush1.msra.mxu0 0.0
    %1000 = vmatprep.subr.mxu0 0.0
    %1001 = vmatpush1.msra.mxu0 0.0
    %1002 = vmatprep.subr.mxu0 0.0
    %1003 = vmatpush1.msra.mxu0 0.0
    %1004 = vmatprep.subr.mxu0 0.0
    %1005 = vmatpush1.msra.mxu0 0.0
    %1006 = vmatprep.subr.mxu0 0.0
    %1007 = vmatpush1.msra.mxu0 0.0
    %1008 = vmatprep.subr.mxu0 0.0
    %1009 = vmatpush1.msra.mxu0 0.0
    %1010 = vmatprep.subr.mxu0 0.0
    %1011 = vmatpush1.msra.mxu0 0.0
    %1012 = vmatprep.subr.mxu0 0.0
    %1013 = vmatpush1.msra.mxu0 0.0
    %1014 = vmatprep.subr.mxu0 0.0
    %1015 = vmatpush1.msra.mxu0 0.0
    %1016 = vmatprep.subr.mxu0 0.0
    %1017 = vmatpush1.msra.mxu0 0.0
    %1018 = vmatprep.subr.mxu0 0.0
    %1019 = vmatpush1.msra.mxu0 0.0
    %1020 = vmatprep.subr.mxu0 0.0
    %1021 = vmatpush1.msra.mxu0 0.0
    %1022 = vmatprep.subr.mxu0 0.0
    %1023 = vmatpush1.msra.mxu0 0.0
    %1024 = vmatprep.subr.mxu0 0.0
    %1025 = vmatpush1.msra.mxu0 0.0
    %1026 = vmatprep.subr.mxu0 0.0
    %1027 = vmatpush1.msra.mxu0 0.0
    %1028 = vmatprep.subr.mxu0 0.0
    %1029 = vmatpush1.msra.mxu0 0.0
    %1030 = vmatprep.subr.mxu0 0.0
    %1031 = vmatpush1.msra.mxu0 0.0
    %1032 = vmatprep.subr.mxu0 0.0
    %1033 = vmatpush1.msra.mxu0 0.0
    %1034 = vmatprep.subr.mxu0 0.0
    %1035 = vmatpush1.msra.mxu0 0.0
    %1036 = vmatprep.subr.mxu0 0.0
    %1037 = vmatpush1.msra.mxu0 0.0
    %1038 = vmatprep.mubr.f32.mxu0 0.0
    %v1039 = vand.u32 %v511, 4294901760
    %v1040 = vsub.f32 %v511, %v1039
    %v1041 = vand.u32 %v1040, 4294901760
    %v1042 = vsub.f32 %v1040, %v1041
    %v1043 = vand.u32 %v1042, 4294901760
    %1044 = vmatmul.mubr.f32.gmra.mrb[0].mxu0 %v1043
    %v1045 = vpop.f32.mrb[0].mxu0
    %v1046 = vadd.f32 0.0, %v1045
    %v1047 = vpop.f32.mrb[0].mxu0
    %1048 = vdwg.mxu0
    %1049 = vmatprep.subr.mxu0 0.0
    %v1050 = vand.u32 %v500, 4294901760
    %v1051 = vsub.f32 %v500, %v1050
    %v1052 = vand.u32 %v1051, 4294901760
    %v1053 = vsub.f32 %v1051, %v1052
    %v1054 = vand.u32 %v1053, 4294901760
    %1055 = vmatpush1.msra.mxu0 %v1054
    %1056 = vmatprep.subr.mxu0 0.0
    %v1057 = vand.u32 %v501, 4294901760
    %v1058 = vsub.f32 %v501, %v1057
    %v1059 = vand.u32 %v1058, 4294901760
    %v1060 = vsub.f32 %v1058, %v1059
    %v1061 = vand.u32 %v1060, 4294901760
    %1062 = vmatpush1.msra.mxu0 %v1061
    %1063 = vmatprep.subr.mxu0 0.0
    %1064 = vmatpush1.msra.mxu0 0.0
    %1065 = vmatprep.subr.mxu0 0.0
    %1066 = vmatpush1.msra.mxu0 0.0
    %1067 = vmatprep.subr.mxu0 0.0
    %1068 = vmatpush1.msra.mxu0 0.0
    %1069 = vmatprep.subr.mxu0 0.0
    %1070 = vmatpush1.msra.mxu0 0.0
    %1071 = vmatprep.subr.mxu0 0.0
    %1072 = vmatpush1.msra.mxu0 0.0
    %1073 = vmatprep.subr.mxu0 0.0
    %1074 = vmatpush1.msra.mxu0 0.0
    %1075 = vmatprep.subr.mxu0 0.0
    %1076 = vmatpush1.msra.mxu0 0.0
    %1077 = vmatprep.subr.mxu0 0.0
    %1078 = vmatpush1.msra.mxu0 0.0
    %1079 = vmatprep.subr.mxu0 0.0
    %1080 = vmatpush1.msra.mxu0 0.0
    %1081 = vmatprep.subr.mxu0 0.0
    %1082 = vmatpush1.msra.mxu0 0.0
    %1083 = vmatprep.subr.mxu0 0.0
    %1084 = vmatpush1.msra.mxu0 0.0
    %1085 = vmatprep.subr.mxu0 0.0
    %1086 = vmatpush1.msra.mxu0 0.0
    %1087 = vmatprep.subr.mxu0 0.0
    %1088 = vmatpush1.msra.mxu0 0.0
    %1089 = vmatprep.subr.mxu0 0.0
    %1090 = vmatpush1.msra.mxu0 0.0
    %1091 = vmatprep.subr.mxu0 0.0
    %1092 = vmatpush1.msra.mxu0 0.0
    %1093 = vmatprep.subr.mxu0 0.0
    %1094 = vmatpush1.msra.mxu0 0.0
    %1095 = vmatprep.subr.mxu0 0.0
    %1096 = vmatpush1.msra.mxu0 0.0
    %1097 = vmatprep.subr.mxu0 0.0
    %1098 = vmatpush1.msra.mxu0 0.0
    %1099 = vmatprep.subr.mxu0 0.0
    %1100 = vmatpush1.msra.mxu0 0.0
    %1101 = vmatprep.subr.mxu0 0.0
    %1102 = vmatpush1.msra.mxu0 0.0
    %1103 = vmatprep.subr.mxu0 0.0
    %1104 = vmatpush1.msra.mxu0 0.0
    %1105 = vmatprep.subr.mxu0 0.0
    %1106 = vmatpush1.msra.mxu0 0.0
    %1107 = vmatprep.subr.mxu0 0.0
    %1108 = vmatpush1.msra.mxu0 0.0
    %1109 = vmatprep.subr.mxu0 0.0
    %1110 = vmatpush1.msra.mxu0 0.0
    %1111 = vmatprep.subr.mxu0 0.0
    %1112 = vmatpush1.msra.mxu0 0.0
    %1113 = vmatprep.subr.mxu0 0.0
    %1114 = vmatpush1.msra.mxu0 0.0
    %1115 = vmatprep.subr.mxu0 0.0
    %1116 = vmatpush1.msra.mxu0 0.0
    %1117 = vmatprep.subr.mxu0 0.0
    %1118 = vmatpush1.msra.mxu0 0.0
    %1119 = vmatprep.subr.mxu0 0.0
    %1120 = vmatpush1.msra.mxu0 0.0
    %1121 = vmatprep.subr.mxu0 0.0
    %1122 = vmatpush1.msra.mxu0 0.0
    %1123 = vmatprep.mubr.f32.mxu0 0.0
    %v1124 = vand.u32 %v511, 4294901760
    %1125 = vmatmul.mubr.f32.gmra.mrb[0].mxu0 %v1124
    %v1126 = vpop.f32.mrb[0].mxu0
    %v1127 = vadd.f32 %v1046, %v1126
    %v1128 = vpop.f32.mrb[0].mxu0
    %1129 = vdwg.mxu0
    %1130 = vmatprep.subr.mxu0 0.0
    %v1131 = vand.u32 %v500, 4294901760
    %v1132 = vsub.f32 %v500, %v1131
    %1133 = vmatpush1.msra.mxu0 %v1132
    %1134 = vmatprep.subr.mxu0 0.0
    %v1135 = vand.u32 %v501, 4294901760
    %v1136 = vsub.f32 %v501, %v1135
    %1137 = vmatpush1.msra.mxu0 %v1136
    %1138 = vmatprep.subr.mxu0 0.0
    %1139 = vmatpush1.msra.mxu0 0.0
    %1140 = vmatprep.subr.mxu0 0.0
    %1141 = vmatpush1.msra.mxu0 0.0
    %1142 = vmatprep.subr.mxu0 0.0
    %1143 = vmatpush1.msra.mxu0 0.0
    %1144 = vmatprep.subr.mxu0 0.0
    %1145 = vmatpush1.msra.mxu0 0.0
    %1146 = vmatprep.subr.mxu0 0.0
    %1147 = vmatpush1.msra.mxu0 0.0
    %1148 = vmatprep.subr.mxu0 0.0
    %1149 = vmatpush1.msra.mxu0 0.0
    %1150 = vmatprep.subr.mxu0 0.0
    %1151 = vmatpush1.msra.mxu0 0.0
    %1152 = vmatprep.subr.mxu0 0.0
    %1153 = vmatpush1.msra.mxu0 0.0
    %1154 = vmatprep.subr.mxu0 0.0
    %1155 = vmatpush1.msra.mxu0 0.0
    %1156 = vmatprep.subr.mxu0 0.0
    %1157 = vmatpush1.msra.mxu0 0.0
    %1158 = vmatprep.subr.mxu0 0.0
    %1159 = vmatpush1.msra.mxu0 0.0
    %1160 = vmatprep.subr.mxu0 0.0
    %1161 = vmatpush1.msra.mxu0 0.0
    %1162 = vmatprep.subr.mxu0 0.0
    %1163 = vmatpush1.msra.mxu0 0.0
    %1164 = vmatprep.subr.mxu0 0.0
    %1165 = vmatpush1.msra.mxu0 0.0
    %1166 = vmatprep.subr.mxu0 0.0
    %1167 = vmatpush1.msra.mxu0 0.0
    %1168 = vmatprep.subr.mxu0 0.0
    %1169 = vmatpush1.msra.mxu0 0.0
    %1170 = vmatprep.subr.mxu0 0.0
    %1171 = vmatpush1.msra.mxu0 0.0
    %1172 = vmatprep.subr.mxu0 0.0
    %1173 = vmatpush1.msra.mxu0 0.0
    %1174 = vmatprep.subr.mxu0 0.0
    %1175 = vmatpush1.msra.mxu0 0.0
    %1176 = vmatprep.subr.mxu0 0.0
    %1177 = vmatpush1.msra.mxu0 0.0
    %1178 = vmatprep.subr.mxu0 0.0
    %1179 = vmatpush1.msra.mxu0 0.0
    %1180 = vmatprep.subr.mxu0 0.0
    %1181 = vmatpush1.msra.mxu0 0.0
    %1182 = vmatprep.subr.mxu0 0.0
    %1183 = vmatpush1.msra.mxu0 0.0
    %1184 = vmatprep.subr.mxu0 0.0
    %1185 = vmatpush1.msra.mxu0 0.0
    %1186 = vmatprep.subr.mxu0 0.0
    %1187 = vmatpush1.msra.mxu0 0.0
    %1188 = vmatprep.subr.mxu0 0.0
    %1189 = vmatpush1.msra.mxu0 0.0
    %1190 = vmatprep.subr.mxu0 0.0
    %1191 = vmatpush1.msra.mxu0 0.0
    %1192 = vmatprep.subr.mxu0 0.0
    %1193 = vmatpush1.msra.mxu0 0.0
    %1194 = vmatprep.subr.mxu0 0.0
    %1195 = vmatpush1.msra.mxu0 0.0
    %1196 = vmatprep.subr.mxu0 0.0
    %1197 = vmatpush1.msra.mxu0 0.0
    %1198 = vmatprep.mubr.f32.mxu0 0.0
    %v1199 = vand.u32 %v511, 4294901760
    %v1200 = vsub.f32 %v511, %v1199
    %1201 = vmatmul.mubr.f32.gmra.mrb[0].mxu0 %v1200
    %v1202 = vpop.f32.mrb[0].mxu0
    %v1203 = vadd.f32 %v1127, %v1202
    %v1204 = vpop.f32.mrb[0].mxu0
    %1205 = vdwg.mxu0
    %1206 = vmatprep.subr.mxu0 0.0
    %v1207 = vand.u32 %v500, 4294901760
    %1208 = vmatpush1.msra.mxu0 %v1207
    %1209 = vmatprep.subr.mxu0 0.0
    %v1210 = vand.u32 %v501, 4294901760
    %1211 = vmatpush1.msra.mxu0 %v1210
    %1212 = vmatprep.subr.mxu0 0.0
    %1213 = vmatpush1.msra.mxu0 0.0
    %1214 = vmatprep.subr.mxu0 0.0
    %1215 = vmatpush1.msra.mxu0 0.0
    %1216 = vmatprep.subr.mxu0 0.0
    %1217 = vmatpush1.msra.mxu0 0.0
    %1218 = vmatprep.subr.mxu0 0.0
    %1219 = vmatpush1.msra.mxu0 0.0
    %1220 = vmatprep.subr.mxu0 0.0
    %1221 = vmatpush1.msra.mxu0 0.0
    %1222 = vmatprep.subr.mxu0 0.0
    %1223 = vmatpush1.msra.mxu0 0.0
    %1224 = vmatprep.subr.mxu0 0.0
    %1225 = vmatpush1.msra.mxu0 0.0
    %1226 = vmatprep.subr.mxu0 0.0
    %1227 = vmatpush1.msra.mxu0 0.0
    %1228 = vmatprep.subr.mxu0 0.0
    %1229 = vmatpush1.msra.mxu0 0.0
    %1230 = vmatprep.subr.mxu0 0.0
    %1231 = vmatpush1.msra.mxu0 0.0
    %1232 = vmatprep.subr.mxu0 0.0
    %1233 = vmatpush1.msra.mxu0 0.0
    %1234 = vmatprep.subr.mxu0 0.0
    %1235 = vmatpush1.msra.mxu0 0.0
    %1236 = vmatprep.subr.mxu0 0.0
    %1237 = vmatpush1.msra.mxu0 0.0
    %1238 = vmatprep.subr.mxu0 0.0
    %1239 = vmatpush1.msra.mxu0 0.0
    %1240 = vmatprep.subr.mxu0 0.0
    %1241 = vmatpush1.msra.mxu0 0.0
    %1242 = vmatprep.subr.mxu0 0.0
    %1243 = vmatpush1.msra.mxu0 0.0
    %1244 = vmatprep.subr.mxu0 0.0
    %1245 = vmatpush1.msra.mxu0 0.0
    %1246 = vmatprep.subr.mxu0 0.0
    %1247 = vmatpush1.msra.mxu0 0.0
    %1248 = vmatprep.subr.mxu0 0.0
    %1249 = vmatpush1.msra.mxu0 0.0
    %1250 = vmatprep.subr.mxu0 0.0
    %1251 = vmatpush1.msra.mxu0 0.0
    %1252 = vmatprep.subr.mxu0 0.0
    %1253 = vmatpush1.msra.mxu0 0.0
    %1254 = vmatprep.subr.mxu0 0.0
    %1255 = vmatpush1.msra.mxu0 0.0
    %1256 = vmatprep.subr.mxu0 0.0
    %1257 = vmatpush1.msra.mxu0 0.0
    %1258 = vmatprep.subr.mxu0 0.0
    %1259 = vmatpush1.msra.mxu0 0.0
    %1260 = vmatprep.subr.mxu0 0.0
    %1261 = vmatpush1.msra.mxu0 0.0
    %1262 = vmatprep.subr.mxu0 0.0
    %1263 = vmatpush1.msra.mxu0 0.0
    %1264 = vmatprep.subr.mxu0 0.0
    %1265 = vmatpush1.msra.mxu0 0.0
    %1266 = vmatprep.subr.mxu0 0.0
    %1267 = vmatpush1.msra.mxu0 0.0
    %1268 = vmatprep.subr.mxu0 0.0
    %1269 = vmatpush1.msra.mxu0 0.0
    %1270 = vmatprep.subr.mxu0 0.0
    %1271 = vmatpush1.msra.mxu0 0.0
    %1272 = vmatprep.mubr.f32.mxu0 0.0
    %v1273 = vand.u32 %v511, 4294901760
    %v1274 = vsub.f32 %v511, %v1273
    %v1275 = vand.u32 %v1274, 4294901760
    %1276 = vmatmul.mubr.f32.gmra.mrb[0].mxu0 %v1275
    %v1277 = vpop.f32.mrb[0].mxu0
    %v1278 = vadd.f32 %v1203, %v1277
    %v1279 = vpop.f32.mrb[0].mxu0
    %1280 = vdwg.mxu0
    %1281 = vmatprep.subr.mxu0 0.0
    %v1282 = vand.u32 %v500, 4294901760
    %v1283 = vsub.f32 %v500, %v1282
    %v1284 = vand.u32 %v1283, 4294901760
    %1285 = vmatpush1.msra.mxu0 %v1284
    %1286 = vmatprep.subr.mxu0 0.0
    %v1287 = vand.u32 %v501, 4294901760
    %v1288 = vsub.f32 %v501, %v1287
    %v1289 = vand.u32 %v1288, 4294901760
    %1290 = vmatpush1.msra.mxu0 %v1289
    %1291 = vmatprep.subr.mxu0 0.0
    %1292 = vmatpush1.msra.mxu0 0.0
    %1293 = vmatprep.subr.mxu0 0.0
    %1294 = vmatpush1.msra.mxu0 0.0
    %1295 = vmatprep.subr.mxu0 0.0
    %1296 = vmatpush1.msra.mxu0 0.0
    %1297 = vmatprep.subr.mxu0 0.0
    %1298 = vmatpush1.msra.mxu0 0.0
    %1299 = vmatprep.subr.mxu0 0.0
    %1300 = vmatpush1.msra.mxu0 0.0
    %1301 = vmatprep.subr.mxu0 0.0
    %1302 = vmatpush1.msra.mxu0 0.0
    %1303 = vmatprep.subr.mxu0 0.0
    %1304 = vmatpush1.msra.mxu0 0.0
    %1305 = vmatprep.subr.mxu0 0.0
    %1306 = vmatpush1.msra.mxu0 0.0
    %1307 = vmatprep.subr.mxu0 0.0
    %1308 = vmatpush1.msra.mxu0 0.0
    %1309 = vmatprep.subr.mxu0 0.0
    %1310 = vmatpush1.msra.mxu0 0.0
    %1311 = vmatprep.subr.mxu0 0.0
    %1312 = vmatpush1.msra.mxu0 0.0
    %1313 = vmatprep.subr.mxu0 0.0
    %1314 = vmatpush1.msra.mxu0 0.0
    %1315 = vmatprep.subr.mxu0 0.0
    %1316 = vmatpush1.msra.mxu0 0.0
    %1317 = vmatprep.subr.mxu0 0.0
    %1318 = vmatpush1.msra.mxu0 0.0
    %1319 = vmatprep.subr.mxu0 0.0
    %1320 = vmatpush1.msra.mxu0 0.0
    %1321 = vmatprep.subr.mxu0 0.0
    %1322 = vmatpush1.msra.mxu0 0.0
    %1323 = vmatprep.subr.mxu0 0.0
    %1324 = vmatpush1.msra.mxu0 0.0
    %1325 = vmatprep.subr.mxu0 0.0
    %1326 = vmatpush1.msra.mxu0 0.0
    %1327 = vmatprep.subr.mxu0 0.0
    %1328 = vmatpush1.msra.mxu0 0.0
    %1329 = vmatprep.subr.mxu0 0.0
    %1330 = vmatpush1.msra.mxu0 0.0
    %1331 = vmatprep.subr.mxu0 0.0
    %1332 = vmatpush1.msra.mxu0 0.0
    %1333 = vmatprep.subr.mxu0 0.0
    %1334 = vmatpush1.msra.mxu0 0.0
    %1335 = vmatprep.subr.mxu0 0.0
    %1336 = vmatpush1.msra.mxu0 0.0
    %1337 = vmatprep.subr.mxu0 0.0
    %1338 = vmatpush1.msra.mxu0 0.0
    %1339 = vmatprep.subr.mxu0 0.0
    %1340 = vmatpush1.msra.mxu0 0.0
    %1341 = vmatprep.subr.mxu0 0.0
    %1342 = vmatpush1.msra.mxu0 0.0
    %1343 = vmatprep.subr.mxu0 0.0
    %1344 = vmatpush1.msra.mxu0 0.0
    %1345 = vmatprep.subr.mxu0 0.0
    %1346 = vmatpush1.msra.mxu0 0.0
    %1347 = vmatprep.subr.mxu0 0.0
    %1348 = vmatpush1.msra.mxu0 0.0
    %1349 = vmatprep.subr.mxu0 0.0
    %1350 = vmatpush1.msra.mxu0 0.0
    %1351 = vmatprep.mubr.f32.mxu0 0.0
    %v1352 = vand.u32 %v511, 4294901760
    %1353 = vmatmul.mubr.f32.gmra.mrb[0].mxu0 %v1352
    %v1354 = vpop.f32.mrb[0].mxu0
    %v1355 = vadd.f32 %v1278, %v1354
    %v1356 = vpop.f32.mrb[0].mxu0
    %1357 = vdwg.mxu0
    %1358 = vmatprep.subr.mxu0 0.0
    %v1359 = vand.u32 %v500, 4294901760
    %1360 = vmatpush1.msra.mxu0 %v1359
    %1361 = vmatprep.subr.mxu0 0.0
    %v1362 = vand.u32 %v501, 4294901760
    %1363 = vmatpush1.msra.mxu0 %v1362
    %1364 = vmatprep.subr.mxu0 0.0
    %1365 = vmatpush1.msra.mxu0 0.0
    %1366 = vmatprep.subr.mxu0 0.0
    %1367 = vmatpush1.msra.mxu0 0.0
    %1368 = vmatprep.subr.mxu0 0.0
    %1369 = vmatpush1.msra.mxu0 0.0
    %1370 = vmatprep.subr.mxu0 0.0
    %1371 = vmatpush1.msra.mxu0 0.0
    %1372 = vmatprep.subr.mxu0 0.0
    %1373 = vmatpush1.msra.mxu0 0.0
    %1374 = vmatprep.subr.mxu0 0.0
    %1375 = vmatpush1.msra.mxu0 0.0
    %1376 = vmatprep.subr.mxu0 0.0
    %1377 = vmatpush1.msra.mxu0 0.0
    %1378 = vmatprep.subr.mxu0 0.0
    %1379 = vmatpush1.msra.mxu0 0.0
    %1380 = vmatprep.subr.mxu0 0.0
    %1381 = vmatpush1.msra.mxu0 0.0
    %1382 = vmatprep.subr.mxu0 0.0
    %1383 = vmatpush1.msra.mxu0 0.0
    %1384 = vmatprep.subr.mxu0 0.0
    %1385 = vmatpush1.msra.mxu0 0.0
    %1386 = vmatprep.subr.mxu0 0.0
    %1387 = vmatpush1.msra.mxu0 0.0
    %1388 = vmatprep.subr.mxu0 0.0
    %1389 = vmatpush1.msra.mxu0 0.0
    %1390 = vmatprep.subr.mxu0 0.0
    %1391 = vmatpush1.msra.mxu0 0.0
    %1392 = vmatprep.subr.mxu0 0.0
    %1393 = vmatpush1.msra.mxu0 0.0
    %1394 = vmatprep.subr.mxu0 0.0
    %1395 = vmatpush1.msra.mxu0 0.0
    %1396 = vmatprep.subr.mxu0 0.0
    %1397 = vmatpush1.msra.mxu0 0.0
    %1398 = vmatprep.subr.mxu0 0.0
    %1399 = vmatpush1.msra.mxu0 0.0
    %1400 = vmatprep.subr.mxu0 0.0
    %1401 = vmatpush1.msra.mxu0 0.0
    %1402 = vmatprep.subr.mxu0 0.0
    %1403 = vmatpush1.msra.mxu0 0.0
    %1404 = vmatprep.subr.mxu0 0.0
    %1405 = vmatpush1.msra.mxu0 0.0
    %1406 = vmatprep.subr.mxu0 0.0
    %1407 = vmatpush1.msra.mxu0 0.0
    %1408 = vmatprep.subr.mxu0 0.0
    %1409 = vmatpush1.msra.mxu0 0.0
    %1410 = vmatprep.subr.mxu0 0.0
    %1411 = vmatpush1.msra.mxu0 0.0
    %1412 = vmatprep.subr.mxu0 0.0
    %1413 = vmatpush1.msra.mxu0 0.0
    %1414 = vmatprep.subr.mxu0 0.0
    %1415 = vmatpush1.msra.mxu0 0.0
    %1416 = vmatprep.subr.mxu0 0.0
    %1417 = vmatpush1.msra.mxu0 0.0
    %1418 = vmatprep.subr.mxu0 0.0
    %1419 = vmatpush1.msra.mxu0 0.0
    %1420 = vmatprep.subr.mxu0 0.0
    %1421 = vmatpush1.msra.mxu0 0.0
    %1422 = vmatprep.subr.mxu0 0.0
    %1423 = vmatpush1.msra.mxu0 0.0
    %1424 = vmatprep.mubr.f32.mxu0 0.0
    %v1425 = vand.u32 %v511, 4294901760
    %1426 = vmatmul.mubr.f32.gmra.mrb[0].mxu0 %v1425
    %v1427 = vpop.f32.mrb[0].mxu0
    %v1428 = vadd.f32 %v1355, %v1427
    %v1429 = vpop.f32.mrb[0].mxu0
    %1430 = vdwg.mxu0
    %1431 = vmatprep.subr.mxu0 0.0
    %v1432 = vand.u32 %v170, 4294901760
    %1433 = vmatpush1.msra.mxu0 %v1432
    %1434 = vmatprep.subr.mxu0 0.0
    %v1435 = vand.u32 %v171, 4294901760
    %1436 = vmatpush1.msra.mxu0 %v1435
    %1437 = vmatprep.subr.mxu0 0.0
    %1438 = vmatpush1.msra.mxu0 0.0
    %1439 = vmatprep.subr.mxu0 0.0
    %1440 = vmatpush1.msra.mxu0 0.0
    %1441 = vmatprep.subr.mxu0 0.0
    %1442 = vmatpush1.msra.mxu0 0.0
    %1443 = vmatprep.subr.mxu0 0.0
    %1444 = vmatpush1.msra.mxu0 0.0
    %1445 = vmatprep.subr.mxu0 0.0
    %1446 = vmatpush1.msra.mxu0 0.0
    %1447 = vmatprep.subr.mxu0 0.0
    %1448 = vmatpush1.msra.mxu0 0.0
    %1449 = vmatprep.subr.mxu0 0.0
    %1450 = vmatpush1.msra.mxu0 0.0
    %1451 = vmatprep.subr.mxu0 0.0
    %1452 = vmatpush1.msra.mxu0 0.0
    %1453 = vmatprep.subr.mxu0 0.0
    %1454 = vmatpush1.msra.mxu0 0.0
    %1455 = vmatprep.subr.mxu0 0.0
    %1456 = vmatpush1.msra.mxu0 0.0
    %1457 = vmatprep.subr.mxu0 0.0
    %1458 = vmatpush1.msra.mxu0 0.0
    %1459 = vmatprep.subr.mxu0 0.0
    %1460 = vmatpush1.msra.mxu0 0.0
    %1461 = vmatprep.subr.mxu0 0.0
    %1462 = vmatpush1.msra.mxu0 0.0
    %1463 = vmatprep.subr.mxu0 0.0
    %1464 = vmatpush1.msra.mxu0 0.0
    %1465 = vmatprep.subr.mxu0 0.0
    %1466 = vmatpush1.msra.mxu0 0.0
    %1467 = vmatprep.subr.mxu0 0.0
    %1468 = vmatpush1.msra.mxu0 0.0
    %1469 = vmatprep.subr.mxu0 0.0
    %1470 = vmatpush1.msra.mxu0 0.0
    %1471 = vmatprep.subr.mxu0 0.0
    %1472 = vmatpush1.msra.mxu0 0.0
    %1473 = vmatprep.subr.mxu0 0.0
    %1474 = vmatpush1.msra.mxu0 0.0
    %1475 = vmatprep.subr.mxu0 0.0
    %1476 = vmatpush1.msra.mxu0 0.0
    %1477 = vmatprep.subr.mxu0 0.0
    %1478 = vmatpush1.msra.mxu0 0.0
    %1479 = vmatprep.subr.mxu0 0.0
    %1480 = vmatpush1.msra.mxu0 0.0
    %1481 = vmatprep.subr.mxu0 0.0
    %1482 = vmatpush1.msra.mxu0 0.0
    %1483 = vmatprep.subr.mxu0 0.0
    %1484 = vmatpush1.msra.mxu0 0.0
    %1485 = vmatprep.subr.mxu0 0.0
    %1486 = vmatpush1.msra.mxu0 0.0
    %1487 = vmatprep.subr.mxu0 0.0
    %1488 = vmatpush1.msra.mxu0 0.0
    %1489 = vmatprep.subr.mxu0 0.0
    %1490 = vmatpush1.msra.mxu0 0.0
    %1491 = vmatprep.subr.mxu0 0.0
    %1492 = vmatpush1.msra.mxu0 0.0
    %1493 = vmatprep.subr.mxu0 0.0
    %1494 = vmatpush1.msra.mxu0 0.0
    %1495 = vmatprep.subr.mxu0 0.0
    %1496 = vmatpush1.msra.mxu0 0.0
    %1497 = vmatprep.mubr.f32.mxu0 0.0
    %v1498 = vand.u32 %v511, 4294901760
    %v1499 = vsub.f32 %v511, %v1498
    %v1500 = vand.u32 %v1499, 4294901760
    %v1501 = vsub.f32 %v1499, %v1500
    %v1502 = vand.u32 %v1501, 4294901760
    %1503 = vmatmul.mubr.f32.gmra.mrb[0].mxu0 %v1502
    %v1504 = vpop.f32.mrb[0].mxu0
    %v1505 = vadd.f32 0.0, %v1504
    %v1506 = vpop.f32.mrb[0].mxu0
    %1507 = vdwg.mxu0
    %1508 = vmatprep.subr.mxu0 0.0
    %v1509 = vand.u32 %v170, 4294901760
    %v1510 = vsub.f32 %v170, %v1509
    %v1511 = vand.u32 %v1510, 4294901760
    %v1512 = vsub.f32 %v1510, %v1511
    %v1513 = vand.u32 %v1512, 4294901760
    %1514 = vmatpush1.msra.mxu0 %v1513
    %1515 = vmatprep.subr.mxu0 0.0
    %v1516 = vand.u32 %v171, 4294901760
    %v1517 = vsub.f32 %v171, %v1516
    %v1518 = vand.u32 %v1517, 4294901760
    %v1519 = vsub.f32 %v1517, %v1518
    %v1520 = vand.u32 %v1519, 4294901760
    %1521 = vmatpush1.msra.mxu0 %v1520
    %1522 = vmatprep.subr.mxu0 0.0
    %1523 = vmatpush1.msra.mxu0 0.0
    %1524 = vmatprep.subr.mxu0 0.0
    %1525 = vmatpush1.msra.mxu0 0.0
    %1526 = vmatprep.subr.mxu0 0.0
    %1527 = vmatpush1.msra.mxu0 0.0
    %1528 = vmatprep.subr.mxu0 0.0
    %1529 = vmatpush1.msra.mxu0 0.0
    %1530 = vmatprep.subr.mxu0 0.0
    %1531 = vmatpush1.msra.mxu0 0.0
    %1532 = vmatprep.subr.mxu0 0.0
    %1533 = vmatpush1.msra.mxu0 0.0
    %1534 = vmatprep.subr.mxu0 0.0
    %1535 = vmatpush1.msra.mxu0 0.0
    %1536 = vmatprep.subr.mxu0 0.0
    %1537 = vmatpush1.msra.mxu0 0.0
    %1538 = vmatprep.subr.mxu0 0.0
    %1539 = vmatpush1.msra.mxu0 0.0
    %1540 = vmatprep.subr.mxu0 0.0
    %1541 = vmatpush1.msra.mxu0 0.0
    %1542 = vmatprep.subr.mxu0 0.0
    %1543 = vmatpush1.msra.mxu0 0.0
    %1544 = vmatprep.subr.mxu0 0.0
    %1545 = vmatpush1.msra.mxu0 0.0
    %1546 = vmatprep.subr.mxu0 0.0
    %1547 = vmatpush1.msra.mxu0 0.0
    %1548 = vmatprep.subr.mxu0 0.0
    %1549 = vmatpush1.msra.mxu0 0.0
    %1550 = vmatprep.subr.mxu0 0.0
    %1551 = vmatpush1.msra.mxu0 0.0
    %1552 = vmatprep.subr.mxu0 0.0
    %1553 = vmatpush1.msra.mxu0 0.0
    %1554 = vmatprep.subr.mxu0 0.0
    %1555 = vmatpush1.msra.mxu0 0.0
    %1556 = vmatprep.subr.mxu0 0.0
    %1557 = vmatpush1.msra.mxu0 0.0
    %1558 = vmatprep.subr.mxu0 0.0
    %1559 = vmatpush1.msra.mxu0 0.0
    %1560 = vmatprep.subr.mxu0 0.0
    %1561 = vmatpush1.msra.mxu0 0.0
    %1562 = vmatprep.subr.mxu0 0.0
    %1563 = vmatpush1.msra.mxu0 0.0
    %1564 = vmatprep.subr.mxu0 0.0
    %1565 = vmatpush1.msra.mxu0 0.0
    %1566 = vmatprep.subr.mxu0 0.0
    %1567 = vmatpush1.msra.mxu0 0.0
    %1568 = vmatprep.subr.mxu0 0.0
    %1569 = vmatpush1.msra.mxu0 0.0
    %1570 = vmatprep.subr.mxu0 0.0
    %1571 = vmatpush1.msra.mxu0 0.0
    %1572 = vmatprep.subr.mxu0 0.0
    %1573 = vmatpush1.msra.mxu0 0.0
    %1574 = vmatprep.subr.mxu0 0.0
    %1575 = vmatpush1.msra.mxu0 0.0
    %1576 = vmatprep.subr.mxu0 0.0
    %1577 = vmatpush1.msra.mxu0 0.0
    %1578 = vmatprep.subr.mxu0 0.0
    %1579 = vmatpush1.msra.mxu0 0.0
    %1580 = vmatprep.subr.mxu0 0.0
    %1581 = vmatpush1.msra.mxu0 0.0
    %1582 = vmatprep.mubr.f32.mxu0 0.0
    %v1583 = vand.u32 %v511, 4294901760
    %1584 = vmatmul.mubr.f32.gmra.mrb[0].mxu0 %v1583
    %v1585 = vpop.f32.mrb[0].mxu0
    %v1586 = vadd.f32 %v1505, %v1585
    %v1587 = vpop.f32.mrb[0].mxu0
    %1588 = vdwg.mxu0
    %1589 = vmatprep.subr.mxu0 0.0
    %v1590 = vand.u32 %v170, 4294901760
    %v1591 = vsub.f32 %v170, %v1590
    %1592 = vmatpush1.msra.mxu0 %v1591
    %1593 = vmatprep.subr.mxu0 0.0
    %v1594 = vand.u32 %v171, 4294901760
    %v1595 = vsub.f32 %v171, %v1594
    %1596 = vmatpush1.msra.mxu0 %v1595
    %1597 = vmatprep.subr.mxu0 0.0
    %1598 = vmatpush1.msra.mxu0 0.0
    %1599 = vmatprep.subr.mxu0 0.0
    %1600 = vmatpush1.msra.mxu0 0.0
    %1601 = vmatprep.subr.mxu0 0.0
    %1602 = vmatpush1.msra.mxu0 0.0
    %1603 = vmatprep.subr.mxu0 0.0
    %1604 = vmatpush1.msra.mxu0 0.0
    %1605 = vmatprep.subr.mxu0 0.0
    %1606 = vmatpush1.msra.mxu0 0.0
    %1607 = vmatprep.subr.mxu0 0.0
    %1608 = vmatpush1.msra.mxu0 0.0
    %1609 = vmatprep.subr.mxu0 0.0
    %1610 = vmatpush1.msra.mxu0 0.0
    %1611 = vmatprep.subr.mxu0 0.0
    %1612 = vmatpush1.msra.mxu0 0.0
    %1613 = vmatprep.subr.mxu0 0.0
    %1614 = vmatpush1.msra.mxu0 0.0
    %1615 = vmatprep.subr.mxu0 0.0
    %1616 = vmatpush1.msra.mxu0 0.0
    %1617 = vmatprep.subr.mxu0 0.0
    %1618 = vmatpush1.msra.mxu0 0.0
    %1619 = vmatprep.subr.mxu0 0.0
    %1620 = vmatpush1.msra.mxu0 0.0
    %1621 = vmatprep.subr.mxu0 0.0
    %1622 = vmatpush1.msra.mxu0 0.0
    %1623 = vmatprep.subr.mxu0 0.0
    %1624 = vmatpush1.msra.mxu0 0.0
    %1625 = vmatprep.subr.mxu0 0.0
    %1626 = vmatpush1.msra.mxu0 0.0
    %1627 = vmatprep.subr.mxu0 0.0
    %1628 = vmatpush1.msra.mxu0 0.0
    %1629 = vmatprep.subr.mxu0 0.0
    %1630 = vmatpush1.msra.mxu0 0.0
    %1631 = vmatprep.subr.mxu0 0.0
    %1632 = vmatpush1.msra.mxu0 0.0
    %1633 = vmatprep.subr.mxu0 0.0
    %1634 = vmatpush1.msra.mxu0 0.0
    %1635 = vmatprep.subr.mxu0 0.0
    %1636 = vmatpush1.msra.mxu0 0.0
    %1637 = vmatprep.subr.mxu0 0.0
    %1638 = vmatpush1.msra.mxu0 0.0
    %1639 = vmatprep.subr.mxu0 0.0
    %1640 = vmatpush1.msra.mxu0 0.0
    %1641 = vmatprep.subr.mxu0 0.0
    %1642 = vmatpush1.msra.mxu0 0.0
    %1643 = vmatprep.subr.mxu0 0.0
    %1644 = vmatpush1.msra.mxu0 0.0
    %1645 = vmatprep.subr.mxu0 0.0
    %1646 = vmatpush1.msra.mxu0 0.0
    %1647 = vmatprep.subr.mxu0 0.0
    %1648 = vmatpush1.msra.mxu0 0.0
    %1649 = vmatprep.subr.mxu0 0.0
    %1650 = vmatpush1.msra.mxu0 0.0
    %1651 = vmatprep.subr.mxu0 0.0
    %1652 = vmatpush1.msra.mxu0 0.0
    %1653 = vmatprep.subr.mxu0 0.0
    %1654 = vmatpush1.msra.mxu0 0.0
    %1655 = vmatprep.subr.mxu0 0.0
    %1656 = vmatpush1.msra.mxu0 0.0
    %1657 = vmatprep.mubr.f32.mxu0 0.0
    %v1658 = vand.u32 %v511, 4294901760
    %v1659 = vsub.f32 %v511, %v1658
    %1660 = vmatmul.mubr.f32.gmra.mrb[0].mxu0 %v1659
    %v1661 = vpop.f32.mrb[0].mxu0
    %v1662 = vadd.f32 %v1586, %v1661
    %v1663 = vpop.f32.mrb[0].mxu0
    %1664 = vdwg.mxu0
    %1665 = vmatprep.subr.mxu0 0.0
    %v1666 = vand.u32 %v170, 4294901760
    %1667 = vmatpush1.msra.mxu0 %v1666
    %1668 = vmatprep.subr.mxu0 0.0
    %v1669 = vand.u32 %v171, 4294901760
    %1670 = vmatpush1.msra.mxu0 %v1669
    %1671 = vmatprep.subr.mxu0 0.0
    %1672 = vmatpush1.msra.mxu0 0.0
    %1673 = vmatprep.subr.mxu0 0.0
    %1674 = vmatpush1.msra.mxu0 0.0
    %1675 = vmatprep.subr.mxu0 0.0
    %1676 = vmatpush1.msra.mxu0 0.0
    %1677 = vmatprep.subr.mxu0 0.0
    %1678 = vmatpush1.msra.mxu0 0.0
    %1679 = vmatprep.subr.mxu0 0.0
    %1680 = vmatpush1.msra.mxu0 0.0
    %1681 = vmatprep.subr.mxu0 0.0
    %1682 = vmatpush1.msra.mxu0 0.0
    %1683 = vmatprep.subr.mxu0 0.0
    %1684 = vmatpush1.msra.mxu0 0.0
    %1685 = vmatprep.subr.mxu0 0.0
    %1686 = vmatpush1.msra.mxu0 0.0
    %1687 = vmatprep.subr.mxu0 0.0
    %1688 = vmatpush1.msra.mxu0 0.0
    %1689 = vmatprep.subr.mxu0 0.0
    %1690 = vmatpush1.msra.mxu0 0.0
    %1691 = vmatprep.subr.mxu0 0.0
    %1692 = vmatpush1.msra.mxu0 0.0
    %1693 = vmatprep.subr.mxu0 0.0
    %1694 = vmatpush1.msra.mxu0 0.0
    %1695 = vmatprep.subr.mxu0 0.0
    %1696 = vmatpush1.msra.mxu0 0.0
    %1697 = vmatprep.subr.mxu0 0.0
    %1698 = vmatpush1.msra.mxu0 0.0
    %1699 = vmatprep.subr.mxu0 0.0
    %1700 = vmatpush1.msra.mxu0 0.0
    %1701 = vmatprep.subr.mxu0 0.0
    %1702 = vmatpush1.msra.mxu0 0.0
    %1703 = vmatprep.subr.mxu0 0.0
    %1704 = vmatpush1.msra.mxu0 0.0
    %1705 = vmatprep.subr.mxu0 0.0
    %1706 = vmatpush1.msra.mxu0 0.0
    %1707 = vmatprep.subr.mxu0 0.0
    %1708 = vmatpush1.msra.mxu0 0.0
    %1709 = vmatprep.subr.mxu0 0.0
    %1710 = vmatpush1.msra.mxu0 0.0
    %1711 = vmatprep.subr.mxu0 0.0
    %1712 = vmatpush1.msra.mxu0 0.0
    %1713 = vmatprep.subr.mxu0 0.0
    %1714 = vmatpush1.msra.mxu0 0.0
    %1715 = vmatprep.subr.mxu0 0.0
    %1716 = vmatpush1.msra.mxu0 0.0
    %1717 = vmatprep.subr.mxu0 0.0
    %1718 = vmatpush1.msra.mxu0 0.0
    %1719 = vmatprep.subr.mxu0 0.0
    %1720 = vmatpush1.msra.mxu0 0.0
    %1721 = vmatprep.subr.mxu0 0.0
    %1722 = vmatpush1.msra.mxu0 0.0
    %1723 = vmatprep.subr.mxu0 0.0
    %1724 = vmatpush1.msra.mxu0 0.0
    %1725 = vmatprep.subr.mxu0 0.0
    %1726 = vmatpush1.msra.mxu0 0.0
    %1727 = vmatprep.subr.mxu0 0.0
    %1728 = vmatpush1.msra.mxu0 0.0
    %1729 = vmatprep.subr.mxu0 0.0
    %1730 = vmatpush1.msra.mxu0 0.0
    %1731 = vmatprep.mubr.f32.mxu0 0.0
    %v1732 = vand.u32 %v511, 4294901760
    %v1733 = vsub.f32 %v511, %v1732
    %v1734 = vand.u32 %v1733, 4294901760
    %1735 = vmatmul.mubr.f32.gmra.mrb[0].mxu0 %v1734
    %v1736 = vpop.f32.mrb[0].mxu0
    %v1737 = vadd.f32 %v1662, %v1736
    %v1738 = vpop.f32.mrb[0].mxu0
    %1739 = vdwg.mxu0
    %1740 = vmatprep.subr.mxu0 0.0
    %v1741 = vand.u32 %v170, 4294901760
    %v1742 = vsub.f32 %v170, %v1741
    %v1743 = vand.u32 %v1742, 4294901760
    %1744 = vmatpush1.msra.mxu0 %v1743
    %1745 = vmatprep.subr.mxu0 0.0
    %v1746 = vand.u32 %v171, 4294901760
    %v1747 = vsub.f32 %v171, %v1746
    %v1748 = vand.u32 %v1747, 4294901760
    %1749 = vmatpush1.msra.mxu0 %v1748
    %1750 = vmatprep.subr.mxu0 0.0
    %1751 = vmatpush1.msra.mxu0 0.0
    %1752 = vmatprep.subr.mxu0 0.0
    %1753 = vmatpush1.msra.mxu0 0.0
    %1754 = vmatprep.subr.mxu0 0.0
    %1755 = vmatpush1.msra.mxu0 0.0
    %1756 = vmatprep.subr.mxu0 0.0
    %1757 = vmatpush1.msra.mxu0 0.0
    %1758 = vmatprep.subr.mxu0 0.0
    %1759 = vmatpush1.msra.mxu0 0.0
    %1760 = vmatprep.subr.mxu0 0.0
    %1761 = vmatpush1.msra.mxu0 0.0
    %1762 = vmatprep.subr.mxu0 0.0
    %1763 = vmatpush1.msra.mxu0 0.0
    %1764 = vmatprep.subr.mxu0 0.0
    %1765 = vmatpush1.msra.mxu0 0.0
    %1766 = vmatprep.subr.mxu0 0.0
    %1767 = vmatpush1.msra.mxu0 0.0
    %1768 = vmatprep.subr.mxu0 0.0
    %1769 = vmatpush1.msra.mxu0 0.0
    %1770 = vmatprep.subr.mxu0 0.0
    %1771 = vmatpush1.msra.mxu0 0.0
    %1772 = vmatprep.subr.mxu0 0.0
    %1773 = vmatpush1.msra.mxu0 0.0
    %1774 = vmatprep.subr.mxu0 0.0
    %1775 = vmatpush1.msra.mxu0 0.0
    %1776 = vmatprep.subr.mxu0 0.0
    %1777 = vmatpush1.msra.mxu0 0.0
    %1778 = vmatprep.subr.mxu0 0.0
    %1779 = vmatpush1.msra.mxu0 0.0
    %1780 = vmatprep.subr.mxu0 0.0
    %1781 = vmatpush1.msra.mxu0 0.0
    %1782 = vmatprep.subr.mxu0 0.0
    %1783 = vmatpush1.msra.mxu0 0.0
    %1784 = vmatprep.subr.mxu0 0.0
    %1785 = vmatpush1.msra.mxu0 0.0
    %1786 = vmatprep.subr.mxu0 0.0
    %1787 = vmatpush1.msra.mxu0 0.0
    %1788 = vmatprep.subr.mxu0 0.0
    %1789 = vmatpush1.msra.mxu0 0.0
    %1790 = vmatprep.subr.mxu0 0.0
    %1791 = vmatpush1.msra.mxu0 0.0
    %1792 = vmatprep.subr.mxu0 0.0
    %1793 = vmatpush1.msra.mxu0 0.0
    %1794 = vmatprep.subr.mxu0 0.0
    %1795 = vmatpush1.msra.mxu0 0.0
    %1796 = vmatprep.subr.mxu0 0.0
    %1797 = vmatpush1.msra.mxu0 0.0
    %1798 = vmatprep.subr.mxu0 0.0
    %1799 = vmatpush1.msra.mxu0 0.0
    %1800 = vmatprep.subr.mxu0 0.0
    %1801 = vmatpush1.msra.mxu0 0.0
    %1802 = vmatprep.subr.mxu0 0.0
    %1803 = vmatpush1.msra.mxu0 0.0
    %1804 = vmatprep.subr.mxu0 0.0
    %1805 = vmatpush1.msra.mxu0 0.0
    %1806 = vmatprep.subr.mxu0 0.0
    %1807 = vmatpush1.msra.mxu0 0.0
    %1808 = vmatprep.subr.mxu0 0.0
    %1809 = vmatpush1.msra.mxu0 0.0
    %1810 = vmatprep.mubr.f32.mxu0 0.0
    %v1811 = vand.u32 %v511, 4294901760
    %1812 = vmatmul.mubr.f32.gmra.mrb[0].mxu0 %v1811
    %v1813 = vpop.f32.mrb[0].mxu0
    %v1814 = vadd.f32 %v1737, %v1813
    %v1815 = vpop.f32.mrb[0].mxu0
    %1816 = vdwg.mxu0
    %1817 = vmatprep.subr.mxu0 0.0
    %v1818 = vand.u32 %v170, 4294901760
    %1819 = vmatpush1.msra.mxu0 %v1818
    %1820 = vmatprep.subr.mxu0 0.0
    %v1821 = vand.u32 %v171, 4294901760
    %1822 = vmatpush1.msra.mxu0 %v1821
    %1823 = vmatprep.subr.mxu0 0.0
    %1824 = vmatpush1.msra.mxu0 0.0
    %1825 = vmatprep.subr.mxu0 0.0
    %1826 = vmatpush1.msra.mxu0 0.0
    %1827 = vmatprep.subr.mxu0 0.0
    %1828 = vmatpush1.msra.mxu0 0.0
    %1829 = vmatprep.subr.mxu0 0.0
    %1830 = vmatpush1.msra.mxu0 0.0
    %1831 = vmatprep.subr.mxu0 0.0
    %1832 = vmatpush1.msra.mxu0 0.0
    %1833 = vmatprep.subr.mxu0 0.0
    %1834 = vmatpush1.msra.mxu0 0.0
    %1835 = vmatprep.subr.mxu0 0.0
    %1836 = vmatpush1.msra.mxu0 0.0
    %1837 = vmatprep.subr.mxu0 0.0
    %1838 = vmatpush1.msra.mxu0 0.0
    %1839 = vmatprep.subr.mxu0 0.0
    %1840 = vmatpush1.msra.mxu0 0.0
    %1841 = vmatprep.subr.mxu0 0.0
    %1842 = vmatpush1.msra.mxu0 0.0
    %1843 = vmatprep.subr.mxu0 0.0
    %1844 = vmatpush1.msra.mxu0 0.0
    %1845 = vmatprep.subr.mxu0 0.0
    %1846 = vmatpush1.msra.mxu0 0.0
    %1847 = vmatprep.subr.mxu0 0.0
    %1848 = vmatpush1.msra.mxu0 0.0
    %1849 = vmatprep.subr.mxu0 0.0
    %1850 = vmatpush1.msra.mxu0 0.0
    %1851 = vmatprep.subr.mxu0 0.0
    %1852 = vmatpush1.msra.mxu0 0.0
    %1853 = vmatprep.subr.mxu0 0.0
    %1854 = vmatpush1.msra.mxu0 0.0
    %1855 = vmatprep.subr.mxu0 0.0
    %1856 = vmatpush1.msra.mxu0 0.0
    %1857 = vmatprep.subr.mxu0 0.0
    %1858 = vmatpush1.msra.mxu0 0.0
    %1859 = vmatprep.subr.mxu0 0.0
    %1860 = vmatpush1.msra.mxu0 0.0
    %1861 = vmatprep.subr.mxu0 0.0
    %1862 = vmatpush1.msra.mxu0 0.0
    %1863 = vmatprep.subr.mxu0 0.0
    %1864 = vmatpush1.msra.mxu0 0.0
    %1865 = vmatprep.subr.mxu0 0.0
    %1866 = vmatpush1.msra.mxu0 0.0
    %1867 = vmatprep.subr.mxu0 0.0
    %1868 = vmatpush1.msra.mxu0 0.0
    %1869 = vmatprep.subr.mxu0 0.0
    %1870 = vmatpush1.msra.mxu0 0.0
    %1871 = vmatprep.subr.mxu0 0.0
    %1872 = vmatpush1.msra.mxu0 0.0
    %1873 = vmatprep.subr.mxu0 0.0
    %1874 = vmatpush1.msra.mxu0 0.0
    %1875 = vmatprep.subr.mxu0 0.0
    %1876 = vmatpush1.msra.mxu0 0.0
    %1877 = vmatprep.subr.mxu0 0.0
    %1878 = vmatpush1.msra.mxu0 0.0
    %1879 = vmatprep.subr.mxu0 0.0
    %1880 = vmatpush1.msra.mxu0 0.0
    %1881 = vmatprep.subr.mxu0 0.0
    %1882 = vmatpush1.msra.mxu0 0.0
    %1883 = vmatprep.mubr.f32.mxu0 0.0
    %v1884 = vand.u32 %v511, 4294901760
    %1885 = vmatmul.mubr.f32.gmra.mrb[0].mxu0 %v1884
    %v1886 = vpop.f32.mrb[0].mxu0
    %v1887 = vadd.f32 %v1814, %v1886
    %v1888 = vpop.f32.mrb[0].mxu0
    %1889 = vdwg.mxu0
    %1890 = vmatprep.subr.mxu0 0.0
    %v1891 = vand.u32 %v172, 4294901760
    %1892 = vmatpush1.msra.mxu0 %v1891
    %1893 = vmatprep.subr.mxu0 0.0
    %v1894 = vand.u32 %v173, 4294901760
    %1895 = vmatpush1.msra.mxu0 %v1894
    %1896 = vmatprep.subr.mxu0 0.0
    %1897 = vmatpush1.msra.mxu0 0.0
    %1898 = vmatprep.subr.mxu0 0.0
    %1899 = vmatpush1.msra.mxu0 0.0
    %1900 = vmatprep.subr.mxu0 0.0
    %1901 = vmatpush1.msra.mxu0 0.0
    %1902 = vmatprep.subr.mxu0 0.0
    %1903 = vmatpush1.msra.mxu0 0.0
    %1904 = vmatprep.subr.mxu0 0.0
    %1905 = vmatpush1.msra.mxu0 0.0
    %1906 = vmatprep.subr.mxu0 0.0
    %1907 = vmatpush1.msra.mxu0 0.0
    %1908 = vmatprep.subr.mxu0 0.0
    %1909 = vmatpush1.msra.mxu0 0.0
    %1910 = vmatprep.subr.mxu0 0.0
    %1911 = vmatpush1.msra.mxu0 0.0
    %1912 = vmatprep.subr.mxu0 0.0
    %1913 = vmatpush1.msra.mxu0 0.0
    %1914 = vmatprep.subr.mxu0 0.0
    %1915 = vmatpush1.msra.mxu0 0.0
    %1916 = vmatprep.subr.mxu0 0.0
    %1917 = vmatpush1.msra.mxu0 0.0
    %1918 = vmatprep.subr.mxu0 0.0
    %1919 = vmatpush1.msra.mxu0 0.0
    %1920 = vmatprep.subr.mxu0 0.0
    %1921 = vmatpush1.msra.mxu0 0.0
    %1922 = vmatprep.subr.mxu0 0.0
    %1923 = vmatpush1.msra.mxu0 0.0
    %1924 = vmatprep.subr.mxu0 0.0
    %1925 = vmatpush1.msra.mxu0 0.0
    %1926 = vmatprep.subr.mxu0 0.0
    %1927 = vmatpush1.msra.mxu0 0.0
    %1928 = vmatprep.subr.mxu0 0.0
    %1929 = vmatpush1.msra.mxu0 0.0
    %1930 = vmatprep.subr.mxu0 0.0
    %1931 = vmatpush1.msra.mxu0 0.0
    %1932 = vmatprep.subr.mxu0 0.0
    %1933 = vmatpush1.msra.mxu0 0.0
    %1934 = vmatprep.subr.mxu0 0.0
    %1935 = vmatpush1.msra.mxu0 0.0
    %1936 = vmatprep.subr.mxu0 0.0
    %1937 = vmatpush1.msra.mxu0 0.0
    %1938 = vmatprep.subr.mxu0 0.0
    %1939 = vmatpush1.msra.mxu0 0.0
    %1940 = vmatprep.subr.mxu0 0.0
    %1941 = vmatpush1.msra.mxu0 0.0
    %1942 = vmatprep.subr.mxu0 0.0
    %1943 = vmatpush1.msra.mxu0 0.0
    %1944 = vmatprep.subr.mxu0 0.0
    %1945 = vmatpush1.msra.mxu0 0.0
    %1946 = vmatprep.subr.mxu0 0.0
    %1947 = vmatpush1.msra.mxu0 0.0
    %1948 = vmatprep.subr.mxu0 0.0
    %1949 = vmatpush1.msra.mxu0 0.0
    %1950 = vmatprep.subr.mxu0 0.0
    %1951 = vmatpush1.msra.mxu0 0.0
    %1952 = vmatprep.subr.mxu0 0.0
    %1953 = vmatpush1.msra.mxu0 0.0
    %1954 = vmatprep.subr.mxu0 0.0
    %1955 = vmatpush1.msra.mxu0 0.0
    %1956 = vmatprep.mubr.f32.mxu0 0.0
    %v1957 = vand.u32 %v511, 4294901760
    %v1958 = vsub.f32 %v511, %v1957
    %v1959 = vand.u32 %v1958, 4294901760
    %v1960 = vsub.f32 %v1958, %v1959
    %v1961 = vand.u32 %v1960, 4294901760
    %1962 = vmatmul.mubr.f32.gmra.mrb[0].mxu0 %v1961
    %v1963 = vpop.f32.mrb[0].mxu0
    %v1964 = vadd.f32 0.0, %v1963
    %v1965 = vpop.f32.mrb[0].mxu0
    %1966 = vdwg.mxu0
    %1967 = vmatprep.subr.mxu0 0.0
    %v1968 = vand.u32 %v172, 4294901760
    %v1969 = vsub.f32 %v172, %v1968
    %v1970 = vand.u32 %v1969, 4294901760
    %v1971 = vsub.f32 %v1969, %v1970
    %v1972 = vand.u32 %v1971, 4294901760
    %1973 = vmatpush1.msra.mxu0 %v1972
    %1974 = vmatprep.subr.mxu0 0.0
    %v1975 = vand.u32 %v173, 4294901760
    %v1976 = vsub.f32 %v173, %v1975
    %v1977 = vand.u32 %v1976, 4294901760
    %v1978 = vsub.f32 %v1976, %v1977
    %v1979 = vand.u32 %v1978, 4294901760
    %1980 = vmatpush1.msra.mxu0 %v1979
    %1981 = vmatprep.subr.mxu0 0.0
    %1982 = vmatpush1.msra.mxu0 0.0
    %1983 = vmatprep.subr.mxu0 0.0
    %1984 = vmatpush1.msra.mxu0 0.0
    %1985 = vmatprep.subr.mxu0 0.0
    %1986 = vmatpush1.msra.mxu0 0.0
    %1987 = vmatprep.subr.mxu0 0.0
    %1988 = vmatpush1.msra.mxu0 0.0
    %1989 = vmatprep.subr.mxu0 0.0
    %1990 = vmatpush1.msra.mxu0 0.0
    %1991 = vmatprep.subr.mxu0 0.0
    %1992 = vmatpush1.msra.mxu0 0.0
    %1993 = vmatprep.subr.mxu0 0.0
    %1994 = vmatpush1.msra.mxu0 0.0
    %1995 = vmatprep.subr.mxu0 0.0
    %1996 = vmatpush1.msra.mxu0 0.0
    %1997 = vmatprep.subr.mxu0 0.0
    %1998 = vmatpush1.msra.mxu0 0.0
    %1999 = vmatprep.subr.mxu0 0.0
    %2000 = vmatpush1.msra.mxu0 0.0
    %2001 = vmatprep.subr.mxu0 0.0
    %2002 = vmatpush1.msra.mxu0 0.0
    %2003 = vmatprep.subr.mxu0 0.0
    %2004 = vmatpush1.msra.mxu0 0.0
    %2005 = vmatprep.subr.mxu0 0.0
    %2006 = vmatpush1.msra.mxu0 0.0
    %2007 = vmatprep.subr.mxu0 0.0
    %2008 = vmatpush1.msra.mxu0 0.0
    %2009 = vmatprep.subr.mxu0 0.0
    %2010 = vmatpush1.msra.mxu0 0.0
    %2011 = vmatprep.subr.mxu0 0.0
    %2012 = vmatpush1.msra.mxu0 0.0
    %2013 = vmatprep.subr.mxu0 0.0
    %2014 = vmatpush1.msra.mxu0 0.0
    %2015 = vmatprep.subr.mxu0 0.0
    %2016 = vmatpush1.msra.mxu0 0.0
    %2017 = vmatprep.subr.mxu0 0.0
    %2018 = vmatpush1.msra.mxu0 0.0
    %2019 = vmatprep.subr.mxu0 0.0
    %2020 = vmatpush1.msra.mxu0 0.0
    %2021 = vmatprep.subr.mxu0 0.0
    %2022 = vmatpush1.msra.mxu0 0.0
    %2023 = vmatprep.subr.mxu0 0.0
    %2024 = vmatpush1.msra.mxu0 0.0
    %2025 = vmatprep.subr.mxu0 0.0
    %2026 = vmatpush1.msra.mxu0 0.0
    %2027 = vmatprep.subr.mxu0 0.0
    %2028 = vmatpush1.msra.mxu0 0.0
    %2029 = vmatprep.subr.mxu0 0.0
    %2030 = vmatpush1.msra.mxu0 0.0
    %2031 = vmatprep.subr.mxu0 0.0
    %2032 = vmatpush1.msra.mxu0 0.0
    %2033 = vmatprep.subr.mxu0 0.0
    %2034 = vmatpush1.msra.mxu0 0.0
    %2035 = vmatprep.subr.mxu0 0.0
    %2036 = vmatpush1.msra.mxu0 0.0
    %2037 = vmatprep.subr.mxu0 0.0
    %2038 = vmatpush1.msra.mxu0 0.0
    %2039 = vmatprep.subr.mxu0 0.0
    %2040 = vmatpush1.msra.mxu0 0.0
    %2041 = vmatprep.mubr.f32.mxu0 0.0
    %v2042 = vand.u32 %v511, 4294901760
    %2043 = vmatmul.mubr.f32.gmra.mrb[0].mxu0 %v2042
    %v2044 = vpop.f32.mrb[0].mxu0
    %v2045 = vadd.f32 %v1964, %v2044
    %v2046 = vpop.f32.mrb[0].mxu0
    %2047 = vdwg.mxu0
    %2048 = vmatprep.subr.mxu0 0.0
    %v2049 = vand.u32 %v172, 4294901760
    %v2050 = vsub.f32 %v172, %v2049
    %2051 = vmatpush1.msra.mxu0 %v2050
    %2052 = vmatprep.subr.mxu0 0.0
    %v2053 = vand.u32 %v173, 4294901760
    %v2054 = vsub.f32 %v173, %v2053
    %2055 = vmatpush1.msra.mxu0 %v2054
    %2056 = vmatprep.subr.mxu0 0.0
    %2057 = vmatpush1.msra.mxu0 0.0
    %2058 = vmatprep.subr.mxu0 0.0
    %2059 = vmatpush1.msra.mxu0 0.0
    %2060 = vmatprep.subr.mxu0 0.0
    %2061 = vmatpush1.msra.mxu0 0.0
    %2062 = vmatprep.subr.mxu0 0.0
    %2063 = vmatpush1.msra.mxu0 0.0
    %2064 = vmatprep.subr.mxu0 0.0
    %2065 = vmatpush1.msra.mxu0 0.0
    %2066 = vmatprep.subr.mxu0 0.0
    %2067 = vmatpush1.msra.mxu0 0.0
    %2068 = vmatprep.subr.mxu0 0.0
    %2069 = vmatpush1.msra.mxu0 0.0
    %2070 = vmatprep.subr.mxu0 0.0
    %2071 = vmatpush1.msra.mxu0 0.0
    %2072 = vmatprep.subr.mxu0 0.0
    %2073 = vmatpush1.msra.mxu0 0.0
    %2074 = vmatprep.subr.mxu0 0.0
    %2075 = vmatpush1.msra.mxu0 0.0
    %2076 = vmatprep.subr.mxu0 0.0
    %2077 = vmatpush1.msra.mxu0 0.0
    %2078 = vmatprep.subr.mxu0 0.0
    %2079 = vmatpush1.msra.mxu0 0.0
    %2080 = vmatprep.subr.mxu0 0.0
    %2081 = vmatpush1.msra.mxu0 0.0
    %2082 = vmatprep.subr.mxu0 0.0
    %2083 = vmatpush1.msra.mxu0 0.0
    %2084 = vmatprep.subr.mxu0 0.0
    %2085 = vmatpush1.msra.mxu0 0.0
    %2086 = vmatprep.subr.mxu0 0.0
    %2087 = vmatpush1.msra.mxu0 0.0
    %2088 = vmatprep.subr.mxu0 0.0
    %2089 = vmatpush1.msra.mxu0 0.0
    %2090 = vmatprep.subr.mxu0 0.0
    %2091 = vmatpush1.msra.mxu0 0.0
    %2092 = vmatprep.subr.mxu0 0.0
    %2093 = vmatpush1.msra.mxu0 0.0
    %2094 = vmatprep.subr.mxu0 0.0
    %2095 = vmatpush1.msra.mxu0 0.0
    %2096 = vmatprep.subr.mxu0 0.0
    %2097 = vmatpush1.msra.mxu0 0.0
    %2098 = vmatprep.subr.mxu0 0.0
    %2099 = vmatpush1.msra.mxu0 0.0
    %2100 = vmatprep.subr.mxu0 0.0
    %2101 = vmatpush1.msra.mxu0 0.0
    %2102 = vmatprep.subr.mxu0 0.0
    %2103 = vmatpush1.msra.mxu0 0.0
    %2104 = vmatprep.subr.mxu0 0.0
    %2105 = vmatpush1.msra.mxu0 0.0
    %2106 = vmatprep.subr.mxu0 0.0
    %2107 = vmatpush1.msra.mxu0 0.0
    %2108 = vmatprep.subr.mxu0 0.0
    %2109 = vmatpush1.msra.mxu0 0.0
    %2110 = vmatprep.subr.mxu0 0.0
    %2111 = vmatpush1.msra.mxu0 0.0
    %2112 = vmatprep.subr.mxu0 0.0
    %2113 = vmatpush1.msra.mxu0 0.0
    %2114 = vmatprep.subr.mxu0 0.0
    %2115 = vmatpush1.msra.mxu0 0.0
    %2116 = vmatprep.mubr.f32.mxu0 0.0
    %v2117 = vand.u32 %v511, 4294901760
    %v2118 = vsub.f32 %v511, %v2117
    %2119 = vmatmul.mubr.f32.gmra.mrb[0].mxu0 %v2118
    %v2120 = vpop.f32.mrb[0].mxu0
    %v2121 = vadd.f32 %v2045, %v2120
    %v2122 = vpop.f32.mrb[0].mxu0
    %2123 = vdwg.mxu0
    %2124 = vmatprep.subr.mxu0 0.0
    %v2125 = vand.u32 %v172, 4294901760
    %2126 = vmatpush1.msra.mxu0 %v2125
    %2127 = vmatprep.subr.mxu0 0.0
    %v2128 = vand.u32 %v173, 4294901760
    %2129 = vmatpush1.msra.mxu0 %v2128
    %2130 = vmatprep.subr.mxu0 0.0
    %2131 = vmatpush1.msra.mxu0 0.0
    %2132 = vmatprep.subr.mxu0 0.0
    %2133 = vmatpush1.msra.mxu0 0.0
    %2134 = vmatprep.subr.mxu0 0.0
    %2135 = vmatpush1.msra.mxu0 0.0
    %2136 = vmatprep.subr.mxu0 0.0
    %2137 = vmatpush1.msra.mxu0 0.0
    %2138 = vmatprep.subr.mxu0 0.0
    %2139 = vmatpush1.msra.mxu0 0.0
    %2140 = vmatprep.subr.mxu0 0.0
    %2141 = vmatpush1.msra.mxu0 0.0
    %2142 = vmatprep.subr.mxu0 0.0
    %2143 = vmatpush1.msra.mxu0 0.0
    %2144 = vmatprep.subr.mxu0 0.0
    %2145 = vmatpush1.msra.mxu0 0.0
    %2146 = vmatprep.subr.mxu0 0.0
    %2147 = vmatpush1.msra.mxu0 0.0
    %2148 = vmatprep.subr.mxu0 0.0
    %2149 = vmatpush1.msra.mxu0 0.0
    %2150 = vmatprep.subr.mxu0 0.0
    %2151 = vmatpush1.msra.mxu0 0.0
    %2152 = vmatprep.subr.mxu0 0.0
    %2153 = vmatpush1.msra.mxu0 0.0
    %2154 = vmatprep.subr.mxu0 0.0
    %2155 = vmatpush1.msra.mxu0 0.0
    %2156 = vmatprep.subr.mxu0 0.0
    %2157 = vmatpush1.msra.mxu0 0.0
    %2158 = vmatprep.subr.mxu0 0.0
    %2159 = vmatpush1.msra.mxu0 0.0
    %2160 = vmatprep.subr.mxu0 0.0
    %2161 = vmatpush1.msra.mxu0 0.0
    %2162 = vmatprep.subr.mxu0 0.0
    %2163 = vmatpush1.msra.mxu0 0.0
    %2164 = vmatprep.subr.mxu0 0.0
    %2165 = vmatpush1.msra.mxu0 0.0
    %2166 = vmatprep.subr.mxu0 0.0
    %2167 = vmatpush1.msra.mxu0 0.0
    %2168 = vmatprep.subr.mxu0 0.0
    %2169 = vmatpush1.msra.mxu0 0.0
    %2170 = vmatprep.subr.mxu0 0.0
    %2171 = vmatpush1.msra.mxu0 0.0
    %2172 = vmatprep.subr.mxu0 0.0
    %2173 = vmatpush1.msra.mxu0 0.0
    %2174 = vmatprep.subr.mxu0 0.0
    %2175 = vmatpush1.msra.mxu0 0.0
    %2176 = vmatprep.subr.mxu0 0.0
    %2177 = vmatpush1.msra.mxu0 0.0
    %2178 = vmatprep.subr.mxu0 0.0
    %2179 = vmatpush1.msra.mxu0 0.0
    %2180 = vmatprep.subr.mxu0 0.0
    %2181 = vmatpush1.msra.mxu0 0.0
    %2182 = vmatprep.subr.mxu0 0.0
    %2183 = vmatpush1.msra.mxu0 0.0
    %2184 = vmatprep.subr.mxu0 0.0
    %2185 = vmatpush1.msra.mxu0 0.0
    %2186 = vmatprep.subr.mxu0 0.0
    %2187 = vmatpush1.msra.mxu0 0.0
    %2188 = vmatprep.subr.mxu0 0.0
    %2189 = vmatpush1.msra.mxu0 0.0
    %2190 = vmatprep.mubr.f32.mxu0 0.0
    %v2191 = vand.u32 %v511, 4294901760
    %v2192 = vsub.f32 %v511, %v2191
    %v2193 = vand.u32 %v2192, 4294901760
    %2194 = vmatmul.mubr.f32.gmra.mrb[0].mxu0 %v2193
    %v2195 = vpop.f32.mrb[0].mxu0
    %v2196 = vadd.f32 %v2121, %v2195
    %v2197 = vpop.f32.mrb[0].mxu0
    %2198 = vdwg.mxu0
    %2199 = vmatprep.subr.mxu0 0.0
    %v2200 = vand.u32 %v172, 4294901760
    %v2201 = vsub.f32 %v172, %v2200
    %v2202 = vand.u32 %v2201, 4294901760
    %2203 = vmatpush1.msra.mxu0 %v2202
    %2204 = vmatprep.subr.mxu0 0.0
    %v2205 = vand.u32 %v173, 4294901760
    %v2206 = vsub.f32 %v173, %v2205
    %v2207 = vand.u32 %v2206, 4294901760
    %2208 = vmatpush1.msra.mxu0 %v2207
    %2209 = vmatprep.subr.mxu0 0.0
    %2210 = vmatpush1.msra.mxu0 0.0
    %2211 = vmatprep.subr.mxu0 0.0
    %2212 = vmatpush1.msra.mxu0 0.0
    %2213 = vmatprep.subr.mxu0 0.0
    %2214 = vmatpush1.msra.mxu0 0.0
    %2215 = vmatprep.subr.mxu0 0.0
    %2216 = vmatpush1.msra.mxu0 0.0
    %2217 = vmatprep.subr.mxu0 0.0
    %2218 = vmatpush1.msra.mxu0 0.0
    %2219 = vmatprep.subr.mxu0 0.0
    %2220 = vmatpush1.msra.mxu0 0.0
    %2221 = vmatprep.subr.mxu0 0.0
    %2222 = vmatpush1.msra.mxu0 0.0
    %2223 = vmatprep.subr.mxu0 0.0
    %2224 = vmatpush1.msra.mxu0 0.0
    %2225 = vmatprep.subr.mxu0 0.0
    %2226 = vmatpush1.msra.mxu0 0.0
    %2227 = vmatprep.subr.mxu0 0.0
    %2228 = vmatpush1.msra.mxu0 0.0
    %2229 = vmatprep.subr.mxu0 0.0
    %2230 = vmatpush1.msra.mxu0 0.0
    %2231 = vmatprep.subr.mxu0 0.0
    %2232 = vmatpush1.msra.mxu0 0.0
    %2233 = vmatprep.subr.mxu0 0.0
    %2234 = vmatpush1.msra.mxu0 0.0
    %2235 = vmatprep.subr.mxu0 0.0
    %2236 = vmatpush1.msra.mxu0 0.0
    %2237 = vmatprep.subr.mxu0 0.0
    %2238 = vmatpush1.msra.mxu0 0.0
    %2239 = vmatprep.subr.mxu0 0.0
    %2240 = vmatpush1.msra.mxu0 0.0
    %2241 = vmatprep.subr.mxu0 0.0
    %2242 = vmatpush1.msra.mxu0 0.0
    %2243 = vmatprep.subr.mxu0 0.0
    %2244 = vmatpush1.msra.mxu0 0.0
    %2245 = vmatprep.subr.mxu0 0.0
    %2246 = vmatpush1.msra.mxu0 0.0
    %2247 = vmatprep.subr.mxu0 0.0
    %2248 = vmatpush1.msra.mxu0 0.0
    %2249 = vmatprep.subr.mxu0 0.0
    %2250 = vmatpush1.msra.mxu0 0.0
    %2251 = vmatprep.subr.mxu0 0.0
    %2252 = vmatpush1.msra.mxu0 0.0
    %2253 = vmatprep.subr.mxu0 0.0
    %2254 = vmatpush1.msra.mxu0 0.0
    %2255 = vmatprep.subr.mxu0 0.0
    %2256 = vmatpush1.msra.mxu0 0.0
    %2257 = vmatprep.subr.mxu0 0.0
    %2258 = vmatpush1.msra.mxu0 0.0
    %2259 = vmatprep.subr.mxu0 0.0
    %2260 = vmatpush1.msra.mxu0 0.0
    %2261 = vmatprep.subr.mxu0 0.0
    %2262 = vmatpush1.msra.mxu0 0.0
    %2263 = vmatprep.subr.mxu0 0.0
    %2264 = vmatpush1.msra.mxu0 0.0
    %2265 = vmatprep.subr.mxu0 0.0
    %2266 = vmatpush1.msra.mxu0 0.0
    %2267 = vmatprep.subr.mxu0 0.0
    %2268 = vmatpush1.msra.mxu0 0.0
    %2269 = vmatprep.mubr.f32.mxu0 0.0
    %v2270 = vand.u32 %v511, 4294901760
    %2271 = vmatmul.mubr.f32.gmra.mrb[0].mxu0 %v2270
    %v2272 = vpop.f32.mrb[0].mxu0
    %v2273 = vadd.f32 %v2196, %v2272
    %v2274 = vpop.f32.mrb[0].mxu0
    %2275 = vdwg.mxu0
    %2276 = vmatprep.subr.mxu0 0.0
    %v2277 = vand.u32 %v172, 4294901760
    %2278 = vmatpush1.msra.mxu0 %v2277
    %2279 = vmatprep.subr.mxu0 0.0
    %v2280 = vand.u32 %v173, 4294901760
    %2281 = vmatpush1.msra.mxu0 %v2280
    %2282 = vmatprep.subr.mxu0 0.0
    %2283 = vmatpush1.msra.mxu0 0.0
    %2284 = vmatprep.subr.mxu0 0.0
    %2285 = vmatpush1.msra.mxu0 0.0
    %2286 = vmatprep.subr.mxu0 0.0
    %2287 = vmatpush1.msra.mxu0 0.0
    %2288 = vmatprep.subr.mxu0 0.0
    %2289 = vmatpush1.msra.mxu0 0.0
    %2290 = vmatprep.subr.mxu0 0.0
    %2291 = vmatpush1.msra.mxu0 0.0
    %2292 = vmatprep.subr.mxu0 0.0
    %2293 = vmatpush1.msra.mxu0 0.0
    %2294 = vmatprep.subr.mxu0 0.0
    %2295 = vmatpush1.msra.mxu0 0.0
    %2296 = vmatprep.subr.mxu0 0.0
    %2297 = vmatpush1.msra.mxu0 0.0
    %2298 = vmatprep.subr.mxu0 0.0
    %2299 = vmatpush1.msra.mxu0 0.0
    %2300 = vmatprep.subr.mxu0 0.0
    %2301 = vmatpush1.msra.mxu0 0.0
    %2302 = vmatprep.subr.mxu0 0.0
    %2303 = vmatpush1.msra.mxu0 0.0
    %2304 = vmatprep.subr.mxu0 0.0
    %2305 = vmatpush1.msra.mxu0 0.0
    %2306 = vmatprep.subr.mxu0 0.0
    %2307 = vmatpush1.msra.mxu0 0.0
    %2308 = vmatprep.subr.mxu0 0.0
    %2309 = vmatpush1.msra.mxu0 0.0
    %2310 = vmatprep.subr.mxu0 0.0
    %2311 = vmatpush1.msra.mxu0 0.0
    %2312 = vmatprep.subr.mxu0 0.0
    %2313 = vmatpush1.msra.mxu0 0.0
    %2314 = vmatprep.subr.mxu0 0.0
    %2315 = vmatpush1.msra.mxu0 0.0
    %2316 = vmatprep.subr.mxu0 0.0
    %2317 = vmatpush1.msra.mxu0 0.0
    %2318 = vmatprep.subr.mxu0 0.0
    %2319 = vmatpush1.msra.mxu0 0.0
    %2320 = vmatprep.subr.mxu0 0.0
    %2321 = vmatpush1.msra.mxu0 0.0
    %2322 = vmatprep.subr.mxu0 0.0
    %2323 = vmatpush1.msra.mxu0 0.0
    %2324 = vmatprep.subr.mxu0 0.0
    %2325 = vmatpush1.msra.mxu0 0.0
    %2326 = vmatprep.subr.mxu0 0.0
    %2327 = vmatpush1.msra.mxu0 0.0
    %2328 = vmatprep.subr.mxu0 0.0
    %2329 = vmatpush1.msra.mxu0 0.0
    %2330 = vmatprep.subr.mxu0 0.0
    %2331 = vmatpush1.msra.mxu0 0.0
    %2332 = vmatprep.subr.mxu0 0.0
    %2333 = vmatpush1.msra.mxu0 0.0
    %2334 = vmatprep.subr.mxu0 0.0
    %2335 = vmatpush1.msra.mxu0 0.0
    %2336 = vmatprep.subr.mxu0 0.0
    %2337 = vmatpush1.msra.mxu0 0.0
    %2338 = vmatprep.subr.mxu0 0.0
    %2339 = vmatpush1.msra.mxu0 0.0
    %2340 = vmatprep.subr.mxu0 0.0
    %2341 = vmatpush1.msra.mxu0 0.0
    %2342 = vmatprep.mubr.f32.mxu0 0.0
    %v2343 = vand.u32 %v511, 4294901760
    %2344 = vmatmul.mubr.f32.gmra.mrb[0].mxu0 %v2343
    %v2345 = vpop.f32.mrb[0].mxu0
    %v2346 = vadd.f32 %v2273, %v2345
    %v2347 = vpop.f32.mrb[0].mxu0
    %2348 = vdwg.mxu0
    %v2349 = vld [vmem:[%s3] sm:$0x1]
    %v2350 = vlaneseq
    %v2351 = vshrl.u32 %v2350, 7
    %v2352 = vsub.s32 0, %v2351
    %v2353 = vrot.slane %v2349, %v2352
    %v2354 = vadd.f32 %v969, %v2353
    %v2355 = vadd.f32 %v1428, %v2353
    %v2356 = vld [vmem:[%s3 + $0x1] sm:$0x1]
    %v2357 = vld [vmem:[%s3 + $0x2] sm:$0x1]
    %v2358 = vsel %vm179, %v2354, 0.0
    %v2359 = vsel %vm179, %v2355, 0.0
    %v2360 = vadd.f32 %v2358, %v2359
    %v2361 = vrot.slane %v2360, 4
    %v2362 = vadd.f32 %v2360, %v2361
    %v2363 = vrot.slane %v2362, 2
    %v2364 = vadd.f32 %v2362, %v2363
    %v2365 = vrot.slane %v2364, 1
    %v2366 = vadd.f32 %v2364, %v2365
    %v2367 = vmul.f32 %v2354, %v2354
    %v2368 = vmul.f32 %v2355, %v2355
    %v2369 = vsel %vm179, %v2367, 0.0
    %v2370 = vsel %vm179, %v2368, 0.0
    %v2371 = vadd.f32 %v2369, %v2370
    %v2372 = vrot.slane %v2371, 4
    %v2373 = vadd.f32 %v2371, %v2372
    %v2374 = vrot.slane %v2373, 2
    %v2375 = vadd.f32 %v2373, %v2374
    %v2376 = vrot.slane %v2375, 1
    %v2377 = vadd.f32 %v2375, %v2376
    %v2378 = vmul.f32 %v2366, 0.0625
    %v2379 = vmul.f32 %v2377, 0.0625
    %v2380 = vmul.f32 %v2378, %v2378
    %v2381 = vsub.f32 %v2379, %v2380
    %v2382 = vadd.f32 %v2381, 1e-05
    %v2383 = vrsqrt.pop %v2382
    %v2384 = vmul.f32 %v2356, %v2383
    %v2385 = vmul.f32 %v2378, %v2384
    %v2386 = vsub.f32 %v2357, %v2385
    %v2387 = vlaneseq
    %v2388 = vshrl.u32 %v2387, 7
    %v2389 = vsub.s32 0, %v2388
    %v2390 = vrot.slane %v2384, %v2389
    %v2391 = vmul.f32 %v2354, %v2390
    %v2392 = vmul.f32 %v2355, %v2390
    %v2393 = vlaneseq
    %v2394 = vshrl.u32 %v2393, 7
    %v2395 = vsub.s32 0, %v2394
    %v2396 = vrot.slane %v2386, %v2395
    %v2397 = vadd.f32 %v2391, %v2396
    %v2398 = vadd.f32 %v2392, %v2396
    %v2399 = vmax.f32 %v2397, 0.0
    %v2400 = vmax.f32 %v2398, 0.0
    %2401 = vst.msk [vmem:[#allocation3] sm:$0x1] %vm174, 0.0
    %2402 = vst.msk [vmem:[#allocation3 + $0x10] sm:$0x1] %vm174, 0.0
    %2403 = vst.msk [vmem:[#allocation3 + $0x9] sm:$0x1] %vm174, 0.0
    %2404 = vst.msk [vmem:[#allocation3 + $0x19] sm:$0x1] %vm174, 0.0
    %2405 = vst.msk [vmem:[#allocation3 + $0x1] sm:$0xff] %vm179, %v2399
    %2406 = vst.msk [vmem:[#allocation3 + $0x11] sm:$0xff] %vm179, %v2400
    %v2407 = vld [vmem:[#allocation3] sm:$0xff]
    %v2408 = vld [vmem:[#allocation3 + $0x10] sm:$0xff]
    %v2409 = vld [vmem:[#allocation3 + $0x2] sm:$0xff]
    %v2410 = vld [vmem:[#allocation3 + $0x12] sm:$0xff]
    %v2411 = vld [vmem:[#allocation13] sm:$0xf]
    %s2412 = scalar_lea.vmem [#allocation13], 4
    %v2413 = vld [vmem:[%s2412] sm:$0xf]
    %v2415 = vsel %vm179, %v2399, 0
    %v2418 = vsel %vm179, %v2400, 0
    %v2421 = vsel %vm207, %v2413, 0
    %2423 = vmatprep.subr.mxu0 0.0
    %2424 = vmatpush1.msra.mxu0 %v2421
    %2425 = vmatprep.subr.mxu0 0.0
    %2426 = vmatpush1.msra.mxu0 0.0
    %2427 = vmatprep.subr.mxu0 0.0
    %2428 = vmatpush1.msra.mxu0 0.0
    %2429 = vmatprep.subr.mxu0 0.0
    %2430 = vmatpush1.msra.mxu0 0.0
    %2431 = vmatprep.subr.mxu0 0.0
    %2432 = vmatpush1.msra.mxu0 0.0
    %2433 = vmatprep.subr.mxu0 0.0
    %2434 = vmatpush1.msra.mxu0 0.0
    %2435 = vmatprep.subr.mxu0 0.0
    %2436 = vmatpush1.msra.mxu0 0.0
    %2437 = vmatprep.subr.mxu0 0.0
    %2438 = vmatpush1.msra.mxu0 0.0
    %2439 = vmatprep.subr.mxu0 0.0
    %2440 = vmatpush1.msra.mxu0 0.0
    %2441 = vmatprep.subr.mxu0 0.0
    %2442 = vmatpush1.msra.mxu0 0.0
    %2443 = vmatprep.subr.mxu0 0.0
    %2444 = vmatpush1.msra.mxu0 0.0
    %2445 = vmatprep.subr.mxu0 0.0
    %2446 = vmatpush1.msra.mxu0 0.0
    %2447 = vmatprep.subr.mxu0 0.0
    %2448 = vmatpush1.msra.mxu0 0.0
    %2449 = vmatprep.subr.mxu0 0.0
    %2450 = vmatpush1.msra.mxu0 0.0
    %2451 = vmatprep.subr.mxu0 0.0
    %2452 = vmatpush1.msra.mxu0 0.0
    %2453 = vmatprep.subr.mxu0 0.0
    %2454 = vmatpush1.msra.mxu0 0.0
    %2455 = vmatprep.subr.mxu0 0.0
    %2456 = vmatpush1.msra.mxu0 0.0
    %2457 = vmatprep.subr.mxu0 0.0
    %2458 = vmatpush1.msra.mxu0 0.0
    %2459 = vmatprep.subr.mxu0 0.0
    %2460 = vmatpush1.msra.mxu0 0.0
    %2461 = vmatprep.subr.mxu0 0.0
    %2462 = vmatpush1.msra.mxu0 0.0
    %2463 = vmatprep.subr.mxu0 0.0
    %2464 = vmatpush1.msra.mxu0 0.0
    %2465 = vmatprep.subr.mxu0 0.0
    %2466 = vmatpush1.msra.mxu0 0.0
    %2467 = vmatprep.subr.mxu0 0.0
    %2468 = vmatpush1.msra.mxu0 0.0
    %2469 = vmatprep.subr.mxu0 0.0
    %2470 = vmatpush1.msra.mxu0 0.0
    %2471 = vmatprep.subr.mxu0 0.0
    %2472 = vmatpush1.msra.mxu0 0.0
    %2473 = vmatprep.subr.mxu0 0.0
    %2474 = vmatpush1.msra.mxu0 0.0
    %2475 = vmatprep.subr.mxu0 0.0
    %2476 = vmatpush1.msra.mxu0 0.0
    %2477 = vmatprep.subr.mxu0 0.0
    %2478 = vmatpush1.msra.mxu0 0.0
    %2479 = vmatprep.subr.mxu0 0.0
    %2480 = vmatpush1.msra.mxu0 0.0
    %2481 = vmatprep.subr.mxu0 0.0
    %2482 = vmatpush1.msra.mxu0 0.0
    %2483 = vmatprep.subr.mxu0 0.0
    %2484 = vmatpush1.msra.mxu0 0.0
    %2485 = vmatprep.subr.mxu0 0.0
    %2486 = vmatpush1.msra.mxu0 0.0
    %2487 = vmatprep.mubr.f32.mxu0 0.0
    %2488 = vmatmul.mubr.f32.gmra.mrb[0].mxu0 %v2415
    %v2489 = vpop.f32.mrb[0].mxu0
    %v2490 = vadd.f32 0.0, %v2489
    %v2491 = vpop.f32.mrb[0].mxu0
    %2492 = vmatprep.mubr.f32.mxu0 0.0
    %2493 = vmatmul.mubr.f32.gmra.mrb[0].mxu0 %v2418
    %v2494 = vpop.f32.mrb[0].mxu0
    %v2495 = vadd.f32 0.0, %v2494
    %v2496 = vpop.f32.mrb[0].mxu0
    %2497 = vdwg.mxu0
    %v2499 = vsel %vm179, %v2407, 0
    %v2502 = vsel %vm179, %v2408, 0
    %v2505 = vsel %vm207, %v2411, 0
    %2507 = vmatprep.subr.mxu0 0.0
    %2508 = vmatpush1.msra.mxu0 %v2505
    %2509 = vmatprep.subr.mxu0 0.0
    %2510 = vmatpush1.msra.mxu0 0.0
    %2511 = vmatprep.subr.mxu0 0.0
    %2512 = vmatpush1.msra.mxu0 0.0
    %2513 = vmatprep.subr.mxu0 0.0
    %2514 = vmatpush1.msra.mxu0 0.0
    %2515 = vmatprep.subr.mxu0 0.0
    %2516 = vmatpush1.msra.mxu0 0.0
    %2517 = vmatprep.subr.mxu0 0.0
    %2518 = vmatpush1.msra.mxu0 0.0
    %2519 = vmatprep.subr.mxu0 0.0
    %2520 = vmatpush1.msra.mxu0 0.0
    %2521 = vmatprep.subr.mxu0 0.0
    %2522 = vmatpush1.msra.mxu0 0.0
    %2523 = vmatprep.subr.mxu0 0.0
    %2524 = vmatpush1.msra.mxu0 0.0
    %2525 = vmatprep.subr.mxu0 0.0
    %2526 = vmatpush1.msra.mxu0 0.0
    %2527 = vmatprep.subr.mxu0 0.0
    %2528 = vmatpush1.msra.mxu0 0.0
    %2529 = vmatprep.subr.mxu0 0.0
    %2530 = vmatpush1.msra.mxu0 0.0
    %2531 = vmatprep.subr.mxu0 0.0
    %2532 = vmatpush1.msra.mxu0 0.0
    %2533 = vmatprep.subr.mxu0 0.0
    %2534 = vmatpush1.msra.mxu0 0.0
    %2535 = vmatprep.subr.mxu0 0.0
    %2536 = vmatpush1.msra.mxu0 0.0
    %2537 = vmatprep.subr.mxu0 0.0
    %2538 = vmatpush1.msra.mxu0 0.0
    %2539 = vmatprep.subr.mxu0 0.0
    %2540 = vmatpush1.msra.mxu0 0.0
    %2541 = vmatprep.subr.mxu0 0.0
    %2542 = vmatpush1.msra.mxu0 0.0
    %2543 = vmatprep.subr.mxu0 0.0
    %2544 = vmatpush1.msra.mxu0 0.0
    %2545 = vmatprep.subr.mxu0 0.0
    %2546 = vmatpush1.msra.mxu0 0.0
    %2547 = vmatprep.subr.mxu0 0.0
    %2548 = vmatpush1.msra.mxu0 0.0
    %2549 = vmatprep.subr.mxu0 0.0
    %2550 = vmatpush1.msra.mxu0 0.0
    %2551 = vmatprep.subr.mxu0 0.0
    %2552 = vmatpush1.msra.mxu0 0.0
    %2553 = vmatprep.subr.mxu0 0.0
    %2554 = vmatpush1.msra.mxu0 0.0
    %2555 = vmatprep.subr.mxu0 0.0
    %2556 = vmatpush1.msra.mxu0 0.0
    %2557 = vmatprep.subr.mxu0 0.0
    %2558 = vmatpush1.msra.mxu0 0.0
    %2559 = vmatprep.subr.mxu0 0.0
    %2560 = vmatpush1.msra.mxu0 0.0
    %2561 = vmatprep.subr.mxu0 0.0
    %2562 = vmatpush1.msra.mxu0 0.0
    %2563 = vmatprep.subr.mxu0 0.0
    %2564 = vmatpush1.msra.mxu0 0.0
    %2565 = vmatprep.subr.mxu0 0.0
    %2566 = vmatpush1.msra.mxu0 0.0
    %2567 = vmatprep.subr.mxu0 0.0
    %2568 = vmatpush1.msra.mxu0 0.0
    %2569 = vmatprep.subr.mxu0 0.0
    %2570 = vmatpush1.msra.mxu0 0.0
    %2571 = vmatprep.mubr.f32.mxu0 0.0
    %2572 = vmatmul.mubr.f32.gmra.mrb[0].mxu0 %v2499
    %v2573 = vpop.f32.mrb[0].mxu0
    %v2574 = vadd.f32 %v2490, %v2573
    %v2575 = vpop.f32.mrb[0].mxu0
    %2576 = vmatprep.mubr.f32.mxu0 0.0
    %2577 = vmatmul.mubr.f32.gmra.mrb[0].mxu0 %v2502
    %v2578 = vpop.f32.mrb[0].mxu0
    %v2579 = vadd.f32 %v2495, %v2578
    %v2580 = vpop.f32.mrb[0].mxu0
    %2581 = vdwg.mxu0
    %s2582 = scalar_lea.vmem [#allocation13], 8
    %v2583 = vld [vmem:[%s2582] sm:$0xf]
    %v2585 = vsel %vm179, %v2409, 0
    %v2588 = vsel %vm179, %v2410, 0
    %v2591 = vsel %vm207, %v2583, 0
    %2593 = vmatprep.subr.mxu0 0.0
    %2594 = vmatpush1.msra.mxu0 %v2591
    %2595 = vmatprep.subr.mxu0 0.0
    %2596 = vmatpush1.msra.mxu0 0.0
    %2597 = vmatprep.subr.mxu0 0.0
    %2598 = vmatpush1.msra.mxu0 0.0
    %2599 = vmatprep.subr.mxu0 0.0
    %2600 = vmatpush1.msra.mxu0 0.0
    %2601 = vmatprep.subr.mxu0 0.0
    %2602 = vmatpush1.msra.mxu0 0.0
    %2603 = vmatprep.subr.mxu0 0.0
    %2604 = vmatpush1.msra.mxu0 0.0
    %2605 = vmatprep.subr.mxu0 0.0
    %2606 = vmatpush1.msra.mxu0 0.0
    %2607 = vmatprep.subr.mxu0 0.0
    %2608 = vmatpush1.msra.mxu0 0.0
    %2609 = vmatprep.subr.mxu0 0.0
    %2610 = vmatpush1.msra.mxu0 0.0
    %2611 = vmatprep.subr.mxu0 0.0
    %2612 = vmatpush1.msra.mxu0 0.0
    %2613 = vmatprep.subr.mxu0 0.0
    %2614 = vmatpush1.msra.mxu0 0.0
    %2615 = vmatprep.subr.mxu0 0.0
    %2616 = vmatpush1.msra.mxu0 0.0
    %2617 = vmatprep.subr.mxu0 0.0
    %2618 = vmatpush1.msra.mxu0 0.0
    %2619 = vmatprep.subr.mxu0 0.0
    %2620 = vmatpush1.msra.mxu0 0.0
    %2621 = vmatprep.subr.mxu0 0.0
    %2622 = vmatpush1.msra.mxu0 0.0
    %2623 = vmatprep.subr.mxu0 0.0
    %2624 = vmatpush1.msra.mxu0 0.0
    %2625 = vmatprep.subr.mxu0 0.0
    %2626 = vmatpush1.msra.mxu0 0.0
    %2627 = vmatprep.subr.mxu0 0.0
    %2628 = vmatpush1.msra.mxu0 0.0
    %2629 = vmatprep.subr.mxu0 0.0
    %2630 = vmatpush1.msra.mxu0 0.0
    %2631 = vmatprep.subr.mxu0 0.0
    %2632 = vmatpush1.msra.mxu0 0.0
    %2633 = vmatprep.subr.mxu0 0.0
    %2634 = vmatpush1.msra.mxu0 0.0
    %2635 = vmatprep.subr.mxu0 0.0
    %2636 = vmatpush1.msra.mxu0 0.0
    %2637 = vmatprep.subr.mxu0 0.0
    %2638 = vmatpush1.msra.mxu0 0.0
    %2639 = vmatprep.subr.mxu0 0.0
    %2640 = vmatpush1.msra.mxu0 0.0
    %2641 = vmatprep.subr.mxu0 0.0
    %2642 = vmatpush1.msra.mxu0 0.0
    %2643 = vmatprep.subr.mxu0 0.0
    %2644 = vmatpush1.msra.mxu0 0.0
    %2645 = vmatprep.subr.mxu0 0.0
    %2646 = vmatpush1.msra.mxu0 0.0
    %2647 = vmatprep.subr.mxu0 0.0
    %2648 = vmatpush1.msra.mxu0 0.0
    %2649 = vmatprep.subr.mxu0 0.0
    %2650 = vmatpush1.msra.mxu0 0.0
    %2651 = vmatprep.subr.mxu0 0.0
    %2652 = vmatpush1.msra.mxu0 0.0
    %2653 = vmatprep.subr.mxu0 0.0
    %2654 = vmatpush1.msra.mxu0 0.0
    %2655 = vmatprep.subr.mxu0 0.0
    %2656 = vmatpush1.msra.mxu0 0.0
    %2657 = vmatprep.mubr.f32.mxu0 0.0
    %2658 = vmatmul.mubr.f32.gmra.mrb[0].mxu0 %v2585
    %v2659 = vpop.f32.mrb[0].mxu0
    %v2660 = vadd.f32 0.0, %v2659
    %v2661 = vpop.f32.mrb[0].mxu0
    %2662 = vmatprep.mubr.f32.mxu0 0.0
    %2663 = vmatmul.mubr.f32.gmra.mrb[0].mxu0 %v2588
    %v2664 = vpop.f32.mrb[0].mxu0
    %v2665 = vadd.f32 0.0, %v2664
    %v2666 = vpop.f32.mrb[0].mxu0
    %2667 = vdwg.mxu0
    %v2668 = vadd.f32 %v2574, %v2660
    %v2669 = vadd.f32 %v2579, %v2665
    %v2670 = vld [vmem:[%s3 + $0x3] sm:$0x1]
    %v2671 = vlaneseq
    %v2672 = vshrl.u32 %v2671, 7
    %v2673 = vsub.s32 0, %v2672
    %v2674 = vrot.slane %v2670, %v2673
    %v2675 = vadd.f32 %v2668, %v2674
    %v2676 = vadd.f32 %v2669, %v2674
    %v2677 = vld [vmem:[%s3 + $0x4] sm:$0x1]
    %v2678 = vld [vmem:[%s3 + $0x5] sm:$0x1]
    %v2679 = vsel %vm179, %v2675, 0.0
    %v2680 = vsel %vm179, %v2676, 0.0
    %v2681 = vadd.f32 %v2679, %v2680
    %v2682 = vrot.slane %v2681, 4
    %v2683 = vadd.f32 %v2681, %v2682
    %v2684 = vrot.slane %v2683, 2
    %v2685 = vadd.f32 %v2683, %v2684
    %v2686 = vrot.slane %v2685, 1
    %v2687 = vadd.f32 %v2685, %v2686
    %v2688 = vmul.f32 %v2675, %v2675
    %v2689 = vmul.f32 %v2676, %v2676
    %v2690 = vsel %vm179, %v2688, 0.0
    %v2691 = vsel %vm179, %v2689, 0.0
    %v2692 = vadd.f32 %v2690, %v2691
    %v2693 = vrot.slane %v2692, 4
    %v2694 = vadd.f32 %v2692, %v2693
    %v2695 = vrot.slane %v2694, 2
    %v2696 = vadd.f32 %v2694, %v2695
    %v2697 = vrot.slane %v2696, 1
    %v2698 = vadd.f32 %v2696, %v2697
    %v2699 = vmul.f32 %v2687, 0.0625
    %v2700 = vmul.f32 %v2698, 0.0625
    %v2701 = vmul.f32 %v2699, %v2699
    %v2702 = vsub.f32 %v2700, %v2701
    %v2703 = vadd.f32 %v2702, 1e-05
    %v2704 = vrsqrt.pop %v2703
    %v2705 = vmul.f32 %v2677, %v2704
    %v2706 = vmul.f32 %v2699, %v2705
    %v2707 = vsub.f32 %v2678, %v2706
    %v2708 = vlaneseq
    %v2709 = vshrl.u32 %v2708, 7
    %v2710 = vsub.s32 0, %v2709
    %v2711 = vrot.slane %v2705, %v2710
    %v2712 = vmul.f32 %v2675, %v2711
    %v2713 = vmul.f32 %v2676, %v2711
    %v2714 = vlaneseq
    %v2715 = vshrl.u32 %v2714, 7
    %v2716 = vsub.s32 0, %v2715
    %v2717 = vrot.slane %v2707, %v2716
    %v2718 = vadd.f32 %v2712, %v2717
    %v2719 = vadd.f32 %v2713, %v2717
    %v2720 = vld [vmem:[#allocation15] sm:$0xf]
    %v2721 = vld [vmem:[%s3 + $0x6] sm:$0x1]
    %v2722 = vlaneseq
    %v2723 = vshrl.u32 %v2722, 7
    %v2724 = vsub.s32 0, %v2723
    %v2725 = vrot.slane %v2721, %v2724
    %v2727 = vsel %vm179, %v1887, 0
    %v2730 = vsel %vm179, %v2346, 0
    %v2733 = vsel %vm207, %v2720, 0
    %2735 = vmatprep.subr.mxu0 0.0
    %2736 = vmatpush1.msra.mxu0 %v2733
    %2737 = vmatprep.subr.mxu0 0.0
    %2738 = vmatpush1.msra.mxu0 0.0
    %2739 = vmatprep.subr.mxu0 0.0
    %2740 = vmatpush1.msra.mxu0 0.0
    %2741 = vmatprep.subr.mxu0 0.0
    %2742 = vmatpush1.msra.mxu0 0.0
    %2743 = vmatprep.subr.mxu0 0.0
    %2744 = vmatpush1.msra.mxu0 0.0
    %2745 = vmatprep.subr.mxu0 0.0
    %2746 = vmatpush1.msra.mxu0 0.0
    %2747 = vmatprep.subr.mxu0 0.0
    %2748 = vmatpush1.msra.mxu0 0.0
    %2749 = vmatprep.subr.mxu0 0.0
    %2750 = vmatpush1.msra.mxu0 0.0
    %2751 = vmatprep.subr.mxu0 0.0
    %2752 = vmatpush1.msra.mxu0 0.0
    %2753 = vmatprep.subr.mxu0 0.0
    %2754 = vmatpush1.msra.mxu0 0.0
    %2755 = vmatprep.subr.mxu0 0.0
    %2756 = vmatpush1.msra.mxu0 0.0
    %2757 = vmatprep.subr.mxu0 0.0
    %2758 = vmatpush1.msra.mxu0 0.0
    %2759 = vmatprep.subr.mxu0 0.0
    %2760 = vmatpush1.msra.mxu0 0.0
    %2761 = vmatprep.subr.mxu0 0.0
    %2762 = vmatpush1.msra.mxu0 0.0
    %2763 = vmatprep.subr.mxu0 0.0
    %2764 = vmatpush1.msra.mxu0 0.0
    %2765 = vmatprep.subr.mxu0 0.0
    %2766 = vmatpush1.msra.mxu0 0.0
    %2767 = vmatprep.subr.mxu0 0.0
    %2768 = vmatpush1.msra.mxu0 0.0
    %2769 = vmatprep.subr.mxu0 0.0
    %2770 = vmatpush1.msra.mxu0 0.0
    %2771 = vmatprep.subr.mxu0 0.0
    %2772 = vmatpush1.msra.mxu0 0.0
    %2773 = vmatprep.subr.mxu0 0.0
    %2774 = vmatpush1.msra.mxu0 0.0
    %2775 = vmatprep.subr.mxu0 0.0
    %2776 = vmatpush1.msra.mxu0 0.0
    %2777 = vmatprep.subr.mxu0 0.0
    %2778 = vmatpush1.msra.mxu0 0.0
    %2779 = vmatprep.subr.mxu0 0.0
    %2780 = vmatpush1.msra.mxu0 0.0
    %2781 = vmatprep.subr.mxu0 0.0
    %2782 = vmatpush1.msra.mxu0 0.0
    %2783 = vmatprep.subr.mxu0 0.0
    %2784 = vmatpush1.msra.mxu0 0.0
    %2785 = vmatprep.subr.mxu0 0.0
    %2786 = vmatpush1.msra.mxu0 0.0
    %2787 = vmatprep.subr.mxu0 0.0
    %2788 = vmatpush1.msra.mxu0 0.0
    %2789 = vmatprep.subr.mxu0 0.0
    %2790 = vmatpush1.msra.mxu0 0.0
    %2791 = vmatprep.subr.mxu0 0.0
    %2792 = vmatpush1.msra.mxu0 0.0
    %2793 = vmatprep.subr.mxu0 0.0
    %2794 = vmatpush1.msra.mxu0 0.0
    %2795 = vmatprep.subr.mxu0 0.0
    %2796 = vmatpush1.msra.mxu0 0.0
    %2797 = vmatprep.subr.mxu0 0.0
    %2798 = vmatpush1.msra.mxu0 0.0
    %2799 = vmatprep.mubr.f32.mxu0 0.0
    %2800 = vmatmul.mubr.f32.gmra.mrb[0].mxu0 %v2727
    %v2801 = vpop.f32.mrb[0].mxu0
    %v2802 = vadd.f32 %v2725, %v2801
    %v2803 = vpop.f32.mrb[0].mxu0
    %2804 = vmatprep.mubr.f32.mxu0 0.0
    %2805 = vmatmul.mubr.f32.gmra.mrb[0].mxu0 %v2730
    %v2806 = vpop.f32.mrb[0].mxu0
    %v2807 = vadd.f32 %v2725, %v2806
    %v2808 = vpop.f32.mrb[0].mxu0
    %2809 = vdwg.mxu0
    %v2810 = vadd.f32 %v2718, %v2802
    %v2811 = vadd.f32 %v2719, %v2807
    %v2812 = vmax.f32 %v2810, 0.0
    %v2813 = vmax.f32 %v2811, 0.0
    %2814 = vst.msk [vmem:[%s16] sm:$0xff] %vm179, %v2812
    %2815 = vst.msk [vmem:[%s16 + $0x8] sm:$0xff] %vm179, %v2813
    %2816 = vst.msk [vmem:[#allocation4] sm:$0x1] %vm174, 0.0
    %2817 = vst.msk [vmem:[#allocation4 + $0x10] sm:$0x1] %vm174, 0.0
    %2818 = vst.msk [vmem:[#allocation4 + $0x9] sm:$0x1] %vm174, 0.0
    %2819 = vst.msk [vmem:[#allocation4 + $0x19] sm:$0x1] %vm174, 0.0
    %2820 = vst.msk [vmem:[#allocation4 + $0x1] sm:$0xff] %vm179, %v2812
    %2821 = vst.msk [vmem:[#allocation4 + $0x11] sm:$0xff] %vm179, %v2813
    %v2822 = vld [vmem:[#allocation4] sm:$0xff]
    %v2823 = vld [vmem:[#allocation4 + $0x10] sm:$0xff]
    %v2824 = vld [vmem:[#allocation4 + $0x2] sm:$0xff]
    %v2825 = vld [vmem:[#allocation4 + $0x12] sm:$0xff]
    %v2826 = vld [vmem:[#allocation16] sm:$0xf]
    %s2827 = scalar_lea.vmem [#allocation16], 4
    %v2828 = vld [vmem:[%s2827] sm:$0xf]
    %v2830 = vsel %vm179, %v2812, 0
    %v2833 = vsel %vm179, %v2813, 0
    %v2836 = vsel %vm207, %v2828, 0
    %2838 = vmatprep.subr.mxu0 0.0
    %2839 = vmatpush1.msra.mxu0 %v2836
    %2840 = vmatprep.subr.mxu0 0.0
    %2841 = vmatpush1.msra.mxu0 0.0
    %2842 = vmatprep.subr.mxu0 0.0
    %2843 = vmatpush1.msra.mxu0 0.0
    %2844 = vmatprep.subr.mxu0 0.0
    %2845 = vmatpush1.msra.mxu0 0.0
    %2846 = vmatprep.subr.mxu0 0.0
    %2847 = vmatpush1.msra.mxu0 0.0
    %2848 = vmatprep.subr.mxu0 0.0
    %2849 = vmatpush1.msra.mxu0 0.0
    %2850 = vmatprep.subr.mxu0 0.0
    %2851 = vmatpush1.msra.mxu0 0.0
    %2852 = vmatprep.subr.mxu0 0.0
    %2853 = vmatpush1.msra.mxu0 0.0
    %2854 = vmatprep.subr.mxu0 0.0
    %2855 = vmatpush1.msra.mxu0 0.0
    %2856 = vmatprep.subr.mxu0 0.0
    %2857 = vmatpush1.msra.mxu0 0.0
    %2858 = vmatprep.subr.mxu0 0.0
    %2859 = vmatpush1.msra.mxu0 0.0
    %2860 = vmatprep.subr.mxu0 0.0
    %2861 = vmatpush1.msra.mxu0 0.0
    %2862 = vmatprep.subr.mxu0 0.0
    %2863 = vmatpush1.msra.mxu0 0.0
    %2864 = vmatprep.subr.mxu0 0.0
    %2865 = vmatpush1.msra.mxu0 0.0
    %2866 = vmatprep.subr.mxu0 0.0
    %2867 = vmatpush1.msra.mxu0 0.0
    %2868 = vmatprep.subr.mxu0 0.0
    %2869 = vmatpush1.msra.mxu0 0.0
    %2870 = vmatprep.subr.mxu0 0.0
    %2871 = vmatpush1.msra.mxu0 0.0
    %2872 = vmatprep.subr.mxu0 0.0
    %2873 = vmatpush1.msra.mxu0 0.0
    %2874 = vmatprep.subr.mxu0 0.0
    %2875 = vmatpush1.msra.mxu0 0.0
    %2876 = vmatprep.subr.mxu0 0.0
    %2877 = vmatpush1.msra.mxu0 0.0
    %2878 = vmatprep.subr.mxu0 0.0
    %2879 = vmatpush1.msra.mxu0 0.0
    %2880 = vmatprep.subr.mxu0 0.0
    %2881 = vmatpush1.msra.mxu0 0.0
    %2882 = vmatprep.subr.mxu0 0.0
    %2883 = vmatpush1.msra.mxu0 0.0
    %2884 = vmatprep.subr.mxu0 0.0
    %2885 = vmatpush1.msra.mxu0 0.0
    %2886 = vmatprep.subr.mxu0 0.0
    %2887 = vmatpush1.msra.mxu0 0.0
    %2888 = vmatprep.subr.mxu0 0.0
    %2889 = vmatpush1.msra.mxu0 0.0
    %2890 = vmatprep.subr.mxu0 0.0
    %2891 = vmatpush1.msra.mxu0 0.0
    %2892 = vmatprep.subr.mxu0 0.0
    %2893 = vmatpush1.msra.mxu0 0.0
    %2894 = vmatprep.subr.mxu0 0.0
    %2895 = vmatpush1.msra.mxu0 0.0
    %2896 = vmatprep.subr.mxu0 0.0
    %2897 = vmatpush1.msra.mxu0 0.0
    %2898 = vmatprep.subr.mxu0 0.0
    %2899 = vmatpush1.msra.mxu0 0.0
    %2900 = vmatprep.subr.mxu0 0.0
    %2901 = vmatpush1.msra.mxu0 0.0
    %2902 = vmatprep.mubr.f32.mxu0 0.0
    %2903 = vmatmul.mubr.f32.gmra.mrb[0].mxu0 %v2830
    %v2904 = vpop.f32.mrb[0].mxu0
    %v2905 = vadd.f32 0.0, %v2904
    %v2906 = vpop.f32.mrb[0].mxu0
    %2907 = vmatprep.mubr.f32.mxu0 0.0
    %2908 = vmatmul.mubr.f32.gmra.mrb[0].mxu0 %v2833
    %v2909 = vpop.f32.mrb[0].mxu0
    %v2910 = vadd.f32 0.0, %v2909
    %v2911 = vpop.f32.mrb[0].mxu0
    %2912 = vdwg.mxu0
    %v2914 = vsel %vm179, %v2822, 0
    %v2917 = vsel %vm179, %v2823, 0
    %v2920 = vsel %vm207, %v2826, 0
    %2922 = vmatprep.subr.mxu0 0.0
    %2923 = vmatpush1.msra.mxu0 %v2920
    %2924 = vmatprep.subr.mxu0 0.0
    %2925 = vmatpush1.msra.mxu0 0.0
    %2926 = vmatprep.subr.mxu0 0.0
    %2927 = vmatpush1.msra.mxu0 0.0
    %2928 = vmatprep.subr.mxu0 0.0
    %2929 = vmatpush1.msra.mxu0 0.0
    %2930 = vmatprep.subr.mxu0 0.0
    %2931 = vmatpush1.msra.mxu0 0.0
    %2932 = vmatprep.subr.mxu0 0.0
    %2933 = vmatpush1.msra.mxu0 0.0
    %2934 = vmatprep.subr.mxu0 0.0
    %2935 = vmatpush1.msra.mxu0 0.0
    %2936 = vmatprep.subr.mxu0 0.0
    %2937 = vmatpush1.msra.mxu0 0.0
    %2938 = vmatprep.subr.mxu0 0.0
    %2939 = vmatpush1.msra.mxu0 0.0
    %2940 = vmatprep.subr.mxu0 0.0
    %2941 = vmatpush1.msra.mxu0 0.0
    %2942 = vmatprep.subr.mxu0 0.0
    %2943 = vmatpush1.msra.mxu0 0.0
    %2944 = vmatprep.subr.mxu0 0.0
    %2945 = vmatpush1.msra.mxu0 0.0
    %2946 = vmatprep.subr.mxu0 0.0
    %2947 = vmatpush1.msra.mxu0 0.0
    %2948 = vmatprep.subr.mxu0 0.0
    %2949 = vmatpush1.msra.mxu0 0.0
    %2950 = vmatprep.subr.mxu0 0.0
    %2951 = vmatpush1.msra.mxu0 0.0
    %2952 = vmatprep.subr.mxu0 0.0
    %2953 = vmatpush1.msra.mxu0 0.0
    %2954 = vmatprep.subr.mxu0 0.0
    %2955 = vmatpush1.msra.mxu0 0.0
    %2956 = vmatprep.subr.mxu0 0.0
    %2957 = vmatpush1.msra.mxu0 0.0
    %2958 = vmatprep.subr.mxu0 0.0
    %2959 = vmatpush1.msra.mxu0 0.0
    %2960 = vmatprep.subr.mxu0 0.0
    %2961 = vmatpush1.msra.mxu0 0.0
    %2962 = vmatprep.subr.mxu0 0.0
    %2963 = vmatpush1.msra.mxu0 0.0
    %2964 = vmatprep.subr.mxu0 0.0
    %2965 = vmatpush1.msra.mxu0 0.0
    %2966 = vmatprep.subr.mxu0 0.0
    %2967 = vmatpush1.msra.mxu0 0.0
    %2968 = vmatprep.subr.mxu0 0.0
    %2969 = vmatpush1.msra.mxu0 0.0
    %2970 = vmatprep.subr.mxu0 0.0
    %2971 = vmatpush1.msra.mxu0 0.0
    %2972 = vmatprep.subr.mxu0 0.0
    %2973 = vmatpush1.msra.mxu0 0.0
    %2974 = vmatprep.subr.mxu0 0.0
    %2975 = vmatpush1.msra.mxu0 0.0
    %2976 = vmatprep.subr.mxu0 0.0
    %2977 = vmatpush1.msra.mxu0 0.0
    %2978 = vmatprep.subr.mxu0 0.0
    %2979 = vmatpush1.msra.mxu0 0.0
    %2980 = vmatprep.subr.mxu0 0.0
    %2981 = vmatpush1.msra.mxu0 0.0
    %2982 = vmatprep.subr.mxu0 0.0
    %2983 = vmatpush1.msra.mxu0 0.0
    %2984 = vmatprep.subr.mxu0 0.0
    %2985 = vmatpush1.msra.mxu0 0.0
    %2986 = vmatprep.mubr.f32.mxu0 0.0
    %2987 = vmatmul.mubr.f32.gmra.mrb[0].mxu0 %v2914
    %v2988 = vpop.f32.mrb[0].mxu0
    %v2989 = vadd.f32 %v2905, %v2988
    %v2990 = vpop.f32.mrb[0].mxu0
    %2991 = vmatprep.mubr.f32.mxu0 0.0
    %2992 = vmatmul.mubr.f32.gmra.mrb[0].mxu0 %v2917
    %v2993 = vpop.f32.mrb[0].mxu0
    %v2994 = vadd.f32 %v2910, %v2993
    %v2995 = vpop.f32.mrb[0].mxu0
    %2996 = vdwg.mxu0
    %s2997 = scalar_lea.vmem [#allocation16], 8
    %v2998 = vld [vmem:[%s2997] sm:$0xf]
    %v3000 = vsel %vm179, %v2824, 0
    %v3003 = vsel %vm179, %v2825, 0
    %v3006 = vsel %vm207, %v2998, 0
    %3008 = vmatprep.subr.mxu0 0.0
    %3009 = vmatpush1.msra.mxu0 %v3006
    %3010 = vmatprep.subr.mxu0 0.0
    %3011 = vmatpush1.msra.mxu0 0.0
    %3012 = vmatprep.subr.mxu0 0.0
    %3013 = vmatpush1.msra.mxu0 0.0
    %3014 = vmatprep.subr.mxu0 0.0
    %3015 = vmatpush1.msra.mxu0 0.0
    %3016 = vmatprep.subr.mxu0 0.0
    %3017 = vmatpush1.msra.mxu0 0.0
    %3018 = vmatprep.subr.mxu0 0.0
    %3019 = vmatpush1.msra.mxu0 0.0
    %3020 = vmatprep.subr.mxu0 0.0
    %3021 = vmatpush1.msra.mxu0 0.0
    %3022 = vmatprep.subr.mxu0 0.0
    %3023 = vmatpush1.msra.mxu0 0.0
    %3024 = vmatprep.subr.mxu0 0.0
    %3025 = vmatpush1.msra.mxu0 0.0
    %3026 = vmatprep.subr.mxu0 0.0
    %3027 = vmatpush1.msra.mxu0 0.0
    %3028 = vmatprep.subr.mxu0 0.0
    %3029 = vmatpush1.msra.mxu0 0.0
    %3030 = vmatprep.subr.mxu0 0.0
    %3031 = vmatpush1.msra.mxu0 0.0
    %3032 = vmatprep.subr.mxu0 0.0
    %3033 = vmatpush1.msra.mxu0 0.0
    %3034 = vmatprep.subr.mxu0 0.0
    %3035 = vmatpush1.msra.mxu0 0.0
    %3036 = vmatprep.subr.mxu0 0.0
    %3037 = vmatpush1.msra.mxu0 0.0
    %3038 = vmatprep.subr.mxu0 0.0
    %3039 = vmatpush1.msra.mxu0 0.0
    %3040 = vmatprep.subr.mxu0 0.0
    %3041 = vmatpush1.msra.mxu0 0.0
    %3042 = vmatprep.subr.mxu0 0.0
    %3043 = vmatpush1.msra.mxu0 0.0
    %3044 = vmatprep.subr.mxu0 0.0
    %3045 = vmatpush1.msra.mxu0 0.0
    %3046 = vmatprep.subr.mxu0 0.0
    %3047 = vmatpush1.msra.mxu0 0.0
    %3048 = vmatprep.subr.mxu0 0.0
    %3049 = vmatpush1.msra.mxu0 0.0
    %3050 = vmatprep.subr.mxu0 0.0
    %3051 = vmatpush1.msra.mxu0 0.0
    %3052 = vmatprep.subr.mxu0 0.0
    %3053 = vmatpush1.msra.mxu0 0.0
    %3054 = vmatprep.subr.mxu0 0.0
    %3055 = vmatpush1.msra.mxu0 0.0
    %3056 = vmatprep.subr.mxu0 0.0
    %3057 = vmatpush1.msra.mxu0 0.0
    %3058 = vmatprep.subr.mxu0 0.0
    %3059 = vmatpush1.msra.mxu0 0.0
    %3060 = vmatprep.subr.mxu0 0.0
    %3061 = vmatpush1.msra.mxu0 0.0
    %3062 = vmatprep.subr.mxu0 0.0
    %3063 = vmatpush1.msra.mxu0 0.0
    %3064 = vmatprep.subr.mxu0 0.0
    %3065 = vmatpush1.msra.mxu0 0.0
    %3066 = vmatprep.subr.mxu0 0.0
    %3067 = vmatpush1.msra.mxu0 0.0
    %3068 = vmatprep.subr.mxu0 0.0
    %3069 = vmatpush1.msra.mxu0 0.0
    %3070 = vmatprep.subr.mxu0 0.0
    %3071 = vmatpush1.msra.mxu0 0.0
    %3072 = vmatprep.mubr.f32.mxu0 0.0
    %3073 = vmatmul.mubr.f32.gmra.mrb[0].mxu0 %v3000
    %v3074 = vpop.f32.mrb[0].mxu0
    %v3075 = vadd.f32 0.0, %v3074
    %v3076 = vpop.f32.mrb[0].mxu0
    %3077 = vmatprep.mubr.f32.mxu0 0.0
    %3078 = vmatmul.mubr.f32.gmra.mrb[0].mxu0 %v3003
    %v3079 = vpop.f32.mrb[0].mxu0
    %v3080 = vadd.f32 0.0, %v3079
    %v3081 = vpop.f32.mrb[0].mxu0
    %3082 = vdwg.mxu0
    %v3083 = vadd.f32 %v2989, %v3075
    %v3084 = vadd.f32 %v2994, %v3080
    %v3085 = vld [vmem:[#allocation18] sm:$0x1]
    %v3086 = vlaneseq
    %v3087 = vshrl.u32 %v3086, 7
    %v3088 = vsub.s32 0, %v3087
    %v3089 = vrot.slane %v3085, %v3088
    %v3090 = vadd.f32 %v3083, %v3089
    %v3091 = vadd.f32 %v3084, %v3089
    %v3092 = vld [vmem:[#allocation18 + $0x1] sm:$0x1]
    %v3093 = vld [vmem:[#allocation18 + $0x2] sm:$0x1]
    %vm3094 = vcmask 64512
    %v3095 = vsel %vm3094, %v3090, 0.0
    %v3096 = vsel %vm3094, %v3091, 0.0
    %v3097 = vadd.f32 %v3095, %v3096
    %v3098 = vrot.slane %v3097, 4
    %v3099 = vadd.f32 %v3097, %v3098
    %v3100 = vrot.slane %v3099, 2
    %v3101 = vadd.f32 %v3099, %v3100
    %v3102 = vrot.slane %v3101, 1
    %v3103 = vadd.f32 %v3101, %v3102
    %v3104 = vmul.f32 %v3090, %v3090
    %v3105 = vmul.f32 %v3091, %v3091
    %v3106 = vsel %vm3094, %v3104, 0.0
    %v3107 = vsel %vm3094, %v3105, 0.0
    %v3108 = vadd.f32 %v3106, %v3107
    %v3109 = vrot.slane %v3108, 4
    %v3110 = vadd.f32 %v3108, %v3109
    %v3111 = vrot.slane %v3110, 2
    %v3112 = vadd.f32 %v3110, %v3111
    %v3113 = vrot.slane %v3112, 1
    %v3114 = vadd.f32 %v3112, %v3113
    %v3115 = vmul.f32 %v3103, 0.0625
    %v3116 = vmul.f32 %v3114, 0.0625
    %v3117 = vmul.f32 %v3115, %v3115
    %v3118 = vsub.f32 %v3116, %v3117
    %v3119 = vadd.f32 %v3118, 1e-05
    %v3120 = vrsqrt.pop %v3119
    %v3121 = vmul.f32 %v3092, %v3120
    %v3122 = vmul.f32 %v3115, %v3121
    %v3123 = vsub.f32 %v3093, %v3122
    %v3124 = vlaneseq
    %v3125 = vshrl.u32 %v3124, 7
    %v3126 = vsub.s32 0, %v3125
    %v3127 = vrot.slane %v3121, %v3126
    %v3128 = vmul.f32 %v3090, %v3127
    %v3129 = vmul.f32 %v3091, %v3127
    %v3130 = vlaneseq
    %v3131 = vshrl.u32 %v3130, 7
    %v3132 = vsub.s32 0, %v3131
    %v3133 = vrot.slane %v3123, %v3132
    %v3134 = vadd.f32 %v3128, %v3133
    %v3135 = vadd.f32 %v3129, %v3133
    %v3136 = vmax.f32 %v3134, 0.0
    %v3137 = vmax.f32 %v3135, 0.0
    %vm3138 = vcmask 57344
    %3139 = vst.msk [vmem:[#allocation5] sm:$0x1] %vm3138, 0.0
    %3140 = vst.msk [vmem:[#allocation5 + $0x10] sm:$0x1] %vm3138, 0.0
    %3141 = vst.msk [vmem:[#allocation5 + $0x9] sm:$0x1] %vm3138, 0.0
    %3142 = vst.msk [vmem:[#allocation5 + $0x19] sm:$0x1] %vm3138, 0.0
    %3143 = vst.msk [vmem:[#allocation5 + $0x1] sm:$0xff] %vm3094, %v3136
    %3144 = vst.msk [vmem:[#allocation5 + $0x11] sm:$0xff] %vm3094, %v3137
    %v3145 = vld [vmem:[#allocation5] sm:$0xff]
    %v3146 = vld [vmem:[#allocation5 + $0x10] sm:$0xff]
    %v3147 = vld [vmem:[#allocation5 + $0x2] sm:$0xff]
    %v3148 = vld [vmem:[#allocation5 + $0x12] sm:$0xff]
    %v3149 = vld [vmem:[%s6] sm:$0xff]
    %s3150 = scalar_lea.vmem %s6, 8
    %v3151 = vld [vmem:[%s3150] sm:$0xff]
    %v3153 = vsel %vm3094, %v3136, 0
    %v3156 = vsel %vm3094, %v3137, 0
    %3158 = vmatprep.subr.mxu0 0.0
    %3159 = vmatpush1.msra.mxu0 %v3151
    %3160 = vmatprep.subr.mxu0 0.0
    %3161 = vmatpush1.msra.mxu0 0.0
    %3162 = vmatprep.subr.mxu0 0.0
    %3163 = vmatpush1.msra.mxu0 0.0
    %3164 = vmatprep.subr.mxu0 0.0
    %3165 = vmatpush1.msra.mxu0 0.0
    %3166 = vmatprep.subr.mxu0 0.0
    %3167 = vmatpush1.msra.mxu0 0.0
    %3168 = vmatprep.subr.mxu0 0.0
    %3169 = vmatpush1.msra.mxu0 0.0
    %3170 = vmatprep.subr.mxu0 0.0
    %3171 = vmatpush1.msra.mxu0 0.0
    %3172 = vmatprep.subr.mxu0 0.0
    %3173 = vmatpush1.msra.mxu0 0.0
    %3174 = vmatprep.subr.mxu0 0.0
    %3175 = vmatpush1.msra.mxu0 0.0
    %3176 = vmatprep.subr.mxu0 0.0
    %3177 = vmatpush1.msra.mxu0 0.0
    %3178 = vmatprep.subr.mxu0 0.0
    %3179 = vmatpush1.msra.mxu0 0.0
    %3180 = vmatprep.subr.mxu0 0.0
    %3181 = vmatpush1.msra.mxu0 0.0
    %3182 = vmatprep.subr.mxu0 0.0
    %3183 = vmatpush1.msra.mxu0 0.0
    %3184 = vmatprep.subr.mxu0 0.0
    %3185 = vmatpush1.msra.mxu0 0.0
    %3186 = vmatprep.subr.mxu0 0.0
    %3187 = vmatpush1.msra.mxu0 0.0
    %3188 = vmatprep.subr.mxu0 0.0
    %3189 = vmatpush1.msra.mxu0 0.0
    %3190 = vmatprep.subr.mxu0 0.0
    %3191 = vmatpush1.msra.mxu0 0.0
    %3192 = vmatprep.subr.mxu0 0.0
    %3193 = vmatpush1.msra.mxu0 0.0
    %3194 = vmatprep.subr.mxu0 0.0
    %3195 = vmatpush1.msra.mxu0 0.0
    %3196 = vmatprep.subr.mxu0 0.0
    %3197 = vmatpush1.msra.mxu0 0.0
    %3198 = vmatprep.subr.mxu0 0.0
    %3199 = vmatpush1.msra.mxu0 0.0
    %3200 = vmatprep.subr.mxu0 0.0
    %3201 = vmatpush1.msra.mxu0 0.0
    %3202 = vmatprep.subr.mxu0 0.0
    %3203 = vmatpush1.msra.mxu0 0.0
    %3204 = vmatprep.subr.mxu0 0.0
    %3205 = vmatpush1.msra.mxu0 0.0
    %3206 = vmatprep.subr.mxu0 0.0
    %3207 = vmatpush1.msra.mxu0 0.0
    %3208 = vmatprep.subr.mxu0 0.0
    %3209 = vmatpush1.msra.mxu0 0.0
    %3210 = vmatprep.subr.mxu0 0.0
    %3211 = vmatpush1.msra.mxu0 0.0
    %3212 = vmatprep.subr.mxu0 0.0
    %3213 = vmatpush1.msra.mxu0 0.0
    %3214 = vmatprep.subr.mxu0 0.0
    %3215 = vmatpush1.msra.mxu0 0.0
    %3216 = vmatprep.subr.mxu0 0.0
    %3217 = vmatpush1.msra.mxu0 0.0
    %3218 = vmatprep.subr.mxu0 0.0
    %3219 = vmatpush1.msra.mxu0 0.0
    %3220 = vmatprep.subr.mxu0 0.0
    %3221 = vmatpush1.msra.mxu0 0.0
    %3222 = vmatprep.mubr.f32.mxu0 0.0
    %3223 = vmatmul.mubr.f32.gmra.mrb[0].mxu0 %v3153
    %v3224 = vpop.f32.mrb[0].mxu0
    %v3225 = vadd.f32 0.0, %v3224
    %v3226 = vpop.f32.mrb[0].mxu0
    %3227 = vmatprep.mubr.f32.mxu0 0.0
    %3228 = vmatmul.mubr.f32.gmra.mrb[0].mxu0 %v3156
    %v3229 = vpop.f32.mrb[0].mxu0
    %v3230 = vadd.f32 0.0, %v3229
    %v3231 = vpop.f32.mrb[0].mxu0
    %3232 = vdwg.mxu0
    %v3234 = vsel %vm3094, %v3145, 0
    %v3237 = vsel %vm3094, %v3146, 0
    %3239 = vmatprep.subr.mxu0 0.0
    %3240 = vmatpush1.msra.mxu0 %v3149
    %3241 = vmatprep.subr.mxu0 0.0
    %3242 = vmatpush1.msra.mxu0 0.0
    %3243 = vmatprep.subr.mxu0 0.0
    %3244 = vmatpush1.msra.mxu0 0.0
    %3245 = vmatprep.subr.mxu0 0.0
    %3246 = vmatpush1.msra.mxu0 0.0
    %3247 = vmatprep.subr.mxu0 0.0
    %3248 = vmatpush1.msra.mxu0 0.0
    %3249 = vmatprep.subr.mxu0 0.0
    %3250 = vmatpush1.msra.mxu0 0.0
    %3251 = vmatprep.subr.mxu0 0.0
    %3252 = vmatpush1.msra.mxu0 0.0
    %3253 = vmatprep.subr.mxu0 0.0
    %3254 = vmatpush1.msra.mxu0 0.0
    %3255 = vmatprep.subr.mxu0 0.0
    %3256 = vmatpush1.msra.mxu0 0.0
    %3257 = vmatprep.subr.mxu0 0.0
    %3258 = vmatpush1.msra.mxu0 0.0
    %3259 = vmatprep.subr.mxu0 0.0
    %3260 = vmatpush1.msra.mxu0 0.0
    %3261 = vmatprep.subr.mxu0 0.0
    %3262 = vmatpush1.msra.mxu0 0.0
    %3263 = vmatprep.subr.mxu0 0.0
    %3264 = vmatpush1.msra.mxu0 0.0
    %3265 = vmatprep.subr.mxu0 0.0
    %3266 = vmatpush1.msra.mxu0 0.0
    %3267 = vmatprep.subr.mxu0 0.0
    %3268 = vmatpush1.msra.mxu0 0.0
    %3269 = vmatprep.subr.mxu0 0.0
    %3270 = vmatpush1.msra.mxu0 0.0
    %3271 = vmatprep.subr.mxu0 0.0
    %3272 = vmatpush1.msra.mxu0 0.0
    %3273 = vmatprep.subr.mxu0 0.0
    %3274 = vmatpush1.msra.mxu0 0.0
    %3275 = vmatprep.subr.mxu0 0.0
    %3276 = vmatpush1.msra.mxu0 0.0
    %3277 = vmatprep.subr.mxu0 0.0
    %3278 = vmatpush1.msra.mxu0 0.0
    %3279 = vmatprep.subr.mxu0 0.0
    %3280 = vmatpush1.msra.mxu0 0.0
    %3281 = vmatprep.subr.mxu0 0.0
    %3282 = vmatpush1.msra.mxu0 0.0
    %3283 = vmatprep.subr.mxu0 0.0
    %3284 = vmatpush1.msra.mxu0 0.0
    %3285 = vmatprep.subr.mxu0 0.0
    %3286 = vmatpush1.msra.mxu0 0.0
    %3287 = vmatprep.subr.mxu0 0.0
    %3288 = vmatpush1.msra.mxu0 0.0
    %3289 = vmatprep.subr.mxu0 0.0
    %3290 = vmatpush1.msra.mxu0 0.0
    %3291 = vmatprep.subr.mxu0 0.0
    %3292 = vmatpush1.msra.mxu0 0.0
    %3293 = vmatprep.subr.mxu0 0.0
    %3294 = vmatpush1.msra.mxu0 0.0
    %3295 = vmatprep.subr.mxu0 0.0
    %3296 = vmatpush1.msra.mxu0 0.0
    %3297 = vmatprep.subr.mxu0 0.0
    %3298 = vmatpush1.msra.mxu0 0.0
    %3299 = vmatprep.subr.mxu0 0.0
    %3300 = vmatpush1.msra.mxu0 0.0
    %3301 = vmatprep.subr.mxu0 0.0
    %3302 = vmatpush1.msra.mxu0 0.0
    %3303 = vmatprep.mubr.f32.mxu0 0.0
    %3304 = vmatmul.mubr.f32.gmra.mrb[0].mxu0 %v3234
    %v3305 = vpop.f32.mrb[0].mxu0
    %v3306 = vadd.f32 %v3225, %v3305
    %v3307 = vpop.f32.mrb[0].mxu0
    %3308 = vmatprep.mubr.f32.mxu0 0.0
    %3309 = vmatmul.mubr.f32.gmra.mrb[0].mxu0 %v3237
    %v3310 = vpop.f32.mrb[0].mxu0
    %v3311 = vadd.f32 %v3230, %v3310
    %v3312 = vpop.f32.mrb[0].mxu0
    %3313 = vdwg.mxu0
    %s3314 = scalar_lea.vmem %s6, 16
    %v3315 = vld [vmem:[%s3314] sm:$0xff]
    %v3317 = vsel %vm3094, %v3147, 0
    %v3320 = vsel %vm3094, %v3148, 0
    %3322 = vmatprep.subr.mxu0 0.0
    %3323 = vmatpush1.msra.mxu0 %v3315
    %3324 = vmatprep.subr.mxu0 0.0
    %3325 = vmatpush1.msra.mxu0 0.0
    %3326 = vmatprep.subr.mxu0 0.0
    %3327 = vmatpush1.msra.mxu0 0.0
    %3328 = vmatprep.subr.mxu0 0.0
    %3329 = vmatpush1.msra.mxu0 0.0
    %3330 = vmatprep.subr.mxu0 0.0
    %3331 = vmatpush1.msra.mxu0 0.0
    %3332 = vmatprep.subr.mxu0 0.0
    %3333 = vmatpush1.msra.mxu0 0.0
    %3334 = vmatprep.subr.mxu0 0.0
    %3335 = vmatpush1.msra.mxu0 0.0
    %3336 = vmatprep.subr.mxu0 0.0
    %3337 = vmatpush1.msra.mxu0 0.0
    %3338 = vmatprep.subr.mxu0 0.0
    %3339 = vmatpush1.msra.mxu0 0.0
    %3340 = vmatprep.subr.mxu0 0.0
    %3341 = vmatpush1.msra.mxu0 0.0
    %3342 = vmatprep.subr.mxu0 0.0
    %3343 = vmatpush1.msra.mxu0 0.0
    %3344 = vmatprep.subr.mxu0 0.0
    %3345 = vmatpush1.msra.mxu0 0.0
    %3346 = vmatprep.subr.mxu0 0.0
    %3347 = vmatpush1.msra.mxu0 0.0
    %3348 = vmatprep.subr.mxu0 0.0
    %3349 = vmatpush1.msra.mxu0 0.0
    %3350 = vmatprep.subr.mxu0 0.0
    %3351 = vmatpush1.msra.mxu0 0.0
    %3352 = vmatprep.subr.mxu0 0.0
    %3353 = vmatpush1.msra.mxu0 0.0
    %3354 = vmatprep.subr.mxu0 0.0
    %3355 = vmatpush1.msra.mxu0 0.0
    %3356 = vmatprep.subr.mxu0 0.0
    %3357 = vmatpush1.msra.mxu0 0.0
    %3358 = vmatprep.subr.mxu0 0.0
    %3359 = vmatpush1.msra.mxu0 0.0
    %3360 = vmatprep.subr.mxu0 0.0
    %3361 = vmatpush1.msra.mxu0 0.0
    %3362 = vmatprep.subr.mxu0 0.0
    %3363 = vmatpush1.msra.mxu0 0.0
    %3364 = vmatprep.subr.mxu0 0.0
    %3365 = vmatpush1.msra.mxu0 0.0
    %3366 = vmatprep.subr.mxu0 0.0
    %3367 = vmatpush1.msra.mxu0 0.0
    %3368 = vmatprep.subr.mxu0 0.0
    %3369 = vmatpush1.msra.mxu0 0.0
    %3370 = vmatprep.subr.mxu0 0.0
    %3371 = vmatpush1.msra.mxu0 0.0
    %3372 = vmatprep.subr.mxu0 0.0
    %3373 = vmatpush1.msra.mxu0 0.0
    %3374 = vmatprep.subr.mxu0 0.0
    %3375 = vmatpush1.msra.mxu0 0.0
    %3376 = vmatprep.subr.mxu0 0.0
    %3377 = vmatpush1.msra.mxu0 0.0
    %3378 = vmatprep.subr.mxu0 0.0
    %3379 = vmatpush1.msra.mxu0 0.0
    %3380 = vmatprep.subr.mxu0 0.0
    %3381 = vmatpush1.msra.mxu0 0.0
    %3382 = vmatprep.subr.mxu0 0.0
    %3383 = vmatpush1.msra.mxu0 0.0
    %3384 = vmatprep.subr.mxu0 0.0
    %3385 = vmatpush1.msra.mxu0 0.0
    %3386 = vmatprep.mubr.f32.mxu0 0.0
    %3387 = vmatmul.mubr.f32.gmra.mrb[0].mxu0 %v3317
    %v3388 = vpop.f32.mrb[0].mxu0
    %v3389 = vadd.f32 0.0, %v3388
    %v3390 = vpop.f32.mrb[0].mxu0
    %3391 = vmatprep.mubr.f32.mxu0 0.0
    %3392 = vmatmul.mubr.f32.gmra.mrb[0].mxu0 %v3320
    %v3393 = vpop.f32.mrb[0].mxu0
    %v3394 = vadd.f32 0.0, %v3393
    %v3395 = vpop.f32.mrb[0].mxu0
    %3396 = vdwg.mxu0
    %v3397 = vadd.f32 %v3306, %v3389
    %v3398 = vadd.f32 %v3311, %v3394
    %v3399 = vld [vmem:[#allocation18 + $0x3] sm:$0x1]
    %v3400 = vlaneseq
    %v3401 = vshrl.u32 %v3400, 7
    %v3402 = vsub.s32 0, %v3401
    %v3403 = vrot.slane %v3399, %v3402
    %v3404 = vadd.f32 %v3397, %v3403
    %v3405 = vadd.f32 %v3398, %v3403
    %v3406 = vld [vmem:[#allocation18 + $0x4] sm:$0x1]
    %v3407 = vld [vmem:[#allocation18 + $0x5] sm:$0x1]
    %v3408 = vsel %vm3094, %v3404, 0.0
    %v3409 = vsel %vm3094, %v3405, 0.0
    %v3410 = vadd.f32 %v3408, %v3409
    %v3411 = vrot.slane %v3410, 4
    %v3412 = vadd.f32 %v3410, %v3411
    %v3413 = vrot.slane %v3412, 2
    %v3414 = vadd.f32 %v3412, %v3413
    %v3415 = vrot.slane %v3414, 1
    %v3416 = vadd.f32 %v3414, %v3415
    %v3417 = vmul.f32 %v3404, %v3404
    %v3418 = vmul.f32 %v3405, %v3405
    %v3419 = vsel %vm3094, %v3417, 0.0
    %v3420 = vsel %vm3094, %v3418, 0.0
    %v3421 = vadd.f32 %v3419, %v3420
    %v3422 = vrot.slane %v3421, 4
    %v3423 = vadd.f32 %v3421, %v3422
    %v3424 = vrot.slane %v3423, 2
    %v3425 = vadd.f32 %v3423, %v3424
    %v3426 = vrot.slane %v3425, 1
    %v3427 = vadd.f32 %v3425, %v3426
    %v3428 = vmul.f32 %v3416, 0.0625
    %v3429 = vmul.f32 %v3427, 0.0625
    %v3430 = vmul.f32 %v3428, %v3428
    %v3431 = vsub.f32 %v3429, %v3430
    %v3432 = vadd.f32 %v3431, 1e-05
    %v3433 = vrsqrt.pop %v3432
    %v3434 = vmul.f32 %v3406, %v3433
    %v3435 = vmul.f32 %v3428, %v3434
    %v3436 = vsub.f32 %v3407, %v3435
    %v3437 = vlaneseq
    %v3438 = vshrl.u32 %v3437, 7
    %v3439 = vsub.s32 0, %v3438
    %v3440 = vrot.slane %v3434, %v3439
    %v3441 = vmul.f32 %v3404, %v3440
    %v3442 = vmul.f32 %v3405, %v3440
    %v3443 = vlaneseq
    %v3444 = vshrl.u32 %v3443, 7
    %v3445 = vsub.s32 0, %v3444
    %v3446 = vrot.slane %v3436, %v3445
    %v3447 = vadd.f32 %v3441, %v3446
    %v3448 = vadd.f32 %v3442, %v3446
    %v3449 = vld [vmem:[#allocation19] sm:$0xf]
    %v3450 = vld [vmem:[#allocation18 + $0x6] sm:$0x1]
    %v3451 = vlaneseq
    %v3452 = vshrl.u32 %v3451, 7
    %v3453 = vsub.s32 0, %v3452
    %v3454 = vrot.slane %v3450, %v3453
    %v3456 = vsel %vm207, %v3449, 0
    %3458 = vmatprep.subr.mxu0 0.0
    %3459 = vmatpush1.msra.mxu0 %v3456
    %3460 = vmatprep.subr.mxu0 0.0
    %3461 = vmatpush1.msra.mxu0 0.0
    %3462 = vmatprep.subr.mxu0 0.0
    %3463 = vmatpush1.msra.mxu0 0.0
    %3464 = vmatprep.subr.mxu0 0.0
    %3465 = vmatpush1.msra.mxu0 0.0
    %3466 = vmatprep.subr.mxu0 0.0
    %3467 = vmatpush1.msra.mxu0 0.0
    %3468 = vmatprep.subr.mxu0 0.0
    %3469 = vmatpush1.msra.mxu0 0.0
    %3470 = vmatprep.subr.mxu0 0.0
    %3471 = vmatpush1.msra.mxu0 0.0
    %3472 = vmatprep.subr.mxu0 0.0
    %3473 = vmatpush1.msra.mxu0 0.0
    %3474 = vmatprep.subr.mxu0 0.0
    %3475 = vmatpush1.msra.mxu0 0.0
    %3476 = vmatprep.subr.mxu0 0.0
    %3477 = vmatpush1.msra.mxu0 0.0
    %3478 = vmatprep.subr.mxu0 0.0
    %3479 = vmatpush1.msra.mxu0 0.0
    %3480 = vmatprep.subr.mxu0 0.0
    %3481 = vmatpush1.msra.mxu0 0.0
    %3482 = vmatprep.subr.mxu0 0.0
    %3483 = vmatpush1.msra.mxu0 0.0
    %3484 = vmatprep.subr.mxu0 0.0
    %3485 = vmatpush1.msra.mxu0 0.0
    %3486 = vmatprep.subr.mxu0 0.0
    %3487 = vmatpush1.msra.mxu0 0.0
    %3488 = vmatprep.subr.mxu0 0.0
    %3489 = vmatpush1.msra.mxu0 0.0
    %3490 = vmatprep.subr.mxu0 0.0
    %3491 = vmatpush1.msra.mxu0 0.0
    %3492 = vmatprep.subr.mxu0 0.0
    %3493 = vmatpush1.msra.mxu0 0.0
    %3494 = vmatprep.subr.mxu0 0.0
    %3495 = vmatpush1.msra.mxu0 0.0
    %3496 = vmatprep.subr.mxu0 0.0
    %3497 = vmatpush1.msra.mxu0 0.0
    %3498 = vmatprep.subr.mxu0 0.0
    %3499 = vmatpush1.msra.mxu0 0.0
    %3500 = vmatprep.subr.mxu0 0.0
    %3501 = vmatpush1.msra.mxu0 0.0
    %3502 = vmatprep.subr.mxu0 0.0
    %3503 = vmatpush1.msra.mxu0 0.0
    %3504 = vmatprep.subr.mxu0 0.0
    %3505 = vmatpush1.msra.mxu0 0.0
    %3506 = vmatprep.subr.mxu0 0.0
    %3507 = vmatpush1.msra.mxu0 0.0
    %3508 = vmatprep.subr.mxu0 0.0
    %3509 = vmatpush1.msra.mxu0 0.0
    %3510 = vmatprep.subr.mxu0 0.0
    %3511 = vmatpush1.msra.mxu0 0.0
    %3512 = vmatprep.subr.mxu0 0.0
    %3513 = vmatpush1.msra.mxu0 0.0
    %3514 = vmatprep.subr.mxu0 0.0
    %3515 = vmatpush1.msra.mxu0 0.0
    %3516 = vmatprep.subr.mxu0 0.0
    %3517 = vmatpush1.msra.mxu0 0.0
    %3518 = vmatprep.subr.mxu0 0.0
    %3519 = vmatpush1.msra.mxu0 0.0
    %3520 = vmatprep.subr.mxu0 0.0
    %3521 = vmatpush1.msra.mxu0 0.0
    %3522 = vmatprep.mubr.f32.mxu0 0.0
    %3523 = vmatmul.mubr.f32.gmra.mrb[0].mxu0 %v2830
    %v3524 = vpop.f32.mrb[0].mxu0
    %v3525 = vadd.f32 %v3454, %v3524
    %v3526 = vpop.f32.mrb[0].mxu0
    %3527 = vmatprep.mubr.f32.mxu0 0.0
    %3528 = vmatmul.mubr.f32.gmra.mrb[0].mxu0 %v2833
    %v3529 = vpop.f32.mrb[0].mxu0
    %v3530 = vadd.f32 %v3454, %v3529
    %v3531 = vpop.f32.mrb[0].mxu0
    %3532 = vdwg.mxu0
    %v3533 = vadd.f32 %v3447, %v3525
    %v3534 = vadd.f32 %v3448, %v3530
    %v3535 = vmax.f32 %v3533, 0.0
    %v3536 = vmax.f32 %v3534, 0.0
    %3537 = vst.msk [vmem:[%s17] sm:$0xff] %vm3094, %v3535
    %3538 = vst.msk [vmem:[%s17 + $0x8] sm:$0xff] %vm3094, %v3536
    %3539 = vst.msk [vmem:[#allocation6] sm:$0x1] %vm3138, 0.0
    %3540 = vst.msk [vmem:[#allocation6 + $0x10] sm:$0x1] %vm3138, 0.0
    %3541 = vst.msk [vmem:[#allocation6 + $0x9] sm:$0x1] %vm3138, 0.0
    %3542 = vst.msk [vmem:[#allocation6 + $0x19] sm:$0x1] %vm3138, 0.0
    %3543 = vst.msk [vmem:[#allocation6 + $0x1] sm:$0xff] %vm3094, %v3535
    %3544 = vst.msk [vmem:[#allocation6 + $0x11] sm:$0xff] %vm3094, %v3536
    %v3545 = vld [vmem:[#allocation6] sm:$0xff]
    %v3546 = vld [vmem:[#allocation6 + $0x10] sm:$0xff]
    %v3547 = vld [vmem:[#allocation6 + $0x2] sm:$0xff]
    %v3548 = vld [vmem:[#allocation6 + $0x12] sm:$0xff]
    %v3549 = vld [vmem:[%s9] sm:$0xff]
    %s3550 = scalar_lea.vmem %s9, 8
    %v3551 = vld [vmem:[%s3550] sm:$0xff]
    %v3553 = vsel %vm3094, %v3535, 0
    %v3556 = vsel %vm3094, %v3536, 0
    %3558 = vmatprep.subr.mxu0 0.0
    %3559 = vmatpush1.msra.mxu0 %v3551
    %3560 = vmatprep.subr.mxu0 0.0
    %3561 = vmatpush1.msra.mxu0 0.0
    %3562 = vmatprep.subr.mxu0 0.0
    %3563 = vmatpush1.msra.mxu0 0.0
    %3564 = vmatprep.subr.mxu0 0.0
    %3565 = vmatpush1.msra.mxu0 0.0
    %3566 = vmatprep.subr.mxu0 0.0
    %3567 = vmatpush1.msra.mxu0 0.0
    %3568 = vmatprep.subr.mxu0 0.0
    %3569 = vmatpush1.msra.mxu0 0.0
    %3570 = vmatprep.subr.mxu0 0.0
    %3571 = vmatpush1.msra.mxu0 0.0
    %3572 = vmatprep.subr.mxu0 0.0
    %3573 = vmatpush1.msra.mxu0 0.0
    %3574 = vmatprep.subr.mxu0 0.0
    %3575 = vmatpush1.msra.mxu0 0.0
    %3576 = vmatprep.subr.mxu0 0.0
    %3577 = vmatpush1.msra.mxu0 0.0
    %3578 = vmatprep.subr.mxu0 0.0
    %3579 = vmatpush1.msra.mxu0 0.0
    %3580 = vmatprep.subr.mxu0 0.0
    %3581 = vmatpush1.msra.mxu0 0.0
    %3582 = vmatprep.subr.mxu0 0.0
    %3583 = vmatpush1.msra.mxu0 0.0
    %3584 = vmatprep.subr.mxu0 0.0
    %3585 = vmatpush1.msra.mxu0 0.0
    %3586 = vmatprep.subr.mxu0 0.0
    %3587 = vmatpush1.msra.mxu0 0.0
    %3588 = vmatprep.subr.mxu0 0.0
    %3589 = vmatpush1.msra.mxu0 0.0
    %3590 = vmatprep.subr.mxu0 0.0
    %3591 = vmatpush1.msra.mxu0 0.0
    %3592 = vmatprep.subr.mxu0 0.0
    %3593 = vmatpush1.msra.mxu0 0.0
    %3594 = vmatprep.subr.mxu0 0.0
    %3595 = vmatpush1.msra.mxu0 0.0
    %3596 = vmatprep.subr.mxu0 0.0
    %3597 = vmatpush1.msra.mxu0 0.0
    %3598 = vmatprep.subr.mxu0 0.0
    %3599 = vmatpush1.msra.mxu0 0.0
    %3600 = vmatprep.subr.mxu0 0.0
    %3601 = vmatpush1.msra.mxu0 0.0
    %3602 = vmatprep.subr.mxu0 0.0
    %3603 = vmatpush1.msra.mxu0 0.0
    %3604 = vmatprep.subr.mxu0 0.0
    %3605 = vmatpush1.msra.mxu0 0.0
    %3606 = vmatprep.subr.mxu0 0.0
    %3607 = vmatpush1.msra.mxu0 0.0
    %3608 = vmatprep.subr.mxu0 0.0
    %3609 = vmatpush1.msra.mxu0 0.0
    %3610 = vmatprep.subr.mxu0 0.0
    %3611 = vmatpush1.msra.mxu0 0.0
    %3612 = vmatprep.subr.mxu0 0.0
    %3613 = vmatpush1.msra.mxu0 0.0
    %3614 = vmatprep.subr.mxu0 0.0
    %3615 = vmatpush1.msra.mxu0 0.0
    %3616 = vmatprep.subr.mxu0 0.0
    %3617 = vmatpush1.msra.mxu0 0.0
    %3618 = vmatprep.subr.mxu0 0.0
    %3619 = vmatpush1.msra.mxu0 0.0
    %3620 = vmatprep.subr.mxu0 0.0
    %3621 = vmatpush1.msra.mxu0 0.0
    %3622 = vmatprep.mubr.f32.mxu0 0.0
    %3623 = vmatmul.mubr.f32.gmra.mrb[0].mxu0 %v3553
    %v3624 = vpop.f32.mrb[0].mxu0
    %v3625 = vadd.f32 0.0, %v3624
    %v3626 = vpop.f32.mrb[0].mxu0
    %3627 = vmatprep.mubr.f32.mxu0 0.0
    %3628 = vmatmul.mubr.f32.gmra.mrb[0].mxu0 %v3556
    %v3629 = vpop.f32.mrb[0].mxu0
    %v3630 = vadd.f32 0.0, %v3629
    %v3631 = vpop.f32.mrb[0].mxu0
    %3632 = vdwg.mxu0
    %v3634 = vsel %vm3094, %v3545, 0
    %v3637 = vsel %vm3094, %v3546, 0
    %3639 = vmatprep.subr.mxu0 0.0
    %3640 = vmatpush1.msra.mxu0 %v3549
    %3641 = vmatprep.subr.mxu0 0.0
    %3642 = vmatpush1.msra.mxu0 0.0
    %3643 = vmatprep.subr.mxu0 0.0
    %3644 = vmatpush1.msra.mxu0 0.0
    %3645 = vmatprep.subr.mxu0 0.0
    %3646 = vmatpush1.msra.mxu0 0.0
    %3647 = vmatprep.subr.mxu0 0.0
    %3648 = vmatpush1.msra.mxu0 0.0
    %3649 = vmatprep.subr.mxu0 0.0
    %3650 = vmatpush1.msra.mxu0 0.0
    %3651 = vmatprep.subr.mxu0 0.0
    %3652 = vmatpush1.msra.mxu0 0.0
    %3653 = vmatprep.subr.mxu0 0.0
    %3654 = vmatpush1.msra.mxu0 0.0
    %3655 = vmatprep.subr.mxu0 0.0
    %3656 = vmatpush1.msra.mxu0 0.0
    %3657 = vmatprep.subr.mxu0 0.0
    %3658 = vmatpush1.msra.mxu0 0.0
    %3659 = vmatprep.subr.mxu0 0.0
    %3660 = vmatpush1.msra.mxu0 0.0
    %3661 = vmatprep.subr.mxu0 0.0
    %3662 = vmatpush1.msra.mxu0 0.0
    %3663 = vmatprep.subr.mxu0 0.0
    %3664 = vmatpush1.msra.mxu0 0.0
    %3665 = vmatprep.subr.mxu0 0.0
    %3666 = vmatpush1.msra.mxu0 0.0
    %3667 = vmatprep.subr.mxu0 0.0
    %3668 = vmatpush1.msra.mxu0 0.0
    %3669 = vmatprep.subr.mxu0 0.0
    %3670 = vmatpush1.msra.mxu0 0.0
    %3671 = vmatprep.subr.mxu0 0.0
    %3672 = vmatpush1.msra.mxu0 0.0
    %3673 = vmatprep.subr.mxu0 0.0
    %3674 = vmatpush1.msra.mxu0 0.0
    %3675 = vmatprep.subr.mxu0 0.0
    %3676 = vmatpush1.msra.mxu0 0.0
    %3677 = vmatprep.subr.mxu0 0.0
    %3678 = vmatpush1.msra.mxu0 0.0
    %3679 = vmatprep.subr.mxu0 0.0
    %3680 = vmatpush1.msra.mxu0 0.0
    %3681 = vmatprep.subr.mxu0 0.0
    %3682 = vmatpush1.msra.mxu0 0.0
    %3683 = vmatprep.subr.mxu0 0.0
    %3684 = vmatpush1.msra.mxu0 0.0
    %3685 = vmatprep.subr.mxu0 0.0
    %3686 = vmatpush1.msra.mxu0 0.0
    %3687 = vmatprep.subr.mxu0 0.0
    %3688 = vmatpush1.msra.mxu0 0.0
    %3689 = vmatprep.subr.mxu0 0.0
    %3690 = vmatpush1.msra.mxu0 0.0
    %3691 = vmatprep.subr.mxu0 0.0
    %3692 = vmatpush1.msra.mxu0 0.0
    %3693 = vmatprep.subr.mxu0 0.0
    %3694 = vmatpush1.msra.mxu0 0.0
    %3695 = vmatprep.subr.mxu0 0.0
    %3696 = vmatpush1.msra.mxu0 0.0
    %3697 = vmatprep.subr.mxu0 0.0
    %3698 = vmatpush1.msra.mxu0 0.0
    %3699 = vmatprep.subr.mxu0 0.0
    %3700 = vmatpush1.msra.mxu0 0.0
    %3701 = vmatprep.subr.mxu0 0.0
    %3702 = vmatpush1.msra.mxu0 0.0
    %3703 = vmatprep.mubr.f32.mxu0 0.0
    %3704 = vmatmul.mubr.f32.gmra.mrb[0].mxu0 %v3634
    %v3705 = vpop.f32.mrb[0].mxu0
    %v3706 = vadd.f32 %v3625, %v3705
    %v3707 = vpop.f32.mrb[0].mxu0
    %3708 = vmatprep.mubr.f32.mxu0 0.0
    %3709 = vmatmul.mubr.f32.gmra.mrb[0].mxu0 %v3637
    %v3710 = vpop.f32.mrb[0].mxu0
    %v3711 = vadd.f32 %v3630, %v3710
    %v3712 = vpop.f32.mrb[0].mxu0
    %3713 = vdwg.mxu0
    %s3714 = scalar_lea.vmem %s9, 16
    %v3715 = vld [vmem:[%s3714] sm:$0xff]
    %v3717 = vsel %vm3094, %v3547, 0
    %v3720 = vsel %vm3094, %v3548, 0
    %3722 = vmatprep.subr.mxu0 0.0
    %3723 = vmatpush1.msra.mxu0 %v3715
    %3724 = vmatprep.subr.mxu0 0.0
    %3725 = vmatpush1.msra.mxu0 0.0
    %3726 = vmatprep.subr.mxu0 0.0
    %3727 = vmatpush1.msra.mxu0 0.0
    %3728 = vmatprep.subr.mxu0 0.0
    %3729 = vmatpush1.msra.mxu0 0.0
    %3730 = vmatprep.subr.mxu0 0.0
    %3731 = vmatpush1.msra.mxu0 0.0
    %3732 = vmatprep.subr.mxu0 0.0
    %3733 = vmatpush1.msra.mxu0 0.0
    %3734 = vmatprep.subr.mxu0 0.0
    %3735 = vmatpush1.msra.mxu0 0.0
    %3736 = vmatprep.subr.mxu0 0.0
    %3737 = vmatpush1.msra.mxu0 0.0
    %3738 = vmatprep.subr.mxu0 0.0
    %3739 = vmatpush1.msra.mxu0 0.0
    %3740 = vmatprep.subr.mxu0 0.0
    %3741 = vmatpush1.msra.mxu0 0.0
    %3742 = vmatprep.subr.mxu0 0.0
    %3743 = vmatpush1.msra.mxu0 0.0
    %3744 = vmatprep.subr.mxu0 0.0
    %3745 = vmatpush1.msra.mxu0 0.0
    %3746 = vmatprep.subr.mxu0 0.0
    %3747 = vmatpush1.msra.mxu0 0.0
    %3748 = vmatprep.subr.mxu0 0.0
    %3749 = vmatpush1.msra.mxu0 0.0
    %3750 = vmatprep.subr.mxu0 0.0
    %3751 = vmatpush1.msra.mxu0 0.0
    %3752 = vmatprep.subr.mxu0 0.0
    %3753 = vmatpush1.msra.mxu0 0.0
    %3754 = vmatprep.subr.mxu0 0.0
    %3755 = vmatpush1.msra.mxu0 0.0
    %3756 = vmatprep.subr.mxu0 0.0
    %3757 = vmatpush1.msra.mxu0 0.0
    %3758 = vmatprep.subr.mxu0 0.0
    %3759 = vmatpush1.msra.mxu0 0.0
    %3760 = vmatprep.subr.mxu0 0.0
    %3761 = vmatpush1.msra.mxu0 0.0
    %3762 = vmatprep.subr.mxu0 0.0
    %3763 = vmatpush1.msra.mxu0 0.0
    %3764 = vmatprep.subr.mxu0 0.0
    %3765 = vmatpush1.msra.mxu0 0.0
    %3766 = vmatprep.subr.mxu0 0.0
    %3767 = vmatpush1.msra.mxu0 0.0
    %3768 = vmatprep.subr.mxu0 0.0
    %3769 = vmatpush1.msra.mxu0 0.0
    %3770 = vmatprep.subr.mxu0 0.0
    %3771 = vmatpush1.msra.mxu0 0.0
    %3772 = vmatprep.subr.mxu0 0.0
    %3773 = vmatpush1.msra.mxu0 0.0
    %3774 = vmatprep.subr.mxu0 0.0
    %3775 = vmatpush1.msra.mxu0 0.0
    %3776 = vmatprep.subr.mxu0 0.0
    %3777 = vmatpush1.msra.mxu0 0.0
    %3778 = vmatprep.subr.mxu0 0.0
    %3779 = vmatpush1.msra.mxu0 0.0
    %3780 = vmatprep.subr.mxu0 0.0
    %3781 = vmatpush1.msra.mxu0 0.0
    %3782 = vmatprep.subr.mxu0 0.0
    %3783 = vmatpush1.msra.mxu0 0.0
    %3784 = vmatprep.subr.mxu0 0.0
    %3785 = vmatpush1.msra.mxu0 0.0
    %3786 = vmatprep.mubr.f32.mxu0 0.0
    %3787 = vmatmul.mubr.f32.gmra.mrb[0].mxu0 %v3717
    %v3788 = vpop.f32.mrb[0].mxu0
    %v3789 = vadd.f32 0.0, %v3788
    %v3790 = vpop.f32.mrb[0].mxu0
    %3791 = vmatprep.mubr.f32.mxu0 0.0
    %3792 = vmatmul.mubr.f32.gmra.mrb[0].mxu0 %v3720
    %v3793 = vpop.f32.mrb[0].mxu0
    %v3794 = vadd.f32 0.0, %v3793
    %v3795 = vpop.f32.mrb[0].mxu0
    %3796 = vdwg.mxu0
    %v3797 = vadd.f32 %v3706, %v3789
    %v3798 = vadd.f32 %v3711, %v3794
    %v3799 = vsel %vm3094, %v508, 0
    %3801 = vmatprep.subr.mxu0 0.0
    %v3802 = vand.u32 %v3797, 4294901760
    %3803 = vmatpush1.msra.mxu0 %v3802
    %3804 = vmatprep.subr.mxu0 0.0
    %3805 = vmatpush1.msra.mxu0 0.0
    %3806 = vmatprep.subr.mxu0 0.0
    %3807 = vmatpush1.msra.mxu0 0.0
    %3808 = vmatprep.subr.mxu0 0.0
    %3809 = vmatpush1.msra.mxu0 0.0
    %3810 = vmatprep.subr.mxu0 0.0
    %3811 = vmatpush1.msra.mxu0 0.0
    %3812 = vmatprep.subr.mxu0 0.0
    %3813 = vmatpush1.msra.mxu0 0.0
    %3814 = vmatprep.subr.mxu0 0.0
    %3815 = vmatpush1.msra.mxu0 0.0
    %3816 = vmatprep.subr.mxu0 0.0
    %3817 = vmatpush1.msra.mxu0 0.0
    %3818 = vmatprep.subr.mxu0 0.0
    %3819 = vmatpush1.msra.mxu0 0.0
    %3820 = vmatprep.subr.mxu0 0.0
    %3821 = vmatpush1.msra.mxu0 0.0
    %3822 = vmatprep.subr.mxu0 0.0
    %3823 = vmatpush1.msra.mxu0 0.0
    %3824 = vmatprep.subr.mxu0 0.0
    %3825 = vmatpush1.msra.mxu0 0.0
    %3826 = vmatprep.subr.mxu0 0.0
    %3827 = vmatpush1.msra.mxu0 0.0
    %3828 = vmatprep.subr.mxu0 0.0
    %3829 = vmatpush1.msra.mxu0 0.0
    %3830 = vmatprep.subr.mxu0 0.0
    %3831 = vmatpush1.msra.mxu0 0.0
    %3832 = vmatprep.subr.mxu0 0.0
    %3833 = vmatpush1.msra.mxu0 0.0
    %3834 = vmatprep.subr.mxu0 0.0
    %3835 = vmatpush1.msra.mxu0 0.0
    %3836 = vmatprep.subr.mxu0 0.0
    %3837 = vmatpush1.msra.mxu0 0.0
    %3838 = vmatprep.subr.mxu0 0.0
    %3839 = vmatpush1.msra.mxu0 0.0
    %3840 = vmatprep.subr.mxu0 0.0
    %3841 = vmatpush1.msra.mxu0 0.0
    %3842 = vmatprep.subr.mxu0 0.0
    %3843 = vmatpush1.msra.mxu0 0.0
    %3844 = vmatprep.subr.mxu0 0.0
    %3845 = vmatpush1.msra.mxu0 0.0
    %3846 = vmatprep.subr.mxu0 0.0
    %3847 = vmatpush1.msra.mxu0 0.0
    %3848 = vmatprep.subr.mxu0 0.0
    %3849 = vmatpush1.msra.mxu0 0.0
    %3850 = vmatprep.subr.mxu0 0.0
    %3851 = vmatpush1.msra.mxu0 0.0
    %3852 = vmatprep.subr.mxu0 0.0
    %3853 = vmatpush1.msra.mxu0 0.0
    %3854 = vmatprep.subr.mxu0 0.0
    %3855 = vmatpush1.msra.mxu0 0.0
    %3856 = vmatprep.subr.mxu0 0.0
    %3857 = vmatpush1.msra.mxu0 0.0
    %3858 = vmatprep.subr.mxu0 0.0
    %3859 = vmatpush1.msra.mxu0 0.0
    %3860 = vmatprep.subr.mxu0 0.0
    %3861 = vmatpush1.msra.mxu0 0.0
    %3862 = vmatprep.subr.mxu0 0.0
    %3863 = vmatpush1.msra.mxu0 0.0
    %3864 = vmatprep.subr.mxu0 0.0
    %3865 = vmatpush1.msra.mxu0 0.0
    %3866 = vmatprep.mubr.f32.mxu0 0.0
    %v3867 = vand.u32 %v3799, 4294901760
    %v3868 = vsub.f32 %v3799, %v3867
    %v3869 = vand.u32 %v3868, 4294901760
    %v3870 = vsub.f32 %v3868, %v3869
    %v3871 = vand.u32 %v3870, 4294901760
    %3872 = vmatmul.mubr.f32.gmra.mrb[0].mxu0 %v3871
    %v3873 = vpop.f32.mrb[0].mxu0
    %v3874 = vadd.f32 0.0, %v3873
    %v3875 = vpop.f32.mrb[0].mxu0
    %3876 = vdwg.mxu0
    %3877 = vmatprep.subr.mxu0 0.0
    %v3878 = vand.u32 %v3797, 4294901760
    %v3879 = vsub.f32 %v3797, %v3878
    %v3880 = vand.u32 %v3879, 4294901760
    %v3881 = vsub.f32 %v3879, %v3880
    %v3882 = vand.u32 %v3881, 4294901760
    %3883 = vmatpush1.msra.mxu0 %v3882
    %3884 = vmatprep.subr.mxu0 0.0
    %3885 = vmatpush1.msra.mxu0 0.0
    %3886 = vmatprep.subr.mxu0 0.0
    %3887 = vmatpush1.msra.mxu0 0.0
    %3888 = vmatprep.subr.mxu0 0.0
    %3889 = vmatpush1.msra.mxu0 0.0
    %3890 = vmatprep.subr.mxu0 0.0
    %3891 = vmatpush1.msra.mxu0 0.0
    %3892 = vmatprep.subr.mxu0 0.0
    %3893 = vmatpush1.msra.mxu0 0.0
    %3894 = vmatprep.subr.mxu0 0.0
    %3895 = vmatpush1.msra.mxu0 0.0
    %3896 = vmatprep.subr.mxu0 0.0
    %3897 = vmatpush1.msra.mxu0 0.0
    %3898 = vmatprep.subr.mxu0 0.0
    %3899 = vmatpush1.msra.mxu0 0.0
    %3900 = vmatprep.subr.mxu0 0.0
    %3901 = vmatpush1.msra.mxu0 0.0
    %3902 = vmatprep.subr.mxu0 0.0
    %3903 = vmatpush1.msra.mxu0 0.0
    %3904 = vmatprep.subr.mxu0 0.0
    %3905 = vmatpush1.msra.mxu0 0.0
    %3906 = vmatprep.subr.mxu0 0.0
    %3907 = vmatpush1.msra.mxu0 0.0
    %3908 = vmatprep.subr.mxu0 0.0
    %3909 = vmatpush1.msra.mxu0 0.0
    %3910 = vmatprep.subr.mxu0 0.0
    %3911 = vmatpush1.msra.mxu0 0.0
    %3912 = vmatprep.subr.mxu0 0.0
    %3913 = vmatpush1.msra.mxu0 0.0
    %3914 = vmatprep.subr.mxu0 0.0
    %3915 = vmatpush1.msra.mxu0 0.0
    %3916 = vmatprep.subr.mxu0 0.0
    %3917 = vmatpush1.msra.mxu0 0.0
    %3918 = vmatprep.subr.mxu0 0.0
    %3919 = vmatpush1.msra.mxu0 0.0
    %3920 = vmatprep.subr.mxu0 0.0
    %3921 = vmatpush1.msra.mxu0 0.0
    %3922 = vmatprep.subr.mxu0 0.0
    %3923 = vmatpush1.msra.mxu0 0.0
    %3924 = vmatprep.subr.mxu0 0.0
    %3925 = vmatpush1.msra.mxu0 0.0
    %3926 = vmatprep.subr.mxu0 0.0
    %3927 = vmatpush1.msra.mxu0 0.0
    %3928 = vmatprep.subr.mxu0 0.0
    %3929 = vmatpush1.msra.mxu0 0.0
    %3930 = vmatprep.subr.mxu0 0.0
    %3931 = vmatpush1.msra.mxu0 0.0
    %3932 = vmatprep.subr.mxu0 0.0
    %3933 = vmatpush1.msra.mxu0 0.0
    %3934 = vmatprep.subr.mxu0 0.0
    %3935 = vmatpush1.msra.mxu0 0.0
    %3936 = vmatprep.subr.mxu0 0.0
    %3937 = vmatpush1.msra.mxu0 0.0
    %3938 = vmatprep.subr.mxu0 0.0
    %3939 = vmatpush1.msra.mxu0 0.0
    %3940 = vmatprep.subr.mxu0 0.0
    %3941 = vmatpush1.msra.mxu0 0.0
    %3942 = vmatprep.subr.mxu0 0.0
    %3943 = vmatpush1.msra.mxu0 0.0
    %3944 = vmatprep.subr.mxu0 0.0
    %3945 = vmatpush1.msra.mxu0 0.0
    %3946 = vmatprep.mubr.f32.mxu0 0.0
    %v3947 = vand.u32 %v3799, 4294901760
    %3948 = vmatmul.mubr.f32.gmra.mrb[0].mxu0 %v3947
    %v3949 = vpop.f32.mrb[0].mxu0
    %v3950 = vadd.f32 %v3874, %v3949
    %v3951 = vpop.f32.mrb[0].mxu0
    %3952 = vdwg.mxu0
    %3953 = vmatprep.subr.mxu0 0.0
    %v3954 = vand.u32 %v3797, 4294901760
    %v3955 = vsub.f32 %v3797, %v3954
    %3956 = vmatpush1.msra.mxu0 %v3955
    %3957 = vmatprep.subr.mxu0 0.0
    %3958 = vmatpush1.msra.mxu0 0.0
    %3959 = vmatprep.subr.mxu0 0.0
    %3960 = vmatpush1.msra.mxu0 0.0
    %3961 = vmatprep.subr.mxu0 0.0
    %3962 = vmatpush1.msra.mxu0 0.0
    %3963 = vmatprep.subr.mxu0 0.0
    %3964 = vmatpush1.msra.mxu0 0.0
    %3965 = vmatprep.subr.mxu0 0.0
    %3966 = vmatpush1.msra.mxu0 0.0
    %3967 = vmatprep.subr.mxu0 0.0
    %3968 = vmatpush1.msra.mxu0 0.0
    %3969 = vmatprep.subr.mxu0 0.0
    %3970 = vmatpush1.msra.mxu0 0.0
    %3971 = vmatprep.subr.mxu0 0.0
    %3972 = vmatpush1.msra.mxu0 0.0
    %3973 = vmatprep.subr.mxu0 0.0
    %3974 = vmatpush1.msra.mxu0 0.0
    %3975 = vmatprep.subr.mxu0 0.0
    %3976 = vmatpush1.msra.mxu0 0.0
    %3977 = vmatprep.subr.mxu0 0.0
    %3978 = vmatpush1.msra.mxu0 0.0
    %3979 = vmatprep.subr.mxu0 0.0
    %3980 = vmatpush1.msra.mxu0 0.0
    %3981 = vmatprep.subr.mxu0 0.0
    %3982 = vmatpush1.msra.mxu0 0.0
    %3983 = vmatprep.subr.mxu0 0.0
    %3984 = vmatpush1.msra.mxu0 0.0
    %3985 = vmatprep.subr.mxu0 0.0
    %3986 = vmatpush1.msra.mxu0 0.0
    %3987 = vmatprep.subr.mxu0 0.0
    %3988 = vmatpush1.msra.mxu0 0.0
    %3989 = vmatprep.subr.mxu0 0.0
    %3990 = vmatpush1.msra.mxu0 0.0
    %3991 = vmatprep.subr.mxu0 0.0
    %3992 = vmatpush1.msra.mxu0 0.0
    %3993 = vmatprep.subr.mxu0 0.0
    %3994 = vmatpush1.msra.mxu0 0.0
    %3995 = vmatprep.subr.mxu0 0.0
    %3996 = vmatpush1.msra.mxu0 0.0
    %3997 = vmatprep.subr.mxu0 0.0
    %3998 = vmatpush1.msra.mxu0 0.0
    %3999 = vmatprep.subr.mxu0 0.0
    %4000 = vmatpush1.msra.mxu0 0.0
    %4001 = vmatprep.subr.mxu0 0.0
    %4002 = vmatpush1.msra.mxu0 0.0
    %4003 = vmatprep.subr.mxu0 0.0
    %4004 = vmatpush1.msra.mxu0 0.0
    %4005 = vmatprep.subr.mxu0 0.0
    %4006 = vmatpush1.msra.mxu0 0.0
    %4007 = vmatprep.subr.mxu0 0.0
    %4008 = vmatpush1.msra.mxu0 0.0
    %4009 = vmatprep.subr.mxu0 0.0
    %4010 = vmatpush1.msra.mxu0 0.0
    %4011 = vmatprep.subr.mxu0 0.0
    %4012 = vmatpush1.msra.mxu0 0.0
    %4013 = vmatprep.subr.mxu0 0.0
    %4014 = vmatpush1.msra.mxu0 0.0
    %4015 = vmatprep.subr.mxu0 0.0
    %4016 = vmatpush1.msra.mxu0 0.0
    %4017 = vmatprep.subr.mxu0 0.0
    %4018 = vmatpush1.msra.mxu0 0.0
    %4019 = vmatprep.mubr.f32.mxu0 0.0
    %v4020 = vand.u32 %v3799, 4294901760
    %v4021 = vsub.f32 %v3799, %v4020
    %4022 = vmatmul.mubr.f32.gmra.mrb[0].mxu0 %v4021
    %v4023 = vpop.f32.mrb[0].mxu0
    %v4024 = vadd.f32 %v3950, %v4023
    %v4025 = vpop.f32.mrb[0].mxu0
    %4026 = vdwg.mxu0
    %4027 = vmatprep.subr.mxu0 0.0
    %v4028 = vand.u32 %v3797, 4294901760
    %4029 = vmatpush1.msra.mxu0 %v4028
    %4030 = vmatprep.subr.mxu0 0.0
    %4031 = vmatpush1.msra.mxu0 0.0
    %4032 = vmatprep.subr.mxu0 0.0
    %4033 = vmatpush1.msra.mxu0 0.0
    %4034 = vmatprep.subr.mxu0 0.0
    %4035 = vmatpush1.msra.mxu0 0.0
    %4036 = vmatprep.subr.mxu0 0.0
    %4037 = vmatpush1.msra.mxu0 0.0
    %4038 = vmatprep.subr.mxu0 0.0
    %4039 = vmatpush1.msra.mxu0 0.0
    %4040 = vmatprep.subr.mxu0 0.0
    %4041 = vmatpush1.msra.mxu0 0.0
    %4042 = vmatprep.subr.mxu0 0.0
    %4043 = vmatpush1.msra.mxu0 0.0
    %4044 = vmatprep.subr.mxu0 0.0
    %4045 = vmatpush1.msra.mxu0 0.0
    %4046 = vmatprep.subr.mxu0 0.0
    %4047 = vmatpush1.msra.mxu0 0.0
    %4048 = vmatprep.subr.mxu0 0.0
    %4049 = vmatpush1.msra.mxu0 0.0
    %4050 = vmatprep.subr.mxu0 0.0
    %4051 = vmatpush1.msra.mxu0 0.0
    %4052 = vmatprep.subr.mxu0 0.0
    %4053 = vmatpush1.msra.mxu0 0.0
    %4054 = vmatprep.subr.mxu0 0.0
    %4055 = vmatpush1.msra.mxu0 0.0
    %4056 = vmatprep.subr.mxu0 0.0
    %4057 = vmatpush1.msra.mxu0 0.0
    %4058 = vmatprep.subr.mxu0 0.0
    %4059 = vmatpush1.msra.mxu0 0.0
    %4060 = vmatprep.subr.mxu0 0.0
    %4061 = vmatpush1.msra.mxu0 0.0
    %4062 = vmatprep.subr.mxu0 0.0
    %4063 = vmatpush1.msra.mxu0 0.0
    %4064 = vmatprep.subr.mxu0 0.0
    %4065 = vmatpush1.msra.mxu0 0.0
    %4066 = vmatprep.subr.mxu0 0.0
    %4067 = vmatpush1.msra.mxu0 0.0
    %4068 = vmatprep.subr.mxu0 0.0
    %4069 = vmatpush1.msra.mxu0 0.0
    %4070 = vmatprep.subr.mxu0 0.0
    %4071 = vmatpush1.msra.mxu0 0.0
    %4072 = vmatprep.subr.mxu0 0.0
    %4073 = vmatpush1.msra.mxu0 0.0
    %4074 = vmatprep.subr.mxu0 0.0
    %4075 = vmatpush1.msra.mxu0 0.0
    %4076 = vmatprep.subr.mxu0 0.0
    %4077 = vmatpush1.msra.mxu0 0.0
    %4078 = vmatprep.subr.mxu0 0.0
    %4079 = vmatpush1.msra.mxu0 0.0
    %4080 = vmatprep.subr.mxu0 0.0
    %4081 = vmatpush1.msra.mxu0 0.0
    %4082 = vmatprep.subr.mxu0 0.0
    %4083 = vmatpush1.msra.mxu0 0.0
    %4084 = vmatprep.subr.mxu0 0.0
    %4085 = vmatpush1.msra.mxu0 0.0
    %4086 = vmatprep.subr.mxu0 0.0
    %4087 = vmatpush1.msra.mxu0 0.0
    %4088 = vmatprep.subr.mxu0 0.0
    %4089 = vmatpush1.msra.mxu0 0.0
    %4090 = vmatprep.subr.mxu0 0.0
    %4091 = vmatpush1.msra.mxu0 0.0
    %4092 = vmatprep.mubr.f32.mxu0 0.0
    %v4093 = vand.u32 %v3799, 4294901760
    %v4094 = vsub.f32 %v3799, %v4093
    %v4095 = vand.u32 %v4094, 4294901760
    %4096 = vmatmul.mubr.f32.gmra.mrb[0].mxu0 %v4095
    %v4097 = vpop.f32.mrb[0].mxu0
    %v4098 = vadd.f32 %v4024, %v4097
    %v4099 = vpop.f32.mrb[0].mxu0
    %4100 = vdwg.mxu0
    %4101 = vmatprep.subr.mxu0 0.0
    %v4102 = vand.u32 %v3797, 4294901760
    %v4103 = vsub.f32 %v3797, %v4102
    %v4104 = vand.u32 %v4103, 4294901760
    %4105 = vmatpush1.msra.mxu0 %v4104
    %4106 = vmatprep.subr.mxu0 0.0
    %4107 = vmatpush1.msra.mxu0 0.0
    %4108 = vmatprep.subr.mxu0 0.0
    %4109 = vmatpush1.msra.mxu0 0.0
    %4110 = vmatprep.subr.mxu0 0.0
    %4111 = vmatpush1.msra.mxu0 0.0
    %4112 = vmatprep.subr.mxu0 0.0
    %4113 = vmatpush1.msra.mxu0 0.0
    %4114 = vmatprep.subr.mxu0 0.0
    %4115 = vmatpush1.msra.mxu0 0.0
    %4116 = vmatprep.subr.mxu0 0.0
    %4117 = vmatpush1.msra.mxu0 0.0
    %4118 = vmatprep.subr.mxu0 0.0
    %4119 = vmatpush1.msra.mxu0 0.0
    %4120 = vmatprep.subr.mxu0 0.0
    %4121 = vmatpush1.msra.mxu0 0.0
    %4122 = vmatprep.subr.mxu0 0.0
    %4123 = vmatpush1.msra.mxu0 0.0
    %4124 = vmatprep.subr.mxu0 0.0
    %4125 = vmatpush1.msra.mxu0 0.0
    %4126 = vmatprep.subr.mxu0 0.0
    %4127 = vmatpush1.msra.mxu0 0.0
    %4128 = vmatprep.subr.mxu0 0.0
    %4129 = vmatpush1.msra.mxu0 0.0
    %4130 = vmatprep.subr.mxu0 0.0
    %4131 = vmatpush1.msra.mxu0 0.0
    %4132 = vmatprep.subr.mxu0 0.0
    %4133 = vmatpush1.msra.mxu0 0.0
    %4134 = vmatprep.subr.mxu0 0.0
    %4135 = vmatpush1.msra.mxu0 0.0
    %4136 = vmatprep.subr.mxu0 0.0
    %4137 = vmatpush1.msra.mxu0 0.0
    %4138 = vmatprep.subr.mxu0 0.0
    %4139 = vmatpush1.msra.mxu0 0.0
    %4140 = vmatprep.subr.mxu0 0.0
    %4141 = vmatpush1.msra.mxu0 0.0
    %4142 = vmatprep.subr.mxu0 0.0
    %4143 = vmatpush1.msra.mxu0 0.0
    %4144 = vmatprep.subr.mxu0 0.0
    %4145 = vmatpush1.msra.mxu0 0.0
    %4146 = vmatprep.subr.mxu0 0.0
    %4147 = vmatpush1.msra.mxu0 0.0
    %4148 = vmatprep.subr.mxu0 0.0
    %4149 = vmatpush1.msra.mxu0 0.0
    %4150 = vmatprep.subr.mxu0 0.0
    %4151 = vmatpush1.msra.mxu0 0.0
    %4152 = vmatprep.subr.mxu0 0.0
    %4153 = vmatpush1.msra.mxu0 0.0
    %4154 = vmatprep.subr.mxu0 0.0
    %4155 = vmatpush1.msra.mxu0 0.0
    %4156 = vmatprep.subr.mxu0 0.0
    %4157 = vmatpush1.msra.mxu0 0.0
    %4158 = vmatprep.subr.mxu0 0.0
    %4159 = vmatpush1.msra.mxu0 0.0
    %4160 = vmatprep.subr.mxu0 0.0
    %4161 = vmatpush1.msra.mxu0 0.0
    %4162 = vmatprep.subr.mxu0 0.0
    %4163 = vmatpush1.msra.mxu0 0.0
    %4164 = vmatprep.subr.mxu0 0.0
    %4165 = vmatpush1.msra.mxu0 0.0
    %4166 = vmatprep.subr.mxu0 0.0
    %4167 = vmatpush1.msra.mxu0 0.0
    %4168 = vmatprep.mubr.f32.mxu0 0.0
    %v4169 = vand.u32 %v3799, 4294901760
    %4170 = vmatmul.mubr.f32.gmra.mrb[0].mxu0 %v4169
    %v4171 = vpop.f32.mrb[0].mxu0
    %v4172 = vadd.f32 %v4098, %v4171
    %v4173 = vpop.f32.mrb[0].mxu0
    %4174 = vdwg.mxu0
    %4175 = vmatprep.subr.mxu0 0.0
    %v4176 = vand.u32 %v3797, 4294901760
    %4177 = vmatpush1.msra.mxu0 %v4176
    %4178 = vmatprep.subr.mxu0 0.0
    %4179 = vmatpush1.msra.mxu0 0.0
    %4180 = vmatprep.subr.mxu0 0.0
    %4181 = vmatpush1.msra.mxu0 0.0
    %4182 = vmatprep.subr.mxu0 0.0
    %4183 = vmatpush1.msra.mxu0 0.0
    %4184 = vmatprep.subr.mxu0 0.0
    %4185 = vmatpush1.msra.mxu0 0.0
    %4186 = vmatprep.subr.mxu0 0.0
    %4187 = vmatpush1.msra.mxu0 0.0
    %4188 = vmatprep.subr.mxu0 0.0
    %4189 = vmatpush1.msra.mxu0 0.0
    %4190 = vmatprep.subr.mxu0 0.0
    %4191 = vmatpush1.msra.mxu0 0.0
    %4192 = vmatprep.subr.mxu0 0.0
    %4193 = vmatpush1.msra.mxu0 0.0
    %4194 = vmatprep.subr.mxu0 0.0
    %4195 = vmatpush1.msra.mxu0 0.0
    %4196 = vmatprep.subr.mxu0 0.0
    %4197 = vmatpush1.msra.mxu0 0.0
    %4198 = vmatprep.subr.mxu0 0.0
    %4199 = vmatpush1.msra.mxu0 0.0
    %4200 = vmatprep.subr.mxu0 0.0
    %4201 = vmatpush1.msra.mxu0 0.0
    %4202 = vmatprep.subr.mxu0 0.0
    %4203 = vmatpush1.msra.mxu0 0.0
    %4204 = vmatprep.subr.mxu0 0.0
    %4205 = vmatpush1.msra.mxu0 0.0
    %4206 = vmatprep.subr.mxu0 0.0
    %4207 = vmatpush1.msra.mxu0 0.0
    %4208 = vmatprep.subr.mxu0 0.0
    %4209 = vmatpush1.msra.mxu0 0.0
    %4210 = vmatprep.subr.mxu0 0.0
    %4211 = vmatpush1.msra.mxu0 0.0
    %4212 = vmatprep.subr.mxu0 0.0
    %4213 = vmatpush1.msra.mxu0 0.0
    %4214 = vmatprep.subr.mxu0 0.0
    %4215 = vmatpush1.msra.mxu0 0.0
    %4216 = vmatprep.subr.mxu0 0.0
    %4217 = vmatpush1.msra.mxu0 0.0
    %4218 = vmatprep.subr.mxu0 0.0
    %4219 = vmatpush1.msra.mxu0 0.0
    %4220 = vmatprep.subr.mxu0 0.0
    %4221 = vmatpush1.msra.mxu0 0.0
    %4222 = vmatprep.subr.mxu0 0.0
    %4223 = vmatpush1.msra.mxu0 0.0
    %4224 = vmatprep.subr.mxu0 0.0
    %4225 = vmatpush1.msra.mxu0 0.0
    %4226 = vmatprep.subr.mxu0 0.0
    %4227 = vmatpush1.msra.mxu0 0.0
    %4228 = vmatprep.subr.mxu0 0.0
    %4229 = vmatpush1.msra.mxu0 0.0
    %4230 = vmatprep.subr.mxu0 0.0
    %4231 = vmatpush1.msra.mxu0 0.0
    %4232 = vmatprep.subr.mxu0 0.0
    %4233 = vmatpush1.msra.mxu0 0.0
    %4234 = vmatprep.subr.mxu0 0.0
    %4235 = vmatpush1.msra.mxu0 0.0
    %4236 = vmatprep.subr.mxu0 0.0
    %4237 = vmatpush1.msra.mxu0 0.0
    %4238 = vmatprep.subr.mxu0 0.0
    %4239 = vmatpush1.msra.mxu0 0.0
    %4240 = vmatprep.mubr.f32.mxu0 0.0
    %v4241 = vand.u32 %v3799, 4294901760
    %4242 = vmatmul.mubr.f32.gmra.mrb[0].mxu0 %v4241
    %v4243 = vpop.f32.mrb[0].mxu0
    %v4244 = vadd.f32 %v4172, %v4243
    %v4245 = vpop.f32.mrb[0].mxu0
    %4246 = vdwg.mxu0
    %4247 = vmatprep.subr.mxu0 0.0
    %v4248 = vand.u32 %v3798, 4294901760
    %4249 = vmatpush1.msra.mxu0 %v4248
    %4250 = vmatprep.subr.mxu0 0.0
    %4251 = vmatpush1.msra.mxu0 0.0
    %4252 = vmatprep.subr.mxu0 0.0
    %4253 = vmatpush1.msra.mxu0 0.0
    %4254 = vmatprep.subr.mxu0 0.0
    %4255 = vmatpush1.msra.mxu0 0.0
    %4256 = vmatprep.subr.mxu0 0.0
    %4257 = vmatpush1.msra.mxu0 0.0
    %4258 = vmatprep.subr.mxu0 0.0
    %4259 = vmatpush1.msra.mxu0 0.0
    %4260 = vmatprep.subr.mxu0 0.0
    %4261 = vmatpush1.msra.mxu0 0.0
    %4262 = vmatprep.subr.mxu0 0.0
    %4263 = vmatpush1.msra.mxu0 0.0
    %4264 = vmatprep.subr.mxu0 0.0
    %4265 = vmatpush1.msra.mxu0 0.0
    %4266 = vmatprep.subr.mxu0 0.0
    %4267 = vmatpush1.msra.mxu0 0.0
    %4268 = vmatprep.subr.mxu0 0.0
    %4269 = vmatpush1.msra.mxu0 0.0
    %4270 = vmatprep.subr.mxu0 0.0
    %4271 = vmatpush1.msra.mxu0 0.0
    %4272 = vmatprep.subr.mxu0 0.0
    %4273 = vmatpush1.msra.mxu0 0.0
    %4274 = vmatprep.subr.mxu0 0.0
    %4275 = vmatpush1.msra.mxu0 0.0
    %4276 = vmatprep.subr.mxu0 0.0
    %4277 = vmatpush1.msra.mxu0 0.0
    %4278 = vmatprep.subr.mxu0 0.0
    %4279 = vmatpush1.msra.mxu0 0.0
    %4280 = vmatprep.subr.mxu0 0.0
    %4281 = vmatpush1.msra.mxu0 0.0
    %4282 = vmatprep.subr.mxu0 0.0
    %4283 = vmatpush1.msra.mxu0 0.0
    %4284 = vmatprep.subr.mxu0 0.0
    %4285 = vmatpush1.msra.mxu0 0.0
    %4286 = vmatprep.subr.mxu0 0.0
    %4287 = vmatpush1.msra.mxu0 0.0
    %4288 = vmatprep.subr.mxu0 0.0
    %4289 = vmatpush1.msra.mxu0 0.0
    %4290 = vmatprep.subr.mxu0 0.0
    %4291 = vmatpush1.msra.mxu0 0.0
    %4292 = vmatprep.subr.mxu0 0.0
    %4293 = vmatpush1.msra.mxu0 0.0
    %4294 = vmatprep.subr.mxu0 0.0
    %4295 = vmatpush1.msra.mxu0 0.0
    %4296 = vmatprep.subr.mxu0 0.0
    %4297 = vmatpush1.msra.mxu0 0.0
    %4298 = vmatprep.subr.mxu0 0.0
    %4299 = vmatpush1.msra.mxu0 0.0
    %4300 = vmatprep.subr.mxu0 0.0
    %4301 = vmatpush1.msra.mxu0 0.0
    %4302 = vmatprep.subr.mxu0 0.0
    %4303 = vmatpush1.msra.mxu0 0.0
    %4304 = vmatprep.subr.mxu0 0.0
    %4305 = vmatpush1.msra.mxu0 0.0
    %4306 = vmatprep.subr.mxu0 0.0
    %4307 = vmatpush1.msra.mxu0 0.0
    %4308 = vmatprep.subr.mxu0 0.0
    %4309 = vmatpush1.msra.mxu0 0.0
    %4310 = vmatprep.subr.mxu0 0.0
    %4311 = vmatpush1.msra.mxu0 0.0
    %4312 = vmatprep.mubr.f32.mxu0 0.0
    %v4313 = vand.u32 %v3799, 4294901760
    %v4314 = vsub.f32 %v3799, %v4313
    %v4315 = vand.u32 %v4314, 4294901760
    %v4316 = vsub.f32 %v4314, %v4315
    %v4317 = vand.u32 %v4316, 4294901760
    %4318 = vmatmul.mubr.f32.gmra.mrb[0].mxu0 %v4317
    %v4319 = vpop.f32.mrb[0].mxu0
    %v4320 = vadd.f32 0.0, %v4319
    %v4321 = vpop.f32.mrb[0].mxu0
    %4322 = vdwg.mxu0
    %4323 = vmatprep.subr.mxu0 0.0
    %v4324 = vand.u32 %v3798, 4294901760
    %v4325 = vsub.f32 %v3798, %v4324
    %v4326 = vand.u32 %v4325, 4294901760
    %v4327 = vsub.f32 %v4325, %v4326
    %v4328 = vand.u32 %v4327, 4294901760
    %4329 = vmatpush1.msra.mxu0 %v4328
    %4330 = vmatprep.subr.mxu0 0.0
    %4331 = vmatpush1.msra.mxu0 0.0
    %4332 = vmatprep.subr.mxu0 0.0
    %4333 = vmatpush1.msra.mxu0 0.0
    %4334 = vmatprep.subr.mxu0 0.0
    %4335 = vmatpush1.msra.mxu0 0.0
    %4336 = vmatprep.subr.mxu0 0.0
    %4337 = vmatpush1.msra.mxu0 0.0
    %4338 = vmatprep.subr.mxu0 0.0
    %4339 = vmatpush1.msra.mxu0 0.0
    %4340 = vmatprep.subr.mxu0 0.0
    %4341 = vmatpush1.msra.mxu0 0.0
    %4342 = vmatprep.subr.mxu0 0.0
    %4343 = vmatpush1.msra.mxu0 0.0
    %4344 = vmatprep.subr.mxu0 0.0
    %4345 = vmatpush1.msra.mxu0 0.0
    %4346 = vmatprep.subr.mxu0 0.0
    %4347 = vmatpush1.msra.mxu0 0.0
    %4348 = vmatprep.subr.mxu0 0.0
    %4349 = vmatpush1.msra.mxu0 0.0
    %4350 = vmatprep.subr.mxu0 0.0
    %4351 = vmatpush1.msra.mxu0 0.0
    %4352 = vmatprep.subr.mxu0 0.0
    %4353 = vmatpush1.msra.mxu0 0.0
    %4354 = vmatprep.subr.mxu0 0.0
    %4355 = vmatpush1.msra.mxu0 0.0
    %4356 = vmatprep.subr.mxu0 0.0
    %4357 = vmatpush1.msra.mxu0 0.0
    %4358 = vmatprep.subr.mxu0 0.0
    %4359 = vmatpush1.msra.mxu0 0.0
    %4360 = vmatprep.subr.mxu0 0.0
    %4361 = vmatpush1.msra.mxu0 0.0
    %4362 = vmatprep.subr.mxu0 0.0
    %4363 = vmatpush1.msra.mxu0 0.0
    %4364 = vmatprep.subr.mxu0 0.0
    %4365 = vmatpush1.msra.mxu0 0.0
    %4366 = vmatprep.subr.mxu0 0.0
    %4367 = vmatpush1.msra.mxu0 0.0
    %4368 = vmatprep.subr.mxu0 0.0
    %4369 = vmatpush1.msra.mxu0 0.0
    %4370 = vmatprep.subr.mxu0 0.0
    %4371 = vmatpush1.msra.mxu0 0.0
    %4372 = vmatprep.subr.mxu0 0.0
    %4373 = vmatpush1.msra.mxu0 0.0
    %4374 = vmatprep.subr.mxu0 0.0
    %4375 = vmatpush1.msra.mxu0 0.0
    %4376 = vmatprep.subr.mxu0 0.0
    %4377 = vmatpush1.msra.mxu0 0.0
    %4378 = vmatprep.subr.mxu0 0.0
    %4379 = vmatpush1.msra.mxu0 0.0
    %4380 = vmatprep.subr.mxu0 0.0
    %4381 = vmatpush1.msra.mxu0 0.0
    %4382 = vmatprep.subr.mxu0 0.0
    %4383 = vmatpush1.msra.mxu0 0.0
    %4384 = vmatprep.subr.mxu0 0.0
    %4385 = vmatpush1.msra.mxu0 0.0
    %4386 = vmatprep.subr.mxu0 0.0
    %4387 = vmatpush1.msra.mxu0 0.0
    %4388 = vmatprep.subr.mxu0 0.0
    %4389 = vmatpush1.msra.mxu0 0.0
    %4390 = vmatprep.subr.mxu0 0.0
    %4391 = vmatpush1.msra.mxu0 0.0
    %4392 = vmatprep.mubr.f32.mxu0 0.0
    %v4393 = vand.u32 %v3799, 4294901760
    %4394 = vmatmul.mubr.f32.gmra.mrb[0].mxu0 %v4393
    %v4395 = vpop.f32.mrb[0].mxu0
    %v4396 = vadd.f32 %v4320, %v4395
    %v4397 = vpop.f32.mrb[0].mxu0
    %4398 = vdwg.mxu0
    %4399 = vmatprep.subr.mxu0 0.0
    %v4400 = vand.u32 %v3798, 4294901760
    %v4401 = vsub.f32 %v3798, %v4400
    %4402 = vmatpush1.msra.mxu0 %v4401
    %4403 = vmatprep.subr.mxu0 0.0
    %4404 = vmatpush1.msra.mxu0 0.0
    %4405 = vmatprep.subr.mxu0 0.0
    %4406 = vmatpush1.msra.mxu0 0.0
    %4407 = vmatprep.subr.mxu0 0.0
    %4408 = vmatpush1.msra.mxu0 0.0
    %4409 = vmatprep.subr.mxu0 0.0
    %4410 = vmatpush1.msra.mxu0 0.0
    %4411 = vmatprep.subr.mxu0 0.0
    %4412 = vmatpush1.msra.mxu0 0.0
    %4413 = vmatprep.subr.mxu0 0.0
    %4414 = vmatpush1.msra.mxu0 0.0
    %4415 = vmatprep.subr.mxu0 0.0
    %4416 = vmatpush1.msra.mxu0 0.0
    %4417 = vmatprep.subr.mxu0 0.0
    %4418 = vmatpush1.msra.mxu0 0.0
    %4419 = vmatprep.subr.mxu0 0.0
    %4420 = vmatpush1.msra.mxu0 0.0
    %4421 = vmatprep.subr.mxu0 0.0
    %4422 = vmatpush1.msra.mxu0 0.0
    %4423 = vmatprep.subr.mxu0 0.0
    %4424 = vmatpush1.msra.mxu0 0.0
    %4425 = vmatprep.subr.mxu0 0.0
    %4426 = vmatpush1.msra.mxu0 0.0
    %4427 = vmatprep.subr.mxu0 0.0
    %4428 = vmatpush1.msra.mxu0 0.0
    %4429 = vmatprep.subr.mxu0 0.0
    %4430 = vmatpush1.msra.mxu0 0.0
    %4431 = vmatprep.subr.mxu0 0.0
    %4432 = vmatpush1.msra.mxu0 0.0
    %4433 = vmatprep.subr.mxu0 0.0
    %4434 = vmatpush1.msra.mxu0 0.0
    %4435 = vmatprep.subr.mxu0 0.0
    %4436 = vmatpush1.msra.mxu0 0.0
    %4437 = vmatprep.subr.mxu0 0.0
    %4438 = vmatpush1.msra.mxu0 0.0
    %4439 = vmatprep.subr.mxu0 0.0
    %4440 = vmatpush1.msra.mxu0 0.0
    %4441 = vmatprep.subr.mxu0 0.0
    %4442 = vmatpush1.msra.mxu0 0.0
    %4443 = vmatprep.subr.mxu0 0.0
    %4444 = vmatpush1.msra.mxu0 0.0
    %4445 = vmatprep.subr.mxu0 0.0
    %4446 = vmatpush1.msra.mxu0 0.0
    %4447 = vmatprep.subr.mxu0 0.0
    %4448 = vmatpush1.msra.mxu0 0.0
    %4449 = vmatprep.subr.mxu0 0.0
    %4450 = vmatpush1.msra.mxu0 0.0
    %4451 = vmatprep.subr.mxu0 0.0
    %4452 = vmatpush1.msra.mxu0 0.0
    %4453 = vmatprep.subr.mxu0 0.0
    %4454 = vmatpush1.msra.mxu0 0.0
    %4455 = vmatprep.subr.mxu0 0.0
    %4456 = vmatpush1.msra.mxu0 0.0
    %4457 = vmatprep.subr.mxu0 0.0
    %4458 = vmatpush1.msra.mxu0 0.0
    %4459 = vmatprep.subr.mxu0 0.0
    %4460 = vmatpush1.msra.mxu0 0.0
    %4461 = vmatprep.subr.mxu0 0.0
    %4462 = vmatpush1.msra.mxu0 0.0
    %4463 = vmatprep.subr.mxu0 0.0
    %4464 = vmatpush1.msra.mxu0 0.0
    %4465 = vmatprep.mubr.f32.mxu0 0.0
    %v4466 = vand.u32 %v3799, 4294901760
    %v4467 = vsub.f32 %v3799, %v4466
    %4468 = vmatmul.mubr.f32.gmra.mrb[0].mxu0 %v4467
    %v4469 = vpop.f32.mrb[0].mxu0
    %v4470 = vadd.f32 %v4396, %v4469
    %v4471 = vpop.f32.mrb[0].mxu0
    %4472 = vdwg.mxu0
    %4473 = vmatprep.subr.mxu0 0.0
    %v4474 = vand.u32 %v3798, 4294901760
    %4475 = vmatpush1.msra.mxu0 %v4474
    %4476 = vmatprep.subr.mxu0 0.0
    %4477 = vmatpush1.msra.mxu0 0.0
    %4478 = vmatprep.subr.mxu0 0.0
    %4479 = vmatpush1.msra.mxu0 0.0
    %4480 = vmatprep.subr.mxu0 0.0
    %4481 = vmatpush1.msra.mxu0 0.0
    %4482 = vmatprep.subr.mxu0 0.0
    %4483 = vmatpush1.msra.mxu0 0.0
    %4484 = vmatprep.subr.mxu0 0.0
    %4485 = vmatpush1.msra.mxu0 0.0
    %4486 = vmatprep.subr.mxu0 0.0
    %4487 = vmatpush1.msra.mxu0 0.0
    %4488 = vmatprep.subr.mxu0 0.0
    %4489 = vmatpush1.msra.mxu0 0.0
    %4490 = vmatprep.subr.mxu0 0.0
    %4491 = vmatpush1.msra.mxu0 0.0
    %4492 = vmatprep.subr.mxu0 0.0
    %4493 = vmatpush1.msra.mxu0 0.0
    %4494 = vmatprep.subr.mxu0 0.0
    %4495 = vmatpush1.msra.mxu0 0.0
    %4496 = vmatprep.subr.mxu0 0.0
    %4497 = vmatpush1.msra.mxu0 0.0
    %4498 = vmatprep.subr.mxu0 0.0
    %4499 = vmatpush1.msra.mxu0 0.0
    %4500 = vmatprep.subr.mxu0 0.0
    %4501 = vmatpush1.msra.mxu0 0.0
    %4502 = vmatprep.subr.mxu0 0.0
    %4503 = vmatpush1.msra.mxu0 0.0
    %4504 = vmatprep.subr.mxu0 0.0
    %4505 = vmatpush1.msra.mxu0 0.0
    %4506 = vmatprep.subr.mxu0 0.0
    %4507 = vmatpush1.msra.mxu0 0.0
    %4508 = vmatprep.subr.mxu0 0.0
    %4509 = vmatpush1.msra.mxu0 0.0
    %4510 = vmatprep.subr.mxu0 0.0
    %4511 = vmatpush1.msra.mxu0 0.0
    %4512 = vmatprep.subr.mxu0 0.0
    %4513 = vmatpush1.msra.mxu0 0.0
    %4514 = vmatprep.subr.mxu0 0.0
    %4515 = vmatpush1.msra.mxu0 0.0
    %4516 = vmatprep.subr.mxu0 0.0
    %4517 = vmatpush1.msra.mxu0 0.0
    %4518 = vmatprep.subr.mxu0 0.0
    %4519 = vmatpush1.msra.mxu0 0.0
    %4520 = vmatprep.subr.mxu0 0.0
    %4521 = vmatpush1.msra.mxu0 0.0
    %4522 = vmatprep.subr.mxu0 0.0
    %4523 = vmatpush1.msra.mxu0 0.0
    %4524 = vmatprep.subr.mxu0 0.0
    %4525 = vmatpush1.msra.mxu0 0.0
    %4526 = vmatprep.subr.mxu0 0.0
    %4527 = vmatpush1.msra.mxu0 0.0
    %4528 = vmatprep.subr.mxu0 0.0
    %4529 = vmatpush1.msra.mxu0 0.0
    %4530 = vmatprep.subr.mxu0 0.0
    %4531 = vmatpush1.msra.mxu0 0.0
    %4532 = vmatprep.subr.mxu0 0.0
    %4533 = vmatpush1.msra.mxu0 0.0
    %4534 = vmatprep.subr.mxu0 0.0
    %4535 = vmatpush1.msra.mxu0 0.0
    %4536 = vmatprep.subr.mxu0 0.0
    %4537 = vmatpush1.msra.mxu0 0.0
    %4538 = vmatprep.mubr.f32.mxu0 0.0
    %v4539 = vand.u32 %v3799, 4294901760
    %v4540 = vsub.f32 %v3799, %v4539
    %v4541 = vand.u32 %v4540, 4294901760
    %4542 = vmatmul.mubr.f32.gmra.mrb[0].mxu0 %v4541
    %v4543 = vpop.f32.mrb[0].mxu0
    %v4544 = vadd.f32 %v4470, %v4543
    %v4545 = vpop.f32.mrb[0].mxu0
    %4546 = vdwg.mxu0
    %4547 = vmatprep.subr.mxu0 0.0
    %v4548 = vand.u32 %v3798, 4294901760
    %v4549 = vsub.f32 %v3798, %v4548
    %v4550 = vand.u32 %v4549, 4294901760
    %4551 = vmatpush1.msra.mxu0 %v4550
    %4552 = vmatprep.subr.mxu0 0.0
    %4553 = vmatpush1.msra.mxu0 0.0
    %4554 = vmatprep.subr.mxu0 0.0
    %4555 = vmatpush1.msra.mxu0 0.0
    %4556 = vmatprep.subr.mxu0 0.0
    %4557 = vmatpush1.msra.mxu0 0.0
    %4558 = vmatprep.subr.mxu0 0.0
    %4559 = vmatpush1.msra.mxu0 0.0
    %4560 = vmatprep.subr.mxu0 0.0
    %4561 = vmatpush1.msra.mxu0 0.0
    %4562 = vmatprep.subr.mxu0 0.0
    %4563 = vmatpush1.msra.mxu0 0.0
    %4564 = vmatprep.subr.mxu0 0.0
    %4565 = vmatpush1.msra.mxu0 0.0
    %4566 = vmatprep.subr.mxu0 0.0
    %4567 = vmatpush1.msra.mxu0 0.0
    %4568 = vmatprep.subr.mxu0 0.0
    %4569 = vmatpush1.msra.mxu0 0.0
    %4570 = vmatprep.subr.mxu0 0.0
    %4571 = vmatpush1.msra.mxu0 0.0
    %4572 = vmatprep.subr.mxu0 0.0
    %4573 = vmatpush1.msra.mxu0 0.0
    %4574 = vmatprep.subr.mxu0 0.0
    %4575 = vmatpush1.msra.mxu0 0.0
    %4576 = vmatprep.subr.mxu0 0.0
    %4577 = vmatpush1.msra.mxu0 0.0
    %4578 = vmatprep.subr.mxu0 0.0
    %4579 = vmatpush1.msra.mxu0 0.0
    %4580 = vmatprep.subr.mxu0 0.0
    %4581 = vmatpush1.msra.mxu0 0.0
    %4582 = vmatprep.subr.mxu0 0.0
    %4583 = vmatpush1.msra.mxu0 0.0
    %4584 = vmatprep.subr.mxu0 0.0
    %4585 = vmatpush1.msra.mxu0 0.0
    %4586 = vmatprep.subr.mxu0 0.0
    %4587 = vmatpush1.msra.mxu0 0.0
    %4588 = vmatprep.subr.mxu0 0.0
    %4589 = vmatpush1.msra.mxu0 0.0
    %4590 = vmatprep.subr.mxu0 0.0
    %4591 = vmatpush1.msra.mxu0 0.0
    %4592 = vmatprep.subr.mxu0 0.0
    %4593 = vmatpush1.msra.mxu0 0.0
    %4594 = vmatprep.subr.mxu0 0.0
    %4595 = vmatpush1.msra.mxu0 0.0
    %4596 = vmatprep.subr.mxu0 0.0
    %4597 = vmatpush1.msra.mxu0 0.0
    %4598 = vmatprep.subr.mxu0 0.0
    %4599 = vmatpush1.msra.mxu0 0.0
    %4600 = vmatprep.subr.mxu0 0.0
    %4601 = vmatpush1.msra.mxu0 0.0
    %4602 = vmatprep.subr.mxu0 0.0
    %4603 = vmatpush1.msra.mxu0 0.0
    %4604 = vmatprep.subr.mxu0 0.0
    %4605 = vmatpush1.msra.mxu0 0.0
    %4606 = vmatprep.subr.mxu0 0.0
    %4607 = vmatpush1.msra.mxu0 0.0
    %4608 = vmatprep.subr.mxu0 0.0
    %4609 = vmatpush1.msra.mxu0 0.0
    %4610 = vmatprep.subr.mxu0 0.0
    %4611 = vmatpush1.msra.mxu0 0.0
    %4612 = vmatprep.subr.mxu0 0.0
    %4613 = vmatpush1.msra.mxu0 0.0
    %4614 = vmatprep.mubr.f32.mxu0 0.0
    %v4615 = vand.u32 %v3799, 4294901760
    %4616 = vmatmul.mubr.f32.gmra.mrb[0].mxu0 %v4615
    %v4617 = vpop.f32.mrb[0].mxu0
    %v4618 = vadd.f32 %v4544, %v4617
    %v4619 = vpop.f32.mrb[0].mxu0
    %4620 = vdwg.mxu0
    %4621 = vmatprep.subr.mxu0 0.0
    %v4622 = vand.u32 %v3798, 4294901760
    %4623 = vmatpush1.msra.mxu0 %v4622
    %4624 = vmatprep.subr.mxu0 0.0
    %4625 = vmatpush1.msra.mxu0 0.0
    %4626 = vmatprep.subr.mxu0 0.0
    %4627 = vmatpush1.msra.mxu0 0.0
    %4628 = vmatprep.subr.mxu0 0.0
    %4629 = vmatpush1.msra.mxu0 0.0
    %4630 = vmatprep.subr.mxu0 0.0
    %4631 = vmatpush1.msra.mxu0 0.0
    %4632 = vmatprep.subr.mxu0 0.0
    %4633 = vmatpush1.msra.mxu0 0.0
    %4634 = vmatprep.subr.mxu0 0.0
    %4635 = vmatpush1.msra.mxu0 0.0
    %4636 = vmatprep.subr.mxu0 0.0
    %4637 = vmatpush1.msra.mxu0 0.0
    %4638 = vmatprep.subr.mxu0 0.0
    %4639 = vmatpush1.msra.mxu0 0.0
    %4640 = vmatprep.subr.mxu0 0.0
    %4641 = vmatpush1.msra.mxu0 0.0
    %4642 = vmatprep.subr.mxu0 0.0
    %4643 = vmatpush1.msra.mxu0 0.0
    %4644 = vmatprep.subr.mxu0 0.0
    %4645 = vmatpush1.msra.mxu0 0.0
    %4646 = vmatprep.subr.mxu0 0.0
    %4647 = vmatpush1.msra.mxu0 0.0
    %4648 = vmatprep.subr.mxu0 0.0
    %4649 = vmatpush1.msra.mxu0 0.0
    %4650 = vmatprep.subr.mxu0 0.0
    %4651 = vmatpush1.msra.mxu0 0.0
    %4652 = vmatprep.subr.mxu0 0.0
    %4653 = vmatpush1.msra.mxu0 0.0
    %4654 = vmatprep.subr.mxu0 0.0
    %4655 = vmatpush1.msra.mxu0 0.0
    %4656 = vmatprep.subr.mxu0 0.0
    %4657 = vmatpush1.msra.mxu0 0.0
    %4658 = vmatprep.subr.mxu0 0.0
    %4659 = vmatpush1.msra.mxu0 0.0
    %4660 = vmatprep.subr.mxu0 0.0
    %4661 = vmatpush1.msra.mxu0 0.0
    %4662 = vmatprep.subr.mxu0 0.0
    %4663 = vmatpush1.msra.mxu0 0.0
    %4664 = vmatprep.subr.mxu0 0.0
    %4665 = vmatpush1.msra.mxu0 0.0
    %4666 = vmatprep.subr.mxu0 0.0
    %4667 = vmatpush1.msra.mxu0 0.0
    %4668 = vmatprep.subr.mxu0 0.0
    %4669 = vmatpush1.msra.mxu0 0.0
    %4670 = vmatprep.subr.mxu0 0.0
    %4671 = vmatpush1.msra.mxu0 0.0
    %4672 = vmatprep.subr.mxu0 0.0
    %4673 = vmatpush1.msra.mxu0 0.0
    %4674 = vmatprep.subr.mxu0 0.0
    %4675 = vmatpush1.msra.mxu0 0.0
    %4676 = vmatprep.subr.mxu0 0.0
    %4677 = vmatpush1.msra.mxu0 0.0
    %4678 = vmatprep.subr.mxu0 0.0
    %4679 = vmatpush1.msra.mxu0 0.0
    %4680 = vmatprep.subr.mxu0 0.0
    %4681 = vmatpush1.msra.mxu0 0.0
    %4682 = vmatprep.subr.mxu0 0.0
    %4683 = vmatpush1.msra.mxu0 0.0
    %4684 = vmatprep.subr.mxu0 0.0
    %4685 = vmatpush1.msra.mxu0 0.0
    %4686 = vmatprep.mubr.f32.mxu0 0.0
    %v4687 = vand.u32 %v3799, 4294901760
    %4688 = vmatmul.mubr.f32.gmra.mrb[0].mxu0 %v4687
    %v4689 = vpop.f32.mrb[0].mxu0
    %v4690 = vadd.f32 %v4618, %v4689
    %v4691 = vpop.f32.mrb[0].mxu0
    %4692 = vdwg.mxu0
    %4693 = vmatprep.subr.mxu0 0.0
    %v4694 = vand.u32 %v3535, 4294901760
    %4695 = vmatpush1.msra.mxu0 %v4694
    %4696 = vmatprep.subr.mxu0 0.0
    %4697 = vmatpush1.msra.mxu0 0.0
    %4698 = vmatprep.subr.mxu0 0.0
    %4699 = vmatpush1.msra.mxu0 0.0
    %4700 = vmatprep.subr.mxu0 0.0
    %4701 = vmatpush1.msra.mxu0 0.0
    %4702 = vmatprep.subr.mxu0 0.0
    %4703 = vmatpush1.msra.mxu0 0.0
    %4704 = vmatprep.subr.mxu0 0.0
    %4705 = vmatpush1.msra.mxu0 0.0
    %4706 = vmatprep.subr.mxu0 0.0
    %4707 = vmatpush1.msra.mxu0 0.0
    %4708 = vmatprep.subr.mxu0 0.0
    %4709 = vmatpush1.msra.mxu0 0.0
    %4710 = vmatprep.subr.mxu0 0.0
    %4711 = vmatpush1.msra.mxu0 0.0
    %4712 = vmatprep.subr.mxu0 0.0
    %4713 = vmatpush1.msra.mxu0 0.0
    %4714 = vmatprep.subr.mxu0 0.0
    %4715 = vmatpush1.msra.mxu0 0.0
    %4716 = vmatprep.subr.mxu0 0.0
    %4717 = vmatpush1.msra.mxu0 0.0
    %4718 = vmatprep.subr.mxu0 0.0
    %4719 = vmatpush1.msra.mxu0 0.0
    %4720 = vmatprep.subr.mxu0 0.0
    %4721 = vmatpush1.msra.mxu0 0.0
    %4722 = vmatprep.subr.mxu0 0.0
    %4723 = vmatpush1.msra.mxu0 0.0
    %4724 = vmatprep.subr.mxu0 0.0
    %4725 = vmatpush1.msra.mxu0 0.0
    %4726 = vmatprep.subr.mxu0 0.0
    %4727 = vmatpush1.msra.mxu0 0.0
    %4728 = vmatprep.subr.mxu0 0.0
    %4729 = vmatpush1.msra.mxu0 0.0
    %4730 = vmatprep.subr.mxu0 0.0
    %4731 = vmatpush1.msra.mxu0 0.0
    %4732 = vmatprep.subr.mxu0 0.0
    %4733 = vmatpush1.msra.mxu0 0.0
    %4734 = vmatprep.subr.mxu0 0.0
    %4735 = vmatpush1.msra.mxu0 0.0
    %4736 = vmatprep.subr.mxu0 0.0
    %4737 = vmatpush1.msra.mxu0 0.0
    %4738 = vmatprep.subr.mxu0 0.0
    %4739 = vmatpush1.msra.mxu0 0.0
    %4740 = vmatprep.subr.mxu0 0.0
    %4741 = vmatpush1.msra.mxu0 0.0
    %4742 = vmatprep.subr.mxu0 0.0
    %4743 = vmatpush1.msra.mxu0 0.0
    %4744 = vmatprep.subr.mxu0 0.0
    %4745 = vmatpush1.msra.mxu0 0.0
    %4746 = vmatprep.subr.mxu0 0.0
    %4747 = vmatpush1.msra.mxu0 0.0
    %4748 = vmatprep.subr.mxu0 0.0
    %4749 = vmatpush1.msra.mxu0 0.0
    %4750 = vmatprep.subr.mxu0 0.0
    %4751 = vmatpush1.msra.mxu0 0.0
    %4752 = vmatprep.subr.mxu0 0.0
    %4753 = vmatpush1.msra.mxu0 0.0
    %4754 = vmatprep.subr.mxu0 0.0
    %4755 = vmatpush1.msra.mxu0 0.0
    %4756 = vmatprep.subr.mxu0 0.0
    %4757 = vmatpush1.msra.mxu0 0.0
    %4758 = vmatprep.mubr.f32.mxu0 0.0
    %v4759 = vand.u32 %v3799, 4294901760
    %v4760 = vsub.f32 %v3799, %v4759
    %v4761 = vand.u32 %v4760, 4294901760
    %v4762 = vsub.f32 %v4760, %v4761
    %v4763 = vand.u32 %v4762, 4294901760
    %4764 = vmatmul.mubr.f32.gmra.mrb[0].mxu0 %v4763
    %v4765 = vpop.f32.mrb[0].mxu0
    %v4766 = vadd.f32 0.0, %v4765
    %v4767 = vpop.f32.mrb[0].mxu0
    %4768 = vdwg.mxu0
    %4769 = vmatprep.subr.mxu0 0.0
    %v4770 = vand.u32 %v3535, 4294901760
    %v4771 = vsub.f32 %v3535, %v4770
    %v4772 = vand.u32 %v4771, 4294901760
    %v4773 = vsub.f32 %v4771, %v4772
    %v4774 = vand.u32 %v4773, 4294901760
    %4775 = vmatpush1.msra.mxu0 %v4774
    %4776 = vmatprep.subr.mxu0 0.0
    %4777 = vmatpush1.msra.mxu0 0.0
    %4778 = vmatprep.subr.mxu0 0.0
    %4779 = vmatpush1.msra.mxu0 0.0
    %4780 = vmatprep.subr.mxu0 0.0
    %4781 = vmatpush1.msra.mxu0 0.0
    %4782 = vmatprep.subr.mxu0 0.0
    %4783 = vmatpush1.msra.mxu0 0.0
    %4784 = vmatprep.subr.mxu0 0.0
    %4785 = vmatpush1.msra.mxu0 0.0
    %4786 = vmatprep.subr.mxu0 0.0
    %4787 = vmatpush1.msra.mxu0 0.0
    %4788 = vmatprep.subr.mxu0 0.0
    %4789 = vmatpush1.msra.mxu0 0.0
    %4790 = vmatprep.subr.mxu0 0.0
    %4791 = vmatpush1.msra.mxu0 0.0
    %4792 = vmatprep.subr.mxu0 0.0
    %4793 = vmatpush1.msra.mxu0 0.0
    %4794 = vmatprep.subr.mxu0 0.0
    %4795 = vmatpush1.msra.mxu0 0.0
    %4796 = vmatprep.subr.mxu0 0.0
    %4797 = vmatpush1.msra.mxu0 0.0
    %4798 = vmatprep.subr.mxu0 0.0
    %4799 = vmatpush1.msra.mxu0 0.0
    %4800 = vmatprep.subr.mxu0 0.0
    %4801 = vmatpush1.msra.mxu0 0.0
    %4802 = vmatprep.subr.mxu0 0.0
    %4803 = vmatpush1.msra.mxu0 0.0
    %4804 = vmatprep.subr.mxu0 0.0
    %4805 = vmatpush1.msra.mxu0 0.0
    %4806 = vmatprep.subr.mxu0 0.0
    %4807 = vmatpush1.msra.mxu0 0.0
    %4808 = vmatprep.subr.mxu0 0.0
    %4809 = vmatpush1.msra.mxu0 0.0
    %4810 = vmatprep.subr.mxu0 0.0
    %4811 = vmatpush1.msra.mxu0 0.0
    %4812 = vmatprep.subr.mxu0 0.0
    %4813 = vmatpush1.msra.mxu0 0.0
    %4814 = vmatprep.subr.mxu0 0.0
    %4815 = vmatpush1.msra.mxu0 0.0
    %4816 = vmatprep.subr.mxu0 0.0
    %4817 = vmatpush1.msra.mxu0 0.0
    %4818 = vmatprep.subr.mxu0 0.0
    %4819 = vmatpush1.msra.mxu0 0.0
    %4820 = vmatprep.subr.mxu0 0.0
    %4821 = vmatpush1.msra.mxu0 0.0
    %4822 = vmatprep.subr.mxu0 0.0
    %4823 = vmatpush1.msra.mxu0 0.0
    %4824 = vmatprep.subr.mxu0 0.0
    %4825 = vmatpush1.msra.mxu0 0.0
    %4826 = vmatprep.subr.mxu0 0.0
    %4827 = vmatpush1.msra.mxu0 0.0
    %4828 = vmatprep.subr.mxu0 0.0
    %4829 = vmatpush1.msra.mxu0 0.0
    %4830 = vmatprep.subr.mxu0 0.0
    %4831 = vmatpush1.msra.mxu0 0.0
    %4832 = vmatprep.subr.mxu0 0.0
    %4833 = vmatpush1.msra.mxu0 0.0
    %4834 = vmatprep.subr.mxu0 0.0
    %4835 = vmatpush1.msra.mxu0 0.0
    %4836 = vmatprep.subr.mxu0 0.0
    %4837 = vmatpush1.msra.mxu0 0.0
    %4838 = vmatprep.mubr.f32.mxu0 0.0
    %v4839 = vand.u32 %v3799, 4294901760
    %4840 = vmatmul.mubr.f32.gmra.mrb[0].mxu0 %v4839
    %v4841 = vpop.f32.mrb[0].mxu0
    %v4842 = vadd.f32 %v4766, %v4841
    %v4843 = vpop.f32.mrb[0].mxu0
    %4844 = vdwg.mxu0
    %4845 = vmatprep.subr.mxu0 0.0
    %v4846 = vand.u32 %v3535, 4294901760
    %v4847 = vsub.f32 %v3535, %v4846
    %4848 = vmatpush1.msra.mxu0 %v4847
    %4849 = vmatprep.subr.mxu0 0.0
    %4850 = vmatpush1.msra.mxu0 0.0
    %4851 = vmatprep.subr.mxu0 0.0
    %4852 = vmatpush1.msra.mxu0 0.0
    %4853 = vmatprep.subr.mxu0 0.0
    %4854 = vmatpush1.msra.mxu0 0.0
    %4855 = vmatprep.subr.mxu0 0.0
    %4856 = vmatpush1.msra.mxu0 0.0
    %4857 = vmatprep.subr.mxu0 0.0
    %4858 = vmatpush1.msra.mxu0 0.0
    %4859 = vmatprep.subr.mxu0 0.0
    %4860 = vmatpush1.msra.mxu0 0.0
    %4861 = vmatprep.subr.mxu0 0.0
    %4862 = vmatpush1.msra.mxu0 0.0
    %4863 = vmatprep.subr.mxu0 0.0
    %4864 = vmatpush1.msra.mxu0 0.0
    %4865 = vmatprep.subr.mxu0 0.0
    %4866 = vmatpush1.msra.mxu0 0.0
    %4867 = vmatprep.subr.mxu0 0.0
    %4868 = vmatpush1.msra.mxu0 0.0
    %4869 = vmatprep.subr.mxu0 0.0
    %4870 = vmatpush1.msra.mxu0 0.0
    %4871 = vmatprep.subr.mxu0 0.0
    %4872 = vmatpush1.msra.mxu0 0.0
    %4873 = vmatprep.subr.mxu0 0.0
    %4874 = vmatpush1.msra.mxu0 0.0
    %4875 = vmatprep.subr.mxu0 0.0
    %4876 = vmatpush1.msra.mxu0 0.0
    %4877 = vmatprep.subr.mxu0 0.0
    %4878 = vmatpush1.msra.mxu0 0.0
    %4879 = vmatprep.subr.mxu0 0.0
    %4880 = vmatpush1.msra.mxu0 0.0
    %4881 = vmatprep.subr.mxu0 0.0
    %4882 = vmatpush1.msra.mxu0 0.0
    %4883 = vmatprep.subr.mxu0 0.0
    %4884 = vmatpush1.msra.mxu0 0.0
    %4885 = vmatprep.subr.mxu0 0.0
    %4886 = vmatpush1.msra.mxu0 0.0
    %4887 = vmatprep.subr.mxu0 0.0
    %4888 = vmatpush1.msra.mxu0 0.0
    %4889 = vmatprep.subr.mxu0 0.0
    %4890 = vmatpush1.msra.mxu0 0.0
    %4891 = vmatprep.subr.mxu0 0.0
    %4892 = vmatpush1.msra.mxu0 0.0
    %4893 = vmatprep.subr.mxu0 0.0
    %4894 = vmatpush1.msra.mxu0 0.0
    %4895 = vmatprep.subr.mxu0 0.0
    %4896 = vmatpush1.msra.mxu0 0.0
    %4897 = vmatprep.subr.mxu0 0.0
    %4898 = vmatpush1.msra.mxu0 0.0
    %4899 = vmatprep.subr.mxu0 0.0
    %4900 = vmatpush1.msra.mxu0 0.0
    %4901 = vmatprep.subr.mxu0 0.0
    %4902 = vmatpush1.msra.mxu0 0.0
    %4903 = vmatprep.subr.mxu0 0.0
    %4904 = vmatpush1.msra.mxu0 0.0
    %4905 = vmatprep.subr.mxu0 0.0
    %4906 = vmatpush1.msra.mxu0 0.0
    %4907 = vmatprep.subr.mxu0 0.0
    %4908 = vmatpush1.msra.mxu0 0.0
    %4909 = vmatprep.subr.mxu0 0.0
    %4910 = vmatpush1.msra.mxu0 0.0
    %4911 = vmatprep.mubr.f32.mxu0 0.0
    %v4912 = vand.u32 %v3799, 4294901760
    %v4913 = vsub.f32 %v3799, %v4912
    %4914 = vmatmul.mubr.f32.gmra.mrb[0].mxu0 %v4913
    %v4915 = vpop.f32.mrb[0].mxu0
    %v4916 = vadd.f32 %v4842, %v4915
    %v4917 = vpop.f32.mrb[0].mxu0
    %4918 = vdwg.mxu0
    %4919 = vmatprep.subr.mxu0 0.0
    %v4920 = vand.u32 %v3535, 4294901760
    %4921 = vmatpush1.msra.mxu0 %v4920
    %4922 = vmatprep.subr.mxu0 0.0
    %4923 = vmatpush1.msra.mxu0 0.0
    %4924 = vmatprep.subr.mxu0 0.0
    %4925 = vmatpush1.msra.mxu0 0.0
    %4926 = vmatprep.subr.mxu0 0.0
    %4927 = vmatpush1.msra.mxu0 0.0
    %4928 = vmatprep.subr.mxu0 0.0
    %4929 = vmatpush1.msra.mxu0 0.0
    %4930 = vmatprep.subr.mxu0 0.0
    %4931 = vmatpush1.msra.mxu0 0.0
    %4932 = vmatprep.subr.mxu0 0.0
    %4933 = vmatpush1.msra.mxu0 0.0
    %4934 = vmatprep.subr.mxu0 0.0
    %4935 = vmatpush1.msra.mxu0 0.0
    %4936 = vmatprep.subr.mxu0 0.0
    %4937 = vmatpush1.msra.mxu0 0.0
    %4938 = vmatprep.subr.mxu0 0.0
    %4939 = vmatpush1.msra.mxu0 0.0
    %4940 = vmatprep.subr.mxu0 0.0
    %4941 = vmatpush1.msra.mxu0 0.0
    %4942 = vmatprep.subr.mxu0 0.0
    %4943 = vmatpush1.msra.mxu0 0.0
    %4944 = vmatprep.subr.mxu0 0.0
    %4945 = vmatpush1.msra.mxu0 0.0
    %4946 = vmatprep.subr.mxu0 0.0
    %4947 = vmatpush1.msra.mxu0 0.0
    %4948 = vmatprep.subr.mxu0 0.0
    %4949 = vmatpush1.msra.mxu0 0.0
    %4950 = vmatprep.subr.mxu0 0.0
    %4951 = vmatpush1.msra.mxu0 0.0
    %4952 = vmatprep.subr.mxu0 0.0
    %4953 = vmatpush1.msra.mxu0 0.0
    %4954 = vmatprep.subr.mxu0 0.0
    %4955 = vmatpush1.msra.mxu0 0.0
    %4956 = vmatprep.subr.mxu0 0.0
    %4957 = vmatpush1.msra.mxu0 0.0
    %4958 = vmatprep.subr.mxu0 0.0
    %4959 = vmatpush1.msra.mxu0 0.0
    %4960 = vmatprep.subr.mxu0 0.0
    %4961 = vmatpush1.msra.mxu0 0.0
    %4962 = vmatprep.subr.mxu0 0.0
    %4963 = vmatpush1.msra.mxu0 0.0
    %4964 = vmatprep.subr.mxu0 0.0
    %4965 = vmatpush1.msra.mxu0 0.0
    %4966 = vmatprep.subr.mxu0 0.0
    %4967 = vmatpush1.msra.mxu0 0.0
    %4968 = vmatprep.subr.mxu0 0.0
    %4969 = vmatpush1.msra.mxu0 0.0
    %4970 = vmatprep.subr.mxu0 0.0
    %4971 = vmatpush1.msra.mxu0 0.0
    %4972 = vmatprep.subr.mxu0 0.0
    %4973 = vmatpush1.msra.mxu0 0.0
    %4974 = vmatprep.subr.mxu0 0.0
    %4975 = vmatpush1.msra.mxu0 0.0
    %4976 = vmatprep.subr.mxu0 0.0
    %4977 = vmatpush1.msra.mxu0 0.0
    %4978 = vmatprep.subr.mxu0 0.0
    %4979 = vmatpush1.msra.mxu0 0.0
    %4980 = vmatprep.subr.mxu0 0.0
    %4981 = vmatpush1.msra.mxu0 0.0
    %4982 = vmatprep.subr.mxu0 0.0
    %4983 = vmatpush1.msra.mxu0 0.0
    %4984 = vmatprep.mubr.f32.mxu0 0.0
    %v4985 = vand.u32 %v3799, 4294901760
    %v4986 = vsub.f32 %v3799, %v4985
    %v4987 = vand.u32 %v4986, 4294901760
    %4988 = vmatmul.mubr.f32.gmra.mrb[0].mxu0 %v4987
    %v4989 = vpop.f32.mrb[0].mxu0
    %v4990 = vadd.f32 %v4916, %v4989
    %v4991 = vpop.f32.mrb[0].mxu0
    %4992 = vdwg.mxu0
    %4993 = vmatprep.subr.mxu0 0.0
    %v4994 = vand.u32 %v3535, 4294901760
    %v4995 = vsub.f32 %v3535, %v4994
    %v4996 = vand.u32 %v4995, 4294901760
    %4997 = vmatpush1.msra.mxu0 %v4996
    %4998 = vmatprep.subr.mxu0 0.0
    %4999 = vmatpush1.msra.mxu0 0.0
    %5000 = vmatprep.subr.mxu0 0.0
    %5001 = vmatpush1.msra.mxu0 0.0
    %5002 = vmatprep.subr.mxu0 0.0
    %5003 = vmatpush1.msra.mxu0 0.0
    %5004 = vmatprep.subr.mxu0 0.0
    %5005 = vmatpush1.msra.mxu0 0.0
    %5006 = vmatprep.subr.mxu0 0.0
    %5007 = vmatpush1.msra.mxu0 0.0
    %5008 = vmatprep.subr.mxu0 0.0
    %5009 = vmatpush1.msra.mxu0 0.0
    %5010 = vmatprep.subr.mxu0 0.0
    %5011 = vmatpush1.msra.mxu0 0.0
    %5012 = vmatprep.subr.mxu0 0.0
    %5013 = vmatpush1.msra.mxu0 0.0
    %5014 = vmatprep.subr.mxu0 0.0
    %5015 = vmatpush1.msra.mxu0 0.0
    %5016 = vmatprep.subr.mxu0 0.0
    %5017 = vmatpush1.msra.mxu0 0.0
    %5018 = vmatprep.subr.mxu0 0.0
    %5019 = vmatpush1.msra.mxu0 0.0
    %5020 = vmatprep.subr.mxu0 0.0
    %5021 = vmatpush1.msra.mxu0 0.0
    %5022 = vmatprep.subr.mxu0 0.0
    %5023 = vmatpush1.msra.mxu0 0.0
    %5024 = vmatprep.subr.mxu0 0.0
    %5025 = vmatpush1.msra.mxu0 0.0
    %5026 = vmatprep.subr.mxu0 0.0
    %5027 = vmatpush1.msra.mxu0 0.0
    %5028 = vmatprep.subr.mxu0 0.0
    %5029 = vmatpush1.msra.mxu0 0.0
    %5030 = vmatprep.subr.mxu0 0.0
    %5031 = vmatpush1.msra.mxu0 0.0
    %5032 = vmatprep.subr.mxu0 0.0
    %5033 = vmatpush1.msra.mxu0 0.0
    %5034 = vmatprep.subr.mxu0 0.0
    %5035 = vmatpush1.msra.mxu0 0.0
    %5036 = vmatprep.subr.mxu0 0.0
    %5037 = vmatpush1.msra.mxu0 0.0
    %5038 = vmatprep.subr.mxu0 0.0
    %5039 = vmatpush1.msra.mxu0 0.0
    %5040 = vmatprep.subr.mxu0 0.0
    %5041 = vmatpush1.msra.mxu0 0.0
    %5042 = vmatprep.subr.mxu0 0.0
    %5043 = vmatpush1.msra.mxu0 0.0
    %5044 = vmatprep.subr.mxu0 0.0
    %5045 = vmatpush1.msra.mxu0 0.0
    %5046 = vmatprep.subr.mxu0 0.0
    %5047 = vmatpush1.msra.mxu0 0.0
    %5048 = vmatprep.subr.mxu0 0.0
    %5049 = vmatpush1.msra.mxu0 0.0
    %5050 = vmatprep.subr.mxu0 0.0
    %5051 = vmatpush1.msra.mxu0 0.0
    %5052 = vmatprep.subr.mxu0 0.0
    %5053 = vmatpush1.msra.mxu0 0.0
    %5054 = vmatprep.subr.mxu0 0.0
    %5055 = vmatpush1.msra.mxu0 0.0
    %5056 = vmatprep.subr.mxu0 0.0
    %5057 = vmatpush1.msra.mxu0 0.0
    %5058 = vmatprep.subr.mxu0 0.0
    %5059 = vmatpush1.msra.mxu0 0.0
    %5060 = vmatprep.mubr.f32.mxu0 0.0
    %v5061 = vand.u32 %v3799, 4294901760
    %5062 = vmatmul.mubr.f32.gmra.mrb[0].mxu0 %v5061
    %v5063 = vpop.f32.mrb[0].mxu0
    %v5064 = vadd.f32 %v4990, %v5063
    %v5065 = vpop.f32.mrb[0].mxu0
    %5066 = vdwg.mxu0
    %5067 = vmatprep.subr.mxu0 0.0
    %v5068 = vand.u32 %v3535, 4294901760
    %5069 = vmatpush1.msra.mxu0 %v5068
    %5070 = vmatprep.subr.mxu0 0.0
    %5071 = vmatpush1.msra.mxu0 0.0
    %5072 = vmatprep.subr.mxu0 0.0
    %5073 = vmatpush1.msra.mxu0 0.0
    %5074 = vmatprep.subr.mxu0 0.0
    %5075 = vmatpush1.msra.mxu0 0.0
    %5076 = vmatprep.subr.mxu0 0.0
    %5077 = vmatpush1.msra.mxu0 0.0
    %5078 = vmatprep.subr.mxu0 0.0
    %5079 = vmatpush1.msra.mxu0 0.0
    %5080 = vmatprep.subr.mxu0 0.0
    %5081 = vmatpush1.msra.mxu0 0.0
    %5082 = vmatprep.subr.mxu0 0.0
    %5083 = vmatpush1.msra.mxu0 0.0
    %5084 = vmatprep.subr.mxu0 0.0
    %5085 = vmatpush1.msra.mxu0 0.0
    %5086 = vmatprep.subr.mxu0 0.0
    %5087 = vmatpush1.msra.mxu0 0.0
    %5088 = vmatprep.subr.mxu0 0.0
    %5089 = vmatpush1.msra.mxu0 0.0
    %5090 = vmatprep.subr.mxu0 0.0
    %5091 = vmatpush1.msra.mxu0 0.0
    %5092 = vmatprep.subr.mxu0 0.0
    %5093 = vmatpush1.msra.mxu0 0.0
    %5094 = vmatprep.subr.mxu0 0.0
    %5095 = vmatpush1.msra.mxu0 0.0
    %5096 = vmatprep.subr.mxu0 0.0
    %5097 = vmatpush1.msra.mxu0 0.0
    %5098 = vmatprep.subr.mxu0 0.0
    %5099 = vmatpush1.msra.mxu0 0.0
    %5100 = vmatprep.subr.mxu0 0.0
    %5101 = vmatpush1.msra.mxu0 0.0
    %5102 = vmatprep.subr.mxu0 0.0
    %5103 = vmatpush1.msra.mxu0 0.0
    %5104 = vmatprep.subr.mxu0 0.0
    %5105 = vmatpush1.msra.mxu0 0.0
    %5106 = vmatprep.subr.mxu0 0.0
    %5107 = vmatpush1.msra.mxu0 0.0
    %5108 = vmatprep.subr.mxu0 0.0
    %5109 = vmatpush1.msra.mxu0 0.0
    %5110 = vmatprep.subr.mxu0 0.0
    %5111 = vmatpush1.msra.mxu0 0.0
    %5112 = vmatprep.subr.mxu0 0.0
    %5113 = vmatpush1.msra.mxu0 0.0
    %5114 = vmatprep.subr.mxu0 0.0
    %5115 = vmatpush1.msra.mxu0 0.0
    %5116 = vmatprep.subr.mxu0 0.0
    %5117 = vmatpush1.msra.mxu0 0.0
    %5118 = vmatprep.subr.mxu0 0.0
    %5119 = vmatpush1.msra.mxu0 0.0
    %5120 = vmatprep.subr.mxu0 0.0
    %5121 = vmatpush1.msra.mxu0 0.0
    %5122 = vmatprep.subr.mxu0 0.0
    %5123 = vmatpush1.msra.mxu0 0.0
    %5124 = vmatprep.subr.mxu0 0.0
    %5125 = vmatpush1.msra.mxu0 0.0
    %5126 = vmatprep.subr.mxu0 0.0
    %5127 = vmatpush1.msra.mxu0 0.0
    %5128 = vmatprep.subr.mxu0 0.0
    %5129 = vmatpush1.msra.mxu0 0.0
    %5130 = vmatprep.subr.mxu0 0.0
    %5131 = vmatpush1.msra.mxu0 0.0
    %5132 = vmatprep.mubr.f32.mxu0 0.0
    %v5133 = vand.u32 %v3799, 4294901760
    %5134 = vmatmul.mubr.f32.gmra.mrb[0].mxu0 %v5133
    %v5135 = vpop.f32.mrb[0].mxu0
    %v5136 = vadd.f32 %v5064, %v5135
    %v5137 = vpop.f32.mrb[0].mxu0
    %5138 = vdwg.mxu0
    %5139 = vmatprep.subr.mxu0 0.0
    %v5140 = vand.u32 %v3536, 4294901760
    %5141 = vmatpush1.msra.mxu0 %v5140
    %5142 = vmatprep.subr.mxu0 0.0
    %5143 = vmatpush1.msra.mxu0 0.0
    %5144 = vmatprep.subr.mxu0 0.0
    %5145 = vmatpush1.msra.mxu0 0.0
    %5146 = vmatprep.subr.mxu0 0.0
    %5147 = vmatpush1.msra.mxu0 0.0
    %5148 = vmatprep.subr.mxu0 0.0
    %5149 = vmatpush1.msra.mxu0 0.0
    %5150 = vmatprep.subr.mxu0 0.0
    %5151 = vmatpush1.msra.mxu0 0.0
    %5152 = vmatprep.subr.mxu0 0.0
    %5153 = vmatpush1.msra.mxu0 0.0
    %5154 = vmatprep.subr.mxu0 0.0
    %5155 = vmatpush1.msra.mxu0 0.0
    %5156 = vmatprep.subr.mxu0 0.0
    %5157 = vmatpush1.msra.mxu0 0.0
    %5158 = vmatprep.subr.mxu0 0.0
    %5159 = vmatpush1.msra.mxu0 0.0
    %5160 = vmatprep.subr.mxu0 0.0
    %5161 = vmatpush1.msra.mxu0 0.0
    %5162 = vmatprep.subr.mxu0 0.0
    %5163 = vmatpush1.msra.mxu0 0.0
    %5164 = vmatprep.subr.mxu0 0.0
    %5165 = vmatpush1.msra.mxu0 0.0
    %5166 = vmatprep.subr.mxu0 0.0
    %5167 = vmatpush1.msra.mxu0 0.0
    %5168 = vmatprep.subr.mxu0 0.0
    %5169 = vmatpush1.msra.mxu0 0.0
    %5170 = vmatprep.subr.mxu0 0.0
    %5171 = vmatpush1.msra.mxu0 0.0
    %5172 = vmatprep.subr.mxu0 0.0
    %5173 = vmatpush1.msra.mxu0 0.0
    %5174 = vmatprep.subr.mxu0 0.0
    %5175 = vmatpush1.msra.mxu0 0.0
    %5176 = vmatprep.subr.mxu0 0.0
    %5177 = vmatpush1.msra.mxu0 0.0
    %5178 = vmatprep.subr.mxu0 0.0
    %5179 = vmatpush1.msra.mxu0 0.0
    %5180 = vmatprep.subr.mxu0 0.0
    %5181 = vmatpush1.msra.mxu0 0.0
    %5182 = vmatprep.subr.mxu0 0.0
    %5183 = vmatpush1.msra.mxu0 0.0
    %5184 = vmatprep.subr.mxu0 0.0
    %5185 = vmatpush1.msra.mxu0 0.0
    %5186 = vmatprep.subr.mxu0 0.0
    %5187 = vmatpush1.msra.mxu0 0.0
    %5188 = vmatprep.subr.mxu0 0.0
    %5189 = vmatpush1.msra.mxu0 0.0
    %5190 = vmatprep.subr.mxu0 0.0
    %5191 = vmatpush1.msra.mxu0 0.0
    %5192 = vmatprep.subr.mxu0 0.0
    %5193 = vmatpush1.msra.mxu0 0.0
    %5194 = vmatprep.subr.mxu0 0.0
    %5195 = vmatpush1.msra.mxu0 0.0
    %5196 = vmatprep.subr.mxu0 0.0
    %5197 = vmatpush1.msra.mxu0 0.0
    %5198 = vmatprep.subr.mxu0 0.0
    %5199 = vmatpush1.msra.mxu0 0.0
    %5200 = vmatprep.subr.mxu0 0.0
    %5201 = vmatpush1.msra.mxu0 0.0
    %5202 = vmatprep.subr.mxu0 0.0
    %5203 = vmatpush1.msra.mxu0 0.0
    %5204 = vmatprep.mubr.f32.mxu0 0.0
    %v5205 = vand.u32 %v3799, 4294901760
    %v5206 = vsub.f32 %v3799, %v5205
    %v5207 = vand.u32 %v5206, 4294901760
    %v5208 = vsub.f32 %v5206, %v5207
    %v5209 = vand.u32 %v5208, 4294901760
    %5210 = vmatmul.mubr.f32.gmra.mrb[0].mxu0 %v5209
    %v5211 = vpop.f32.mrb[0].mxu0
    %v5212 = vadd.f32 0.0, %v5211
    %v5213 = vpop.f32.mrb[0].mxu0
    %5214 = vdwg.mxu0
    %5215 = vmatprep.subr.mxu0 0.0
    %v5216 = vand.u32 %v3536, 4294901760
    %v5217 = vsub.f32 %v3536, %v5216
    %v5218 = vand.u32 %v5217, 4294901760
    %v5219 = vsub.f32 %v5217, %v5218
    %v5220 = vand.u32 %v5219, 4294901760
    %5221 = vmatpush1.msra.mxu0 %v5220
    %5222 = vmatprep.subr.mxu0 0.0
    %5223 = vmatpush1.msra.mxu0 0.0
    %5224 = vmatprep.subr.mxu0 0.0
    %5225 = vmatpush1.msra.mxu0 0.0
    %5226 = vmatprep.subr.mxu0 0.0
    %5227 = vmatpush1.msra.mxu0 0.0
    %5228 = vmatprep.subr.mxu0 0.0
    %5229 = vmatpush1.msra.mxu0 0.0
    %5230 = vmatprep.subr.mxu0 0.0
    %5231 = vmatpush1.msra.mxu0 0.0
    %5232 = vmatprep.subr.mxu0 0.0
    %5233 = vmatpush1.msra.mxu0 0.0
    %5234 = vmatprep.subr.mxu0 0.0
    %5235 = vmatpush1.msra.mxu0 0.0
    %5236 = vmatprep.subr.mxu0 0.0
    %5237 = vmatpush1.msra.mxu0 0.0
    %5238 = vmatprep.subr.mxu0 0.0
    %5239 = vmatpush1.msra.mxu0 0.0
    %5240 = vmatprep.subr.mxu0 0.0
    %5241 = vmatpush1.msra.mxu0 0.0
    %5242 = vmatprep.subr.mxu0 0.0
    %5243 = vmatpush1.msra.mxu0 0.0
    %5244 = vmatprep.subr.mxu0 0.0
    %5245 = vmatpush1.msra.mxu0 0.0
    %5246 = vmatprep.subr.mxu0 0.0
    %5247 = vmatpush1.msra.mxu0 0.0
    %5248 = vmatprep.subr.mxu0 0.0
    %5249 = vmatpush1.msra.mxu0 0.0
    %5250 = vmatprep.subr.mxu0 0.0
    %5251 = vmatpush1.msra.mxu0 0.0
    %5252 = vmatprep.subr.mxu0 0.0
    %5253 = vmatpush1.msra.mxu0 0.0
    %5254 = vmatprep.subr.mxu0 0.0
    %5255 = vmatpush1.msra.mxu0 0.0
    %5256 = vmatprep.subr.mxu0 0.0
    %5257 = vmatpush1.msra.mxu0 0.0
    %5258 = vmatprep.subr.mxu0 0.0
    %5259 = vmatpush1.msra.mxu0 0.0
    %5260 = vmatprep.subr.mxu0 0.0
    %5261 = vmatpush1.msra.mxu0 0.0
    %5262 = vmatprep.subr.mxu0 0.0
    %5263 = vmatpush1.msra.mxu0 0.0
    %5264 = vmatprep.subr.mxu0 0.0
    %5265 = vmatpush1.msra.mxu0 0.0
    %5266 = vmatprep.subr.mxu0 0.0
    %5267 = vmatpush1.msra.mxu0 0.0
    %5268 = vmatprep.subr.mxu0 0.0
    %5269 = vmatpush1.msra.mxu0 0.0
    %5270 = vmatprep.subr.mxu0 0.0
    %5271 = vmatpush1.msra.mxu0 0.0
    %5272 = vmatprep.subr.mxu0 0.0
    %5273 = vmatpush1.msra.mxu0 0.0
    %5274 = vmatprep.subr.mxu0 0.0
    %5275 = vmatpush1.msra.mxu0 0.0
    %5276 = vmatprep.subr.mxu0 0.0
    %5277 = vmatpush1.msra.mxu0 0.0
    %5278 = vmatprep.subr.mxu0 0.0
    %5279 = vmatpush1.msra.mxu0 0.0
    %5280 = vmatprep.subr.mxu0 0.0
    %5281 = vmatpush1.msra.mxu0 0.0
    %5282 = vmatprep.subr.mxu0 0.0
    %5283 = vmatpush1.msra.mxu0 0.0
    %5284 = vmatprep.mubr.f32.mxu0 0.0
    %v5285 = vand.u32 %v3799, 4294901760
    %5286 = vmatmul.mubr.f32.gmra.mrb[0].mxu0 %v5285
    %v5287 = vpop.f32.mrb[0].mxu0
    %v5288 = vadd.f32 %v5212, %v5287
    %v5289 = vpop.f32.mrb[0].mxu0
    %5290 = vdwg.mxu0
    %5291 = vmatprep.subr.mxu0 0.0
    %v5292 = vand.u32 %v3536, 4294901760
    %v5293 = vsub.f32 %v3536, %v5292
    %5294 = vmatpush1.msra.mxu0 %v5293
    %5295 = vmatprep.subr.mxu0 0.0
    %5296 = vmatpush1.msra.mxu0 0.0
    %5297 = vmatprep.subr.mxu0 0.0
    %5298 = vmatpush1.msra.mxu0 0.0
    %5299 = vmatprep.subr.mxu0 0.0
    %5300 = vmatpush1.msra.mxu0 0.0
    %5301 = vmatprep.subr.mxu0 0.0
    %5302 = vmatpush1.msra.mxu0 0.0
    %5303 = vmatprep.subr.mxu0 0.0
    %5304 = vmatpush1.msra.mxu0 0.0
    %5305 = vmatprep.subr.mxu0 0.0
    %5306 = vmatpush1.msra.mxu0 0.0
    %5307 = vmatprep.subr.mxu0 0.0
    %5308 = vmatpush1.msra.mxu0 0.0
    %5309 = vmatprep.subr.mxu0 0.0
    %5310 = vmatpush1.msra.mxu0 0.0
    %5311 = vmatprep.subr.mxu0 0.0
    %5312 = vmatpush1.msra.mxu0 0.0
    %5313 = vmatprep.subr.mxu0 0.0
    %5314 = vmatpush1.msra.mxu0 0.0
    %5315 = vmatprep.subr.mxu0 0.0
    %5316 = vmatpush1.msra.mxu0 0.0
    %5317 = vmatprep.subr.mxu0 0.0
    %5318 = vmatpush1.msra.mxu0 0.0
    %5319 = vmatprep.subr.mxu0 0.0
    %5320 = vmatpush1.msra.mxu0 0.0
    %5321 = vmatprep.subr.mxu0 0.0
    %5322 = vmatpush1.msra.mxu0 0.0
    %5323 = vmatprep.subr.mxu0 0.0
    %5324 = vmatpush1.msra.mxu0 0.0
    %5325 = vmatprep.subr.mxu0 0.0
    %5326 = vmatpush1.msra.mxu0 0.0
    %5327 = vmatprep.subr.mxu0 0.0
    %5328 = vmatpush1.msra.mxu0 0.0
    %5329 = vmatprep.subr.mxu0 0.0
    %5330 = vmatpush1.msra.mxu0 0.0
    %5331 = vmatprep.subr.mxu0 0.0
    %5332 = vmatpush1.msra.mxu0 0.0
    %5333 = vmatprep.subr.mxu0 0.0
    %5334 = vmatpush1.msra.mxu0 0.0
    %5335 = vmatprep.subr.mxu0 0.0
    %5336 = vmatpush1.msra.mxu0 0.0
    %5337 = vmatprep.subr.mxu0 0.0
    %5338 = vmatpush1.msra.mxu0 0.0
    %5339 = vmatprep.subr.mxu0 0.0
    %5340 = vmatpush1.msra.mxu0 0.0
    %5341 = vmatprep.subr.mxu0 0.0
    %5342 = vmatpush1.msra.mxu0 0.0
    %5343 = vmatprep.subr.mxu0 0.0
    %5344 = vmatpush1.msra.mxu0 0.0
    %5345 = vmatprep.subr.mxu0 0.0
    %5346 = vmatpush1.msra.mxu0 0.0
    %5347 = vmatprep.subr.mxu0 0.0
    %5348 = vmatpush1.msra.mxu0 0.0
    %5349 = vmatprep.subr.mxu0 0.0
    %5350 = vmatpush1.msra.mxu0 0.0
    %5351 = vmatprep.subr.mxu0 0.0
    %5352 = vmatpush1.msra.mxu0 0.0
    %5353 = vmatprep.subr.mxu0 0.0
    %5354 = vmatpush1.msra.mxu0 0.0
    %5355 = vmatprep.subr.mxu0 0.0
    %5356 = vmatpush1.msra.mxu0 0.0
    %5357 = vmatprep.mubr.f32.mxu0 0.0
    %v5358 = vand.u32 %v3799, 4294901760
    %v5359 = vsub.f32 %v3799, %v5358
    %5360 = vmatmul.mubr.f32.gmra.mrb[0].mxu0 %v5359
    %v5361 = vpop.f32.mrb[0].mxu0
    %v5362 = vadd.f32 %v5288, %v5361
    %v5363 = vpop.f32.mrb[0].mxu0
    %5364 = vdwg.mxu0
    %5365 = vmatprep.subr.mxu0 0.0
    %v5366 = vand.u32 %v3536, 4294901760
    %5367 = vmatpush1.msra.mxu0 %v5366
    %5368 = vmatprep.subr.mxu0 0.0
    %5369 = vmatpush1.msra.mxu0 0.0
    %5370 = vmatprep.subr.mxu0 0.0
    %5371 = vmatpush1.msra.mxu0 0.0
    %5372 = vmatprep.subr.mxu0 0.0
    %5373 = vmatpush1.msra.mxu0 0.0
    %5374 = vmatprep.subr.mxu0 0.0
    %5375 = vmatpush1.msra.mxu0 0.0
    %5376 = vmatprep.subr.mxu0 0.0
    %5377 = vmatpush1.msra.mxu0 0.0
    %5378 = vmatprep.subr.mxu0 0.0
    %5379 = vmatpush1.msra.mxu0 0.0
    %5380 = vmatprep.subr.mxu0 0.0
    %5381 = vmatpush1.msra.mxu0 0.0
    %5382 = vmatprep.subr.mxu0 0.0
    %5383 = vmatpush1.msra.mxu0 0.0
    %5384 = vmatprep.subr.mxu0 0.0
    %5385 = vmatpush1.msra.mxu0 0.0
    %5386 = vmatprep.subr.mxu0 0.0
    %5387 = vmatpush1.msra.mxu0 0.0
    %5388 = vmatprep.subr.mxu0 0.0
    %5389 = vmatpush1.msra.mxu0 0.0
    %5390 = vmatprep.subr.mxu0 0.0
    %5391 = vmatpush1.msra.mxu0 0.0
    %5392 = vmatprep.subr.mxu0 0.0
    %5393 = vmatpush1.msra.mxu0 0.0
    %5394 = vmatprep.subr.mxu0 0.0
    %5395 = vmatpush1.msra.mxu0 0.0
    %5396 = vmatprep.subr.mxu0 0.0
    %5397 = vmatpush1.msra.mxu0 0.0
    %5398 = vmatprep.subr.mxu0 0.0
    %5399 = vmatpush1.msra.mxu0 0.0
    %5400 = vmatprep.subr.mxu0 0.0
    %5401 = vmatpush1.msra.mxu0 0.0
    %5402 = vmatprep.subr.mxu0 0.0
    %5403 = vmatpush1.msra.mxu0 0.0
    %5404 = vmatprep.subr.mxu0 0.0
    %5405 = vmatpush1.msra.mxu0 0.0
    %5406 = vmatprep.subr.mxu0 0.0
    %5407 = vmatpush1.msra.mxu0 0.0
    %5408 = vmatprep.subr.mxu0 0.0
    %5409 = vmatpush1.msra.mxu0 0.0
    %5410 = vmatprep.subr.mxu0 0.0
    %5411 = vmatpush1.msra.mxu0 0.0
    %5412 = vmatprep.subr.mxu0 0.0
    %5413 = vmatpush1.msra.mxu0 0.0
    %5414 = vmatprep.subr.mxu0 0.0
    %5415 = vmatpush1.msra.mxu0 0.0
    %5416 = vmatprep.subr.mxu0 0.0
    %5417 = vmatpush1.msra.mxu0 0.0
    %5418 = vmatprep.subr.mxu0 0.0
    %5419 = vmatpush1.msra.mxu0 0.0
    %5420 = vmatprep.subr.mxu0 0.0
    %5421 = vmatpush1.msra.mxu0 0.0
    %5422 = vmatprep.subr.mxu0 0.0
    %5423 = vmatpush1.msra.mxu0 0.0
    %5424 = vmatprep.subr.mxu0 0.0
    %5425 = vmatpush1.msra.mxu0 0.0
    %5426 = vmatprep.subr.mxu0 0.0
    %5427 = vmatpush1.msra.mxu0 0.0
    %5428 = vmatprep.subr.mxu0 0.0
    %5429 = vmatpush1.msra.mxu0 0.0
    %5430 = vmatprep.mubr.f32.mxu0 0.0
    %v5431 = vand.u32 %v3799, 4294901760
    %v5432 = vsub.f32 %v3799, %v5431
    %v5433 = vand.u32 %v5432, 4294901760
    %5434 = vmatmul.mubr.f32.gmra.mrb[0].mxu0 %v5433
    %v5435 = vpop.f32.mrb[0].mxu0
    %v5436 = vadd.f32 %v5362, %v5435
    %v5437 = vpop.f32.mrb[0].mxu0
    %5438 = vdwg.mxu0
    %5439 = vmatprep.subr.mxu0 0.0
    %v5440 = vand.u32 %v3536, 4294901760
    %v5441 = vsub.f32 %v3536, %v5440
    %v5442 = vand.u32 %v5441, 4294901760
    %5443 = vmatpush1.msra.mxu0 %v5442
    %5444 = vmatprep.subr.mxu0 0.0
    %5445 = vmatpush1.msra.mxu0 0.0
    %5446 = vmatprep.subr.mxu0 0.0
    %5447 = vmatpush1.msra.mxu0 0.0
    %5448 = vmatprep.subr.mxu0 0.0
    %5449 = vmatpush1.msra.mxu0 0.0
    %5450 = vmatprep.subr.mxu0 0.0
    %5451 = vmatpush1.msra.mxu0 0.0
    %5452 = vmatprep.subr.mxu0 0.0
    %5453 = vmatpush1.msra.mxu0 0.0
    %5454 = vmatprep.subr.mxu0 0.0
    %5455 = vmatpush1.msra.mxu0 0.0
    %5456 = vmatprep.subr.mxu0 0.0
    %5457 = vmatpush1.msra.mxu0 0.0
    %5458 = vmatprep.subr.mxu0 0.0
    %5459 = vmatpush1.msra.mxu0 0.0
    %5460 = vmatprep.subr.mxu0 0.0
    %5461 = vmatpush1.msra.mxu0 0.0
    %5462 = vmatprep.subr.mxu0 0.0
    %5463 = vmatpush1.msra.mxu0 0.0
    %5464 = vmatprep.subr.mxu0 0.0
    %5465 = vmatpush1.msra.mxu0 0.0
    %5466 = vmatprep.subr.mxu0 0.0
    %5467 = vmatpush1.msra.mxu0 0.0
    %5468 = vmatprep.subr.mxu0 0.0
    %5469 = vmatpush1.msra.mxu0 0.0
    %5470 = vmatprep.subr.mxu0 0.0
    %5471 = vmatpush1.msra.mxu0 0.0
    %5472 = vmatprep.subr.mxu0 0.0
    %5473 = vmatpush1.msra.mxu0 0.0
    %5474 = vmatprep.subr.mxu0 0.0
    %5475 = vmatpush1.msra.mxu0 0.0
    %5476 = vmatprep.subr.mxu0 0.0
    %5477 = vmatpush1.msra.mxu0 0.0
    %5478 = vmatprep.subr.mxu0 0.0
    %5479 = vmatpush1.msra.mxu0 0.0
    %5480 = vmatprep.subr.mxu0 0.0
    %5481 = vmatpush1.msra.mxu0 0.0
    %5482 = vmatprep.subr.mxu0 0.0
    %5483 = vmatpush1.msra.mxu0 0.0
    %5484 = vmatprep.subr.mxu0 0.0
    %5485 = vmatpush1.msra.mxu0 0.0
    %5486 = vmatprep.subr.mxu0 0.0
    %5487 = vmatpush1.msra.mxu0 0.0
    %5488 = vmatprep.subr.mxu0 0.0
    %5489 = vmatpush1.msra.mxu0 0.0
    %5490 = vmatprep.subr.mxu0 0.0
    %5491 = vmatpush1.msra.mxu0 0.0
    %5492 = vmatprep.subr.mxu0 0.0
    %5493 = vmatpush1.msra.mxu0 0.0
    %5494 = vmatprep.subr.mxu0 0.0
    %5495 = vmatpush1.msra.mxu0 0.0
    %5496 = vmatprep.subr.mxu0 0.0
    %5497 = vmatpush1.msra.mxu0 0.0
    %5498 = vmatprep.subr.mxu0 0.0
    %5499 = vmatpush1.msra.mxu0 0.0
    %5500 = vmatprep.subr.mxu0 0.0
    %5501 = vmatpush1.msra.mxu0 0.0
    %5502 = vmatprep.subr.mxu0 0.0
    %5503 = vmatpush1.msra.mxu0 0.0
    %5504 = vmatprep.subr.mxu0 0.0
    %5505 = vmatpush1.msra.mxu0 0.0
    %5506 = vmatprep.mubr.f32.mxu0 0.0
    %v5507 = vand.u32 %v3799, 4294901760
    %5508 = vmatmul.mubr.f32.gmra.mrb[0].mxu0 %v5507
    %v5509 = vpop.f32.mrb[0].mxu0
    %v5510 = vadd.f32 %v5436, %v5509
    %v5511 = vpop.f32.mrb[0].mxu0
    %5512 = vdwg.mxu0
    %5513 = vmatprep.subr.mxu0 0.0
    %v5514 = vand.u32 %v3536, 4294901760
    %5515 = vmatpush1.msra.mxu0 %v5514
    %5516 = vmatprep.subr.mxu0 0.0
    %5517 = vmatpush1.msra.mxu0 0.0
    %5518 = vmatprep.subr.mxu0 0.0
    %5519 = vmatpush1.msra.mxu0 0.0
    %5520 = vmatprep.subr.mxu0 0.0
    %5521 = vmatpush1.msra.mxu0 0.0
    %5522 = vmatprep.subr.mxu0 0.0
    %5523 = vmatpush1.msra.mxu0 0.0
    %5524 = vmatprep.subr.mxu0 0.0
    %5525 = vmatpush1.msra.mxu0 0.0
    %5526 = vmatprep.subr.mxu0 0.0
    %5527 = vmatpush1.msra.mxu0 0.0
    %5528 = vmatprep.subr.mxu0 0.0
    %5529 = vmatpush1.msra.mxu0 0.0
    %5530 = vmatprep.subr.mxu0 0.0
    %5531 = vmatpush1.msra.mxu0 0.0
    %5532 = vmatprep.subr.mxu0 0.0
    %5533 = vmatpush1.msra.mxu0 0.0
    %5534 = vmatprep.subr.mxu0 0.0
    %5535 = vmatpush1.msra.mxu0 0.0
    %5536 = vmatprep.subr.mxu0 0.0
    %5537 = vmatpush1.msra.mxu0 0.0
    %5538 = vmatprep.subr.mxu0 0.0
    %5539 = vmatpush1.msra.mxu0 0.0
    %5540 = vmatprep.subr.mxu0 0.0
    %5541 = vmatpush1.msra.mxu0 0.0
    %5542 = vmatprep.subr.mxu0 0.0
    %5543 = vmatpush1.msra.mxu0 0.0
    %5544 = vmatprep.subr.mxu0 0.0
    %5545 = vmatpush1.msra.mxu0 0.0
    %5546 = vmatprep.subr.mxu0 0.0
    %5547 = vmatpush1.msra.mxu0 0.0
    %5548 = vmatprep.subr.mxu0 0.0
    %5549 = vmatpush1.msra.mxu0 0.0
    %5550 = vmatprep.subr.mxu0 0.0
    %5551 = vmatpush1.msra.mxu0 0.0
    %5552 = vmatprep.subr.mxu0 0.0
    %5553 = vmatpush1.msra.mxu0 0.0
    %5554 = vmatprep.subr.mxu0 0.0
    %5555 = vmatpush1.msra.mxu0 0.0
    %5556 = vmatprep.subr.mxu0 0.0
    %5557 = vmatpush1.msra.mxu0 0.0
    %5558 = vmatprep.subr.mxu0 0.0
    %5559 = vmatpush1.msra.mxu0 0.0
    %5560 = vmatprep.subr.mxu0 0.0
    %5561 = vmatpush1.msra.mxu0 0.0
    %5562 = vmatprep.subr.mxu0 0.0
    %5563 = vmatpush1.msra.mxu0 0.0
    %5564 = vmatprep.subr.mxu0 0.0
    %5565 = vmatpush1.msra.mxu0 0.0
    %5566 = vmatprep.subr.mxu0 0.0
    %5567 = vmatpush1.msra.mxu0 0.0
    %5568 = vmatprep.subr.mxu0 0.0
    %5569 = vmatpush1.msra.mxu0 0.0
    %5570 = vmatprep.subr.mxu0 0.0
    %5571 = vmatpush1.msra.mxu0 0.0
    %5572 = vmatprep.subr.mxu0 0.0
    %5573 = vmatpush1.msra.mxu0 0.0
    %5574 = vmatprep.subr.mxu0 0.0
    %5575 = vmatpush1.msra.mxu0 0.0
    %5576 = vmatprep.subr.mxu0 0.0
    %5577 = vmatpush1.msra.mxu0 0.0
    %5578 = vmatprep.mubr.f32.mxu0 0.0
    %v5579 = vand.u32 %v3799, 4294901760
    %5580 = vmatmul.mubr.f32.gmra.mrb[0].mxu0 %v5579
    %v5581 = vpop.f32.mrb[0].mxu0
    %v5582 = vadd.f32 %v5510, %v5581
    %v5583 = vpop.f32.mrb[0].mxu0
    %5584 = vdwg.mxu0
    %v5585 = vld [vmem:[#allocation21] sm:$0x1]
    %v5586 = vlaneseq
    %v5587 = vshrl.u32 %v5586, 7
    %v5588 = vsub.s32 0, %v5587
    %v5589 = vrot.slane %v5585, %v5588
    %v5591 = vcombine.high %v5589, %v5589
    %v5593 = vadd.f32 %v4244, %v5589
    %v5594 = vadd.f32 %v4690, %v5591
    %v5595 = vld [vmem:[#allocation21 + $0x1] sm:$0x1]
    %v5596 = vld [vmem:[#allocation21 + $0x2] sm:$0x1]
    %v5599 = vcombine.low %v5593, %v5594
    %v5601 = vsel %vm3094, %v5599, 0.0
    %v5602 = vrot.slane %v5601, 4
    %v5603 = vadd.f32 %v5601, %v5602
    %v5604 = vrot.slane %v5603, 2
    %v5605 = vadd.f32 %v5603, %v5604
    %v5606 = vrot.slane %v5605, 1
    %v5607 = vadd.f32 %v5605, %v5606
    %v5608 = vmul.f32 %v5593, %v5593
    %v5609 = vmul.f32 %v5594, %v5594
    %v5612 = vcombine.low %v5608, %v5609
    %v5614 = vsel %vm3094, %v5612, 0.0
    %v5615 = vrot.slane %v5614, 4
    %v5616 = vadd.f32 %v5614, %v5615
    %v5617 = vrot.slane %v5616, 2
    %v5618 = vadd.f32 %v5616, %v5617
    %v5619 = vrot.slane %v5618, 1
    %v5620 = vadd.f32 %v5618, %v5619
    %v5621 = vmul.f32 %v5607, 0.125
    %v5622 = vmul.f32 %v5620, 0.125
    %v5623 = vmul.f32 %v5621, %v5621
    %v5624 = vsub.f32 %v5622, %v5623
    %v5625 = vadd.f32 %v5624, 1e-05
    %v5626 = vrsqrt.pop %v5625
    %v5627 = vmul.f32 %v5595, %v5626
    %v5628 = vmul.f32 %v5621, %v5627
    %v5629 = vsub.f32 %v5596, %v5628
    %v5630 = vlaneseq
    %v5631 = vshrl.u32 %v5630, 7
    %v5632 = vsub.s32 0, %v5631
    %v5633 = vrot.slane %v5627, %v5632
    %v5635 = vcombine.high %v5633, %v5633
    %v5637 = vmul.f32 %v5593, %v5633
    %v5638 = vmul.f32 %v5594, %v5635
    %v5639 = vlaneseq
    %v5640 = vshrl.u32 %v5639, 7
    %v5641 = vsub.s32 0, %v5640
    %v5642 = vrot.slane %v5629, %v5641
    %v5644 = vcombine.high %v5642, %v5642
    %v5646 = vadd.f32 %v5637, %v5642
    %v5647 = vadd.f32 %v5638, %v5644
    %v5648 = vmax.f32 %v5646, 0.0
    %v5649 = vmax.f32 %v5647, 0.0
    %5650 = vst.msk [vmem:[#allocation7] sm:$0x1] %vm3138, 0.0
    %5651 = vst.msk [vmem:[#allocation7 + $0x8] sm:$0x1] %vm3138, 0.0
    %5652 = vst.msk [vmem:[#allocation7 + $0x5] sm:$0x1] %vm3138, 0.0
    %5653 = vst.msk [vmem:[#allocation7 + $0xd] sm:$0x1] %vm3138, 0.0
    %vm5654 = vcmask 60416
    %5655 = vst.msk [vmem:[#allocation7 + $0x1] sm:$0xf] %vm5654, %v5648
    %5656 = vst.msk [vmem:[#allocation7 + $0x9] sm:$0xf] %vm5654, %v5649
    %v5657 = vld [vmem:[#allocation7] sm:$0xf]
    %v5658 = vld [vmem:[#allocation7 + $0x8] sm:$0xf]
    %v5659 = vld [vmem:[#allocation7 + $0x2] sm:$0xf]
    %v5660 = vld [vmem:[#allocation7 + $0xa] sm:$0xf]
    %v5661 = vld [vmem:[%s10] sm:$0xff]
    %s5662 = scalar_lea.vmem %s10, 8
    %v5663 = vld [vmem:[%s5662] sm:$0xff]
    %v5666 = vcombine.low %v5648, %v5649
    %v5667 = vsel %vm3094, %v5666, 0
    %5669 = vmatprep.subr.mxu0 0.0
    %5670 = vmatpush1.msra.mxu0 %v5663
    %5671 = vmatprep.subr.mxu0 0.0
    %5672 = vmatpush1.msra.mxu0 0.0
    %5673 = vmatprep.subr.mxu0 0.0
    %5674 = vmatpush1.msra.mxu0 0.0
    %5675 = vmatprep.subr.mxu0 0.0
    %5676 = vmatpush1.msra.mxu0 0.0
    %5677 = vmatprep.subr.mxu0 0.0
    %5678 = vmatpush1.msra.mxu0 0.0
    %5679 = vmatprep.subr.mxu0 0.0
    %5680 = vmatpush1.msra.mxu0 0.0
    %5681 = vmatprep.subr.mxu0 0.0
    %5682 = vmatpush1.msra.mxu0 0.0
    %5683 = vmatprep.subr.mxu0 0.0
    %5684 = vmatpush1.msra.mxu0 0.0
    %5685 = vmatprep.subr.mxu0 0.0
    %5686 = vmatpush1.msra.mxu0 0.0
    %5687 = vmatprep.subr.mxu0 0.0
    %5688 = vmatpush1.msra.mxu0 0.0
    %5689 = vmatprep.subr.mxu0 0.0
    %5690 = vmatpush1.msra.mxu0 0.0
    %5691 = vmatprep.subr.mxu0 0.0
    %5692 = vmatpush1.msra.mxu0 0.0
    %5693 = vmatprep.subr.mxu0 0.0
    %5694 = vmatpush1.msra.mxu0 0.0
    %5695 = vmatprep.subr.mxu0 0.0
    %5696 = vmatpush1.msra.mxu0 0.0
    %5697 = vmatprep.subr.mxu0 0.0
    %5698 = vmatpush1.msra.mxu0 0.0
    %5699 = vmatprep.subr.mxu0 0.0
    %5700 = vmatpush1.msra.mxu0 0.0
    %5701 = vmatprep.subr.mxu0 0.0
    %5702 = vmatpush1.msra.mxu0 0.0
    %5703 = vmatprep.subr.mxu0 0.0
    %5704 = vmatpush1.msra.mxu0 0.0
    %5705 = vmatprep.subr.mxu0 0.0
    %5706 = vmatpush1.msra.mxu0 0.0
    %5707 = vmatprep.subr.mxu0 0.0
    %5708 = vmatpush1.msra.mxu0 0.0
    %5709 = vmatprep.subr.mxu0 0.0
    %5710 = vmatpush1.msra.mxu0 0.0
    %5711 = vmatprep.subr.mxu0 0.0
    %5712 = vmatpush1.msra.mxu0 0.0
    %5713 = vmatprep.subr.mxu0 0.0
    %5714 = vmatpush1.msra.mxu0 0.0
    %5715 = vmatprep.subr.mxu0 0.0
    %5716 = vmatpush1.msra.mxu0 0.0
    %5717 = vmatprep.subr.mxu0 0.0
    %5718 = vmatpush1.msra.mxu0 0.0
    %5719 = vmatprep.subr.mxu0 0.0
    %5720 = vmatpush1.msra.mxu0 0.0
    %5721 = vmatprep.subr.mxu0 0.0
    %5722 = vmatpush1.msra.mxu0 0.0
    %5723 = vmatprep.subr.mxu0 0.0
    %5724 = vmatpush1.msra.mxu0 0.0
    %5725 = vmatprep.subr.mxu0 0.0
    %5726 = vmatpush1.msra.mxu0 0.0
    %5727 = vmatprep.subr.mxu0 0.0
    %5728 = vmatpush1.msra.mxu0 0.0
    %5729 = vmatprep.subr.mxu0 0.0
    %5730 = vmatpush1.msra.mxu0 0.0
    %5731 = vmatprep.subr.mxu0 0.0
    %5732 = vmatpush1.msra.mxu0 0.0
    %5733 = vmatprep.mubr.f32.mxu0 0.0
    %5734 = vmatmul.mubr.f32.gmra.mrb[0].mxu0 %v5667
    %v5735 = vpop.f32.mrb[0].mxu0
    %v5736 = vadd.f32 0.0, %v5735
    %v5737 = vpop.f32.mrb[0].mxu0
    %5738 = vdwg.mxu0
    %v5741 = vcombine.low %v5657, %v5658
    %v5742 = vsel %vm3094, %v5741, 0
    %5744 = vmatprep.subr.mxu0 0.0
    %5745 = vmatpush1.msra.mxu0 %v5661
    %5746 = vmatprep.subr.mxu0 0.0
    %5747 = vmatpush1.msra.mxu0 0.0
    %5748 = vmatprep.subr.mxu0 0.0
    %5749 = vmatpush1.msra.mxu0 0.0
    %5750 = vmatprep.subr.mxu0 0.0
    %5751 = vmatpush1.msra.mxu0 0.0
    %5752 = vmatprep.subr.mxu0 0.0
    %5753 = vmatpush1.msra.mxu0 0.0
    %5754 = vmatprep.subr.mxu0 0.0
    %5755 = vmatpush1.msra.mxu0 0.0
    %5756 = vmatprep.subr.mxu0 0.0
    %5757 = vmatpush1.msra.mxu0 0.0
    %5758 = vmatprep.subr.mxu0 0.0
    %5759 = vmatpush1.msra.mxu0 0.0
    %5760 = vmatprep.subr.mxu0 0.0
    %5761 = vmatpush1.msra.mxu0 0.0
    %5762 = vmatprep.subr.mxu0 0.0
    %5763 = vmatpush1.msra.mxu0 0.0
    %5764 = vmatprep.subr.mxu0 0.0
    %5765 = vmatpush1.msra.mxu0 0.0
    %5766 = vmatprep.subr.mxu0 0.0
    %5767 = vmatpush1.msra.mxu0 0.0
    %5768 = vmatprep.subr.mxu0 0.0
    %5769 = vmatpush1.msra.mxu0 0.0
    %5770 = vmatprep.subr.mxu0 0.0
    %5771 = vmatpush1.msra.mxu0 0.0
    %5772 = vmatprep.subr.mxu0 0.0
    %5773 = vmatpush1.msra.mxu0 0.0
    %5774 = vmatprep.subr.mxu0 0.0
    %5775 = vmatpush1.msra.mxu0 0.0
    %5776 = vmatprep.subr.mxu0 0.0
    %5777 = vmatpush1.msra.mxu0 0.0
    %5778 = vmatprep.subr.mxu0 0.0
    %5779 = vmatpush1.msra.mxu0 0.0
    %5780 = vmatprep.subr.mxu0 0.0
    %5781 = vmatpush1.msra.mxu0 0.0
    %5782 = vmatprep.subr.mxu0 0.0
    %5783 = vmatpush1.msra.mxu0 0.0
    %5784 = vmatprep.subr.mxu0 0.0
    %5785 = vmatpush1.msra.mxu0 0.0
    %5786 = vmatprep.subr.mxu0 0.0
    %5787 = vmatpush1.msra.mxu0 0.0
    %5788 = vmatprep.subr.mxu0 0.0
    %5789 = vmatpush1.msra.mxu0 0.0
    %5790 = vmatprep.subr.mxu0 0.0
    %5791 = vmatpush1.msra.mxu0 0.0
    %5792 = vmatprep.subr.mxu0 0.0
    %5793 = vmatpush1.msra.mxu0 0.0
    %5794 = vmatprep.subr.mxu0 0.0
    %5795 = vmatpush1.msra.mxu0 0.0
    %5796 = vmatprep.subr.mxu0 0.0
    %5797 = vmatpush1.msra.mxu0 0.0
    %5798 = vmatprep.subr.mxu0 0.0
    %5799 = vmatpush1.msra.mxu0 0.0
    %5800 = vmatprep.subr.mxu0 0.0
    %5801 = vmatpush1.msra.mxu0 0.0
    %5802 = vmatprep.subr.mxu0 0.0
    %5803 = vmatpush1.msra.mxu0 0.0
    %5804 = vmatprep.subr.mxu0 0.0
    %5805 = vmatpush1.msra.mxu0 0.0
    %5806 = vmatprep.subr.mxu0 0.0
    %5807 = vmatpush1.msra.mxu0 0.0
    %5808 = vmatprep.mubr.f32.mxu0 0.0
    %5809 = vmatmul.mubr.f32.gmra.mrb[0].mxu0 %v5742
    %v5810 = vpop.f32.mrb[0].mxu0
    %v5811 = vadd.f32 %v5736, %v5810
    %v5812 = vpop.f32.mrb[0].mxu0
    %5813 = vdwg.mxu0
    %s5814 = scalar_lea.vmem %s10, 16
    %v5815 = vld [vmem:[%s5814] sm:$0xff]
    %v5818 = vcombine.low %v5659, %v5660
    %v5819 = vsel %vm3094, %v5818, 0
    %5821 = vmatprep.subr.mxu0 0.0
    %5822 = vmatpush1.msra.mxu0 %v5815
    %5823 = vmatprep.subr.mxu0 0.0
    %5824 = vmatpush1.msra.mxu0 0.0
    %5825 = vmatprep.subr.mxu0 0.0
    %5826 = vmatpush1.msra.mxu0 0.0
    %5827 = vmatprep.subr.mxu0 0.0
    %5828 = vmatpush1.msra.mxu0 0.0
    %5829 = vmatprep.subr.mxu0 0.0
    %5830 = vmatpush1.msra.mxu0 0.0
    %5831 = vmatprep.subr.mxu0 0.0
    %5832 = vmatpush1.msra.mxu0 0.0
    %5833 = vmatprep.subr.mxu0 0.0
    %5834 = vmatpush1.msra.mxu0 0.0
    %5835 = vmatprep.subr.mxu0 0.0
    %5836 = vmatpush1.msra.mxu0 0.0
    %5837 = vmatprep.subr.mxu0 0.0
    %5838 = vmatpush1.msra.mxu0 0.0
    %5839 = vmatprep.subr.mxu0 0.0
    %5840 = vmatpush1.msra.mxu0 0.0
    %5841 = vmatprep.subr.mxu0 0.0
    %5842 = vmatpush1.msra.mxu0 0.0
    %5843 = vmatprep.subr.mxu0 0.0
    %5844 = vmatpush1.msra.mxu0 0.0
    %5845 = vmatprep.subr.mxu0 0.0
    %5846 = vmatpush1.msra.mxu0 0.0
    %5847 = vmatprep.subr.mxu0 0.0
    %5848 = vmatpush1.msra.mxu0 0.0
    %5849 = vmatprep.subr.mxu0 0.0
    %5850 = vmatpush1.msra.mxu0 0.0
    %5851 = vmatprep.subr.mxu0 0.0
    %5852 = vmatpush1.msra.mxu0 0.0
    %5853 = vmatprep.subr.mxu0 0.0
    %5854 = vmatpush1.msra.mxu0 0.0
    %5855 = vmatprep.subr.mxu0 0.0
    %5856 = vmatpush1.msra.mxu0 0.0
    %5857 = vmatprep.subr.mxu0 0.0
    %5858 = vmatpush1.msra.mxu0 0.0
    %5859 = vmatprep.subr.mxu0 0.0
    %5860 = vmatpush1.msra.mxu0 0.0
    %5861 = vmatprep.subr.mxu0 0.0
    %5862 = vmatpush1.msra.mxu0 0.0
    %5863 = vmatprep.subr.mxu0 0.0
    %5864 = vmatpush1.msra.mxu0 0.0
    %5865 = vmatprep.subr.mxu0 0.0
    %5866 = vmatpush1.msra.mxu0 0.0
    %5867 = vmatprep.subr.mxu0 0.0
    %5868 = vmatpush1.msra.mxu0 0.0
    %5869 = vmatprep.subr.mxu0 0.0
    %5870 = vmatpush1.msra.mxu0 0.0
    %5871 = vmatprep.subr.mxu0 0.0
    %5872 = vmatpush1.msra.mxu0 0.0
    %5873 = vmatprep.subr.mxu0 0.0
    %5874 = vmatpush1.msra.mxu0 0.0
    %5875 = vmatprep.subr.mxu0 0.0
    %5876 = vmatpush1.msra.mxu0 0.0
    %5877 = vmatprep.subr.mxu0 0.0
    %5878 = vmatpush1.msra.mxu0 0.0
    %5879 = vmatprep.subr.mxu0 0.0
    %5880 = vmatpush1.msra.mxu0 0.0
    %5881 = vmatprep.subr.mxu0 0.0
    %5882 = vmatpush1.msra.mxu0 0.0
    %5883 = vmatprep.subr.mxu0 0.0
    %5884 = vmatpush1.msra.mxu0 0.0
    %5885 = vmatprep.mubr.f32.mxu0 0.0
    %5886 = vmatmul.mubr.f32.gmra.mrb[0].mxu0 %v5819
    %v5887 = vpop.f32.mrb[0].mxu0
    %v5888 = vadd.f32 0.0, %v5887
    %v5889 = vpop.f32.mrb[0].mxu0
    %5890 = vdwg.mxu0
    %v5891 = vadd.f32 %v5811, %v5888
    %v5892 = vld [vmem:[#allocation21 + $0x3] sm:$0x1]
    %v5893 = vlaneseq
    %v5894 = vshrl.u32 %v5893, 7
    %v5895 = vsub.s32 0, %v5894
    %v5896 = vrot.slane %v5892, %v5895
    %v5897 = vadd.f32 %v5891, %v5896
    %v5898 = vld [vmem:[#allocation21 + $0x4] sm:$0x1]
    %v5899 = vld [vmem:[#allocation21 + $0x5] sm:$0x1]
    %v5900 = vsel %vm3094, %v5897, 0.0
    %v5901 = vrot.slane %v5900, 4
    %v5902 = vadd.f32 %v5900, %v5901
    %v5903 = vrot.slane %v5902, 2
    %v5904 = vadd.f32 %v5902, %v5903
    %v5905 = vrot.slane %v5904, 1
    %v5906 = vadd.f32 %v5904, %v5905
    %v5907 = vmul.f32 %v5897, %v5897
    %v5908 = vsel %vm3094, %v5907, 0.0
    %v5909 = vrot.slane %v5908, 4
    %v5910 = vadd.f32 %v5908, %v5909
    %v5911 = vrot.slane %v5910, 2
    %v5912 = vadd.f32 %v5910, %v5911
    %v5913 = vrot.slane %v5912, 1
    %v5914 = vadd.f32 %v5912, %v5913
    %v5915 = vmul.f32 %v5906, 0.125
    %v5916 = vmul.f32 %v5914, 0.125
    %v5917 = vmul.f32 %v5915, %v5915
    %v5918 = vsub.f32 %v5916, %v5917
    %v5919 = vadd.f32 %v5918, 1e-05
    %v5920 = vrsqrt.pop %v5919
    %v5921 = vmul.f32 %v5898, %v5920
    %v5922 = vmul.f32 %v5915, %v5921
    %v5923 = vsub.f32 %v5899, %v5922
    %v5924 = vlaneseq
    %v5925 = vshrl.u32 %v5924, 7
    %v5926 = vsub.s32 0, %v5925
    %v5927 = vrot.slane %v5921, %v5926
    %v5928 = vmul.f32 %v5897, %v5927
    %v5929 = vlaneseq
    %v5930 = vshrl.u32 %v5929, 7
    %v5931 = vsub.s32 0, %v5930
    %v5932 = vrot.slane %v5923, %v5931
    %v5933 = vadd.f32 %v5928, %v5932
    %v5934 = vld [vmem:[#allocation22] sm:$0xff]
    %v5935 = vld [vmem:[#allocation21 + $0x6] sm:$0x1]
    %v5936 = vlaneseq
    %v5937 = vshrl.u32 %v5936, 7
    %v5938 = vsub.s32 0, %v5937
    %v5939 = vrot.slane %v5935, %v5938
    %v5942 = vcombine.low %v5136, %v5582
    %v5943 = vsel %vm3094, %v5942, 0
    %5945 = vmatprep.subr.mxu0 0.0
    %5946 = vmatpush1.msra.mxu0 %v5934
    %5947 = vmatprep.subr.mxu0 0.0
    %5948 = vmatpush1.msra.mxu0 0.0
    %5949 = vmatprep.subr.mxu0 0.0
    %5950 = vmatpush1.msra.mxu0 0.0
    %5951 = vmatprep.subr.mxu0 0.0
    %5952 = vmatpush1.msra.mxu0 0.0
    %5953 = vmatprep.subr.mxu0 0.0
    %5954 = vmatpush1.msra.mxu0 0.0
    %5955 = vmatprep.subr.mxu0 0.0
    %5956 = vmatpush1.msra.mxu0 0.0
    %5957 = vmatprep.subr.mxu0 0.0
    %5958 = vmatpush1.msra.mxu0 0.0
    %5959 = vmatprep.subr.mxu0 0.0
    %5960 = vmatpush1.msra.mxu0 0.0
    %5961 = vmatprep.subr.mxu0 0.0
    %5962 = vmatpush1.msra.mxu0 0.0
    %5963 = vmatprep.subr.mxu0 0.0
    %5964 = vmatpush1.msra.mxu0 0.0
    %5965 = vmatprep.subr.mxu0 0.0
    %5966 = vmatpush1.msra.mxu0 0.0
    %5967 = vmatprep.subr.mxu0 0.0
    %5968 = vmatpush1.msra.mxu0 0.0
    %5969 = vmatprep.subr.mxu0 0.0
    %5970 = vmatpush1.msra.mxu0 0.0
    %5971 = vmatprep.subr.mxu0 0.0
    %5972 = vmatpush1.msra.mxu0 0.0
    %5973 = vmatprep.subr.mxu0 0.0
    %5974 = vmatpush1.msra.mxu0 0.0
    %5975 = vmatprep.subr.mxu0 0.0
    %5976 = vmatpush1.msra.mxu0 0.0
    %5977 = vmatprep.subr.mxu0 0.0
    %5978 = vmatpush1.msra.mxu0 0.0
    %5979 = vmatprep.subr.mxu0 0.0
    %5980 = vmatpush1.msra.mxu0 0.0
    %5981 = vmatprep.subr.mxu0 0.0
    %5982 = vmatpush1.msra.mxu0 0.0
    %5983 = vmatprep.subr.mxu0 0.0
    %5984 = vmatpush1.msra.mxu0 0.0
    %5985 = vmatprep.subr.mxu0 0.0
    %5986 = vmatpush1.msra.mxu0 0.0
    %5987 = vmatprep.subr.mxu0 0.0
    %5988 = vmatpush1.msra.mxu0 0.0
    %5989 = vmatprep.subr.mxu0 0.0
    %5990 = vmatpush1.msra.mxu0 0.0
    %5991 = vmatprep.subr.mxu0 0.0
    %5992 = vmatpush1.msra.mxu0 0.0
    %5993 = vmatprep.subr.mxu0 0.0
    %5994 = vmatpush1.msra.mxu0 0.0
    %5995 = vmatprep.subr.mxu0 0.0
    %5996 = vmatpush1.msra.mxu0 0.0
    %5997 = vmatprep.subr.mxu0 0.0
    %5998 = vmatpush1.msra.mxu0 0.0
    %5999 = vmatprep.subr.mxu0 0.0
    %6000 = vmatpush1.msra.mxu0 0.0
    %6001 = vmatprep.subr.mxu0 0.0
    %6002 = vmatpush1.msra.mxu0 0.0
    %6003 = vmatprep.subr.mxu0 0.0
    %6004 = vmatpush1.msra.mxu0 0.0
    %6005 = vmatprep.subr.mxu0 0.0
    %6006 = vmatpush1.msra.mxu0 0.0
    %6007 = vmatprep.subr.mxu0 0.0
    %6008 = vmatpush1.msra.mxu0 0.0
    %6009 = vmatprep.mubr.f32.mxu0 0.0
    %6010 = vmatmul.mubr.f32.gmra.mrb[0].mxu0 %v5943
    %v6011 = vpop.f32.mrb[0].mxu0
    %v6012 = vadd.f32 %v5939, %v6011
    %v6013 = vpop.f32.mrb[0].mxu0
    %6014 = vdwg.mxu0
    %v6015 = vadd.f32 %v5933, %v6012
    %v6016 = vmax.f32 %v6015, 0.0
    %v6018 = vcombine.high %v6016, %v6016
    %6020 = vst.msk [vmem:[#allocation25] sm:$0xf] %vm5654, %v6016
    %6021 = vst.msk [vmem:[#allocation25 + $0x4] sm:$0xf] %vm5654, %v6018
    %6022 = vst.msk [vmem:[#allocation8] sm:$0x1] %vm3138, 0.0
    %6023 = vst.msk [vmem:[#allocation8 + $0x8] sm:$0x1] %vm3138, 0.0
    %6024 = vst.msk [vmem:[#allocation8 + $0x5] sm:$0x1] %vm3138, 0.0
    %6025 = vst.msk [vmem:[#allocation8 + $0xd] sm:$0x1] %vm3138, 0.0
    %6026 = vst.msk [vmem:[#allocation8 + $0x1] sm:$0xf] %vm5654, %v6016
    %6027 = vst.msk [vmem:[#allocation8 + $0x9] sm:$0xf] %vm5654, %v6018
    %v6028 = vld [vmem:[#allocation8] sm:$0xf]
    %v6029 = vld [vmem:[#allocation8 + $0x8] sm:$0xf]
    %v6030 = vld [vmem:[#allocation8 + $0x2] sm:$0xf]
    %v6031 = vld [vmem:[#allocation8 + $0xa] sm:$0xf]
    %v6032 = vld [vmem:[%s13] sm:$0xff]
    %s6033 = scalar_lea.vmem %s13, 8
    %v6034 = vld [vmem:[%s6033] sm:$0xff]
    %v6035 = vsel %vm3094, %v6016, 0
    %6037 = vmatprep.subr.mxu0 0.0
    %6038 = vmatpush1.msra.mxu0 %v6034
    %6039 = vmatprep.subr.mxu0 0.0
    %6040 = vmatpush1.msra.mxu0 0.0
    %6041 = vmatprep.subr.mxu0 0.0
    %6042 = vmatpush1.msra.mxu0 0.0
    %6043 = vmatprep.subr.mxu0 0.0
    %6044 = vmatpush1.msra.mxu0 0.0
    %6045 = vmatprep.subr.mxu0 0.0
    %6046 = vmatpush1.msra.mxu0 0.0
    %6047 = vmatprep.subr.mxu0 0.0
    %6048 = vmatpush1.msra.mxu0 0.0
    %6049 = vmatprep.subr.mxu0 0.0
    %6050 = vmatpush1.msra.mxu0 0.0
    %6051 = vmatprep.subr.mxu0 0.0
    %6052 = vmatpush1.msra.mxu0 0.0
    %6053 = vmatprep.subr.mxu0 0.0
    %6054 = vmatpush1.msra.mxu0 0.0
    %6055 = vmatprep.subr.mxu0 0.0
    %6056 = vmatpush1.msra.mxu0 0.0
    %6057 = vmatprep.subr.mxu0 0.0
    %6058 = vmatpush1.msra.mxu0 0.0
    %6059 = vmatprep.subr.mxu0 0.0
    %6060 = vmatpush1.msra.mxu0 0.0
    %6061 = vmatprep.subr.mxu0 0.0
    %6062 = vmatpush1.msra.mxu0 0.0
    %6063 = vmatprep.subr.mxu0 0.0
    %6064 = vmatpush1.msra.mxu0 0.0
    %6065 = vmatprep.subr.mxu0 0.0
    %6066 = vmatpush1.msra.mxu0 0.0
    %6067 = vmatprep.subr.mxu0 0.0
    %6068 = vmatpush1.msra.mxu0 0.0
    %6069 = vmatprep.subr.mxu0 0.0
    %6070 = vmatpush1.msra.mxu0 0.0
    %6071 = vmatprep.subr.mxu0 0.0
    %6072 = vmatpush1.msra.mxu0 0.0
    %6073 = vmatprep.subr.mxu0 0.0
    %6074 = vmatpush1.msra.mxu0 0.0
    %6075 = vmatprep.subr.mxu0 0.0
    %6076 = vmatpush1.msra.mxu0 0.0
    %6077 = vmatprep.subr.mxu0 0.0
    %6078 = vmatpush1.msra.mxu0 0.0
    %6079 = vmatprep.subr.mxu0 0.0
    %6080 = vmatpush1.msra.mxu0 0.0
    %6081 = vmatprep.subr.mxu0 0.0
    %6082 = vmatpush1.msra.mxu0 0.0
    %6083 = vmatprep.subr.mxu0 0.0
    %6084 = vmatpush1.msra.mxu0 0.0
    %6085 = vmatprep.subr.mxu0 0.0
    %6086 = vmatpush1.msra.mxu0 0.0
    %6087 = vmatprep.subr.mxu0 0.0
    %6088 = vmatpush1.msra.mxu0 0.0
    %6089 = vmatprep.subr.mxu0 0.0
    %6090 = vmatpush1.msra.mxu0 0.0
    %6091 = vmatprep.subr.mxu0 0.0
    %6092 = vmatpush1.msra.mxu0 0.0
    %6093 = vmatprep.subr.mxu0 0.0
    %6094 = vmatpush1.msra.mxu0 0.0
    %6095 = vmatprep.subr.mxu0 0.0
    %6096 = vmatpush1.msra.mxu0 0.0
    %6097 = vmatprep.subr.mxu0 0.0
    %6098 = vmatpush1.msra.mxu0 0.0
    %6099 = vmatprep.subr.mxu0 0.0
    %6100 = vmatpush1.msra.mxu0 0.0
    %6101 = vmatprep.mubr.f32.mxu0 0.0
    %6102 = vmatmul.mubr.f32.gmra.mrb[0].mxu0 %v6035
    %v6103 = vpop.f32.mrb[0].mxu0
    %v6104 = vadd.f32 0.0, %v6103
    %v6105 = vpop.f32.mrb[0].mxu0
    %6106 = vdwg.mxu0
    %v6109 = vcombine.low %v6028, %v6029
    %v6110 = vsel %vm3094, %v6109, 0
    %6112 = vmatprep.subr.mxu0 0.0
    %6113 = vmatpush1.msra.mxu0 %v6032
    %6114 = vmatprep.subr.mxu0 0.0
    %6115 = vmatpush1.msra.mxu0 0.0
    %6116 = vmatprep.subr.mxu0 0.0
    %6117 = vmatpush1.msra.mxu0 0.0
    %6118 = vmatprep.subr.mxu0 0.0
    %6119 = vmatpush1.msra.mxu0 0.0
    %6120 = vmatprep.subr.mxu0 0.0
    %6121 = vmatpush1.msra.mxu0 0.0
    %6122 = vmatprep.subr.mxu0 0.0
    %6123 = vmatpush1.msra.mxu0 0.0
    %6124 = vmatprep.subr.mxu0 0.0
    %6125 = vmatpush1.msra.mxu0 0.0
    %6126 = vmatprep.subr.mxu0 0.0
    %6127 = vmatpush1.msra.mxu0 0.0
    %6128 = vmatprep.subr.mxu0 0.0
    %6129 = vmatpush1.msra.mxu0 0.0
    %6130 = vmatprep.subr.mxu0 0.0
    %6131 = vmatpush1.msra.mxu0 0.0
    %6132 = vmatprep.subr.mxu0 0.0
    %6133 = vmatpush1.msra.mxu0 0.0
    %6134 = vmatprep.subr.mxu0 0.0
    %6135 = vmatpush1.msra.mxu0 0.0
    %6136 = vmatprep.subr.mxu0 0.0
    %6137 = vmatpush1.msra.mxu0 0.0
    %6138 = vmatprep.subr.mxu0 0.0
    %6139 = vmatpush1.msra.mxu0 0.0
    %6140 = vmatprep.subr.mxu0 0.0
    %6141 = vmatpush1.msra.mxu0 0.0
    %6142 = vmatprep.subr.mxu0 0.0
    %6143 = vmatpush1.msra.mxu0 0.0
    %6144 = vmatprep.subr.mxu0 0.0
    %6145 = vmatpush1.msra.mxu0 0.0
    %6146 = vmatprep.subr.mxu0 0.0
    %6147 = vmatpush1.msra.mxu0 0.0
    %6148 = vmatprep.subr.mxu0 0.0
    %6149 = vmatpush1.msra.mxu0 0.0
    %6150 = vmatprep.subr.mxu0 0.0
    %6151 = vmatpush1.msra.mxu0 0.0
    %6152 = vmatprep.subr.mxu0 0.0
    %6153 = vmatpush1.msra.mxu0 0.0
    %6154 = vmatprep.subr.mxu0 0.0
    %6155 = vmatpush1.msra.mxu0 0.0
    %6156 = vmatprep.subr.mxu0 0.0
    %6157 = vmatpush1.msra.mxu0 0.0
    %6158 = vmatprep.subr.mxu0 0.0
    %6159 = vmatpush1.msra.mxu0 0.0
    %6160 = vmatprep.subr.mxu0 0.0
    %6161 = vmatpush1.msra.mxu0 0.0
    %6162 = vmatprep.subr.mxu0 0.0
    %6163 = vmatpush1.msra.mxu0 0.0
    %6164 = vmatprep.subr.mxu0 0.0
    %6165 = vmatpush1.msra.mxu0 0.0
    %6166 = vmatprep.subr.mxu0 0.0
    %6167 = vmatpush1.msra.mxu0 0.0
    %6168 = vmatprep.subr.mxu0 0.0
    %6169 = vmatpush1.msra.mxu0 0.0
    %6170 = vmatprep.subr.mxu0 0.0
    %6171 = vmatpush1.msra.mxu0 0.0
    %6172 = vmatprep.subr.mxu0 0.0
    %6173 = vmatpush1.msra.mxu0 0.0
    %6174 = vmatprep.subr.mxu0 0.0
    %6175 = vmatpush1.msra.mxu0 0.0
    %6176 = vmatprep.mubr.f32.mxu0 0.0
    %6177 = vmatmul.mubr.f32.gmra.mrb[0].mxu0 %v6110
    %v6178 = vpop.f32.mrb[0].mxu0
    %v6179 = vadd.f32 %v6104, %v6178
    %v6180 = vpop.f32.mrb[0].mxu0
    %6181 = vdwg.mxu0
    %s6182 = scalar_lea.vmem %s13, 16
    %v6183 = vld [vmem:[%s6182] sm:$0xff]
    %v6186 = vcombine.low %v6030, %v6031
    %v6187 = vsel %vm3094, %v6186, 0
    %6189 = vmatprep.subr.mxu0 0.0
    %6190 = vmatpush1.msra.mxu0 %v6183
    %6191 = vmatprep.subr.mxu0 0.0
    %6192 = vmatpush1.msra.mxu0 0.0
    %6193 = vmatprep.subr.mxu0 0.0
    %6194 = vmatpush1.msra.mxu0 0.0
    %6195 = vmatprep.subr.mxu0 0.0
    %6196 = vmatpush1.msra.mxu0 0.0
    %6197 = vmatprep.subr.mxu0 0.0
    %6198 = vmatpush1.msra.mxu0 0.0
    %6199 = vmatprep.subr.mxu0 0.0
    %6200 = vmatpush1.msra.mxu0 0.0
    %6201 = vmatprep.subr.mxu0 0.0
    %6202 = vmatpush1.msra.mxu0 0.0
    %6203 = vmatprep.subr.mxu0 0.0
    %6204 = vmatpush1.msra.mxu0 0.0
    %6205 = vmatprep.subr.mxu0 0.0
    %6206 = vmatpush1.msra.mxu0 0.0
    %6207 = vmatprep.subr.mxu0 0.0
    %6208 = vmatpush1.msra.mxu0 0.0
    %6209 = vmatprep.subr.mxu0 0.0
    %6210 = vmatpush1.msra.mxu0 0.0
    %6211 = vmatprep.subr.mxu0 0.0
    %6212 = vmatpush1.msra.mxu0 0.0
    %6213 = vmatprep.subr.mxu0 0.0
    %6214 = vmatpush1.msra.mxu0 0.0
    %6215 = vmatprep.subr.mxu0 0.0
    %6216 = vmatpush1.msra.mxu0 0.0
    %6217 = vmatprep.subr.mxu0 0.0
    %6218 = vmatpush1.msra.mxu0 0.0
    %6219 = vmatprep.subr.mxu0 0.0
    %6220 = vmatpush1.msra.mxu0 0.0
    %6221 = vmatprep.subr.mxu0 0.0
    %6222 = vmatpush1.msra.mxu0 0.0
    %6223 = vmatprep.subr.mxu0 0.0
    %6224 = vmatpush1.msra.mxu0 0.0
    %6225 = vmatprep.subr.mxu0 0.0
    %6226 = vmatpush1.msra.mxu0 0.0
    %6227 = vmatprep.subr.mxu0 0.0
    %6228 = vmatpush1.msra.mxu0 0.0
    %6229 = vmatprep.subr.mxu0 0.0
    %6230 = vmatpush1.msra.mxu0 0.0
    %6231 = vmatprep.subr.mxu0 0.0
    %6232 = vmatpush1.msra.mxu0 0.0
    %6233 = vmatprep.subr.mxu0 0.0
    %6234 = vmatpush1.msra.mxu0 0.0
    %6235 = vmatprep.subr.mxu0 0.0
    %6236 = vmatpush1.msra.mxu0 0.0
    %6237 = vmatprep.subr.mxu0 0.0
    %6238 = vmatpush1.msra.mxu0 0.0
    %6239 = vmatprep.subr.mxu0 0.0
    %6240 = vmatpush1.msra.mxu0 0.0
    %6241 = vmatprep.subr.mxu0 0.0
    %6242 = vmatpush1.msra.mxu0 0.0
    %6243 = vmatprep.subr.mxu0 0.0
    %6244 = vmatpush1.msra.mxu0 0.0
    %6245 = vmatprep.subr.mxu0 0.0
    %6246 = vmatpush1.msra.mxu0 0.0
    %6247 = vmatprep.subr.mxu0 0.0
    %6248 = vmatpush1.msra.mxu0 0.0
    %6249 = vmatprep.subr.mxu0 0.0
    %6250 = vmatpush1.msra.mxu0 0.0
    %6251 = vmatprep.subr.mxu0 0.0
    %6252 = vmatpush1.msra.mxu0 0.0
    %6253 = vmatprep.mubr.f32.mxu0 0.0
    %6254 = vmatmul.mubr.f32.gmra.mrb[0].mxu0 %v6187
    %v6255 = vpop.f32.mrb[0].mxu0
    %v6256 = vadd.f32 0.0, %v6255
    %v6257 = vpop.f32.mrb[0].mxu0
    %6258 = vdwg.mxu0
    %v6259 = vadd.f32 %v6179, %v6256
    %v6260 = vld [vmem:[%s15] sm:$0x1]
    %v6261 = vlaneseq
    %v6262 = vshrl.u32 %v6261, 7
    %v6263 = vsub.s32 0, %v6262
    %v6264 = vrot.slane %v6260, %v6263
    %v6265 = vadd.f32 %v6259, %v6264
    %v6266 = vld [vmem:[%s15 + $0x1] sm:$0x1]
    %v6267 = vld [vmem:[%s15 + $0x2] sm:$0x1]
    %v6268 = vsel %vm3094, %v6265, 0.0
    %v6269 = vrot.slane %v6268, 4
    %v6270 = vadd.f32 %v6268, %v6269
    %v6271 = vrot.slane %v6270, 2
    %v6272 = vadd.f32 %v6270, %v6271
    %v6273 = vrot.slane %v6272, 1
    %v6274 = vadd.f32 %v6272, %v6273
    %v6275 = vmul.f32 %v6265, %v6265
    %v6276 = vsel %vm3094, %v6275, 0.0
    %v6277 = vrot.slane %v6276, 4
    %v6278 = vadd.f32 %v6276, %v6277
    %v6279 = vrot.slane %v6278, 2
    %v6280 = vadd.f32 %v6278, %v6279
    %v6281 = vrot.slane %v6280, 1
    %v6282 = vadd.f32 %v6280, %v6281
    %v6283 = vmul.f32 %v6274, 0.125
    %v6284 = vmul.f32 %v6282, 0.125
    %v6285 = vmul.f32 %v6283, %v6283
    %v6286 = vsub.f32 %v6284, %v6285
    %v6287 = vadd.f32 %v6286, 1e-05
    %v6288 = vrsqrt.pop %v6287
    %v6289 = vmul.f32 %v6266, %v6288
    %v6290 = vmul.f32 %v6283, %v6289
    %v6291 = vsub.f32 %v6267, %v6290
    %v6292 = vlaneseq
    %v6293 = vshrl.u32 %v6292, 7
    %v6294 = vsub.s32 0, %v6293
    %v6295 = vrot.slane %v6289, %v6294
    %v6296 = vmul.f32 %v6265, %v6295
    %v6297 = vlaneseq
    %v6298 = vshrl.u32 %v6297, 7
    %v6299 = vsub.s32 0, %v6298
    %v6300 = vrot.slane %v6291, %v6299
    %v6301 = vadd.f32 %v6296, %v6300
    %v6302 = vmax.f32 %v6301, 0.0
    %v6304 = vcombine.high %v6302, %v6302
    %6306 = vst.msk [vmem:[#allocation9] sm:$0x1] %vm3138, 0.0
    %6307 = vst.msk [vmem:[#allocation9 + $0x8] sm:$0x1] %vm3138, 0.0
    %6308 = vst.msk [vmem:[#allocation9 + $0x5] sm:$0x1] %vm3138, 0.0
    %6309 = vst.msk [vmem:[#allocation9 + $0xd] sm:$0x1] %vm3138, 0.0
    %6310 = vst.msk [vmem:[#allocation9 + $0x1] sm:$0xf] %vm5654, %v6302
    %6311 = vst.msk [vmem:[#allocation9 + $0x9] sm:$0xf] %vm5654, %v6304
    %v6312 = vld [vmem:[#allocation9] sm:$0xf]
    %v6313 = vld [vmem:[#allocation9 + $0x8] sm:$0xf]
    %v6314 = vld [vmem:[#allocation9 + $0x2] sm:$0xf]
    %v6315 = vld [vmem:[#allocation9 + $0xa] sm:$0xf]
    %v6316 = vld [vmem:[#allocation24] sm:$0xff]
    %s6317 = scalar_lea.vmem [#allocation24], 8
    %v6318 = vld [vmem:[%s6317] sm:$0xff]
    %v6319 = vsel %vm3094, %v6302, 0
    %6321 = vmatprep.subr.mxu0 0.0
    %6322 = vmatpush1.msra.mxu0 %v6318
    %6323 = vmatprep.subr.mxu0 0.0
    %6324 = vmatpush1.msra.mxu0 0.0
    %6325 = vmatprep.subr.mxu0 0.0
    %6326 = vmatpush1.msra.mxu0 0.0
    %6327 = vmatprep.subr.mxu0 0.0
    %6328 = vmatpush1.msra.mxu0 0.0
    %6329 = vmatprep.subr.mxu0 0.0
    %6330 = vmatpush1.msra.mxu0 0.0
    %6331 = vmatprep.subr.mxu0 0.0
    %6332 = vmatpush1.msra.mxu0 0.0
    %6333 = vmatprep.subr.mxu0 0.0
    %6334 = vmatpush1.msra.mxu0 0.0
    %6335 = vmatprep.subr.mxu0 0.0
    %6336 = vmatpush1.msra.mxu0 0.0
    %6337 = vmatprep.subr.mxu0 0.0
    %6338 = vmatpush1.msra.mxu0 0.0
    %6339 = vmatprep.subr.mxu0 0.0
    %6340 = vmatpush1.msra.mxu0 0.0
    %6341 = vmatprep.subr.mxu0 0.0
    %6342 = vmatpush1.msra.mxu0 0.0
    %6343 = vmatprep.subr.mxu0 0.0
    %6344 = vmatpush1.msra.mxu0 0.0
    %6345 = vmatprep.subr.mxu0 0.0
    %6346 = vmatpush1.msra.mxu0 0.0
    %6347 = vmatprep.subr.mxu0 0.0
    %6348 = vmatpush1.msra.mxu0 0.0
    %6349 = vmatprep.subr.mxu0 0.0
    %6350 = vmatpush1.msra.mxu0 0.0
    %6351 = vmatprep.subr.mxu0 0.0
    %6352 = vmatpush1.msra.mxu0 0.0
    %6353 = vmatprep.subr.mxu0 0.0
    %6354 = vmatpush1.msra.mxu0 0.0
    %6355 = vmatprep.subr.mxu0 0.0
    %6356 = vmatpush1.msra.mxu0 0.0
    %6357 = vmatprep.subr.mxu0 0.0
    %6358 = vmatpush1.msra.mxu0 0.0
    %6359 = vmatprep.subr.mxu0 0.0
    %6360 = vmatpush1.msra.mxu0 0.0
    %6361 = vmatprep.subr.mxu0 0.0
    %6362 = vmatpush1.msra.mxu0 0.0
    %6363 = vmatprep.subr.mxu0 0.0
    %6364 = vmatpush1.msra.mxu0 0.0
    %6365 = vmatprep.subr.mxu0 0.0
    %6366 = vmatpush1.msra.mxu0 0.0
    %6367 = vmatprep.subr.mxu0 0.0
    %6368 = vmatpush1.msra.mxu0 0.0
    %6369 = vmatprep.subr.mxu0 0.0
    %6370 = vmatpush1.msra.mxu0 0.0
    %6371 = vmatprep.subr.mxu0 0.0
    %6372 = vmatpush1.msra.mxu0 0.0
    %6373 = vmatprep.subr.mxu0 0.0
    %6374 = vmatpush1.msra.mxu0 0.0
    %6375 = vmatprep.subr.mxu0 0.0
    %6376 = vmatpush1.msra.mxu0 0.0
    %6377 = vmatprep.subr.mxu0 0.0
    %6378 = vmatpush1.msra.mxu0 0.0
    %6379 = vmatprep.subr.mxu0 0.0
    %6380 = vmatpush1.msra.mxu0 0.0
    %6381 = vmatprep.subr.mxu0 0.0
    %6382 = vmatpush1.msra.mxu0 0.0
    %6383 = vmatprep.subr.mxu0 0.0
    %6384 = vmatpush1.msra.mxu0 0.0
    %6385 = vmatprep.mubr.f32.mxu0 0.0
    %6386 = vmatmul.mubr.f32.gmra.mrb[0].mxu0 %v6319
    %v6387 = vpop.f32.mrb[0].mxu0
    %v6388 = vadd.f32 0.0, %v6387
    %v6389 = vpop.f32.mrb[0].mxu0
    %6390 = vdwg.mxu0
    %v6393 = vcombine.low %v6312, %v6313
    %v6394 = vsel %vm3094, %v6393, 0
    %6396 = vmatprep.subr.mxu0 0.0
    %6397 = vmatpush1.msra.mxu0 %v6316
    %6398 = vmatprep.subr.mxu0 0.0
    %6399 = vmatpush1.msra.mxu0 0.0
    %6400 = vmatprep.subr.mxu0 0.0
    %6401 = vmatpush1.msra.mxu0 0.0
    %6402 = vmatprep.subr.mxu0 0.0
    %6403 = vmatpush1.msra.mxu0 0.0
    %6404 = vmatprep.subr.mxu0 0.0
    %6405 = vmatpush1.msra.mxu0 0.0
    %6406 = vmatprep.subr.mxu0 0.0
    %6407 = vmatpush1.msra.mxu0 0.0
    %6408 = vmatprep.subr.mxu0 0.0
    %6409 = vmatpush1.msra.mxu0 0.0
    %6410 = vmatprep.subr.mxu0 0.0
    %6411 = vmatpush1.msra.mxu0 0.0
    %6412 = vmatprep.subr.mxu0 0.0
    %6413 = vmatpush1.msra.mxu0 0.0
    %6414 = vmatprep.subr.mxu0 0.0
    %6415 = vmatpush1.msra.mxu0 0.0
    %6416 = vmatprep.subr.mxu0 0.0
    %6417 = vmatpush1.msra.mxu0 0.0
    %6418 = vmatprep.subr.mxu0 0.0
    %6419 = vmatpush1.msra.mxu0 0.0
    %6420 = vmatprep.subr.mxu0 0.0
    %6421 = vmatpush1.msra.mxu0 0.0
    %6422 = vmatprep.subr.mxu0 0.0
    %6423 = vmatpush1.msra.mxu0 0.0
    %6424 = vmatprep.subr.mxu0 0.0
    %6425 = vmatpush1.msra.mxu0 0.0
    %6426 = vmatprep.subr.mxu0 0.0
    %6427 = vmatpush1.msra.mxu0 0.0
    %6428 = vmatprep.subr.mxu0 0.0
    %6429 = vmatpush1.msra.mxu0 0.0
    %6430 = vmatprep.subr.mxu0 0.0
    %6431 = vmatpush1.msra.mxu0 0.0
    %6432 = vmatprep.subr.mxu0 0.0
    %6433 = vmatpush1.msra.mxu0 0.0
    %6434 = vmatprep.subr.mxu0 0.0
    %6435 = vmatpush1.msra.mxu0 0.0
    %6436 = vmatprep.subr.mxu0 0.0
    %6437 = vmatpush1.msra.mxu0 0.0
    %6438 = vmatprep.subr.mxu0 0.0
    %6439 = vmatpush1.msra.mxu0 0.0
    %6440 = vmatprep.subr.mxu0 0.0
    %6441 = vmatpush1.msra.mxu0 0.0
    %6442 = vmatprep.subr.mxu0 0.0
    %6443 = vmatpush1.msra.mxu0 0.0
    %6444 = vmatprep.subr.mxu0 0.0
    %6445 = vmatpush1.msra.mxu0 0.0
    %6446 = vmatprep.subr.mxu0 0.0
    %6447 = vmatpush1.msra.mxu0 0.0
    %6448 = vmatprep.subr.mxu0 0.0
    %6449 = vmatpush1.msra.mxu0 0.0
    %6450 = vmatprep.subr.mxu0 0.0
    %6451 = vmatpush1.msra.mxu0 0.0
    %6452 = vmatprep.subr.mxu0 0.0
    %6453 = vmatpush1.msra.mxu0 0.0
    %6454 = vmatprep.subr.mxu0 0.0
    %6455 = vmatpush1.msra.mxu0 0.0
    %6456 = vmatprep.subr.mxu0 0.0
    %6457 = vmatpush1.msra.mxu0 0.0
    %6458 = vmatprep.subr.mxu0 0.0
    %6459 = vmatpush1.msra.mxu0 0.0
    %6460 = vmatprep.mubr.f32.mxu0 0.0
    %6461 = vmatmul.mubr.f32.gmra.mrb[0].mxu0 %v6394
    %v6462 = vpop.f32.mrb[0].mxu0
    %v6463 = vadd.f32 %v6388, %v6462
    %v6464 = vpop.f32.mrb[0].mxu0
    %6465 = vdwg.mxu0
    %s6466 = scalar_lea.vmem [#allocation24], 16
    %v6467 = vld [vmem:[%s6466] sm:$0xff]
    %v6470 = vcombine.low %v6314, %v6315
    %v6471 = vsel %vm3094, %v6470, 0
    %6473 = vmatprep.subr.mxu0 0.0
    %6474 = vmatpush1.msra.mxu0 %v6467
    %6475 = vmatprep.subr.mxu0 0.0
    %6476 = vmatpush1.msra.mxu0 0.0
    %6477 = vmatprep.subr.mxu0 0.0
    %6478 = vmatpush1.msra.mxu0 0.0
    %6479 = vmatprep.subr.mxu0 0.0
    %6480 = vmatpush1.msra.mxu0 0.0
    %6481 = vmatprep.subr.mxu0 0.0
    %6482 = vmatpush1.msra.mxu0 0.0
    %6483 = vmatprep.subr.mxu0 0.0
    %6484 = vmatpush1.msra.mxu0 0.0
    %6485 = vmatprep.subr.mxu0 0.0
    %6486 = vmatpush1.msra.mxu0 0.0
    %6487 = vmatprep.subr.mxu0 0.0
    %6488 = vmatpush1.msra.mxu0 0.0
    %6489 = vmatprep.subr.mxu0 0.0
    %6490 = vmatpush1.msra.mxu0 0.0
    %6491 = vmatprep.subr.mxu0 0.0
    %6492 = vmatpush1.msra.mxu0 0.0
    %6493 = vmatprep.subr.mxu0 0.0
    %6494 = vmatpush1.msra.mxu0 0.0
    %6495 = vmatprep.subr.mxu0 0.0
    %6496 = vmatpush1.msra.mxu0 0.0
    %6497 = vmatprep.subr.mxu0 0.0
    %6498 = vmatpush1.msra.mxu0 0.0
    %6499 = vmatprep.subr.mxu0 0.0
    %6500 = vmatpush1.msra.mxu0 0.0
    %6501 = vmatprep.subr.mxu0 0.0
    %6502 = vmatpush1.msra.mxu0 0.0
    %6503 = vmatprep.subr.mxu0 0.0
    %6504 = vmatpush1.msra.mxu0 0.0
    %6505 = vmatprep.subr.mxu0 0.0
    %6506 = vmatpush1.msra.mxu0 0.0
    %6507 = vmatprep.subr.mxu0 0.0
    %6508 = vmatpush1.msra.mxu0 0.0
    %6509 = vmatprep.subr.mxu0 0.0
    %6510 = vmatpush1.msra.mxu0 0.0
    %6511 = vmatprep.subr.mxu0 0.0
    %6512 = vmatpush1.msra.mxu0 0.0
    %6513 = vmatprep.subr.mxu0 0.0
    %6514 = vmatpush1.msra.mxu0 0.0
    %6515 = vmatprep.subr.mxu0 0.0
    %6516 = vmatpush1.msra.mxu0 0.0
    %6517 = vmatprep.subr.mxu0 0.0
    %6518 = vmatpush1.msra.mxu0 0.0
    %6519 = vmatprep.subr.mxu0 0.0
    %6520 = vmatpush1.msra.mxu0 0.0
    %6521 = vmatprep.subr.mxu0 0.0
    %6522 = vmatpush1.msra.mxu0 0.0
    %6523 = vmatprep.subr.mxu0 0.0
    %6524 = vmatpush1.msra.mxu0 0.0
    %6525 = vmatprep.subr.mxu0 0.0
    %6526 = vmatpush1.msra.mxu0 0.0
    %6527 = vmatprep.subr.mxu0 0.0
    %6528 = vmatpush1.msra.mxu0 0.0
    %6529 = vmatprep.subr.mxu0 0.0
    %6530 = vmatpush1.msra.mxu0 0.0
    %6531 = vmatprep.subr.mxu0 0.0
    %6532 = vmatpush1.msra.mxu0 0.0
    %6533 = vmatprep.subr.mxu0 0.0
    %6534 = vmatpush1.msra.mxu0 0.0
    %6535 = vmatprep.subr.mxu0 0.0
    %6536 = vmatpush1.msra.mxu0 0.0
    %6537 = vmatprep.mubr.f32.mxu0 0.0
    %6538 = vmatmul.mubr.f32.gmra.mrb[0].mxu0 %v6471
    %v6539 = vpop.f32.mrb[0].mxu0
    %v6540 = vadd.f32 0.0, %v6539
    %v6541 = vpop.f32.mrb[0].mxu0
    %6542 = vdwg.mxu0
    %v6543 = vadd.f32 %v6463, %v6540
    %v6544 = vld [vmem:[%s15 + $0x3] sm:$0x1]
    %v6545 = vlaneseq
    %v6546 = vshrl.u32 %v6545, 7
    %v6547 = vsub.s32 0, %v6546
    %v6548 = vrot.slane %v6544, %v6547
    %v6549 = vadd.f32 %v6543, %v6548
    %v6550 = vld [vmem:[%s15 + $0x4] sm:$0x1]
    %v6551 = vld [vmem:[%s15 + $0x5] sm:$0x1]
    %v6552 = vsel %vm3094, %v6549, 0.0
    %v6553 = vrot.slane %v6552, 4
    %v6554 = vadd.f32 %v6552, %v6553
    %v6555 = vrot.slane %v6554, 2
    %v6556 = vadd.f32 %v6554, %v6555
    %v6557 = vrot.slane %v6556, 1
    %v6558 = vadd.f32 %v6556, %v6557
    %v6559 = vmul.f32 %v6549, %v6549
    %v6560 = vsel %vm3094, %v6559, 0.0
    %v6561 = vrot.slane %v6560, 4
    %v6562 = vadd.f32 %v6560, %v6561
    %v6563 = vrot.slane %v6562, 2
    %v6564 = vadd.f32 %v6562, %v6563
    %v6565 = vrot.slane %v6564, 1
    %v6566 = vadd.f32 %v6564, %v6565
    %v6567 = vmul.f32 %v6558, 0.125
    %v6568 = vmul.f32 %v6566, 0.125
    %v6569 = vmul.f32 %v6567, %v6567
    %v6570 = vsub.f32 %v6568, %v6569
    %v6571 = vadd.f32 %v6570, 1e-05
    %v6572 = vrsqrt.pop %v6571
    %v6573 = vmul.f32 %v6550, %v6572
    %v6574 = vmul.f32 %v6567, %v6573
    %v6575 = vsub.f32 %v6551, %v6574
    %v6576 = vlaneseq
    %v6577 = vshrl.u32 %v6576, 7
    %v6578 = vsub.s32 0, %v6577
    %v6579 = vrot.slane %v6573, %v6578
    %v6580 = vmul.f32 %v6549, %v6579
    %v6581 = vlaneseq
    %v6582 = vshrl.u32 %v6581, 7
    %v6583 = vsub.s32 0, %v6582
    %v6584 = vrot.slane %v6575, %v6583
    %v6585 = vadd.f32 %v6580, %v6584
    %v6586 = vadd.f32 %v6585, %v6016
    %v6587 = vmax.f32 %v6586, 0.0
    %v6589 = vcombine.high %v6587, %v6587
    %6591 = vst.msk [vmem:[%s19] sm:$0xf] %vm5654, %v6587
    %6592 = vst.msk [vmem:[%s19 + $0x4] sm:$0xf] %vm5654, %v6589
    // Predicated region
    $region102: #{_forward.1} parent=1 // pred_check
      _
    $region103: #{_forward.1} parent=1 // pred_check_branch
      %6594 = sbr.rel (0) target = $region105
    $region104: #{_forward.1} parent=1 // pred_region
      _
    $region105: #{_forward.1} parent=1 // pred_fallthru
      _
    // Predicated region
    $region106: #{_forward.1} parent=1 // pred_check
      _
    $region107: #{_forward.1} parent=1 // pred_check_branch
      %6596 = sbr.rel (0) target = $region109
    $region108: #{_forward.1} parent=1 // pred_region
      _
    $region109: #{_forward.1} parent=1 // pred_fallthru
      _
    // Predicated region
    $region110: #{_forward.1} parent=1 // pred_check
      _
    $region111: #{_forward.1} parent=1 // pred_check_branch
      %6598 = sbr.rel (0) target = $region113
    $region112: #{_forward.1} parent=1 // pred_region
      %s6600 = ssub.s32 128, 128
      %6601 = vsyncadd [#allocation12], %s6600
      %s6602 = sshll.u32 [#allocation25], 4
      %s6603 = int_to_ptr.vmem [resolvable:$true] %s6602
      %6608 = dma.vmem_to_hbm [thread:$0]  %s6603, 128, %s18, [#allocation12], 64, 64, 4
    $region113: #{_forward.1} parent=1 // pred_fallthru
      _
    // Predicated region
    $region114: #{_forward.1} parent=1 // pred_check
      _
    $region115: #{_forward.1} parent=1 // pred_check_branch
      %6610 = sbr.rel (0) target = $region117
    $region116: #{_forward.1} parent=1 // pred_region
      _
    $region117: #{_forward.1} parent=1 // pred_fallthru
      _
    // Predicated region
    $region118: #{_forward.1} parent=1 // pred_check
      _
    $region119: #{_forward.1} parent=1 // pred_check_branch
      %6612 = sbr.rel (0) target = $region121
    $region120: #{_forward.1} parent=1 // pred_region
      _
    $region121: #{_forward.1} parent=1 // pred_fallthru
      _
    // Predicated region
    $region122: #{_forward.1} parent=1 // pred_check
      _
    $region123: #{_forward.1} parent=1 // pred_check_branch
      %6614 = sbr.rel (0) target = $region125
    $region124: #{_forward.1} parent=1 // pred_region
      _
    $region125: #{_forward.1} parent=1 // pred_fallthru
      _
    // Predicated region
    $region126: #{_forward.1} parent=1 // pred_check
      _
    $region127: #{_forward.1} parent=1 // pred_check_branch
      %6616 = sbr.rel (0) target = $region129
    $region128: #{_forward.1} parent=1 // pred_region
      %6617 = dma.done [#allocation12], 128
    $region129: #{_forward.1} parent=1 // pred_fallthru
      _
    // Predicated region
    $region130: #{_forward.1} parent=1 // pred_check
      _
    $region131: #{_forward.1} parent=1 // pred_check_branch
      %6619 = sbr.rel (0) target = $region133
    $region132: #{_forward.1} parent=1 // pred_region
      _
    $region133: #{_forward.1} parent=1 // pred_fallthru
      _
    %6620 = vsyncpa [#allocation11], 1
    %6621 = vsyncpa [#allocation14], 1
    %6622 = vsyncpa [#allocation17], 1
    %6623 = vsyncpa [#allocation20], 1
    %6624 = vsyncpa [#allocation23], 1
    %6625 = vsyncpa [#allocation12], 1

</llo_original>
